<compile_context>
chip_gen: v5e
topology: v5e:2x2
jax: 0.10.0
libtpu: 0.0.40
codegen_flags: <defaults>
</compile_context>

<pallas_src>
import math

import jax
import jax.numpy as jnp
from jax.experimental import pallas as pl
from jax.experimental.pallas import tpu as pltpu


# ----------------------------------------------------------------------------
# Fused kernel: one batch element per grid step.
# ----------------------------------------------------------------------------
def _sat_scaled_gcn_kernel(x_ref, pa_ref, adj_ref, mask_ref, w_ref, o_ref):
    """spatialAttentionScaledGCN forward for one batch element.

    x_ref   : (1, T, N, F_in)  node features, time-major
    pa_ref  : (1, T, N, N)     phaseAct_matrix slice
    adj_ref : (N, N)           sym_norm_Adj_matrix
    mask_ref: (N, 1)           1.0 = observed node, 0.0 = unknown (gets imputed)
    w_ref   : (F_in, F_out)    Theta weight (bias-free linear)
    o_ref   : (1, T, N, F_out)
    """
    _, T, N, F = x_ref.shape
    x = x_ref[0]            # (T, N, F)
    pa = pa_ref[0]          # (T, N, N)
    adj = adj_ref[...]      # (N, N)
    mask = mask_ref[...]    # (N, 1)
    w = w_ref[...]          # (F, F_out)
    inv_sqrt_f = 1.0 / math.sqrt(F)

    def spatial_attention(xc):
        # SAt(x)/sqrt(F): softmax(X X^T / sqrt(F), axis=-1) / sqrt(F), per time step.
        # Dropout(p=0.0) is the identity (inference).
        scores = jnp.einsum("tnf,tmf->tnm", xc, xc,
                            preferred_element_type=jnp.float32) * inv_sqrt_f
        scores = scores - jnp.max(scores, axis=-1, keepdims=True)
        e = jnp.exp(scores)
        return (e / jnp.sum(e, axis=-1, keepdims=True)) * inv_sqrt_f  # (T, N, N)

    # ---- iterative imputation: T-1 refinement sweeps (static, trace-time unrolled,
    # ---- everything stays resident in VMEM/vregs across sweeps) ----------------
    for _ in range(T - 1):
        sat = jnp.swapaxes(pa * spatial_attention(x), -1, -2)       # (T, N, N)
        # x_pred[t] = sat[t+1] @ x[t]   for t = 0 .. T-2
        x_pred = jnp.einsum("tnm,tmf->tnf", sat[1:], x[:-1],
                            preferred_element_type=jnp.float32)     # (T-1, N, F)
        # TODO(synk): revise_unknown is not defined in the source module; assumed
        # semantics: observed nodes (mask==1) keep their value, unknown nodes are
        # replaced by the prediction at time steps 1..T-1 (time 0 untouched).
        x_tail = mask * x[1:] + (1.0 - mask) * x_pred
        x = jnp.concatenate([x[:1], x_tail], axis=0)                # (T, N, F)

    # ---- final attention-scaled graph convolution ------------------------------
    sat_adj = jnp.swapaxes(pa * adj * spatial_attention(x), -1, -2)  # (T, N, N)
    h = jnp.einsum("tnm,tmf->tnf", sat_adj, x,
                   preferred_element_type=jnp.float32)               # (T, N, F)
    # Theta applied once on the flattened (T*N, F) slab -> single MXU matmul.
    y = jnp.dot(h.reshape(T * N, F), w, preferred_element_type=jnp.float32)
    y = jnp.maximum(y, 0.0)
    o_ref[0] = y.reshape(T, N, w.shape[1]).astype(o_ref.dtype)


# ----------------------------------------------------------------------------
# Wrapper
# ----------------------------------------------------------------------------
def spatial_attention_scaled_gcn(x, phase_act, sym_adj, mask, theta_w):
    """x: (B, N, T, F_in), phase_act: (B, T, N, N) -> (B, N, T, F_out)."""
    B, N, T, F = x.shape
    F_out = theta_w.shape[1]

    # Single boundary-layout pass each way; everything inside the kernel is
    # time-major, so no intermediate transposes / HBM round trips exist.
    x_t = jnp.transpose(x, (0, 2, 1, 3))                      # (B, T, N, F)

    out_t = pl.pallas_call(
        _sat_scaled_gcn_kernel,
        out_shape=jax.ShapeDtypeStruct((B, T, N, F_out), jnp.float32),
        grid=(B,),
        in_specs=[
            pl.BlockSpec((1, T, N, F), lambda b: (b, 0, 0, 0)),
            pl.BlockSpec((1, T, N, N), lambda b: (b, 0, 0, 0)),
            pl.BlockSpec((N, N), lambda b: (0, 0)),
            pl.BlockSpec((N, 1), lambda b: (0, 0)),
            pl.BlockSpec((F, F_out), lambda b: (0, 0)),
        ],
        out_specs=pl.BlockSpec((1, T, N, F_out), lambda b: (b, 0, 0, 0)),
        compiler_params=pltpu.CompilerParams(
            dimension_semantics=("parallel",)),
    )(x_t, phase_act, sym_adj, mask, theta_w)

    return jnp.transpose(out_t, (0, 2, 1, 3))                 # (B, N, T, F_out)


# ----------------------------------------------------------------------------
# Pure-JAX reference (mirrors the PyTorch forward) for a correctness check.
# ----------------------------------------------------------------------------
def _reference_forward(x, phase_act, sym_adj, mask, theta_w):
    B, N, T, F = x.shape
    inv_sqrt_f = 1.0 / math.sqrt(F)

    def sat(xc):  # xc: (B, T, N, F)
        scores = jnp.einsum("btnf,btmf->btnm", xc, xc,
                            precision="highest") * inv_sqrt_f
        return jax.nn.softmax(scores, axis=-1) * inv_sqrt_f

    xc = jnp.transpose(x, (0, 2, 1, 3))                       # (B, T, N, F)
    m = mask[None, None]                                      # (1, 1, N, 1)
    for _ in range(T - 1):
        s = jnp.swapaxes(phase_act * sat(xc), -1, -2)
        x_pred = jnp.einsum("btnm,btmf->btnf", s[:, 1:], xc[:, :-1],
                            precision="highest")
        x_tail = m * xc[:, 1:] + (1.0 - m) * x_pred
        xc = jnp.concatenate([xc[:, :1], x_tail], axis=1)
    s = jnp.swapaxes(phase_act * sym_adj * sat(xc), -1, -2)
    h = jnp.einsum("btnm,btmf->btnf", s, xc, precision="highest")
    y = jax.nn.relu(jnp.einsum("btnf,fo->btno", h, theta_w, precision="highest"))
    return jnp.transpose(y, (0, 2, 1, 3))                     # (B, N, T, F_out)


if __name__ == "__main__":
    B, N, T, F_IN, F_OUT = 2, 16, 8, 4, 32

    key = jax.random.PRNGKey(0)
    k_x, k_pa, k_adj, k_mask, k_w = jax.random.split(key, 5)

    x = jax.random.normal(k_x, (B, N, T, F_IN), jnp.float32)
    phase_act = jax.random.uniform(k_pa, (B, T, N, N), dtype=jnp.float32)

    # Symmetric normalized adjacency D^{-1/2} (A + I) D^{-1/2}.
    a = (jax.random.uniform(k_adj, (N, N)) < 0.3).astype(jnp.float32)
    a = jnp.clip(jnp.maximum(a, a.T) + jnp.eye(N, dtype=jnp.float32), 0.0, 1.0)
    d_inv_sqrt = 1.0 / jnp.sqrt(jnp.sum(a, axis=1))
    sym_adj = a * d_inv_sqrt[:, None] * d_inv_sqrt[None, :]

    # Node observation mask: 1 = observed, 0 = unknown (imputed).
    mask = (jax.random.uniform(k_mask, (N, 1)) < 0.5).astype(jnp.float32)

    # Theta: Linear(F_IN -> F_OUT, bias=False), stored as (in, out).
    theta_w = 0.1 * jax.random.normal(k_w, (F_IN, F_OUT), jnp.float32)

    fwd = jax.jit(spatial_attention_scaled_gcn)
    out = fwd(x, phase_act, sym_adj, mask, theta_w)
    out = jax.block_until_ready(out)
    assert out.shape == (B, N, T, F_OUT)

    ref = _reference_forward(x, phase_act, sym_adj, mask, theta_w)
    err = float(jnp.max(jnp.abs(out - ref)))
    assert err < 1e-3, f"kernel/reference mismatch: max abs err = {err}"

    print("KERNEL_OK")
</pallas_src>

<mosaic_0001>
module attributes {stable_mosaic.version = 11 : i64} {
  func.func @_sat_scaled_gcn_kernel(%arg0: i32, %arg1: memref<1x8x16x4xf32, #tpu.memory_space<vmem>>, %arg2: memref<1x8x16x16xf32, #tpu.memory_space<vmem>>, %arg3: memref<16x16xf32, #tpu.memory_space<vmem>>, %arg4: memref<16x1xf32, #tpu.memory_space<vmem>>, %arg5: memref<4x32xf32, #tpu.memory_space<vmem>>, %arg6: memref<1x8x16x32xf32, #tpu.memory_space<vmem>>) attributes {dimension_semantics = [#tpu.dimension_semantics<parallel>], iteration_bounds = array<i64: 2>, scalar_prefetch = 0 : i64, scratch_operands = 0 : i64, tpu.core_type = #tpu.core_type<tc>, window_params = [{transform_indices = @transform_0, window_bounds = array<i64: 1, 8, 16, 4>}, {transform_indices = @transform_1, window_bounds = array<i64: 1, 8, 16, 16>}, {pipeline_mode = #tpu.pipeline_mode<synchronous>, transform_indices = @transform_2, window_bounds = array<i64: 16, 16>}, {pipeline_mode = #tpu.pipeline_mode<synchronous>, transform_indices = @transform_3, window_bounds = array<i64: 16, 1>}, {pipeline_mode = #tpu.pipeline_mode<synchronous>, transform_indices = @transform_4, window_bounds = array<i64: 4, 32>}, {transform_indices = @transform_5, window_bounds = array<i64: 1, 8, 16, 32>}]} {
    %c0 = arith.constant 0 : index
    %c0_0 = arith.constant 0 : index
    %c0_1 = arith.constant 0 : index
    %c0_2 = arith.constant 0 : index
    %0 = vector.load %arg1[%c0, %c0_0, %c0_1, %c0_2] : memref<1x8x16x4xf32, #tpu.memory_space<vmem>>, vector<1x8x16x4xf32>
    %1 = vector.shape_cast %0 : vector<1x8x16x4xf32> to vector<8x16x4xf32>
    %c0_3 = arith.constant 0 : index
    %c0_4 = arith.constant 0 : index
    %c0_5 = arith.constant 0 : index
    %c0_6 = arith.constant 0 : index
    %2 = vector.load %arg2[%c0_3, %c0_4, %c0_5, %c0_6] : memref<1x8x16x16xf32, #tpu.memory_space<vmem>>, vector<1x8x16x16xf32>
    %3 = vector.shape_cast %2 : vector<1x8x16x16xf32> to vector<8x16x16xf32>
    %c0_7 = arith.constant 0 : index
    %c0_8 = arith.constant 0 : index
    %4 = vector.load %arg3[%c0_7, %c0_8] : memref<16x16xf32, #tpu.memory_space<vmem>>, vector<16x16xf32>
    %c0_9 = arith.constant 0 : index
    %c0_10 = arith.constant 0 : index
    %5 = vector.load %arg4[%c0_9, %c0_10] : memref<16x1xf32, #tpu.memory_space<vmem>>, vector<16x1xf32>
    %c0_11 = arith.constant 0 : index
    %c0_12 = arith.constant 0 : index
    %6 = vector.load %arg5[%c0_11, %c0_12] : memref<4x32xf32, #tpu.memory_space<vmem>>, vector<4x32xf32>
    "tpu.trace_start"() <{level = 10 : i32, message = "tnf,tmf->tnm"}> : () -> ()
    %cst = arith.constant dense<0.000000e+00> : vector<8x16x16xf32>
    %7 = tpu.matmul %1, %1, %cst {dimension_numbers = #tpu.dot_dimension_numbers<[2], [2], [1], [1], [0, 0, 0, 1, 1, 1], [0], [0]>} : vector<8x16x4xf32>, vector<8x16x4xf32>, vector<8x16x16xf32> -> vector<8x16x16xf32>
    "tpu.trace_stop"() : () -> ()
    %cst_13 = arith.constant 5.000000e-01 : f32
    %8 = vector.broadcast %cst_13 : f32 to vector<8x16x16xf32>
    %9 = arith.mulf %7, %8 : vector<8x16x16xf32>
    %cst_14 = arith.constant dense<0xFF800000> : vector<8x16xf32>
    %10 = vector.multi_reduction <maximumf>, %9, %cst_14 [2] : vector<8x16x16xf32> to vector<8x16xf32>
    %11 = vector.shape_cast %10 : vector<8x16xf32> to vector<8x16x1xf32>
    %12 = vector.broadcast %11 : vector<8x16x1xf32> to vector<8x16x16xf32>
    %13 = arith.subf %9, %12 : vector<8x16x16xf32>
    %14 = math.exp %13 : vector<8x16x16xf32>
    %cst_15 = arith.constant dense<0.000000e+00> : vector<8x16xf32>
    %15 = vector.multi_reduction <add>, %14, %cst_15 [2] : vector<8x16x16xf32> to vector<8x16xf32>
    %16 = vector.shape_cast %15 : vector<8x16xf32> to vector<8x16x1xf32>
    %17 = vector.broadcast %16 : vector<8x16x1xf32> to vector<8x16x16xf32>
    %18 = arith.divf %14, %17 : vector<8x16x16xf32>
    %cst_16 = arith.constant 5.000000e-01 : f32
    %19 = vector.broadcast %cst_16 : f32 to vector<8x16x16xf32>
    %20 = arith.mulf %18, %19 : vector<8x16x16xf32>
    %21 = arith.mulf %3, %20 : vector<8x16x16xf32>
    %22 = tpu.transpose %21, [0, 2, 1] : vector<8x16x16xf32> -> vector<8x16x16xf32>
    %23 = vector.extract_strided_slice %22 {offsets = [1, 0, 0], sizes = [7, 16, 16], strides = [1, 1, 1]} : vector<8x16x16xf32> to vector<7x16x16xf32>
    %24 = vector.extract_strided_slice %1 {offsets = [0, 0, 0], sizes = [7, 16, 4], strides = [1, 1, 1]} : vector<8x16x4xf32> to vector<7x16x4xf32>
    "tpu.trace_start"() <{level = 10 : i32, message = "tnm,tmf->tnf"}> : () -> ()
    %cst_17 = arith.constant dense<0.000000e+00> : vector<7x16x4xf32>
    %25 = tpu.matmul %23, %24, %cst_17 {dimension_numbers = #tpu.dot_dimension_numbers<[2], [1], [1], [2], [0, 0, 0, 1, 1, 2], [0], [0]>} : vector<7x16x16xf32>, vector<7x16x4xf32>, vector<7x16x4xf32> -> vector<7x16x4xf32>
    "tpu.trace_stop"() : () -> ()
    %26 = vector.extract_strided_slice %1 {offsets = [1, 0, 0], sizes = [7, 16, 4], strides = [1, 1, 1]} : vector<8x16x4xf32> to vector<7x16x4xf32>
    %27 = vector.shape_cast %5 : vector<16x1xf32> to vector<1x16x1xf32>
    %28 = vector.broadcast %27 : vector<1x16x1xf32> to vector<7x16x4xf32>
    %29 = arith.mulf %28, %26 : vector<7x16x4xf32>
    %cst_18 = arith.constant 1.000000e+00 : f32
    %30 = vector.broadcast %cst_18 : f32 to vector<16x1xf32>
    %31 = arith.subf %30, %5 : vector<16x1xf32>
    %32 = vector.shape_cast %31 : vector<16x1xf32> to vector<1x16x1xf32>
    %33 = vector.broadcast %32 : vector<1x16x1xf32> to vector<7x16x4xf32>
    %34 = arith.mulf %33, %25 : vector<7x16x4xf32>
    %35 = arith.addf %29, %34 : vector<7x16x4xf32>
    %36 = vector.extract_strided_slice %1 {offsets = [0, 0, 0], sizes = [1, 16, 4], strides = [1, 1, 1]} : vector<8x16x4xf32> to vector<1x16x4xf32>
    %37 = tpu.concatenate %36, %35 in 0 : vector<1x16x4xf32>, vector<7x16x4xf32> -> vector<8x16x4xf32>
    "tpu.trace_start"() <{level = 10 : i32, message = "tnf,tmf->tnm"}> : () -> ()
    %cst_19 = arith.constant dense<0.000000e+00> : vector<8x16x16xf32>
    %38 = tpu.matmul %37, %37, %cst_19 {dimension_numbers = #tpu.dot_dimension_numbers<[2], [2], [1], [1], [0, 0, 0, 1, 1, 1], [0], [0]>} : vector<8x16x4xf32>, vector<8x16x4xf32>, vector<8x16x16xf32> -> vector<8x16x16xf32>
    "tpu.trace_stop"() : () -> ()
    %cst_20 = arith.constant 5.000000e-01 : f32
    %39 = vector.broadcast %cst_20 : f32 to vector<8x16x16xf32>
    %40 = arith.mulf %38, %39 : vector<8x16x16xf32>
    %cst_21 = arith.constant dense<0xFF800000> : vector<8x16xf32>
    %41 = vector.multi_reduction <maximumf>, %40, %cst_21 [2] : vector<8x16x16xf32> to vector<8x16xf32>
    %42 = vector.shape_cast %41 : vector<8x16xf32> to vector<8x16x1xf32>
    %43 = vector.broadcast %42 : vector<8x16x1xf32> to vector<8x16x16xf32>
    %44 = arith.subf %40, %43 : vector<8x16x16xf32>
    %45 = math.exp %44 : vector<8x16x16xf32>
    %cst_22 = arith.constant dense<0.000000e+00> : vector<8x16xf32>
    %46 = vector.multi_reduction <add>, %45, %cst_22 [2] : vector<8x16x16xf32> to vector<8x16xf32>
    %47 = vector.shape_cast %46 : vector<8x16xf32> to vector<8x16x1xf32>
    %48 = vector.broadcast %47 : vector<8x16x1xf32> to vector<8x16x16xf32>
    %49 = arith.divf %45, %48 : vector<8x16x16xf32>
    %cst_23 = arith.constant 5.000000e-01 : f32
    %50 = vector.broadcast %cst_23 : f32 to vector<8x16x16xf32>
    %51 = arith.mulf %49, %50 : vector<8x16x16xf32>
    %52 = arith.mulf %3, %51 : vector<8x16x16xf32>
    %53 = tpu.transpose %52, [0, 2, 1] : vector<8x16x16xf32> -> vector<8x16x16xf32>
    %54 = vector.extract_strided_slice %53 {offsets = [1, 0, 0], sizes = [7, 16, 16], strides = [1, 1, 1]} : vector<8x16x16xf32> to vector<7x16x16xf32>
    %55 = vector.extract_strided_slice %37 {offsets = [0, 0, 0], sizes = [7, 16, 4], strides = [1, 1, 1]} : vector<8x16x4xf32> to vector<7x16x4xf32>
    "tpu.trace_start"() <{level = 10 : i32, message = "tnm,tmf->tnf"}> : () -> ()
    %cst_24 = arith.constant dense<0.000000e+00> : vector<7x16x4xf32>
    %56 = tpu.matmul %54, %55, %cst_24 {dimension_numbers = #tpu.dot_dimension_numbers<[2], [1], [1], [2], [0, 0, 0, 1, 1, 2], [0], [0]>} : vector<7x16x16xf32>, vector<7x16x4xf32>, vector<7x16x4xf32> -> vector<7x16x4xf32>
    "tpu.trace_stop"() : () -> ()
    %57 = vector.extract_strided_slice %37 {offsets = [1, 0, 0], sizes = [7, 16, 4], strides = [1, 1, 1]} : vector<8x16x4xf32> to vector<7x16x4xf32>
    %58 = vector.shape_cast %5 : vector<16x1xf32> to vector<1x16x1xf32>
    %59 = vector.broadcast %58 : vector<1x16x1xf32> to vector<7x16x4xf32>
    %60 = arith.mulf %59, %57 : vector<7x16x4xf32>
    %cst_25 = arith.constant 1.000000e+00 : f32
    %61 = vector.broadcast %cst_25 : f32 to vector<16x1xf32>
    %62 = arith.subf %61, %5 : vector<16x1xf32>
    %63 = vector.shape_cast %62 : vector<16x1xf32> to vector<1x16x1xf32>
    %64 = vector.broadcast %63 : vector<1x16x1xf32> to vector<7x16x4xf32>
    %65 = arith.mulf %64, %56 : vector<7x16x4xf32>
    %66 = arith.addf %60, %65 : vector<7x16x4xf32>
    %67 = vector.extract_strided_slice %37 {offsets = [0, 0, 0], sizes = [1, 16, 4], strides = [1, 1, 1]} : vector<8x16x4xf32> to vector<1x16x4xf32>
    %68 = tpu.concatenate %67, %66 in 0 : vector<1x16x4xf32>, vector<7x16x4xf32> -> vector<8x16x4xf32>
    "tpu.trace_start"() <{level = 10 : i32, message = "tnf,tmf->tnm"}> : () -> ()
    %cst_26 = arith.constant dense<0.000000e+00> : vector<8x16x16xf32>
    %69 = tpu.matmul %68, %68, %cst_26 {dimension_numbers = #tpu.dot_dimension_numbers<[2], [2], [1], [1], [0, 0, 0, 1, 1, 1], [0], [0]>} : vector<8x16x4xf32>, vector<8x16x4xf32>, vector<8x16x16xf32> -> vector<8x16x16xf32>
    "tpu.trace_stop"() : () -> ()
    %cst_27 = arith.constant 5.000000e-01 : f32
    %70 = vector.broadcast %cst_27 : f32 to vector<8x16x16xf32>
    %71 = arith.mulf %69, %70 : vector<8x16x16xf32>
    %cst_28 = arith.constant dense<0xFF800000> : vector<8x16xf32>
    %72 = vector.multi_reduction <maximumf>, %71, %cst_28 [2] : vector<8x16x16xf32> to vector<8x16xf32>
    %73 = vector.shape_cast %72 : vector<8x16xf32> to vector<8x16x1xf32>
    %74 = vector.broadcast %73 : vector<8x16x1xf32> to vector<8x16x16xf32>
    %75 = arith.subf %71, %74 : vector<8x16x16xf32>
    %76 = math.exp %75 : vector<8x16x16xf32>
    %cst_29 = arith.constant dense<0.000000e+00> : vector<8x16xf32>
    %77 = vector.multi_reduction <add>, %76, %cst_29 [2] : vector<8x16x16xf32> to vector<8x16xf32>
    %78 = vector.shape_cast %77 : vector<8x16xf32> to vector<8x16x1xf32>
    %79 = vector.broadcast %78 : vector<8x16x1xf32> to vector<8x16x16xf32>
    %80 = arith.divf %76, %79 : vector<8x16x16xf32>
    %cst_30 = arith.constant 5.000000e-01 : f32
    %81 = vector.broadcast %cst_30 : f32 to vector<8x16x16xf32>
    %82 = arith.mulf %80, %81 : vector<8x16x16xf32>
    %83 = arith.mulf %3, %82 : vector<8x16x16xf32>
    %84 = tpu.transpose %83, [0, 2, 1] : vector<8x16x16xf32> -> vector<8x16x16xf32>
    %85 = vector.extract_strided_slice %84 {offsets = [1, 0, 0], sizes = [7, 16, 16], strides = [1, 1, 1]} : vector<8x16x16xf32> to vector<7x16x16xf32>
    %86 = vector.extract_strided_slice %68 {offsets = [0, 0, 0], sizes = [7, 16, 4], strides = [1, 1, 1]} : vector<8x16x4xf32> to vector<7x16x4xf32>
    "tpu.trace_start"() <{level = 10 : i32, message = "tnm,tmf->tnf"}> : () -> ()
    %cst_31 = arith.constant dense<0.000000e+00> : vector<7x16x4xf32>
    %87 = tpu.matmul %85, %86, %cst_31 {dimension_numbers = #tpu.dot_dimension_numbers<[2], [1], [1], [2], [0, 0, 0, 1, 1, 2], [0], [0]>} : vector<7x16x16xf32>, vector<7x16x4xf32>, vector<7x16x4xf32> -> vector<7x16x4xf32>
    "tpu.trace_stop"() : () -> ()
    %88 = vector.extract_strided_slice %68 {offsets = [1, 0, 0], sizes = [7, 16, 4], strides = [1, 1, 1]} : vector<8x16x4xf32> to vector<7x16x4xf32>
    %89 = vector.shape_cast %5 : vector<16x1xf32> to vector<1x16x1xf32>
    %90 = vector.broadcast %89 : vector<1x16x1xf32> to vector<7x16x4xf32>
    %91 = arith.mulf %90, %88 : vector<7x16x4xf32>
    %cst_32 = arith.constant 1.000000e+00 : f32
    %92 = vector.broadcast %cst_32 : f32 to vector<16x1xf32>
    %93 = arith.subf %92, %5 : vector<16x1xf32>
    %94 = vector.shape_cast %93 : vector<16x1xf32> to vector<1x16x1xf32>
    %95 = vector.broadcast %94 : vector<1x16x1xf32> to vector<7x16x4xf32>
    %96 = arith.mulf %95, %87 : vector<7x16x4xf32>
    %97 = arith.addf %91, %96 : vector<7x16x4xf32>
    %98 = vector.extract_strided_slice %68 {offsets = [0, 0, 0], sizes = [1, 16, 4], strides = [1, 1, 1]} : vector<8x16x4xf32> to vector<1x16x4xf32>
    %99 = tpu.concatenate %98, %97 in 0 : vector<1x16x4xf32>, vector<7x16x4xf32> -> vector<8x16x4xf32>
    "tpu.trace_start"() <{level = 10 : i32, message = "tnf,tmf->tnm"}> : () -> ()
    %cst_33 = arith.constant dense<0.000000e+00> : vector<8x16x16xf32>
    %100 = tpu.matmul %99, %99, %cst_33 {dimension_numbers = #tpu.dot_dimension_numbers<[2], [2], [1], [1], [0, 0, 0, 1, 1, 1], [0], [0]>} : vector<8x16x4xf32>, vector<8x16x4xf32>, vector<8x16x16xf32> -> vector<8x16x16xf32>
    "tpu.trace_stop"() : () -> ()
    %cst_34 = arith.constant 5.000000e-01 : f32
    %101 = vector.broadcast %cst_34 : f32 to vector<8x16x16xf32>
    %102 = arith.mulf %100, %101 : vector<8x16x16xf32>
    %cst_35 = arith.constant dense<0xFF800000> : vector<8x16xf32>
    %103 = vector.multi_reduction <maximumf>, %102, %cst_35 [2] : vector<8x16x16xf32> to vector<8x16xf32>
    %104 = vector.shape_cast %103 : vector<8x16xf32> to vector<8x16x1xf32>
    %105 = vector.broadcast %104 : vector<8x16x1xf32> to vector<8x16x16xf32>
    %106 = arith.subf %102, %105 : vector<8x16x16xf32>
    %107 = math.exp %106 : vector<8x16x16xf32>
    %cst_36 = arith.constant dense<0.000000e+00> : vector<8x16xf32>
    %108 = vector.multi_reduction <add>, %107, %cst_36 [2] : vector<8x16x16xf32> to vector<8x16xf32>
    %109 = vector.shape_cast %108 : vector<8x16xf32> to vector<8x16x1xf32>
    %110 = vector.broadcast %109 : vector<8x16x1xf32> to vector<8x16x16xf32>
    %111 = arith.divf %107, %110 : vector<8x16x16xf32>
    %cst_37 = arith.constant 5.000000e-01 : f32
    %112 = vector.broadcast %cst_37 : f32 to vector<8x16x16xf32>
    %113 = arith.mulf %111, %112 : vector<8x16x16xf32>
    %114 = arith.mulf %3, %113 : vector<8x16x16xf32>
    %115 = tpu.transpose %114, [0, 2, 1] : vector<8x16x16xf32> -> vector<8x16x16xf32>
    %116 = vector.extract_strided_slice %115 {offsets = [1, 0, 0], sizes = [7, 16, 16], strides = [1, 1, 1]} : vector<8x16x16xf32> to vector<7x16x16xf32>
    %117 = vector.extract_strided_slice %99 {offsets = [0, 0, 0], sizes = [7, 16, 4], strides = [1, 1, 1]} : vector<8x16x4xf32> to vector<7x16x4xf32>
    "tpu.trace_start"() <{level = 10 : i32, message = "tnm,tmf->tnf"}> : () -> ()
    %cst_38 = arith.constant dense<0.000000e+00> : vector<7x16x4xf32>
    %118 = tpu.matmul %116, %117, %cst_38 {dimension_numbers = #tpu.dot_dimension_numbers<[2], [1], [1], [2], [0, 0, 0, 1, 1, 2], [0], [0]>} : vector<7x16x16xf32>, vector<7x16x4xf32>, vector<7x16x4xf32> -> vector<7x16x4xf32>
    "tpu.trace_stop"() : () -> ()
    %119 = vector.extract_strided_slice %99 {offsets = [1, 0, 0], sizes = [7, 16, 4], strides = [1, 1, 1]} : vector<8x16x4xf32> to vector<7x16x4xf32>
    %120 = vector.shape_cast %5 : vector<16x1xf32> to vector<1x16x1xf32>
    %121 = vector.broadcast %120 : vector<1x16x1xf32> to vector<7x16x4xf32>
    %122 = arith.mulf %121, %119 : vector<7x16x4xf32>
    %cst_39 = arith.constant 1.000000e+00 : f32
    %123 = vector.broadcast %cst_39 : f32 to vector<16x1xf32>
    %124 = arith.subf %123, %5 : vector<16x1xf32>
    %125 = vector.shape_cast %124 : vector<16x1xf32> to vector<1x16x1xf32>
    %126 = vector.broadcast %125 : vector<1x16x1xf32> to vector<7x16x4xf32>
    %127 = arith.mulf %126, %118 : vector<7x16x4xf32>
    %128 = arith.addf %122, %127 : vector<7x16x4xf32>
    %129 = vector.extract_strided_slice %99 {offsets = [0, 0, 0], sizes = [1, 16, 4], strides = [1, 1, 1]} : vector<8x16x4xf32> to vector<1x16x4xf32>
    %130 = tpu.concatenate %129, %128 in 0 : vector<1x16x4xf32>, vector<7x16x4xf32> -> vector<8x16x4xf32>
    "tpu.trace_start"() <{level = 10 : i32, message = "tnf,tmf->tnm"}> : () -> ()
    %cst_40 = arith.constant dense<0.000000e+00> : vector<8x16x16xf32>
    %131 = tpu.matmul %130, %130, %cst_40 {dimension_numbers = #tpu.dot_dimension_numbers<[2], [2], [1], [1], [0, 0, 0, 1, 1, 1], [0], [0]>} : vector<8x16x4xf32>, vector<8x16x4xf32>, vector<8x16x16xf32> -> vector<8x16x16xf32>
    "tpu.trace_stop"() : () -> ()
    %cst_41 = arith.constant 5.000000e-01 : f32
    %132 = vector.broadcast %cst_41 : f32 to vector<8x16x16xf32>
    %133 = arith.mulf %131, %132 : vector<8x16x16xf32>
    %cst_42 = arith.constant dense<0xFF800000> : vector<8x16xf32>
    %134 = vector.multi_reduction <maximumf>, %133, %cst_42 [2] : vector<8x16x16xf32> to vector<8x16xf32>
    %135 = vector.shape_cast %134 : vector<8x16xf32> to vector<8x16x1xf32>
    %136 = vector.broadcast %135 : vector<8x16x1xf32> to vector<8x16x16xf32>
    %137 = arith.subf %133, %136 : vector<8x16x16xf32>
    %138 = math.exp %137 : vector<8x16x16xf32>
    %cst_43 = arith.constant dense<0.000000e+00> : vector<8x16xf32>
    %139 = vector.multi_reduction <add>, %138, %cst_43 [2] : vector<8x16x16xf32> to vector<8x16xf32>
    %140 = vector.shape_cast %139 : vector<8x16xf32> to vector<8x16x1xf32>
    %141 = vector.broadcast %140 : vector<8x16x1xf32> to vector<8x16x16xf32>
    %142 = arith.divf %138, %141 : vector<8x16x16xf32>
    %cst_44 = arith.constant 5.000000e-01 : f32
    %143 = vector.broadcast %cst_44 : f32 to vector<8x16x16xf32>
    %144 = arith.mulf %142, %143 : vector<8x16x16xf32>
    %145 = arith.mulf %3, %144 : vector<8x16x16xf32>
    %146 = tpu.transpose %145, [0, 2, 1] : vector<8x16x16xf32> -> vector<8x16x16xf32>
    %147 = vector.extract_strided_slice %146 {offsets = [1, 0, 0], sizes = [7, 16, 16], strides = [1, 1, 1]} : vector<8x16x16xf32> to vector<7x16x16xf32>
    %148 = vector.extract_strided_slice %130 {offsets = [0, 0, 0], sizes = [7, 16, 4], strides = [1, 1, 1]} : vector<8x16x4xf32> to vector<7x16x4xf32>
    "tpu.trace_start"() <{level = 10 : i32, message = "tnm,tmf->tnf"}> : () -> ()
    %cst_45 = arith.constant dense<0.000000e+00> : vector<7x16x4xf32>
    %149 = tpu.matmul %147, %148, %cst_45 {dimension_numbers = #tpu.dot_dimension_numbers<[2], [1], [1], [2], [0, 0, 0, 1, 1, 2], [0], [0]>} : vector<7x16x16xf32>, vector<7x16x4xf32>, vector<7x16x4xf32> -> vector<7x16x4xf32>
    "tpu.trace_stop"() : () -> ()
    %150 = vector.extract_strided_slice %130 {offsets = [1, 0, 0], sizes = [7, 16, 4], strides = [1, 1, 1]} : vector<8x16x4xf32> to vector<7x16x4xf32>
    %151 = vector.shape_cast %5 : vector<16x1xf32> to vector<1x16x1xf32>
    %152 = vector.broadcast %151 : vector<1x16x1xf32> to vector<7x16x4xf32>
    %153 = arith.mulf %152, %150 : vector<7x16x4xf32>
    %cst_46 = arith.constant 1.000000e+00 : f32
    %154 = vector.broadcast %cst_46 : f32 to vector<16x1xf32>
    %155 = arith.subf %154, %5 : vector<16x1xf32>
    %156 = vector.shape_cast %155 : vector<16x1xf32> to vector<1x16x1xf32>
    %157 = vector.broadcast %156 : vector<1x16x1xf32> to vector<7x16x4xf32>
    %158 = arith.mulf %157, %149 : vector<7x16x4xf32>
    %159 = arith.addf %153, %158 : vector<7x16x4xf32>
    %160 = vector.extract_strided_slice %130 {offsets = [0, 0, 0], sizes = [1, 16, 4], strides = [1, 1, 1]} : vector<8x16x4xf32> to vector<1x16x4xf32>
    %161 = tpu.concatenate %160, %159 in 0 : vector<1x16x4xf32>, vector<7x16x4xf32> -> vector<8x16x4xf32>
    "tpu.trace_start"() <{level = 10 : i32, message = "tnf,tmf->tnm"}> : () -> ()
    %cst_47 = arith.constant dense<0.000000e+00> : vector<8x16x16xf32>
    %162 = tpu.matmul %161, %161, %cst_47 {dimension_numbers = #tpu.dot_dimension_numbers<[2], [2], [1], [1], [0, 0, 0, 1, 1, 1], [0], [0]>} : vector<8x16x4xf32>, vector<8x16x4xf32>, vector<8x16x16xf32> -> vector<8x16x16xf32>
    "tpu.trace_stop"() : () -> ()
    %cst_48 = arith.constant 5.000000e-01 : f32
    %163 = vector.broadcast %cst_48 : f32 to vector<8x16x16xf32>
    %164 = arith.mulf %162, %163 : vector<8x16x16xf32>
    %cst_49 = arith.constant dense<0xFF800000> : vector<8x16xf32>
    %165 = vector.multi_reduction <maximumf>, %164, %cst_49 [2] : vector<8x16x16xf32> to vector<8x16xf32>
    %166 = vector.shape_cast %165 : vector<8x16xf32> to vector<8x16x1xf32>
    %167 = vector.broadcast %166 : vector<8x16x1xf32> to vector<8x16x16xf32>
    %168 = arith.subf %164, %167 : vector<8x16x16xf32>
    %169 = math.exp %168 : vector<8x16x16xf32>
    %cst_50 = arith.constant dense<0.000000e+00> : vector<8x16xf32>
    %170 = vector.multi_reduction <add>, %169, %cst_50 [2] : vector<8x16x16xf32> to vector<8x16xf32>
    %171 = vector.shape_cast %170 : vector<8x16xf32> to vector<8x16x1xf32>
    %172 = vector.broadcast %171 : vector<8x16x1xf32> to vector<8x16x16xf32>
    %173 = arith.divf %169, %172 : vector<8x16x16xf32>
    %cst_51 = arith.constant 5.000000e-01 : f32
    %174 = vector.broadcast %cst_51 : f32 to vector<8x16x16xf32>
    %175 = arith.mulf %173, %174 : vector<8x16x16xf32>
    %176 = arith.mulf %3, %175 : vector<8x16x16xf32>
    %177 = tpu.transpose %176, [0, 2, 1] : vector<8x16x16xf32> -> vector<8x16x16xf32>
    %178 = vector.extract_strided_slice %177 {offsets = [1, 0, 0], sizes = [7, 16, 16], strides = [1, 1, 1]} : vector<8x16x16xf32> to vector<7x16x16xf32>
    %179 = vector.extract_strided_slice %161 {offsets = [0, 0, 0], sizes = [7, 16, 4], strides = [1, 1, 1]} : vector<8x16x4xf32> to vector<7x16x4xf32>
    "tpu.trace_start"() <{level = 10 : i32, message = "tnm,tmf->tnf"}> : () -> ()
    %cst_52 = arith.constant dense<0.000000e+00> : vector<7x16x4xf32>
    %180 = tpu.matmul %178, %179, %cst_52 {dimension_numbers = #tpu.dot_dimension_numbers<[2], [1], [1], [2], [0, 0, 0, 1, 1, 2], [0], [0]>} : vector<7x16x16xf32>, vector<7x16x4xf32>, vector<7x16x4xf32> -> vector<7x16x4xf32>
    "tpu.trace_stop"() : () -> ()
    %181 = vector.extract_strided_slice %161 {offsets = [1, 0, 0], sizes = [7, 16, 4], strides = [1, 1, 1]} : vector<8x16x4xf32> to vector<7x16x4xf32>
    %182 = vector.shape_cast %5 : vector<16x1xf32> to vector<1x16x1xf32>
    %183 = vector.broadcast %182 : vector<1x16x1xf32> to vector<7x16x4xf32>
    %184 = arith.mulf %183, %181 : vector<7x16x4xf32>
    %cst_53 = arith.constant 1.000000e+00 : f32
    %185 = vector.broadcast %cst_53 : f32 to vector<16x1xf32>
    %186 = arith.subf %185, %5 : vector<16x1xf32>
    %187 = vector.shape_cast %186 : vector<16x1xf32> to vector<1x16x1xf32>
    %188 = vector.broadcast %187 : vector<1x16x1xf32> to vector<7x16x4xf32>
    %189 = arith.mulf %188, %180 : vector<7x16x4xf32>
    %190 = arith.addf %184, %189 : vector<7x16x4xf32>
    %191 = vector.extract_strided_slice %161 {offsets = [0, 0, 0], sizes = [1, 16, 4], strides = [1, 1, 1]} : vector<8x16x4xf32> to vector<1x16x4xf32>
    %192 = tpu.concatenate %191, %190 in 0 : vector<1x16x4xf32>, vector<7x16x4xf32> -> vector<8x16x4xf32>
    "tpu.trace_start"() <{level = 10 : i32, message = "tnf,tmf->tnm"}> : () -> ()
    %cst_54 = arith.constant dense<0.000000e+00> : vector<8x16x16xf32>
    %193 = tpu.matmul %192, %192, %cst_54 {dimension_numbers = #tpu.dot_dimension_numbers<[2], [2], [1], [1], [0, 0, 0, 1, 1, 1], [0], [0]>} : vector<8x16x4xf32>, vector<8x16x4xf32>, vector<8x16x16xf32> -> vector<8x16x16xf32>
    "tpu.trace_stop"() : () -> ()
    %cst_55 = arith.constant 5.000000e-01 : f32
    %194 = vector.broadcast %cst_55 : f32 to vector<8x16x16xf32>
    %195 = arith.mulf %193, %194 : vector<8x16x16xf32>
    %cst_56 = arith.constant dense<0xFF800000> : vector<8x16xf32>
    %196 = vector.multi_reduction <maximumf>, %195, %cst_56 [2] : vector<8x16x16xf32> to vector<8x16xf32>
    %197 = vector.shape_cast %196 : vector<8x16xf32> to vector<8x16x1xf32>
    %198 = vector.broadcast %197 : vector<8x16x1xf32> to vector<8x16x16xf32>
    %199 = arith.subf %195, %198 : vector<8x16x16xf32>
    %200 = math.exp %199 : vector<8x16x16xf32>
    %cst_57 = arith.constant dense<0.000000e+00> : vector<8x16xf32>
    %201 = vector.multi_reduction <add>, %200, %cst_57 [2] : vector<8x16x16xf32> to vector<8x16xf32>
    %202 = vector.shape_cast %201 : vector<8x16xf32> to vector<8x16x1xf32>
    %203 = vector.broadcast %202 : vector<8x16x1xf32> to vector<8x16x16xf32>
    %204 = arith.divf %200, %203 : vector<8x16x16xf32>
    %cst_58 = arith.constant 5.000000e-01 : f32
    %205 = vector.broadcast %cst_58 : f32 to vector<8x16x16xf32>
    %206 = arith.mulf %204, %205 : vector<8x16x16xf32>
    %207 = arith.mulf %3, %206 : vector<8x16x16xf32>
    %208 = tpu.transpose %207, [0, 2, 1] : vector<8x16x16xf32> -> vector<8x16x16xf32>
    %209 = vector.extract_strided_slice %208 {offsets = [1, 0, 0], sizes = [7, 16, 16], strides = [1, 1, 1]} : vector<8x16x16xf32> to vector<7x16x16xf32>
    %210 = vector.extract_strided_slice %192 {offsets = [0, 0, 0], sizes = [7, 16, 4], strides = [1, 1, 1]} : vector<8x16x4xf32> to vector<7x16x4xf32>
    "tpu.trace_start"() <{level = 10 : i32, message = "tnm,tmf->tnf"}> : () -> ()
    %cst_59 = arith.constant dense<0.000000e+00> : vector<7x16x4xf32>
    %211 = tpu.matmul %209, %210, %cst_59 {dimension_numbers = #tpu.dot_dimension_numbers<[2], [1], [1], [2], [0, 0, 0, 1, 1, 2], [0], [0]>} : vector<7x16x16xf32>, vector<7x16x4xf32>, vector<7x16x4xf32> -> vector<7x16x4xf32>
    "tpu.trace_stop"() : () -> ()
    %212 = vector.extract_strided_slice %192 {offsets = [1, 0, 0], sizes = [7, 16, 4], strides = [1, 1, 1]} : vector<8x16x4xf32> to vector<7x16x4xf32>
    %213 = vector.shape_cast %5 : vector<16x1xf32> to vector<1x16x1xf32>
    %214 = vector.broadcast %213 : vector<1x16x1xf32> to vector<7x16x4xf32>
    %215 = arith.mulf %214, %212 : vector<7x16x4xf32>
    %cst_60 = arith.constant 1.000000e+00 : f32
    %216 = vector.broadcast %cst_60 : f32 to vector<16x1xf32>
    %217 = arith.subf %216, %5 : vector<16x1xf32>
    %218 = vector.shape_cast %217 : vector<16x1xf32> to vector<1x16x1xf32>
    %219 = vector.broadcast %218 : vector<1x16x1xf32> to vector<7x16x4xf32>
    %220 = arith.mulf %219, %211 : vector<7x16x4xf32>
    %221 = arith.addf %215, %220 : vector<7x16x4xf32>
    %222 = vector.extract_strided_slice %192 {offsets = [0, 0, 0], sizes = [1, 16, 4], strides = [1, 1, 1]} : vector<8x16x4xf32> to vector<1x16x4xf32>
    %223 = tpu.concatenate %222, %221 in 0 : vector<1x16x4xf32>, vector<7x16x4xf32> -> vector<8x16x4xf32>
    %224 = vector.shape_cast %4 : vector<16x16xf32> to vector<1x16x16xf32>
    %225 = vector.broadcast %224 : vector<1x16x16xf32> to vector<8x16x16xf32>
    %226 = arith.mulf %3, %225 : vector<8x16x16xf32>
    "tpu.trace_start"() <{level = 10 : i32, message = "tnf,tmf->tnm"}> : () -> ()
    %cst_61 = arith.constant dense<0.000000e+00> : vector<8x16x16xf32>
    %227 = tpu.matmul %223, %223, %cst_61 {dimension_numbers = #tpu.dot_dimension_numbers<[2], [2], [1], [1], [0, 0, 0, 1, 1, 1], [0], [0]>} : vector<8x16x4xf32>, vector<8x16x4xf32>, vector<8x16x16xf32> -> vector<8x16x16xf32>
    "tpu.trace_stop"() : () -> ()
    %cst_62 = arith.constant 5.000000e-01 : f32
    %228 = vector.broadcast %cst_62 : f32 to vector<8x16x16xf32>
    %229 = arith.mulf %227, %228 : vector<8x16x16xf32>
    %cst_63 = arith.constant dense<0xFF800000> : vector<8x16xf32>
    %230 = vector.multi_reduction <maximumf>, %229, %cst_63 [2] : vector<8x16x16xf32> to vector<8x16xf32>
    %231 = vector.shape_cast %230 : vector<8x16xf32> to vector<8x16x1xf32>
    %232 = vector.broadcast %231 : vector<8x16x1xf32> to vector<8x16x16xf32>
    %233 = arith.subf %229, %232 : vector<8x16x16xf32>
    %234 = math.exp %233 : vector<8x16x16xf32>
    %cst_64 = arith.constant dense<0.000000e+00> : vector<8x16xf32>
    %235 = vector.multi_reduction <add>, %234, %cst_64 [2] : vector<8x16x16xf32> to vector<8x16xf32>
    %236 = vector.shape_cast %235 : vector<8x16xf32> to vector<8x16x1xf32>
    %237 = vector.broadcast %236 : vector<8x16x1xf32> to vector<8x16x16xf32>
    %238 = arith.divf %234, %237 : vector<8x16x16xf32>
    %cst_65 = arith.constant 5.000000e-01 : f32
    %239 = vector.broadcast %cst_65 : f32 to vector<8x16x16xf32>
    %240 = arith.mulf %238, %239 : vector<8x16x16xf32>
    %241 = arith.mulf %226, %240 : vector<8x16x16xf32>
    %242 = tpu.transpose %241, [0, 2, 1] : vector<8x16x16xf32> -> vector<8x16x16xf32>
    "tpu.trace_start"() <{level = 10 : i32, message = "tnm,tmf->tnf"}> : () -> ()
    %cst_66 = arith.constant dense<0.000000e+00> : vector<8x16x4xf32>
    %243 = tpu.matmul %242, %223, %cst_66 {dimension_numbers = #tpu.dot_dimension_numbers<[2], [1], [1], [2], [0, 0, 0, 1, 1, 2], [0], [0]>} : vector<8x16x16xf32>, vector<8x16x4xf32>, vector<8x16x4xf32> -> vector<8x16x4xf32>
    "tpu.trace_stop"() : () -> ()
    %244 = vector.shape_cast %243 : vector<8x16x4xf32> to vector<128x4xf32>
    %cst_67 = arith.constant dense<0.000000e+00> : vector<128x32xf32>
    %245 = tpu.matmul %244, %6, %cst_67 {dimension_numbers = #tpu.dot_dimension_numbers<[1], [0], [0], [1], [0, 0, 1, 1], [], []>} : vector<128x4xf32>, vector<4x32xf32>, vector<128x32xf32> -> vector<128x32xf32>
    %cst_68 = arith.constant 0.000000e+00 : f32
    %246 = vector.broadcast %cst_68 : f32 to vector<128x32xf32>
    %247 = arith.maximumf %245, %246 : vector<128x32xf32>
    %248 = vector.shape_cast %247 : vector<128x32xf32> to vector<8x16x32xf32>
    %c0_69 = arith.constant 0 : index
    %c0_70 = arith.constant 0 : index
    %c0_71 = arith.constant 0 : index
    %c0_72 = arith.constant 0 : index
    %249 = vector.load %arg6[%c0_69, %c0_70, %c0_71, %c0_72] : memref<1x8x16x32xf32, #tpu.memory_space<vmem>>, vector<1x8x16x32xf32>
    %250 = vector.shape_cast %249 : vector<1x8x16x32xf32> to vector<8x16x32xf32>
    %251 = vector.shape_cast %248 : vector<8x16x32xf32> to vector<1x8x16x32xf32>
    tpu.vector_store %arg6[%c0_69, %c0_70, %c0_71, %c0_72], %251 {strides = array<i32>} : memref<1x8x16x32xf32, #tpu.memory_space<vmem>>, vector<1x8x16x32xf32>,
    return
  }
  func.func @transform_0(%arg0: i32) -> (i32, i32, i32, i32) {
    %c0_i32 = arith.constant 0 : i32
    %c0_i32_0 = arith.constant 0 : i32
    %c0_i32_1 = arith.constant 0 : i32
    %c0_i32_2 = arith.constant 0 : i32
    return %arg0, %c0_i32, %c0_i32_0, %c0_i32_1 : i32, i32, i32, i32
  }
  func.func @transform_1(%arg0: i32) -> (i32, i32, i32, i32) {
    %c0_i32 = arith.constant 0 : i32
    %c0_i32_0 = arith.constant 0 : i32
    %c0_i32_1 = arith.constant 0 : i32
    %c0_i32_2 = arith.constant 0 : i32
    return %arg0, %c0_i32, %c0_i32_0, %c0_i32_1 : i32, i32, i32, i32
  }
  func.func @transform_2(%arg0: i32) -> (i32, i32) {
    %c0_i32 = arith.constant 0 : i32
    %c0_i32_0 = arith.constant 0 : i32
    %c0_i32_1 = arith.constant 0 : i32
    return %c0_i32, %c0_i32_0 : i32, i32
  }
  func.func @transform_3(%arg0: i32) -> (i32, i32) {
    %c0_i32 = arith.constant 0 : i32
    %c0_i32_0 = arith.constant 0 : i32
    %c0_i32_1 = arith.constant 0 : i32
    return %c0_i32, %c0_i32_0 : i32, i32
  }
  func.func @transform_4(%arg0: i32) -> (i32, i32) {
    %c0_i32 = arith.constant 0 : i32
    %c0_i32_0 = arith.constant 0 : i32
    %c0_i32_1 = arith.constant 0 : i32
    return %c0_i32, %c0_i32_0 : i32, i32
  }
  func.func @transform_5(%arg0: i32) -> (i32, i32, i32, i32) {
    %c0_i32 = arith.constant 0 : i32
    %c0_i32_0 = arith.constant 0 : i32
    %c0_i32_1 = arith.constant 0 : i32
    %c0_i32_2 = arith.constant 0 : i32
    return %arg0, %c0_i32, %c0_i32_0, %c0_i32_1 : i32, i32, i32, i32
  }
}

</mosaic_0001>

<llo_original>
// kernel: spatial_attention_scaled_gcn.1
$region0: #{spatial_attention_scaled_gcn.1}
  #allocation0 [shape = 'u32[]', space=smem, size = 0x4, offset = 0x4, fixed_abs, tag = 'smem constant byte address 0x4 - core index']
  #allocation1 [shape = 'u32[72,128]{1,0:T(1,128)}', space=vmem, size = 0x9000, scoped, tag = 'internal scratch']
  %s0 = inlined_call_operand.vmem [shape: f32[2,8,16,4], index: 0, kind: input, shape index: {}]
  %s1 = inlined_call_operand.vmem [shape: f32[2,8,16,16], index: 1, kind: input, shape index: {}]
  %s2 = inlined_call_operand.vmem [shape: f32[16,16], index: 2, kind: input, shape index: {}]
  %s3 = inlined_call_operand.vmem [shape: f32[16,1], index: 3, kind: input, shape index: {}]
  %s4 = inlined_call_operand.vmem [shape: f32[4,32], index: 4, kind: input, shape index: {}]
  %s5 = inlined_call_operand.vmem [shape: f32[2,8,16,32], index: 5, kind: output, shape index: {}]
  %s6 = sld [smem:[#allocation0]]
  $region53: #{spatial_attention_scaled_gcn.1} parent=0
    _
  %s8 = ssub.s32 1, %s6
  %s9 = scalar_select 0, %s8, %s6
  loop: start=0, step=1, limit=4
  $region2: #{spatial_attention_scaled_gcn.1} parent=0 // loop_pre_header
    _
  $region3: #{spatial_attention_scaled_gcn.1} parent=0 // loop_header
    %s11 = sphi 0, %s15
    %p12 = scmp.ge.s32.totalorder %s11, 4
    %s21 = sphi 0, %s23
    %s24 = sphi 0, %s21
    %s25 = sphi 0, %s24
    %s41 = sphi 0, %s25
    %s47 = sphi 0, %s49
    %s50 = sphi 0, %s47
    %s51 = sphi 0, %s50
    %s67 = sphi 0, %s51
    %s71 = sphi 0, %s71
    %s73 = sphi 0, %s71
    %s74 = sphi 0, %s73
    %s88 = sphi 0, %s74
    %s92 = sphi 0, %s92
    %s94 = sphi 0, %s92
    %s95 = sphi 0, %s94
    %s109 = sphi 0, %s95
    %s113 = sphi 0, %s113
    %s115 = sphi 0, %s113
    %s116 = sphi 0, %s115
    %s130 = sphi 0, %s116
    %s136 = sphi 0, %s138
    %s139 = sphi 0, %s136
    %s140 = sphi 0, %s139
    %s156 = sphi 0, %s140
  $region4: #{spatial_attention_scaled_gcn.1} parent=0 // loop_header_branch
    %14 = sbr.rel (%p12) target = $region8
  $region5: #{spatial_attention_scaled_gcn.1} parent=0 // loop_body
    %s16 = ssub.s32 %s11, 1
    %s17 = ssub.s32 %s11, 2
    %s18 = sadd.s32 %s11, 1
    %s19 = ssub.s32 %s11, %s18
    %p20 = scmp.eq.s32.totalorder %s19, 0
    %s22 = sadd.s32 %s21, 1
    %s23 = scalar_select %p20, %s21, %s22
    %p26 = pneg %p20
    %p27 = scmp.eq.s32.totalorder %s11, 1
    %p28 = por %p26, %p27
    %p29 = scmp.ne.s32.totalorder %s21, %s24
    %p30 = scmp.eq.s32.totalorder %s11, 0
    %p31 = por %p29, %p30
    %p32 = scmp.ne.s32.totalorder %s21, %s24
    %p33 = scmp.eq.s32.totalorder %s16, 1
    %p34 = por %p32, %p33
    %p35 = scmp.ne.s32.totalorder %s24, %s25
    %p36 = scmp.eq.s32.totalorder %s16, 0
    %p37 = por %p35, %p36
    %p38 = scmp.ne.s32.totalorder %s24, %s25
    %p39 = scmp.eq.s32.totalorder %s17, 1
    %p40 = por %p38, %p39
    %p42 = scmp.ne.s32.totalorder %s25, %s41
    %p43 = scmp.eq.s32.totalorder %s17, 0
    %p44 = por %p42, %p43
    %s45 = ssub.s32 %s11, %s18
    %p46 = scmp.eq.s32.totalorder %s45, 0
    %s48 = sadd.s32 %s47, 1
    %s49 = scalar_select %p46, %s47, %s48
    %p52 = pneg %p46
    %p53 = scmp.eq.s32.totalorder %s11, 1
    %p54 = por %p52, %p53
    %p55 = scmp.ne.s32.totalorder %s47, %s50
    %p56 = scmp.eq.s32.totalorder %s11, 0
    %p57 = por %p55, %p56
    %p58 = scmp.ne.s32.totalorder %s47, %s50
    %p59 = scmp.eq.s32.totalorder %s16, 1
    %p60 = por %p58, %p59
    %p61 = scmp.ne.s32.totalorder %s50, %s51
    %p62 = scmp.eq.s32.totalorder %s16, 0
    %p63 = por %p61, %p62
    %p64 = scmp.ne.s32.totalorder %s50, %s51
    %p65 = scmp.eq.s32.totalorder %s17, 1
    %p66 = por %p64, %p65
    %p68 = scmp.ne.s32.totalorder %s51, %s67
    %p69 = scmp.eq.s32.totalorder %s17, 0
    %p70 = por %p68, %p69
    %s72 = sadd.s32 %s71, 1
    %p75 = scmp.eq.s32.totalorder %s11, 1
    %p76 = scmp.ne.s32.totalorder %s71, %s73
    %p77 = scmp.eq.s32.totalorder %s11, 0
    %p78 = por %p76, %p77
    %p79 = scmp.ne.s32.totalorder %s71, %s73
    %p80 = scmp.eq.s32.totalorder %s16, 1
    %p81 = por %p79, %p80
    %p82 = scmp.ne.s32.totalorder %s73, %s74
    %p83 = scmp.eq.s32.totalorder %s16, 0
    %p84 = por %p82, %p83
    %p85 = scmp.ne.s32.totalorder %s73, %s74
    %p86 = scmp.eq.s32.totalorder %s17, 1
    %p87 = por %p85, %p86
    %p89 = scmp.ne.s32.totalorder %s74, %s88
    %p90 = scmp.eq.s32.totalorder %s17, 0
    %p91 = por %p89, %p90
    %s93 = sadd.s32 %s92, 1
    %p96 = scmp.eq.s32.totalorder %s11, 1
    %p97 = scmp.ne.s32.totalorder %s92, %s94
    %p98 = scmp.eq.s32.totalorder %s11, 0
    %p99 = por %p97, %p98
    %p100 = scmp.ne.s32.totalorder %s92, %s94
    %p101 = scmp.eq.s32.totalorder %s16, 1
    %p102 = por %p100, %p101
    %p103 = scmp.ne.s32.totalorder %s94, %s95
    %p104 = scmp.eq.s32.totalorder %s16, 0
    %p105 = por %p103, %p104
    %p106 = scmp.ne.s32.totalorder %s94, %s95
    %p107 = scmp.eq.s32.totalorder %s17, 1
    %p108 = por %p106, %p107
    %p110 = scmp.ne.s32.totalorder %s95, %s109
    %p111 = scmp.eq.s32.totalorder %s17, 0
    %p112 = por %p110, %p111
    %s114 = sadd.s32 %s113, 1
    %p117 = scmp.eq.s32.totalorder %s11, 1
    %p118 = scmp.ne.s32.totalorder %s113, %s115
    %p119 = scmp.eq.s32.totalorder %s11, 0
    %p120 = por %p118, %p119
    %p121 = scmp.ne.s32.totalorder %s113, %s115
    %p122 = scmp.eq.s32.totalorder %s16, 1
    %p123 = por %p121, %p122
    %p124 = scmp.ne.s32.totalorder %s115, %s116
    %p125 = scmp.eq.s32.totalorder %s16, 0
    %p126 = por %p124, %p125
    %p127 = scmp.ne.s32.totalorder %s115, %s116
    %p128 = scmp.eq.s32.totalorder %s17, 1
    %p129 = por %p127, %p128
    %p131 = scmp.ne.s32.totalorder %s116, %s130
    %p132 = scmp.eq.s32.totalorder %s17, 0
    %p133 = por %p131, %p132
    %s134 = ssub.s32 %s11, %s18
    %p135 = scmp.eq.s32.totalorder %s134, 0
    %s137 = sadd.s32 %s136, 1
    %s138 = scalar_select %p135, %s136, %s137
    %p141 = pneg %p135
    %p142 = scmp.eq.s32.totalorder %s11, 1
    %p143 = por %p141, %p142
    %p144 = scmp.ne.s32.totalorder %s136, %s139
    %p145 = scmp.eq.s32.totalorder %s11, 0
    %p146 = por %p144, %p145
    %p147 = scmp.ne.s32.totalorder %s136, %s139
    %p148 = scmp.eq.s32.totalorder %s16, 1
    %p149 = por %p147, %p148
    %p150 = scmp.ne.s32.totalorder %s139, %s140
    %p151 = scmp.eq.s32.totalorder %s16, 0
    %p152 = por %p150, %p151
    %p153 = scmp.ne.s32.totalorder %s139, %s140
    %p154 = scmp.eq.s32.totalorder %s17, 1
    %p155 = por %p153, %p154
    %p157 = scmp.ne.s32.totalorder %s140, %s156
    %p158 = scmp.eq.s32.totalorder %s17, 0
    %p159 = por %p157, %p158
    %p160 = scmp.le.s32.totalorder 1, %s11
    %p161 = scmp.lt.s32.totalorder %s11, 3
    %p162 = pnand %p160, %p161
    %p163 = pneg %p162
    // Predicated region
    $region9: #{spatial_attention_scaled_gcn.1} parent=5 // pred_check
      _
    $region10: #{spatial_attention_scaled_gcn.1} parent=5 // pred_check_branch
      %165 = sbr.rel (%p162) target = $region12
    $region11: #{spatial_attention_scaled_gcn.1} parent=5 // pred_region
      %s166 = ssub.s32 %s11, 1
      // Predicated region
      $region13: #{spatial_attention_scaled_gcn.1} parent=11 // pred_check
        %p167 = pneg %p84
      $region14: #{spatial_attention_scaled_gcn.1} parent=11 // pred_check_branch
        %169 = sbr.rel (%p167) target = $region16
      $region15: #{spatial_attention_scaled_gcn.1} parent=11 // pred_region
        _
      $region16: #{spatial_attention_scaled_gcn.1} parent=11 // pred_fallthru
        _
      // Predicated region
      $region17: #{spatial_attention_scaled_gcn.1} parent=11 // pred_check
        %p170 = pneg %p105
      $region18: #{spatial_attention_scaled_gcn.1} parent=11 // pred_check_branch
        %172 = sbr.rel (%p170) target = $region20
      $region19: #{spatial_attention_scaled_gcn.1} parent=11 // pred_region
        _
      $region20: #{spatial_attention_scaled_gcn.1} parent=11 // pred_fallthru
        _
      // Predicated region
      $region21: #{spatial_attention_scaled_gcn.1} parent=11 // pred_check
        %p173 = pneg %p126
      $region22: #{spatial_attention_scaled_gcn.1} parent=11 // pred_check_branch
        %175 = sbr.rel (%p173) target = $region24
      $region23: #{spatial_attention_scaled_gcn.1} parent=11 // pred_region
        _
      $region24: #{spatial_attention_scaled_gcn.1} parent=11 // pred_fallthru
        _
    $region12: #{spatial_attention_scaled_gcn.1} parent=5 // pred_fallthru
      _
    %p176 = scmp.lt.s32.totalorder %s11, 2
    // Predicated region
    $region25: #{spatial_attention_scaled_gcn.1} parent=5 // pred_check
      %p177 = pneg %p176
    $region26: #{spatial_attention_scaled_gcn.1} parent=5 // pred_check_branch
      %179 = sbr.rel (%p177) target = $region28
    $region27: #{spatial_attention_scaled_gcn.1} parent=5 // pred_region
      // Predicated region
      $region29: #{spatial_attention_scaled_gcn.1} parent=27 // pred_check
        %p180 = pneg %p31
      $region30: #{spatial_attention_scaled_gcn.1} parent=27 // pred_check_branch
        %182 = sbr.rel (%p180) target = $region32
      $region31: #{spatial_attention_scaled_gcn.1} parent=27 // pred_region
        %p183 = scmp.lt.s32.totalorder %s11, 1
        %s184 = scalar_select %p183, %s11, 1
        %s185 = smul.addr %s184, 16
        %s186 = smul.addr %s185, 8
        %s187 = scalar_lea.vmem %s0, %s186
      $region32: #{spatial_attention_scaled_gcn.1} parent=27 // pred_fallthru
        _
      // Predicated region
      $region33: #{spatial_attention_scaled_gcn.1} parent=27 // pred_check
        %p188 = pneg %p57
      $region34: #{spatial_attention_scaled_gcn.1} parent=27 // pred_check_branch
        %190 = sbr.rel (%p188) target = $region36
      $region35: #{spatial_attention_scaled_gcn.1} parent=27 // pred_region
        %p191 = scmp.lt.s32.totalorder %s11, 1
        %s192 = scalar_select %p191, %s11, 1
        %s193 = smul.addr %s192, 16
        %s194 = smul.addr %s193, 8
        %s195 = scalar_lea.vmem %s1, %s194
      $region36: #{spatial_attention_scaled_gcn.1} parent=27 // pred_fallthru
        _
    $region28: #{spatial_attention_scaled_gcn.1} parent=5 // pred_fallthru
      _
    %p196 = scmp.le.s32.totalorder 1, %s11
    %p197 = scmp.lt.s32.totalorder %s11, 3
    %p198 = pnand %p196, %p197
    %p199 = pneg %p198
    // Predicated region
    $region37: #{spatial_attention_scaled_gcn.1} parent=5 // pred_check
      _
    $region38: #{spatial_attention_scaled_gcn.1} parent=5 // pred_check_branch
      %201 = sbr.rel (%p198) target = $region40
    $region39: #{spatial_attention_scaled_gcn.1} parent=5 // pred_region
      %s202 = ssub.s32 %s11, 1
      %p203 = scmp.lt.s32.totalorder %s16, 1
      %s204 = scalar_select %p203, %s16, 1
      %s205 = smul.addr %s204, 16
      %s206 = smul.addr %s205, 8
      %s207 = scalar_lea.vmem %s0, %s206
      %p208 = pneg %p37
      %p209 = pneg %p34
      %p210 = scmp.lt.s32.totalorder %s16, 1
      %s211 = scalar_select %p210, %s16, 1
      %s212 = smul.addr %s211, 16
      %s213 = smul.addr %s212, 8
      %s214 = scalar_lea.vmem %s1, %s213
      %p215 = pneg %p63
      %p216 = pneg %p60
      %p217 = pneg %p84
      %p218 = pneg %p81
      %p219 = pneg %p105
      %p220 = pneg %p102
      %p221 = pneg %p126
      %p222 = pneg %p123
      %p223 = pneg %p152
      %p224 = pneg %p149
      %p225 = scmp.lt.s32.totalorder %s16, 1
      %s226 = scalar_select %p225, %s16, 1
      %s227 = smul.addr %s226, 16
      %s228 = smul.addr %s227, 8
      %s229 = scalar_lea.vmem %s5, %s228
      %p230 = scmp.lt.s32.totalorder %s16, 1
      %s231 = scalar_select %p230, %s16, 1
      %s232 = smul.addr %s231, 16
      %s233 = smul.addr %s232, 8
      %s234 = scalar_lea.vmem %s0, %s233
      %p235 = scmp.lt.s32.totalorder %s16, 1
      %s236 = scalar_select %p235, %s16, 1
      %s237 = smul.addr %s236, 16
      %s238 = smul.addr %s237, 8
      %s239 = scalar_lea.vmem %s1, %s238
      %p240 = scmp.lt.s32.totalorder %s16, 1
      %s241 = scalar_select %p240, %s16, 1
      %s242 = smul.addr %s241, 16
      %s243 = smul.addr %s242, 8
      %s244 = scalar_lea.vmem %s5, %s243
      %v245 = vld [vmem:[%s234] sm:$0xff]
      %v246 = vld [vmem:[%s234 + $0x8] sm:$0xff]
      %v247 = vld [vmem:[%s234 + $0x10] sm:$0xff]
      %v248 = vld [vmem:[%s234 + $0x18] sm:$0xff]
      %v249 = vld [vmem:[%s234 + $0x20] sm:$0xff]
      %v250 = vld [vmem:[%s234 + $0x28] sm:$0xff]
      %v251 = vld [vmem:[%s234 + $0x30] sm:$0xff]
      %v252 = vld [vmem:[%s234 + $0x38] sm:$0xff]
      %v253 = vld [vmem:[%s234 + $0x40] sm:$0xff]
      %v254 = vld [vmem:[%s234 + $0x48] sm:$0xff]
      %v255 = vld [vmem:[%s234 + $0x50] sm:$0xff]
      %v256 = vld [vmem:[%s234 + $0x58] sm:$0xff]
      %v257 = vld [vmem:[%s234 + $0x60] sm:$0xff]
      %v258 = vld [vmem:[%s234 + $0x68] sm:$0xff]
      %v259 = vld [vmem:[%s234 + $0x70] sm:$0xff]
      %v260 = vld [vmem:[%s234 + $0x78] sm:$0xff]
      %v261 = vld [vmem:[%s239] sm:$0xff]
      %v262 = vld [vmem:[%s239 + $0x8] sm:$0xff]
      %v263 = vld [vmem:[%s239 + $0x10] sm:$0xff]
      %v264 = vld [vmem:[%s239 + $0x18] sm:$0xff]
      %v265 = vld [vmem:[%s239 + $0x20] sm:$0xff]
      %v266 = vld [vmem:[%s239 + $0x28] sm:$0xff]
      %v267 = vld [vmem:[%s239 + $0x30] sm:$0xff]
      %v268 = vld [vmem:[%s239 + $0x38] sm:$0xff]
      %v269 = vld [vmem:[%s239 + $0x40] sm:$0xff]
      %v270 = vld [vmem:[%s239 + $0x48] sm:$0xff]
      %v271 = vld [vmem:[%s239 + $0x50] sm:$0xff]
      %v272 = vld [vmem:[%s239 + $0x58] sm:$0xff]
      %v273 = vld [vmem:[%s239 + $0x60] sm:$0xff]
      %v274 = vld [vmem:[%s239 + $0x68] sm:$0xff]
      %v275 = vld [vmem:[%s239 + $0x70] sm:$0xff]
      %v276 = vld [vmem:[%s239 + $0x78] sm:$0xff]
      %v277 = vld [vmem:[%s2] sm:$0xff]
      %v278 = vld [vmem:[%s2 + $0x8] sm:$0xff]
      %v279 = vld [vmem:[%s3] sm:$0xff]
      %v280 = vld [vmem:[%s3 + $0x8] sm:$0xff]
      %v281 = vld [vmem:[%s4] sm:$0xf]
      %vm282 = vcmask 31744
      %v284 = vsel %vm282, %v247, 0
      %v287 = vsel %vm282, %v248, 0
      %289 = vmatpush.xpose.msra.mxu0 0.0
      %290 = vmatpush.xpose.msra.mxu0 0.0
      %291 = vmatpush.xpose.msra.mxu0 0.0
      %292 = vmatpush.xpose.msra.mxu0 0.0
      %293 = vmatpush.xpose.msra.mxu0 0.0
      %294 = vmatpush.xpose.msra.mxu0 0.0
      %295 = vmatpush.xpose.msra.mxu0 0.0
      %296 = vmatpush.xpose.msra.mxu0 0.0
      %297 = vmatpush.xpose.msra.mxu0 0.0
      %298 = vmatpush.xpose.msra.mxu0 0.0
      %299 = vmatpush.xpose.msra.mxu0 0.0
      %300 = vmatpush.xpose.msra.mxu0 0.0
      %301 = vmatpush.xpose.msra.mxu0 0.0
      %302 = vmatpush.xpose.msra.mxu0 0.0
      %303 = vmatpush.xpose.msra.mxu0 %v287
      %304 = vmatpush.xpose.msra.mxu0 %v284
      %305 = vmatmul.f32.gmra.mxu0 %v284
      %v306 = vpop.f32.mrf.mxu0
      %v307 = vadd.f32 0.0, %v306
      %308 = vmatmul.f32.gmra.mxu0 %v287
      %v309 = vpop.f32.mrf.mxu0
      %v310 = vadd.f32 0.0, %v309
      %311 = vdwg.mxu0
      %v313 = vsel %vm282, %v249, 0
      %v316 = vsel %vm282, %v250, 0
      %318 = vmatpush.xpose.msra.mxu0 0.0
      %319 = vmatpush.xpose.msra.mxu0 0.0
      %320 = vmatpush.xpose.msra.mxu0 0.0
      %321 = vmatpush.xpose.msra.mxu0 0.0
      %322 = vmatpush.xpose.msra.mxu0 0.0
      %323 = vmatpush.xpose.msra.mxu0 0.0
      %324 = vmatpush.xpose.msra.mxu0 0.0
      %325 = vmatpush.xpose.msra.mxu0 0.0
      %326 = vmatpush.xpose.msra.mxu0 0.0
      %327 = vmatpush.xpose.msra.mxu0 0.0
      %328 = vmatpush.xpose.msra.mxu0 0.0
      %329 = vmatpush.xpose.msra.mxu0 0.0
      %330 = vmatpush.xpose.msra.mxu0 0.0
      %331 = vmatpush.xpose.msra.mxu0 0.0
      %332 = vmatpush.xpose.msra.mxu0 %v316
      %333 = vmatpush.xpose.msra.mxu0 %v313
      %334 = vmatmul.f32.gmra.mxu0 %v313
      %v335 = vpop.f32.mrf.mxu0
      %v336 = vadd.f32 0.0, %v335
      %337 = vmatmul.f32.gmra.mxu0 %v316
      %v338 = vpop.f32.mrf.mxu0
      %v339 = vadd.f32 0.0, %v338
      %340 = vdwg.mxu0
      %v342 = vsel %vm282, %v251, 0
      %v345 = vsel %vm282, %v252, 0
      %347 = vmatpush.xpose.msra.mxu0 0.0
      %348 = vmatpush.xpose.msra.mxu0 0.0
      %349 = vmatpush.xpose.msra.mxu0 0.0
      %350 = vmatpush.xpose.msra.mxu0 0.0
      %351 = vmatpush.xpose.msra.mxu0 0.0
      %352 = vmatpush.xpose.msra.mxu0 0.0
      %353 = vmatpush.xpose.msra.mxu0 0.0
      %354 = vmatpush.xpose.msra.mxu0 0.0
      %355 = vmatpush.xpose.msra.mxu0 0.0
      %356 = vmatpush.xpose.msra.mxu0 0.0
      %357 = vmatpush.xpose.msra.mxu0 0.0
      %358 = vmatpush.xpose.msra.mxu0 0.0
      %359 = vmatpush.xpose.msra.mxu0 0.0
      %360 = vmatpush.xpose.msra.mxu0 0.0
      %361 = vmatpush.xpose.msra.mxu0 %v345
      %362 = vmatpush.xpose.msra.mxu0 %v342
      %363 = vmatmul.f32.gmra.mxu0 %v342
      %v364 = vpop.f32.mrf.mxu0
      %v365 = vadd.f32 0.0, %v364
      %366 = vmatmul.f32.gmra.mxu0 %v345
      %v367 = vpop.f32.mrf.mxu0
      %v368 = vadd.f32 0.0, %v367
      %369 = vdwg.mxu0
      %v371 = vsel %vm282, %v253, 0
      %v374 = vsel %vm282, %v254, 0
      %376 = vmatpush.xpose.msra.mxu0 0.0
      %377 = vmatpush.xpose.msra.mxu0 0.0
      %378 = vmatpush.xpose.msra.mxu0 0.0
      %379 = vmatpush.xpose.msra.mxu0 0.0
      %380 = vmatpush.xpose.msra.mxu0 0.0
      %381 = vmatpush.xpose.msra.mxu0 0.0
      %382 = vmatpush.xpose.msra.mxu0 0.0
      %383 = vmatpush.xpose.msra.mxu0 0.0
      %384 = vmatpush.xpose.msra.mxu0 0.0
      %385 = vmatpush.xpose.msra.mxu0 0.0
      %386 = vmatpush.xpose.msra.mxu0 0.0
      %387 = vmatpush.xpose.msra.mxu0 0.0
      %388 = vmatpush.xpose.msra.mxu0 0.0
      %389 = vmatpush.xpose.msra.mxu0 0.0
      %390 = vmatpush.xpose.msra.mxu0 %v374
      %391 = vmatpush.xpose.msra.mxu0 %v371
      %392 = vmatmul.f32.gmra.mxu0 %v371
      %v393 = vpop.f32.mrf.mxu0
      %v394 = vadd.f32 0.0, %v393
      %395 = vmatmul.f32.gmra.mxu0 %v374
      %v396 = vpop.f32.mrf.mxu0
      %v397 = vadd.f32 0.0, %v396
      %398 = vdwg.mxu0
      %v400 = vsel %vm282, %v255, 0
      %v403 = vsel %vm282, %v256, 0
      %405 = vmatpush.xpose.msra.mxu0 0.0
      %406 = vmatpush.xpose.msra.mxu0 0.0
      %407 = vmatpush.xpose.msra.mxu0 0.0
      %408 = vmatpush.xpose.msra.mxu0 0.0
      %409 = vmatpush.xpose.msra.mxu0 0.0
      %410 = vmatpush.xpose.msra.mxu0 0.0
      %411 = vmatpush.xpose.msra.mxu0 0.0
      %412 = vmatpush.xpose.msra.mxu0 0.0
      %413 = vmatpush.xpose.msra.mxu0 0.0
      %414 = vmatpush.xpose.msra.mxu0 0.0
      %415 = vmatpush.xpose.msra.mxu0 0.0
      %416 = vmatpush.xpose.msra.mxu0 0.0
      %417 = vmatpush.xpose.msra.mxu0 0.0
      %418 = vmatpush.xpose.msra.mxu0 0.0
      %419 = vmatpush.xpose.msra.mxu0 %v403
      %420 = vmatpush.xpose.msra.mxu0 %v400
      %421 = vmatmul.f32.gmra.mxu0 %v400
      %v422 = vpop.f32.mrf.mxu0
      %v423 = vadd.f32 0.0, %v422
      %424 = vmatmul.f32.gmra.mxu0 %v403
      %v425 = vpop.f32.mrf.mxu0
      %v426 = vadd.f32 0.0, %v425
      %427 = vdwg.mxu0
      %v429 = vsel %vm282, %v257, 0
      %v432 = vsel %vm282, %v258, 0
      %434 = vmatpush.xpose.msra.mxu0 0.0
      %435 = vmatpush.xpose.msra.mxu0 0.0
      %436 = vmatpush.xpose.msra.mxu0 0.0
      %437 = vmatpush.xpose.msra.mxu0 0.0
      %438 = vmatpush.xpose.msra.mxu0 0.0
      %439 = vmatpush.xpose.msra.mxu0 0.0
      %440 = vmatpush.xpose.msra.mxu0 0.0
      %441 = vmatpush.xpose.msra.mxu0 0.0
      %442 = vmatpush.xpose.msra.mxu0 0.0
      %443 = vmatpush.xpose.msra.mxu0 0.0
      %444 = vmatpush.xpose.msra.mxu0 0.0
      %445 = vmatpush.xpose.msra.mxu0 0.0
      %446 = vmatpush.xpose.msra.mxu0 0.0
      %447 = vmatpush.xpose.msra.mxu0 0.0
      %448 = vmatpush.xpose.msra.mxu0 %v432
      %449 = vmatpush.xpose.msra.mxu0 %v429
      %450 = vmatmul.f32.gmra.mxu0 %v429
      %v451 = vpop.f32.mrf.mxu0
      %v452 = vadd.f32 0.0, %v451
      %453 = vmatmul.f32.gmra.mxu0 %v432
      %v454 = vpop.f32.mrf.mxu0
      %v455 = vadd.f32 0.0, %v454
      %456 = vdwg.mxu0
      %v458 = vsel %vm282, %v259, 0
      %v461 = vsel %vm282, %v260, 0
      %463 = vmatpush.xpose.msra.mxu0 0.0
      %464 = vmatpush.xpose.msra.mxu0 0.0
      %465 = vmatpush.xpose.msra.mxu0 0.0
      %466 = vmatpush.xpose.msra.mxu0 0.0
      %467 = vmatpush.xpose.msra.mxu0 0.0
      %468 = vmatpush.xpose.msra.mxu0 0.0
      %469 = vmatpush.xpose.msra.mxu0 0.0
      %470 = vmatpush.xpose.msra.mxu0 0.0
      %471 = vmatpush.xpose.msra.mxu0 0.0
      %472 = vmatpush.xpose.msra.mxu0 0.0
      %473 = vmatpush.xpose.msra.mxu0 0.0
      %474 = vmatpush.xpose.msra.mxu0 0.0
      %475 = vmatpush.xpose.msra.mxu0 0.0
      %476 = vmatpush.xpose.msra.mxu0 0.0
      %477 = vmatpush.xpose.msra.mxu0 %v461
      %478 = vmatpush.xpose.msra.mxu0 %v458
      %479 = vmatmul.f32.gmra.mxu0 %v458
      %v480 = vpop.f32.mrf.mxu0
      %v481 = vadd.f32 0.0, %v480
      %482 = vmatmul.f32.gmra.mxu0 %v461
      %v483 = vpop.f32.mrf.mxu0
      %v484 = vadd.f32 0.0, %v483
      %485 = vdwg.mxu0
      %v486 = vmul.f32 %v307, 0.5
      %v487 = vmul.f32 %v310, 0.5
      %v488 = vmul.f32 %v336, 0.5
      %v489 = vmul.f32 %v339, 0.5
      %v490 = vmul.f32 %v365, 0.5
      %v491 = vmul.f32 %v368, 0.5
      %v492 = vmul.f32 %v394, 0.5
      %v493 = vmul.f32 %v397, 0.5
      %v494 = vmul.f32 %v423, 0.5
      %v495 = vmul.f32 %v426, 0.5
      %v496 = vmul.f32 %v452, 0.5
      %v497 = vmul.f32 %v455, 0.5
      %v498 = vmul.f32 %v481, 0.5
      %v499 = vmul.f32 %v484, 0.5
      %vm500 = vcmask 130048
      %v501 = vsel %vm500, %v486, -inf
      %502 = vmax.xlane.f32.xlu0 %v501
      %v503 = vpop.xlane.xlu0 %502
      %v504 = vsel %vm500, %v487, -inf
      %505 = vmax.xlane.f32.xlu0 %v504
      %v506 = vpop.xlane.xlu0 %505
      %v507 = vsel %vm500, %v488, -inf
      %508 = vmax.xlane.f32.xlu0 %v507
      %v509 = vpop.xlane.xlu0 %508
      %v510 = vsel %vm500, %v489, -inf
      %511 = vmax.xlane.f32.xlu0 %v510
      %v512 = vpop.xlane.xlu0 %511
      %v513 = vsel %vm500, %v490, -inf
      %514 = vmax.xlane.f32.xlu0 %v513
      %v515 = vpop.xlane.xlu0 %514
      %v516 = vsel %vm500, %v491, -inf
      %517 = vmax.xlane.f32.xlu0 %v516
      %v518 = vpop.xlane.xlu0 %517
      %v519 = vsel %vm500, %v492, -inf
      %520 = vmax.xlane.f32.xlu0 %v519
      %v521 = vpop.xlane.xlu0 %520
      %v522 = vsel %vm500, %v493, -inf
      %523 = vmax.xlane.f32.xlu0 %v522
      %v524 = vpop.xlane.xlu0 %523
      %v525 = vsel %vm500, %v494, -inf
      %526 = vmax.xlane.f32.xlu0 %v525
      %v527 = vpop.xlane.xlu0 %526
      %v528 = vsel %vm500, %v495, -inf
      %529 = vmax.xlane.f32.xlu0 %v528
      %v530 = vpop.xlane.xlu0 %529
      %v531 = vsel %vm500, %v496, -inf
      %532 = vmax.xlane.f32.xlu0 %v531
      %v533 = vpop.xlane.xlu0 %532
      %v534 = vsel %vm500, %v497, -inf
      %535 = vmax.xlane.f32.xlu0 %v534
      %v536 = vpop.xlane.xlu0 %535
      %v537 = vsel %vm500, %v498, -inf
      %538 = vmax.xlane.f32.xlu0 %v537
      %v539 = vpop.xlane.xlu0 %538
      %v540 = vsel %vm500, %v499, -inf
      %541 = vmax.xlane.f32.xlu0 %v540
      %v542 = vpop.xlane.xlu0 %541
      %v543 = vsub.f32 %v486, %v503
      %v544 = vsub.f32 %v487, %v506
      %v545 = vsub.f32 %v488, %v509
      %v546 = vsub.f32 %v489, %v512
      %v547 = vsub.f32 %v490, %v515
      %v548 = vsub.f32 %v491, %v518
      %v549 = vsub.f32 %v492, %v521
      %v550 = vsub.f32 %v493, %v524
      %v551 = vsub.f32 %v494, %v527
      %v552 = vsub.f32 %v495, %v530
      %v553 = vsub.f32 %v496, %v533
      %v554 = vsub.f32 %v497, %v536
      %v555 = vsub.f32 %v498, %v539
      %v556 = vsub.f32 %v499, %v542
      %v557 = vmul.f32 %v543, 1.442695
      %v558 = vpow.pop %v557
      %v559 = vmul.f32 %v544, 1.442695
      %v560 = vpow.pop %v559
      %v561 = vmul.f32 %v545, 1.442695
      %v562 = vpow.pop %v561
      %v563 = vmul.f32 %v546, 1.442695
      %v564 = vpow.pop %v563
      %v565 = vmul.f32 %v547, 1.442695
      %v566 = vpow.pop %v565
      %v567 = vmul.f32 %v548, 1.442695
      %v568 = vpow.pop %v567
      %v569 = vmul.f32 %v549, 1.442695
      %v570 = vpow.pop %v569
      %v571 = vmul.f32 %v550, 1.442695
      %v572 = vpow.pop %v571
      %v573 = vmul.f32 %v551, 1.442695
      %v574 = vpow.pop %v573
      %v575 = vmul.f32 %v552, 1.442695
      %v576 = vpow.pop %v575
      %v577 = vmul.f32 %v553, 1.442695
      %v578 = vpow.pop %v577
      %v579 = vmul.f32 %v554, 1.442695
      %v580 = vpow.pop %v579
      %v581 = vmul.f32 %v555, 1.442695
      %v582 = vpow.pop %v581
      %v583 = vmul.f32 %v556, 1.442695
      %v584 = vpow.pop %v583
      %v585 = vsel %vm500, %v558, 0.0
      %586 = vadd.xlane.f32.xlu0 %v585
      %v587 = vpop.xlane.xlu0 %586
      %v588 = vsel %vm500, %v560, 0.0
      %589 = vadd.xlane.f32.xlu0 %v588
      %v590 = vpop.xlane.xlu0 %589
      %v591 = vsel %vm500, %v562, 0.0
      %592 = vadd.xlane.f32.xlu0 %v591
      %v593 = vpop.xlane.xlu0 %592
      %v594 = vsel %vm500, %v564, 0.0
      %595 = vadd.xlane.f32.xlu0 %v594
      %v596 = vpop.xlane.xlu0 %595
      %v597 = vsel %vm500, %v566, 0.0
      %598 = vadd.xlane.f32.xlu0 %v597
      %v599 = vpop.xlane.xlu0 %598
      %v600 = vsel %vm500, %v568, 0.0
      %601 = vadd.xlane.f32.xlu0 %v600
      %v602 = vpop.xlane.xlu0 %601
      %v603 = vsel %vm500, %v570, 0.0
      %604 = vadd.xlane.f32.xlu0 %v603
      %v605 = vpop.xlane.xlu0 %604
      %v606 = vsel %vm500, %v572, 0.0
      %607 = vadd.xlane.f32.xlu0 %v606
      %v608 = vpop.xlane.xlu0 %607
      %v609 = vsel %vm500, %v574, 0.0
      %610 = vadd.xlane.f32.xlu0 %v609
      %v611 = vpop.xlane.xlu0 %610
      %v612 = vsel %vm500, %v576, 0.0
      %613 = vadd.xlane.f32.xlu0 %v612
      %v614 = vpop.xlane.xlu0 %613
      %v615 = vsel %vm500, %v578, 0.0
      %616 = vadd.xlane.f32.xlu0 %v615
      %v617 = vpop.xlane.xlu0 %616
      %v618 = vsel %vm500, %v580, 0.0
      %619 = vadd.xlane.f32.xlu0 %v618
      %v620 = vpop.xlane.xlu0 %619
      %v621 = vsel %vm500, %v582, 0.0
      %622 = vadd.xlane.f32.xlu0 %v621
      %v623 = vpop.xlane.xlu0 %622
      %v624 = vsel %vm500, %v584, 0.0
      %625 = vadd.xlane.f32.xlu0 %v624
      %v626 = vpop.xlane.xlu0 %625
      %v627 = vrcp.pop %v587
      %v628 = vmul.f32 %v587, %v627
      %v629 = vsub.f32 1.0, %v628
      %v630 = vmul.f32 %v627, %v629
      %v631 = vadd.f32 %v627, %v630
      %vm632 = vweird.f32 %v587
      %vm633 = vweird.f32 %v627
      %vm634 = vmor %vm632, %vm633
      %v635 = vsel %vm634, %v627, %v631
      %v636 = vand.u32 2147483647, %v587
      %vm637 = vcmp.eq.f32.partialorder %v636, 8.507059e+37
      %v638 = vand.u32 %v587, 2147483648
      %v639 = vor.u32 1.1754944e-38, %v638
      %v640 = vsel %vm637, %v639, %v635
      %v641 = vmul.f32 %v558, %v640
      %v642 = vrcp.pop %v590
      %v643 = vmul.f32 %v590, %v642
      %v644 = vsub.f32 1.0, %v643
      %v645 = vmul.f32 %v642, %v644
      %v646 = vadd.f32 %v642, %v645
      %vm647 = vweird.f32 %v590
      %vm648 = vweird.f32 %v642
      %vm649 = vmor %vm647, %vm648
      %v650 = vsel %vm649, %v642, %v646
      %v651 = vand.u32 2147483647, %v590
      %vm652 = vcmp.eq.f32.partialorder %v651, 8.507059e+37
      %v653 = vand.u32 %v590, 2147483648
      %v654 = vor.u32 1.1754944e-38, %v653
      %v655 = vsel %vm652, %v654, %v650
      %v656 = vmul.f32 %v560, %v655
      %v657 = vrcp.pop %v593
      %v658 = vmul.f32 %v593, %v657
      %v659 = vsub.f32 1.0, %v658
      %v660 = vmul.f32 %v657, %v659
      %v661 = vadd.f32 %v657, %v660
      %vm662 = vweird.f32 %v593
      %vm663 = vweird.f32 %v657
      %vm664 = vmor %vm662, %vm663
      %v665 = vsel %vm664, %v657, %v661
      %v666 = vand.u32 2147483647, %v593
      %vm667 = vcmp.eq.f32.partialorder %v666, 8.507059e+37
      %v668 = vand.u32 %v593, 2147483648
      %v669 = vor.u32 1.1754944e-38, %v668
      %v670 = vsel %vm667, %v669, %v665
      %v671 = vmul.f32 %v562, %v670
      %v672 = vrcp.pop %v596
      %v673 = vmul.f32 %v596, %v672
      %v674 = vsub.f32 1.0, %v673
      %v675 = vmul.f32 %v672, %v674
      %v676 = vadd.f32 %v672, %v675
      %vm677 = vweird.f32 %v596
      %vm678 = vweird.f32 %v672
      %vm679 = vmor %vm677, %vm678
      %v680 = vsel %vm679, %v672, %v676
      %v681 = vand.u32 2147483647, %v596
      %vm682 = vcmp.eq.f32.partialorder %v681, 8.507059e+37
      %v683 = vand.u32 %v596, 2147483648
      %v684 = vor.u32 1.1754944e-38, %v683
      %v685 = vsel %vm682, %v684, %v680
      %v686 = vmul.f32 %v564, %v685
      %v687 = vrcp.pop %v599
      %v688 = vmul.f32 %v599, %v687
      %v689 = vsub.f32 1.0, %v688
      %v690 = vmul.f32 %v687, %v689
      %v691 = vadd.f32 %v687, %v690
      %vm692 = vweird.f32 %v599
      %vm693 = vweird.f32 %v687
      %vm694 = vmor %vm692, %vm693
      %v695 = vsel %vm694, %v687, %v691
      %v696 = vand.u32 2147483647, %v599
      %vm697 = vcmp.eq.f32.partialorder %v696, 8.507059e+37
      %v698 = vand.u32 %v599, 2147483648
      %v699 = vor.u32 1.1754944e-38, %v698
      %v700 = vsel %vm697, %v699, %v695
      %v701 = vmul.f32 %v566, %v700
      %v702 = vrcp.pop %v602
      %v703 = vmul.f32 %v602, %v702
      %v704 = vsub.f32 1.0, %v703
      %v705 = vmul.f32 %v702, %v704
      %v706 = vadd.f32 %v702, %v705
      %vm707 = vweird.f32 %v602
      %vm708 = vweird.f32 %v702
      %vm709 = vmor %vm707, %vm708
      %v710 = vsel %vm709, %v702, %v706
      %v711 = vand.u32 2147483647, %v602
      %vm712 = vcmp.eq.f32.partialorder %v711, 8.507059e+37
      %v713 = vand.u32 %v602, 2147483648
      %v714 = vor.u32 1.1754944e-38, %v713
      %v715 = vsel %vm712, %v714, %v710
      %v716 = vmul.f32 %v568, %v715
      %v717 = vrcp.pop %v605
      %v718 = vmul.f32 %v605, %v717
      %v719 = vsub.f32 1.0, %v718
      %v720 = vmul.f32 %v717, %v719
      %v721 = vadd.f32 %v717, %v720
      %vm722 = vweird.f32 %v605
      %vm723 = vweird.f32 %v717
      %vm724 = vmor %vm722, %vm723
      %v725 = vsel %vm724, %v717, %v721
      %v726 = vand.u32 2147483647, %v605
      %vm727 = vcmp.eq.f32.partialorder %v726, 8.507059e+37
      %v728 = vand.u32 %v605, 2147483648
      %v729 = vor.u32 1.1754944e-38, %v728
      %v730 = vsel %vm727, %v729, %v725
      %v731 = vmul.f32 %v570, %v730
      %v732 = vrcp.pop %v608
      %v733 = vmul.f32 %v608, %v732
      %v734 = vsub.f32 1.0, %v733
      %v735 = vmul.f32 %v732, %v734
      %v736 = vadd.f32 %v732, %v735
      %vm737 = vweird.f32 %v608
      %vm738 = vweird.f32 %v732
      %vm739 = vmor %vm737, %vm738
      %v740 = vsel %vm739, %v732, %v736
      %v741 = vand.u32 2147483647, %v608
      %vm742 = vcmp.eq.f32.partialorder %v741, 8.507059e+37
      %v743 = vand.u32 %v608, 2147483648
      %v744 = vor.u32 1.1754944e-38, %v743
      %v745 = vsel %vm742, %v744, %v740
      %v746 = vmul.f32 %v572, %v745
      %v747 = vrcp.pop %v611
      %v748 = vmul.f32 %v611, %v747
      %v749 = vsub.f32 1.0, %v748
      %v750 = vmul.f32 %v747, %v749
      %v751 = vadd.f32 %v747, %v750
      %vm752 = vweird.f32 %v611
      %vm753 = vweird.f32 %v747
      %vm754 = vmor %vm752, %vm753
      %v755 = vsel %vm754, %v747, %v751
      %v756 = vand.u32 2147483647, %v611
      %vm757 = vcmp.eq.f32.partialorder %v756, 8.507059e+37
      %v758 = vand.u32 %v611, 2147483648
      %v759 = vor.u32 1.1754944e-38, %v758
      %v760 = vsel %vm757, %v759, %v755
      %v761 = vmul.f32 %v574, %v760
      %v762 = vrcp.pop %v614
      %v763 = vmul.f32 %v614, %v762
      %v764 = vsub.f32 1.0, %v763
      %v765 = vmul.f32 %v762, %v764
      %v766 = vadd.f32 %v762, %v765
      %vm767 = vweird.f32 %v614
      %vm768 = vweird.f32 %v762
      %vm769 = vmor %vm767, %vm768
      %v770 = vsel %vm769, %v762, %v766
      %v771 = vand.u32 2147483647, %v614
      %vm772 = vcmp.eq.f32.partialorder %v771, 8.507059e+37
      %v773 = vand.u32 %v614, 2147483648
      %v774 = vor.u32 1.1754944e-38, %v773
      %v775 = vsel %vm772, %v774, %v770
      %v776 = vmul.f32 %v576, %v775
      %v777 = vrcp.pop %v617
      %v778 = vmul.f32 %v617, %v777
      %v779 = vsub.f32 1.0, %v778
      %v780 = vmul.f32 %v777, %v779
      %v781 = vadd.f32 %v777, %v780
      %vm782 = vweird.f32 %v617
      %vm783 = vweird.f32 %v777
      %vm784 = vmor %vm782, %vm783
      %v785 = vsel %vm784, %v777, %v781
      %v786 = vand.u32 2147483647, %v617
      %vm787 = vcmp.eq.f32.partialorder %v786, 8.507059e+37
      %v788 = vand.u32 %v617, 2147483648
      %v789 = vor.u32 1.1754944e-38, %v788
      %v790 = vsel %vm787, %v789, %v785
      %v791 = vmul.f32 %v578, %v790
      %v792 = vrcp.pop %v620
      %v793 = vmul.f32 %v620, %v792
      %v794 = vsub.f32 1.0, %v793
      %v795 = vmul.f32 %v792, %v794
      %v796 = vadd.f32 %v792, %v795
      %vm797 = vweird.f32 %v620
      %vm798 = vweird.f32 %v792
      %vm799 = vmor %vm797, %vm798
      %v800 = vsel %vm799, %v792, %v796
      %v801 = vand.u32 2147483647, %v620
      %vm802 = vcmp.eq.f32.partialorder %v801, 8.507059e+37
      %v803 = vand.u32 %v620, 2147483648
      %v804 = vor.u32 1.1754944e-38, %v803
      %v805 = vsel %vm802, %v804, %v800
      %v806 = vmul.f32 %v580, %v805
      %v807 = vrcp.pop %v623
      %v808 = vmul.f32 %v623, %v807
      %v809 = vsub.f32 1.0, %v808
      %v810 = vmul.f32 %v807, %v809
      %v811 = vadd.f32 %v807, %v810
      %vm812 = vweird.f32 %v623
      %vm813 = vweird.f32 %v807
      %vm814 = vmor %vm812, %vm813
      %v815 = vsel %vm814, %v807, %v811
      %v816 = vand.u32 2147483647, %v623
      %vm817 = vcmp.eq.f32.partialorder %v816, 8.507059e+37
      %v818 = vand.u32 %v623, 2147483648
      %v819 = vor.u32 1.1754944e-38, %v818
      %v820 = vsel %vm817, %v819, %v815
      %v821 = vmul.f32 %v582, %v820
      %v822 = vrcp.pop %v626
      %v823 = vmul.f32 %v626, %v822
      %v824 = vsub.f32 1.0, %v823
      %v825 = vmul.f32 %v822, %v824
      %v826 = vadd.f32 %v822, %v825
      %vm827 = vweird.f32 %v626
      %vm828 = vweird.f32 %v822
      %vm829 = vmor %vm827, %vm828
      %v830 = vsel %vm829, %v822, %v826
      %v831 = vand.u32 2147483647, %v626
      %vm832 = vcmp.eq.f32.partialorder %v831, 8.507059e+37
      %v833 = vand.u32 %v626, 2147483648
      %v834 = vor.u32 1.1754944e-38, %v833
      %v835 = vsel %vm832, %v834, %v830
      %v836 = vmul.f32 %v584, %v835
      %v837 = vmul.f32 %v641, 0.5
      %v838 = vmul.f32 %v656, 0.5
      %v839 = vmul.f32 %v671, 0.5
      %v840 = vmul.f32 %v686, 0.5
      %v841 = vmul.f32 %v701, 0.5
      %v842 = vmul.f32 %v716, 0.5
      %v843 = vmul.f32 %v731, 0.5
      %v844 = vmul.f32 %v746, 0.5
      %v845 = vmul.f32 %v761, 0.5
      %v846 = vmul.f32 %v776, 0.5
      %v847 = vmul.f32 %v791, 0.5
      %v848 = vmul.f32 %v806, 0.5
      %v849 = vmul.f32 %v821, 0.5
      %v850 = vmul.f32 %v836, 0.5
      %v851 = vmul.f32 %v263, %v837
      %v852 = vmul.f32 %v264, %v838
      %v853 = vmul.f32 %v265, %v839
      %v854 = vmul.f32 %v266, %v840
      %v855 = vmul.f32 %v267, %v841
      %v856 = vmul.f32 %v268, %v842
      %v857 = vmul.f32 %v269, %v843
      %v858 = vmul.f32 %v270, %v844
      %v859 = vmul.f32 %v271, %v845
      %v860 = vmul.f32 %v272, %v846
      %v861 = vmul.f32 %v273, %v847
      %v862 = vmul.f32 %v274, %v848
      %v863 = vmul.f32 %v275, %v849
      %v864 = vmul.f32 %v276, %v850
      %865 = vxpose.xlu0.b32.start [1/16] %v851, 128
      %866 = vxpose.xlu0.b32.cont [2/16] %v852, 128
      %867 = vxpose.xlu0.b32.cont [3/16] 0.0, 128
      %868 = vxpose.xlu0.b32.cont [4/16] 0.0, 128
      %869 = vxpose.xlu0.b32.cont [5/16] 0.0, 128
      %870 = vxpose.xlu0.b32.cont [6/16] 0.0, 128
      %871 = vxpose.xlu0.b32.cont [7/16] 0.0, 128
      %872 = vxpose.xlu0.b32.cont [8/16] 0.0, 128
      %873 = vxpose.xlu0.b32.cont [9/16] 0.0, 128
      %874 = vxpose.xlu0.b32.cont [10/16] 0.0, 128
      %875 = vxpose.xlu0.b32.cont [11/16] 0.0, 128
      %876 = vxpose.xlu0.b32.cont [12/16] 0.0, 128
      %877 = vxpose.xlu0.b32.cont [13/16] 0.0, 128
      %878 = vxpose.xlu0.b32.cont [14/16] 0.0, 128
      %879 = vxpose.xlu0.b32.cont [15/16] 0.0, 128
      %880 = vxpose.xlu0.b32.end [16/16] 0.0, 128
      %v881 = vpop.trf.xlu0
      %v882 = vpop.trf.xlu0
      %v883 = vpop.trf.xlu0
      %v884 = vpop.trf.xlu0
      %v885 = vpop.trf.xlu0
      %v886 = vpop.trf.xlu0
      %v887 = vpop.trf.xlu0
      %v888 = vpop.trf.xlu0
      %v889 = vpop.trf.xlu0
      %v890 = vpop.trf.xlu0
      %v891 = vpop.trf.xlu0
      %v892 = vpop.trf.xlu0
      %v893 = vpop.trf.xlu0
      %v894 = vpop.trf.xlu0
      %v895 = vpop.trf.xlu0
      %v896 = vpop.trf.xlu0
      %897 = vxpose.xlu0.b32.start [1/16] %v853, 128
      %898 = vxpose.xlu0.b32.cont [2/16] %v854, 128
      %899 = vxpose.xlu0.b32.cont [3/16] 0.0, 128
      %900 = vxpose.xlu0.b32.cont [4/16] 0.0, 128
      %901 = vxpose.xlu0.b32.cont [5/16] 0.0, 128
      %902 = vxpose.xlu0.b32.cont [6/16] 0.0, 128
      %903 = vxpose.xlu0.b32.cont [7/16] 0.0, 128
      %904 = vxpose.xlu0.b32.cont [8/16] 0.0, 128
      %905 = vxpose.xlu0.b32.cont [9/16] 0.0, 128
      %906 = vxpose.xlu0.b32.cont [10/16] 0.0, 128
      %907 = vxpose.xlu0.b32.cont [11/16] 0.0, 128
      %908 = vxpose.xlu0.b32.cont [12/16] 0.0, 128
      %909 = vxpose.xlu0.b32.cont [13/16] 0.0, 128
      %910 = vxpose.xlu0.b32.cont [14/16] 0.0, 128
      %911 = vxpose.xlu0.b32.cont [15/16] 0.0, 128
      %912 = vxpose.xlu0.b32.end [16/16] 0.0, 128
      %v913 = vpop.trf.xlu0
      %v914 = vpop.trf.xlu0
      %v915 = vpop.trf.xlu0
      %v916 = vpop.trf.xlu0
      %v917 = vpop.trf.xlu0
      %v918 = vpop.trf.xlu0
      %v919 = vpop.trf.xlu0
      %v920 = vpop.trf.xlu0
      %v921 = vpop.trf.xlu0
      %v922 = vpop.trf.xlu0
      %v923 = vpop.trf.xlu0
      %v924 = vpop.trf.xlu0
      %v925 = vpop.trf.xlu0
      %v926 = vpop.trf.xlu0
      %v927 = vpop.trf.xlu0
      %v928 = vpop.trf.xlu0
      %929 = vxpose.xlu0.b32.start [1/16] %v855, 128
      %930 = vxpose.xlu0.b32.cont [2/16] %v856, 128
      %931 = vxpose.xlu0.b32.cont [3/16] 0.0, 128
      %932 = vxpose.xlu0.b32.cont [4/16] 0.0, 128
      %933 = vxpose.xlu0.b32.cont [5/16] 0.0, 128
      %934 = vxpose.xlu0.b32.cont [6/16] 0.0, 128
      %935 = vxpose.xlu0.b32.cont [7/16] 0.0, 128
      %936 = vxpose.xlu0.b32.cont [8/16] 0.0, 128
      %937 = vxpose.xlu0.b32.cont [9/16] 0.0, 128
      %938 = vxpose.xlu0.b32.cont [10/16] 0.0, 128
      %939 = vxpose.xlu0.b32.cont [11/16] 0.0, 128
      %940 = vxpose.xlu0.b32.cont [12/16] 0.0, 128
      %941 = vxpose.xlu0.b32.cont [13/16] 0.0, 128
      %942 = vxpose.xlu0.b32.cont [14/16] 0.0, 128
      %943 = vxpose.xlu0.b32.cont [15/16] 0.0, 128
      %944 = vxpose.xlu0.b32.end [16/16] 0.0, 128
      %v945 = vpop.trf.xlu0
      %v946 = vpop.trf.xlu0
      %v947 = vpop.trf.xlu0
      %v948 = vpop.trf.xlu0
      %v949 = vpop.trf.xlu0
      %v950 = vpop.trf.xlu0
      %v951 = vpop.trf.xlu0
      %v952 = vpop.trf.xlu0
      %v953 = vpop.trf.xlu0
      %v954 = vpop.trf.xlu0
      %v955 = vpop.trf.xlu0
      %v956 = vpop.trf.xlu0
      %v957 = vpop.trf.xlu0
      %v958 = vpop.trf.xlu0
      %v959 = vpop.trf.xlu0
      %v960 = vpop.trf.xlu0
      %961 = vxpose.xlu0.b32.start [1/16] %v857, 128
      %962 = vxpose.xlu0.b32.cont [2/16] %v858, 128
      %963 = vxpose.xlu0.b32.cont [3/16] 0.0, 128
      %964 = vxpose.xlu0.b32.cont [4/16] 0.0, 128
      %965 = vxpose.xlu0.b32.cont [5/16] 0.0, 128
      %966 = vxpose.xlu0.b32.cont [6/16] 0.0, 128
      %967 = vxpose.xlu0.b32.cont [7/16] 0.0, 128
      %968 = vxpose.xlu0.b32.cont [8/16] 0.0, 128
      %969 = vxpose.xlu0.b32.cont [9/16] 0.0, 128
      %970 = vxpose.xlu0.b32.cont [10/16] 0.0, 128
      %971 = vxpose.xlu0.b32.cont [11/16] 0.0, 128
      %972 = vxpose.xlu0.b32.cont [12/16] 0.0, 128
      %973 = vxpose.xlu0.b32.cont [13/16] 0.0, 128
      %974 = vxpose.xlu0.b32.cont [14/16] 0.0, 128
      %975 = vxpose.xlu0.b32.cont [15/16] 0.0, 128
      %976 = vxpose.xlu0.b32.end [16/16] 0.0, 128
      %v977 = vpop.trf.xlu0
      %v978 = vpop.trf.xlu0
      %v979 = vpop.trf.xlu0
      %v980 = vpop.trf.xlu0
      %v981 = vpop.trf.xlu0
      %v982 = vpop.trf.xlu0
      %v983 = vpop.trf.xlu0
      %v984 = vpop.trf.xlu0
      %v985 = vpop.trf.xlu0
      %v986 = vpop.trf.xlu0
      %v987 = vpop.trf.xlu0
      %v988 = vpop.trf.xlu0
      %v989 = vpop.trf.xlu0
      %v990 = vpop.trf.xlu0
      %v991 = vpop.trf.xlu0
      %v992 = vpop.trf.xlu0
      %993 = vxpose.xlu0.b32.start [1/16] %v859, 128
      %994 = vxpose.xlu0.b32.cont [2/16] %v860, 128
      %995 = vxpose.xlu0.b32.cont [3/16] 0.0, 128
      %996 = vxpose.xlu0.b32.cont [4/16] 0.0, 128
      %997 = vxpose.xlu0.b32.cont [5/16] 0.0, 128
      %998 = vxpose.xlu0.b32.cont [6/16] 0.0, 128
      %999 = vxpose.xlu0.b32.cont [7/16] 0.0, 128
      %1000 = vxpose.xlu0.b32.cont [8/16] 0.0, 128
      %1001 = vxpose.xlu0.b32.cont [9/16] 0.0, 128
      %1002 = vxpose.xlu0.b32.cont [10/16] 0.0, 128
      %1003 = vxpose.xlu0.b32.cont [11/16] 0.0, 128
      %1004 = vxpose.xlu0.b32.cont [12/16] 0.0, 128
      %1005 = vxpose.xlu0.b32.cont [13/16] 0.0, 128
      %1006 = vxpose.xlu0.b32.cont [14/16] 0.0, 128
      %1007 = vxpose.xlu0.b32.cont [15/16] 0.0, 128
      %1008 = vxpose.xlu0.b32.end [16/16] 0.0, 128
      %v1009 = vpop.trf.xlu0
      %v1010 = vpop.trf.xlu0
      %v1011 = vpop.trf.xlu0
      %v1012 = vpop.trf.xlu0
      %v1013 = vpop.trf.xlu0
      %v1014 = vpop.trf.xlu0
      %v1015 = vpop.trf.xlu0
      %v1016 = vpop.trf.xlu0
      %v1017 = vpop.trf.xlu0
      %v1018 = vpop.trf.xlu0
      %v1019 = vpop.trf.xlu0
      %v1020 = vpop.trf.xlu0
      %v1021 = vpop.trf.xlu0
      %v1022 = vpop.trf.xlu0
      %v1023 = vpop.trf.xlu0
      %v1024 = vpop.trf.xlu0
      %1025 = vxpose.xlu0.b32.start [1/16] %v861, 128
      %1026 = vxpose.xlu0.b32.cont [2/16] %v862, 128
      %1027 = vxpose.xlu0.b32.cont [3/16] 0.0, 128
      %1028 = vxpose.xlu0.b32.cont [4/16] 0.0, 128
      %1029 = vxpose.xlu0.b32.cont [5/16] 0.0, 128
      %1030 = vxpose.xlu0.b32.cont [6/16] 0.0, 128
      %1031 = vxpose.xlu0.b32.cont [7/16] 0.0, 128
      %1032 = vxpose.xlu0.b32.cont [8/16] 0.0, 128
      %1033 = vxpose.xlu0.b32.cont [9/16] 0.0, 128
      %1034 = vxpose.xlu0.b32.cont [10/16] 0.0, 128
      %1035 = vxpose.xlu0.b32.cont [11/16] 0.0, 128
      %1036 = vxpose.xlu0.b32.cont [12/16] 0.0, 128
      %1037 = vxpose.xlu0.b32.cont [13/16] 0.0, 128
      %1038 = vxpose.xlu0.b32.cont [14/16] 0.0, 128
      %1039 = vxpose.xlu0.b32.cont [15/16] 0.0, 128
      %1040 = vxpose.xlu0.b32.end [16/16] 0.0, 128
      %v1041 = vpop.trf.xlu0
      %v1042 = vpop.trf.xlu0
      %v1043 = vpop.trf.xlu0
      %v1044 = vpop.trf.xlu0
      %v1045 = vpop.trf.xlu0
      %v1046 = vpop.trf.xlu0
      %v1047 = vpop.trf.xlu0
      %v1048 = vpop.trf.xlu0
      %v1049 = vpop.trf.xlu0
      %v1050 = vpop.trf.xlu0
      %v1051 = vpop.trf.xlu0
      %v1052 = vpop.trf.xlu0
      %v1053 = vpop.trf.xlu0
      %v1054 = vpop.trf.xlu0
      %v1055 = vpop.trf.xlu0
      %v1056 = vpop.trf.xlu0
      %1057 = vxpose.xlu0.b32.start [1/16] %v863, 128
      %1058 = vxpose.xlu0.b32.cont [2/16] %v864, 128
      %1059 = vxpose.xlu0.b32.cont [3/16] 0.0, 128
      %1060 = vxpose.xlu0.b32.cont [4/16] 0.0, 128
      %1061 = vxpose.xlu0.b32.cont [5/16] 0.0, 128
      %1062 = vxpose.xlu0.b32.cont [6/16] 0.0, 128
      %1063 = vxpose.xlu0.b32.cont [7/16] 0.0, 128
      %1064 = vxpose.xlu0.b32.cont [8/16] 0.0, 128
      %1065 = vxpose.xlu0.b32.cont [9/16] 0.0, 128
      %1066 = vxpose.xlu0.b32.cont [10/16] 0.0, 128
      %1067 = vxpose.xlu0.b32.cont [11/16] 0.0, 128
      %1068 = vxpose.xlu0.b32.cont [12/16] 0.0, 128
      %1069 = vxpose.xlu0.b32.cont [13/16] 0.0, 128
      %1070 = vxpose.xlu0.b32.cont [14/16] 0.0, 128
      %1071 = vxpose.xlu0.b32.cont [15/16] 0.0, 128
      %1072 = vxpose.xlu0.b32.end [16/16] 0.0, 128
      %v1073 = vpop.trf.xlu0
      %v1074 = vpop.trf.xlu0
      %v1075 = vpop.trf.xlu0
      %v1076 = vpop.trf.xlu0
      %v1077 = vpop.trf.xlu0
      %v1078 = vpop.trf.xlu0
      %v1079 = vpop.trf.xlu0
      %v1080 = vpop.trf.xlu0
      %v1081 = vpop.trf.xlu0
      %v1082 = vpop.trf.xlu0
      %v1083 = vpop.trf.xlu0
      %v1084 = vpop.trf.xlu0
      %v1085 = vpop.trf.xlu0
      %v1086 = vpop.trf.xlu0
      %v1087 = vpop.trf.xlu0
      %v1088 = vpop.trf.xlu0
      %v1090 = vsel %vm500, %v881, 0
      %v1093 = vsel %vm500, %v882, 0
      %1095 = vmatpush.msra.mxu0 0.0
      %1096 = vmatpush.msra.mxu0 0.0
      %1097 = vmatpush.msra.mxu0 0.0
      %1098 = vmatpush.msra.mxu0 0.0
      %1099 = vmatpush.msra.mxu0 0.0
      %1100 = vmatpush.msra.mxu0 0.0
      %1101 = vmatpush.msra.mxu0 0.0
      %1102 = vmatpush.msra.mxu0 0.0
      %1103 = vmatpush.msra.mxu0 0.0
      %1104 = vmatpush.msra.mxu0 0.0
      %1105 = vmatpush.msra.mxu0 0.0
      %1106 = vmatpush.msra.mxu0 0.0
      %1107 = vmatpush.msra.mxu0 0.0
      %1108 = vmatpush.msra.mxu0 0.0
      %1109 = vmatpush.msra.mxu0 %v246
      %1110 = vmatpush.msra.mxu0 %v245
      %1111 = vmatmul.f32.gmra.mxu0 %v1090
      %v1112 = vpop.f32.mrf.mxu0
      %v1113 = vadd.f32 0.0, %v1112
      %1114 = vmatmul.f32.gmra.mxu0 %v1093
      %v1115 = vpop.f32.mrf.mxu0
      %v1116 = vadd.f32 0.0, %v1115
      %1117 = vdwg.mxu0
      %v1119 = vsel %vm500, %v913, 0
      %v1122 = vsel %vm500, %v914, 0
      %1124 = vmatpush.msra.mxu0 0.0
      %1125 = vmatpush.msra.mxu0 0.0
      %1126 = vmatpush.msra.mxu0 0.0
      %1127 = vmatpush.msra.mxu0 0.0
      %1128 = vmatpush.msra.mxu0 0.0
      %1129 = vmatpush.msra.mxu0 0.0
      %1130 = vmatpush.msra.mxu0 0.0
      %1131 = vmatpush.msra.mxu0 0.0
      %1132 = vmatpush.msra.mxu0 0.0
      %1133 = vmatpush.msra.mxu0 0.0
      %1134 = vmatpush.msra.mxu0 0.0
      %1135 = vmatpush.msra.mxu0 0.0
      %1136 = vmatpush.msra.mxu0 0.0
      %1137 = vmatpush.msra.mxu0 0.0
      %1138 = vmatpush.msra.mxu0 %v248
      %1139 = vmatpush.msra.mxu0 %v247
      %1140 = vmatmul.f32.gmra.mxu0 %v1119
      %v1141 = vpop.f32.mrf.mxu0
      %v1142 = vadd.f32 0.0, %v1141
      %1143 = vmatmul.f32.gmra.mxu0 %v1122
      %v1144 = vpop.f32.mrf.mxu0
      %v1145 = vadd.f32 0.0, %v1144
      %1146 = vdwg.mxu0
      %v1148 = vsel %vm500, %v945, 0
      %v1151 = vsel %vm500, %v946, 0
      %1153 = vmatpush.msra.mxu0 0.0
      %1154 = vmatpush.msra.mxu0 0.0
      %1155 = vmatpush.msra.mxu0 0.0
      %1156 = vmatpush.msra.mxu0 0.0
      %1157 = vmatpush.msra.mxu0 0.0
      %1158 = vmatpush.msra.mxu0 0.0
      %1159 = vmatpush.msra.mxu0 0.0
      %1160 = vmatpush.msra.mxu0 0.0
      %1161 = vmatpush.msra.mxu0 0.0
      %1162 = vmatpush.msra.mxu0 0.0
      %1163 = vmatpush.msra.mxu0 0.0
      %1164 = vmatpush.msra.mxu0 0.0
      %1165 = vmatpush.msra.mxu0 0.0
      %1166 = vmatpush.msra.mxu0 0.0
      %1167 = vmatpush.msra.mxu0 %v250
      %1168 = vmatpush.msra.mxu0 %v249
      %1169 = vmatmul.f32.gmra.mxu0 %v1148
      %v1170 = vpop.f32.mrf.mxu0
      %v1171 = vadd.f32 0.0, %v1170
      %1172 = vmatmul.f32.gmra.mxu0 %v1151
      %v1173 = vpop.f32.mrf.mxu0
      %v1174 = vadd.f32 0.0, %v1173
      %1175 = vdwg.mxu0
      %v1177 = vsel %vm500, %v977, 0
      %v1180 = vsel %vm500, %v978, 0
      %1182 = vmatpush.msra.mxu0 0.0
      %1183 = vmatpush.msra.mxu0 0.0
      %1184 = vmatpush.msra.mxu0 0.0
      %1185 = vmatpush.msra.mxu0 0.0
      %1186 = vmatpush.msra.mxu0 0.0
      %1187 = vmatpush.msra.mxu0 0.0
      %1188 = vmatpush.msra.mxu0 0.0
      %1189 = vmatpush.msra.mxu0 0.0
      %1190 = vmatpush.msra.mxu0 0.0
      %1191 = vmatpush.msra.mxu0 0.0
      %1192 = vmatpush.msra.mxu0 0.0
      %1193 = vmatpush.msra.mxu0 0.0
      %1194 = vmatpush.msra.mxu0 0.0
      %1195 = vmatpush.msra.mxu0 0.0
      %1196 = vmatpush.msra.mxu0 %v252
      %1197 = vmatpush.msra.mxu0 %v251
      %1198 = vmatmul.f32.gmra.mxu0 %v1177
      %v1199 = vpop.f32.mrf.mxu0
      %v1200 = vadd.f32 0.0, %v1199
      %1201 = vmatmul.f32.gmra.mxu0 %v1180
      %v1202 = vpop.f32.mrf.mxu0
      %v1203 = vadd.f32 0.0, %v1202
      %1204 = vdwg.mxu0
      %v1206 = vsel %vm500, %v1009, 0
      %v1209 = vsel %vm500, %v1010, 0
      %1211 = vmatpush.msra.mxu0 0.0
      %1212 = vmatpush.msra.mxu0 0.0
      %1213 = vmatpush.msra.mxu0 0.0
      %1214 = vmatpush.msra.mxu0 0.0
      %1215 = vmatpush.msra.mxu0 0.0
      %1216 = vmatpush.msra.mxu0 0.0
      %1217 = vmatpush.msra.mxu0 0.0
      %1218 = vmatpush.msra.mxu0 0.0
      %1219 = vmatpush.msra.mxu0 0.0
      %1220 = vmatpush.msra.mxu0 0.0
      %1221 = vmatpush.msra.mxu0 0.0
      %1222 = vmatpush.msra.mxu0 0.0
      %1223 = vmatpush.msra.mxu0 0.0
      %1224 = vmatpush.msra.mxu0 0.0
      %1225 = vmatpush.msra.mxu0 %v254
      %1226 = vmatpush.msra.mxu0 %v253
      %1227 = vmatmul.f32.gmra.mxu0 %v1206
      %v1228 = vpop.f32.mrf.mxu0
      %v1229 = vadd.f32 0.0, %v1228
      %1230 = vmatmul.f32.gmra.mxu0 %v1209
      %v1231 = vpop.f32.mrf.mxu0
      %v1232 = vadd.f32 0.0, %v1231
      %1233 = vdwg.mxu0
      %v1235 = vsel %vm500, %v1041, 0
      %v1238 = vsel %vm500, %v1042, 0
      %1240 = vmatpush.msra.mxu0 0.0
      %1241 = vmatpush.msra.mxu0 0.0
      %1242 = vmatpush.msra.mxu0 0.0
      %1243 = vmatpush.msra.mxu0 0.0
      %1244 = vmatpush.msra.mxu0 0.0
      %1245 = vmatpush.msra.mxu0 0.0
      %1246 = vmatpush.msra.mxu0 0.0
      %1247 = vmatpush.msra.mxu0 0.0
      %1248 = vmatpush.msra.mxu0 0.0
      %1249 = vmatpush.msra.mxu0 0.0
      %1250 = vmatpush.msra.mxu0 0.0
      %1251 = vmatpush.msra.mxu0 0.0
      %1252 = vmatpush.msra.mxu0 0.0
      %1253 = vmatpush.msra.mxu0 0.0
      %1254 = vmatpush.msra.mxu0 %v256
      %1255 = vmatpush.msra.mxu0 %v255
      %1256 = vmatmul.f32.gmra.mxu0 %v1235
      %v1257 = vpop.f32.mrf.mxu0
      %v1258 = vadd.f32 0.0, %v1257
      %1259 = vmatmul.f32.gmra.mxu0 %v1238
      %v1260 = vpop.f32.mrf.mxu0
      %v1261 = vadd.f32 0.0, %v1260
      %1262 = vdwg.mxu0
      %v1264 = vsel %vm500, %v1073, 0
      %v1267 = vsel %vm500, %v1074, 0
      %1269 = vmatpush.msra.mxu0 0.0
      %1270 = vmatpush.msra.mxu0 0.0
      %1271 = vmatpush.msra.mxu0 0.0
      %1272 = vmatpush.msra.mxu0 0.0
      %1273 = vmatpush.msra.mxu0 0.0
      %1274 = vmatpush.msra.mxu0 0.0
      %1275 = vmatpush.msra.mxu0 0.0
      %1276 = vmatpush.msra.mxu0 0.0
      %1277 = vmatpush.msra.mxu0 0.0
      %1278 = vmatpush.msra.mxu0 0.0
      %1279 = vmatpush.msra.mxu0 0.0
      %1280 = vmatpush.msra.mxu0 0.0
      %1281 = vmatpush.msra.mxu0 0.0
      %1282 = vmatpush.msra.mxu0 0.0
      %1283 = vmatpush.msra.mxu0 %v258
      %1284 = vmatpush.msra.mxu0 %v257
      %1285 = vmatmul.f32.gmra.mxu0 %v1264
      %v1286 = vpop.f32.mrf.mxu0
      %v1287 = vadd.f32 0.0, %v1286
      %1288 = vmatmul.f32.gmra.mxu0 %v1267
      %v1289 = vpop.f32.mrf.mxu0
      %v1290 = vadd.f32 0.0, %v1289
      %1291 = vdwg.mxu0
      %1293 = vset.pattern.permute.xlu0 0
      %1294 = vperm.xlu0 %1293, %v279
      %v1295 = vpop.permute.xlu0 %1294
      %1298 = vset.pattern.permute.xlu0 0
      %1299 = vperm.xlu0 %1298, %v280
      %v1300 = vpop.permute.xlu0 %1299
      %v1302 = vmul.f32 %v1295, %v247
      %v1303 = vmul.f32 %v1300, %v248
      %v1304 = vmul.f32 %v1295, %v249
      %v1305 = vmul.f32 %v1300, %v250
      %v1306 = vmul.f32 %v1295, %v251
      %v1307 = vmul.f32 %v1300, %v252
      %v1308 = vmul.f32 %v1295, %v253
      %v1309 = vmul.f32 %v1300, %v254
      %v1310 = vmul.f32 %v1295, %v255
      %v1311 = vmul.f32 %v1300, %v256
      %v1312 = vmul.f32 %v1295, %v257
      %v1313 = vmul.f32 %v1300, %v258
      %v1314 = vmul.f32 %v1295, %v259
      %v1315 = vmul.f32 %v1300, %v260
      %v1316 = vsub.f32 1.0, %v279
      %v1317 = vsub.f32 1.0, %v280
      %1319 = vset.pattern.permute.xlu0 0
      %1320 = vperm.xlu0 %1319, %v1316
      %v1321 = vpop.permute.xlu0 %1320
      %1324 = vset.pattern.permute.xlu0 0
      %1325 = vperm.xlu0 %1324, %v1317
      %v1326 = vpop.permute.xlu0 %1325
      %v1328 = vmul.f32 %v1321, %v1113
      %v1329 = vmul.f32 %v1326, %v1116
      %v1330 = vmul.f32 %v1321, %v1142
      %v1331 = vmul.f32 %v1326, %v1145
      %v1332 = vmul.f32 %v1321, %v1171
      %v1333 = vmul.f32 %v1326, %v1174
      %v1334 = vmul.f32 %v1321, %v1200
      %v1335 = vmul.f32 %v1326, %v1203
      %v1336 = vmul.f32 %v1321, %v1229
      %v1337 = vmul.f32 %v1326, %v1232
      %v1338 = vmul.f32 %v1321, %v1258
      %v1339 = vmul.f32 %v1326, %v1261
      %v1340 = vmul.f32 %v1321, %v1287
      %v1341 = vmul.f32 %v1326, %v1290
      %v1342 = vadd.f32 %v1302, %v1328
      %v1343 = vadd.f32 %v1303, %v1329
      %v1344 = vadd.f32 %v1304, %v1330
      %v1345 = vadd.f32 %v1305, %v1331
      %v1346 = vadd.f32 %v1306, %v1332
      %v1347 = vadd.f32 %v1307, %v1333
      %v1348 = vadd.f32 %v1308, %v1334
      %v1349 = vadd.f32 %v1309, %v1335
      %v1350 = vadd.f32 %v1310, %v1336
      %v1351 = vadd.f32 %v1311, %v1337
      %v1352 = vadd.f32 %v1312, %v1338
      %v1353 = vadd.f32 %v1313, %v1339
      %v1354 = vadd.f32 %v1314, %v1340
      %v1355 = vadd.f32 %v1315, %v1341
      %v1357 = vsel %vm282, %v1342, 0
      %v1360 = vsel %vm282, %v1343, 0
      %1362 = vmatpush.xpose.msra.mxu0 0.0
      %1363 = vmatpush.xpose.msra.mxu0 0.0
      %1364 = vmatpush.xpose.msra.mxu0 0.0
      %1365 = vmatpush.xpose.msra.mxu0 0.0
      %1366 = vmatpush.xpose.msra.mxu0 0.0
      %1367 = vmatpush.xpose.msra.mxu0 0.0
      %1368 = vmatpush.xpose.msra.mxu0 0.0
      %1369 = vmatpush.xpose.msra.mxu0 0.0
      %1370 = vmatpush.xpose.msra.mxu0 0.0
      %1371 = vmatpush.xpose.msra.mxu0 0.0
      %1372 = vmatpush.xpose.msra.mxu0 0.0
      %1373 = vmatpush.xpose.msra.mxu0 0.0
      %1374 = vmatpush.xpose.msra.mxu0 0.0
      %1375 = vmatpush.xpose.msra.mxu0 0.0
      %1376 = vmatpush.xpose.msra.mxu0 %v1360
      %1377 = vmatpush.xpose.msra.mxu0 %v1357
      %1378 = vmatmul.f32.gmra.mxu0 %v1357
      %v1379 = vpop.f32.mrf.mxu0
      %v1380 = vadd.f32 0.0, %v1379
      %1381 = vmatmul.f32.gmra.mxu0 %v1360
      %v1382 = vpop.f32.mrf.mxu0
      %v1383 = vadd.f32 0.0, %v1382
      %1384 = vdwg.mxu0
      %v1386 = vsel %vm282, %v1344, 0
      %v1389 = vsel %vm282, %v1345, 0
      %1391 = vmatpush.xpose.msra.mxu0 0.0
      %1392 = vmatpush.xpose.msra.mxu0 0.0
      %1393 = vmatpush.xpose.msra.mxu0 0.0
      %1394 = vmatpush.xpose.msra.mxu0 0.0
      %1395 = vmatpush.xpose.msra.mxu0 0.0
      %1396 = vmatpush.xpose.msra.mxu0 0.0
      %1397 = vmatpush.xpose.msra.mxu0 0.0
      %1398 = vmatpush.xpose.msra.mxu0 0.0
      %1399 = vmatpush.xpose.msra.mxu0 0.0
      %1400 = vmatpush.xpose.msra.mxu0 0.0
      %1401 = vmatpush.xpose.msra.mxu0 0.0
      %1402 = vmatpush.xpose.msra.mxu0 0.0
      %1403 = vmatpush.xpose.msra.mxu0 0.0
      %1404 = vmatpush.xpose.msra.mxu0 0.0
      %1405 = vmatpush.xpose.msra.mxu0 %v1389
      %1406 = vmatpush.xpose.msra.mxu0 %v1386
      %1407 = vmatmul.f32.gmra.mxu0 %v1386
      %v1408 = vpop.f32.mrf.mxu0
      %v1409 = vadd.f32 0.0, %v1408
      %1410 = vmatmul.f32.gmra.mxu0 %v1389
      %v1411 = vpop.f32.mrf.mxu0
      %v1412 = vadd.f32 0.0, %v1411
      %1413 = vdwg.mxu0
      %v1415 = vsel %vm282, %v1346, 0
      %v1418 = vsel %vm282, %v1347, 0
      %1420 = vmatpush.xpose.msra.mxu0 0.0
      %1421 = vmatpush.xpose.msra.mxu0 0.0
      %1422 = vmatpush.xpose.msra.mxu0 0.0
      %1423 = vmatpush.xpose.msra.mxu0 0.0
      %1424 = vmatpush.xpose.msra.mxu0 0.0
      %1425 = vmatpush.xpose.msra.mxu0 0.0
      %1426 = vmatpush.xpose.msra.mxu0 0.0
      %1427 = vmatpush.xpose.msra.mxu0 0.0
      %1428 = vmatpush.xpose.msra.mxu0 0.0
      %1429 = vmatpush.xpose.msra.mxu0 0.0
      %1430 = vmatpush.xpose.msra.mxu0 0.0
      %1431 = vmatpush.xpose.msra.mxu0 0.0
      %1432 = vmatpush.xpose.msra.mxu0 0.0
      %1433 = vmatpush.xpose.msra.mxu0 0.0
      %1434 = vmatpush.xpose.msra.mxu0 %v1418
      %1435 = vmatpush.xpose.msra.mxu0 %v1415
      %1436 = vmatmul.f32.gmra.mxu0 %v1415
      %v1437 = vpop.f32.mrf.mxu0
      %v1438 = vadd.f32 0.0, %v1437
      %1439 = vmatmul.f32.gmra.mxu0 %v1418
      %v1440 = vpop.f32.mrf.mxu0
      %v1441 = vadd.f32 0.0, %v1440
      %1442 = vdwg.mxu0
      %v1444 = vsel %vm282, %v1348, 0
      %v1447 = vsel %vm282, %v1349, 0
      %1449 = vmatpush.xpose.msra.mxu0 0.0
      %1450 = vmatpush.xpose.msra.mxu0 0.0
      %1451 = vmatpush.xpose.msra.mxu0 0.0
      %1452 = vmatpush.xpose.msra.mxu0 0.0
      %1453 = vmatpush.xpose.msra.mxu0 0.0
      %1454 = vmatpush.xpose.msra.mxu0 0.0
      %1455 = vmatpush.xpose.msra.mxu0 0.0
      %1456 = vmatpush.xpose.msra.mxu0 0.0
      %1457 = vmatpush.xpose.msra.mxu0 0.0
      %1458 = vmatpush.xpose.msra.mxu0 0.0
      %1459 = vmatpush.xpose.msra.mxu0 0.0
      %1460 = vmatpush.xpose.msra.mxu0 0.0
      %1461 = vmatpush.xpose.msra.mxu0 0.0
      %1462 = vmatpush.xpose.msra.mxu0 0.0
      %1463 = vmatpush.xpose.msra.mxu0 %v1447
      %1464 = vmatpush.xpose.msra.mxu0 %v1444
      %1465 = vmatmul.f32.gmra.mxu0 %v1444
      %v1466 = vpop.f32.mrf.mxu0
      %v1467 = vadd.f32 0.0, %v1466
      %1468 = vmatmul.f32.gmra.mxu0 %v1447
      %v1469 = vpop.f32.mrf.mxu0
      %v1470 = vadd.f32 0.0, %v1469
      %1471 = vdwg.mxu0
      %v1473 = vsel %vm282, %v1350, 0
      %v1476 = vsel %vm282, %v1351, 0
      %1478 = vmatpush.xpose.msra.mxu0 0.0
      %1479 = vmatpush.xpose.msra.mxu0 0.0
      %1480 = vmatpush.xpose.msra.mxu0 0.0
      %1481 = vmatpush.xpose.msra.mxu0 0.0
      %1482 = vmatpush.xpose.msra.mxu0 0.0
      %1483 = vmatpush.xpose.msra.mxu0 0.0
      %1484 = vmatpush.xpose.msra.mxu0 0.0
      %1485 = vmatpush.xpose.msra.mxu0 0.0
      %1486 = vmatpush.xpose.msra.mxu0 0.0
      %1487 = vmatpush.xpose.msra.mxu0 0.0
      %1488 = vmatpush.xpose.msra.mxu0 0.0
      %1489 = vmatpush.xpose.msra.mxu0 0.0
      %1490 = vmatpush.xpose.msra.mxu0 0.0
      %1491 = vmatpush.xpose.msra.mxu0 0.0
      %1492 = vmatpush.xpose.msra.mxu0 %v1476
      %1493 = vmatpush.xpose.msra.mxu0 %v1473
      %1494 = vmatmul.f32.gmra.mxu0 %v1473
      %v1495 = vpop.f32.mrf.mxu0
      %v1496 = vadd.f32 0.0, %v1495
      %1497 = vmatmul.f32.gmra.mxu0 %v1476
      %v1498 = vpop.f32.mrf.mxu0
      %v1499 = vadd.f32 0.0, %v1498
      %1500 = vdwg.mxu0
      %v1502 = vsel %vm282, %v1352, 0
      %v1505 = vsel %vm282, %v1353, 0
      %1507 = vmatpush.xpose.msra.mxu0 0.0
      %1508 = vmatpush.xpose.msra.mxu0 0.0
      %1509 = vmatpush.xpose.msra.mxu0 0.0
      %1510 = vmatpush.xpose.msra.mxu0 0.0
      %1511 = vmatpush.xpose.msra.mxu0 0.0
      %1512 = vmatpush.xpose.msra.mxu0 0.0
      %1513 = vmatpush.xpose.msra.mxu0 0.0
      %1514 = vmatpush.xpose.msra.mxu0 0.0
      %1515 = vmatpush.xpose.msra.mxu0 0.0
      %1516 = vmatpush.xpose.msra.mxu0 0.0
      %1517 = vmatpush.xpose.msra.mxu0 0.0
      %1518 = vmatpush.xpose.msra.mxu0 0.0
      %1519 = vmatpush.xpose.msra.mxu0 0.0
      %1520 = vmatpush.xpose.msra.mxu0 0.0
      %1521 = vmatpush.xpose.msra.mxu0 %v1505
      %1522 = vmatpush.xpose.msra.mxu0 %v1502
      %1523 = vmatmul.f32.gmra.mxu0 %v1502
      %v1524 = vpop.f32.mrf.mxu0
      %v1525 = vadd.f32 0.0, %v1524
      %1526 = vmatmul.f32.gmra.mxu0 %v1505
      %v1527 = vpop.f32.mrf.mxu0
      %v1528 = vadd.f32 0.0, %v1527
      %1529 = vdwg.mxu0
      %v1531 = vsel %vm282, %v1354, 0
      %v1534 = vsel %vm282, %v1355, 0
      %1536 = vmatpush.xpose.msra.mxu0 0.0
      %1537 = vmatpush.xpose.msra.mxu0 0.0
      %1538 = vmatpush.xpose.msra.mxu0 0.0
      %1539 = vmatpush.xpose.msra.mxu0 0.0
      %1540 = vmatpush.xpose.msra.mxu0 0.0
      %1541 = vmatpush.xpose.msra.mxu0 0.0
      %1542 = vmatpush.xpose.msra.mxu0 0.0
      %1543 = vmatpush.xpose.msra.mxu0 0.0
      %1544 = vmatpush.xpose.msra.mxu0 0.0
      %1545 = vmatpush.xpose.msra.mxu0 0.0
      %1546 = vmatpush.xpose.msra.mxu0 0.0
      %1547 = vmatpush.xpose.msra.mxu0 0.0
      %1548 = vmatpush.xpose.msra.mxu0 0.0
      %1549 = vmatpush.xpose.msra.mxu0 0.0
      %1550 = vmatpush.xpose.msra.mxu0 %v1534
      %1551 = vmatpush.xpose.msra.mxu0 %v1531
      %1552 = vmatmul.f32.gmra.mxu0 %v1531
      %v1553 = vpop.f32.mrf.mxu0
      %v1554 = vadd.f32 0.0, %v1553
      %1555 = vmatmul.f32.gmra.mxu0 %v1534
      %v1556 = vpop.f32.mrf.mxu0
      %v1557 = vadd.f32 0.0, %v1556
      %1558 = vdwg.mxu0
      %v1559 = vmul.f32 %v1380, 0.5
      %v1560 = vmul.f32 %v1383, 0.5
      %v1561 = vmul.f32 %v1409, 0.5
      %v1562 = vmul.f32 %v1412, 0.5
      %v1563 = vmul.f32 %v1438, 0.5
      %v1564 = vmul.f32 %v1441, 0.5
      %v1565 = vmul.f32 %v1467, 0.5
      %v1566 = vmul.f32 %v1470, 0.5
      %v1567 = vmul.f32 %v1496, 0.5
      %v1568 = vmul.f32 %v1499, 0.5
      %v1569 = vmul.f32 %v1525, 0.5
      %v1570 = vmul.f32 %v1528, 0.5
      %v1571 = vmul.f32 %v1554, 0.5
      %v1572 = vmul.f32 %v1557, 0.5
      %v1573 = vsel %vm500, %v1559, -inf
      %1574 = vmax.xlane.f32.xlu0 %v1573
      %v1575 = vpop.xlane.xlu0 %1574
      %v1576 = vsel %vm500, %v1560, -inf
      %1577 = vmax.xlane.f32.xlu0 %v1576
      %v1578 = vpop.xlane.xlu0 %1577
      %v1579 = vsel %vm500, %v1561, -inf
      %1580 = vmax.xlane.f32.xlu0 %v1579
      %v1581 = vpop.xlane.xlu0 %1580
      %v1582 = vsel %vm500, %v1562, -inf
      %1583 = vmax.xlane.f32.xlu0 %v1582
      %v1584 = vpop.xlane.xlu0 %1583
      %v1585 = vsel %vm500, %v1563, -inf
      %1586 = vmax.xlane.f32.xlu0 %v1585
      %v1587 = vpop.xlane.xlu0 %1586
      %v1588 = vsel %vm500, %v1564, -inf
      %1589 = vmax.xlane.f32.xlu0 %v1588
      %v1590 = vpop.xlane.xlu0 %1589
      %v1591 = vsel %vm500, %v1565, -inf
      %1592 = vmax.xlane.f32.xlu0 %v1591
      %v1593 = vpop.xlane.xlu0 %1592
      %v1594 = vsel %vm500, %v1566, -inf
      %1595 = vmax.xlane.f32.xlu0 %v1594
      %v1596 = vpop.xlane.xlu0 %1595
      %v1597 = vsel %vm500, %v1567, -inf
      %1598 = vmax.xlane.f32.xlu0 %v1597
      %v1599 = vpop.xlane.xlu0 %1598
      %v1600 = vsel %vm500, %v1568, -inf
      %1601 = vmax.xlane.f32.xlu0 %v1600
      %v1602 = vpop.xlane.xlu0 %1601
      %v1603 = vsel %vm500, %v1569, -inf
      %1604 = vmax.xlane.f32.xlu0 %v1603
      %v1605 = vpop.xlane.xlu0 %1604
      %v1606 = vsel %vm500, %v1570, -inf
      %1607 = vmax.xlane.f32.xlu0 %v1606
      %v1608 = vpop.xlane.xlu0 %1607
      %v1609 = vsel %vm500, %v1571, -inf
      %1610 = vmax.xlane.f32.xlu0 %v1609
      %v1611 = vpop.xlane.xlu0 %1610
      %v1612 = vsel %vm500, %v1572, -inf
      %1613 = vmax.xlane.f32.xlu0 %v1612
      %v1614 = vpop.xlane.xlu0 %1613
      %v1615 = vsub.f32 %v1559, %v1575
      %v1616 = vsub.f32 %v1560, %v1578
      %v1617 = vsub.f32 %v1561, %v1581
      %v1618 = vsub.f32 %v1562, %v1584
      %v1619 = vsub.f32 %v1563, %v1587
      %v1620 = vsub.f32 %v1564, %v1590
      %v1621 = vsub.f32 %v1565, %v1593
      %v1622 = vsub.f32 %v1566, %v1596
      %v1623 = vsub.f32 %v1567, %v1599
      %v1624 = vsub.f32 %v1568, %v1602
      %v1625 = vsub.f32 %v1569, %v1605
      %v1626 = vsub.f32 %v1570, %v1608
      %v1627 = vsub.f32 %v1571, %v1611
      %v1628 = vsub.f32 %v1572, %v1614
      %v1629 = vmul.f32 %v1615, 1.442695
      %v1630 = vpow.pop %v1629
      %v1631 = vmul.f32 %v1616, 1.442695
      %v1632 = vpow.pop %v1631
      %v1633 = vmul.f32 %v1617, 1.442695
      %v1634 = vpow.pop %v1633
      %v1635 = vmul.f32 %v1618, 1.442695
      %v1636 = vpow.pop %v1635
      %v1637 = vmul.f32 %v1619, 1.442695
      %v1638 = vpow.pop %v1637
      %v1639 = vmul.f32 %v1620, 1.442695
      %v1640 = vpow.pop %v1639
      %v1641 = vmul.f32 %v1621, 1.442695
      %v1642 = vpow.pop %v1641
      %v1643 = vmul.f32 %v1622, 1.442695
      %v1644 = vpow.pop %v1643
      %v1645 = vmul.f32 %v1623, 1.442695
      %v1646 = vpow.pop %v1645
      %v1647 = vmul.f32 %v1624, 1.442695
      %v1648 = vpow.pop %v1647
      %v1649 = vmul.f32 %v1625, 1.442695
      %v1650 = vpow.pop %v1649
      %v1651 = vmul.f32 %v1626, 1.442695
      %v1652 = vpow.pop %v1651
      %v1653 = vmul.f32 %v1627, 1.442695
      %v1654 = vpow.pop %v1653
      %v1655 = vmul.f32 %v1628, 1.442695
      %v1656 = vpow.pop %v1655
      %v1657 = vsel %vm500, %v1630, 0.0
      %1658 = vadd.xlane.f32.xlu0 %v1657
      %v1659 = vpop.xlane.xlu0 %1658
      %v1660 = vsel %vm500, %v1632, 0.0
      %1661 = vadd.xlane.f32.xlu0 %v1660
      %v1662 = vpop.xlane.xlu0 %1661
      %v1663 = vsel %vm500, %v1634, 0.0
      %1664 = vadd.xlane.f32.xlu0 %v1663
      %v1665 = vpop.xlane.xlu0 %1664
      %v1666 = vsel %vm500, %v1636, 0.0
      %1667 = vadd.xlane.f32.xlu0 %v1666
      %v1668 = vpop.xlane.xlu0 %1667
      %v1669 = vsel %vm500, %v1638, 0.0
      %1670 = vadd.xlane.f32.xlu0 %v1669
      %v1671 = vpop.xlane.xlu0 %1670
      %v1672 = vsel %vm500, %v1640, 0.0
      %1673 = vadd.xlane.f32.xlu0 %v1672
      %v1674 = vpop.xlane.xlu0 %1673
      %v1675 = vsel %vm500, %v1642, 0.0
      %1676 = vadd.xlane.f32.xlu0 %v1675
      %v1677 = vpop.xlane.xlu0 %1676
      %v1678 = vsel %vm500, %v1644, 0.0
      %1679 = vadd.xlane.f32.xlu0 %v1678
      %v1680 = vpop.xlane.xlu0 %1679
      %v1681 = vsel %vm500, %v1646, 0.0
      %1682 = vadd.xlane.f32.xlu0 %v1681
      %v1683 = vpop.xlane.xlu0 %1682
      %v1684 = vsel %vm500, %v1648, 0.0
      %1685 = vadd.xlane.f32.xlu0 %v1684
      %v1686 = vpop.xlane.xlu0 %1685
      %v1687 = vsel %vm500, %v1650, 0.0
      %1688 = vadd.xlane.f32.xlu0 %v1687
      %v1689 = vpop.xlane.xlu0 %1688
      %v1690 = vsel %vm500, %v1652, 0.0
      %1691 = vadd.xlane.f32.xlu0 %v1690
      %v1692 = vpop.xlane.xlu0 %1691
      %v1693 = vsel %vm500, %v1654, 0.0
      %1694 = vadd.xlane.f32.xlu0 %v1693
      %v1695 = vpop.xlane.xlu0 %1694
      %v1696 = vsel %vm500, %v1656, 0.0
      %1697 = vadd.xlane.f32.xlu0 %v1696
      %v1698 = vpop.xlane.xlu0 %1697
      %v1699 = vrcp.pop %v1659
      %v1700 = vmul.f32 %v1659, %v1699
      %v1701 = vsub.f32 1.0, %v1700
      %v1702 = vmul.f32 %v1699, %v1701
      %v1703 = vadd.f32 %v1699, %v1702
      %vm1704 = vweird.f32 %v1659
      %vm1705 = vweird.f32 %v1699
      %vm1706 = vmor %vm1704, %vm1705
      %v1707 = vsel %vm1706, %v1699, %v1703
      %v1708 = vand.u32 2147483647, %v1659
      %vm1709 = vcmp.eq.f32.partialorder %v1708, 8.507059e+37
      %v1710 = vand.u32 %v1659, 2147483648
      %v1711 = vor.u32 1.1754944e-38, %v1710
      %v1712 = vsel %vm1709, %v1711, %v1707
      %v1713 = vmul.f32 %v1630, %v1712
      %v1714 = vrcp.pop %v1662
      %v1715 = vmul.f32 %v1662, %v1714
      %v1716 = vsub.f32 1.0, %v1715
      %v1717 = vmul.f32 %v1714, %v1716
      %v1718 = vadd.f32 %v1714, %v1717
      %vm1719 = vweird.f32 %v1662
      %vm1720 = vweird.f32 %v1714
      %vm1721 = vmor %vm1719, %vm1720
      %v1722 = vsel %vm1721, %v1714, %v1718
      %v1723 = vand.u32 2147483647, %v1662
      %vm1724 = vcmp.eq.f32.partialorder %v1723, 8.507059e+37
      %v1725 = vand.u32 %v1662, 2147483648
      %v1726 = vor.u32 1.1754944e-38, %v1725
      %v1727 = vsel %vm1724, %v1726, %v1722
      %v1728 = vmul.f32 %v1632, %v1727
      %v1729 = vrcp.pop %v1665
      %v1730 = vmul.f32 %v1665, %v1729
      %v1731 = vsub.f32 1.0, %v1730
      %v1732 = vmul.f32 %v1729, %v1731
      %v1733 = vadd.f32 %v1729, %v1732
      %vm1734 = vweird.f32 %v1665
      %vm1735 = vweird.f32 %v1729
      %vm1736 = vmor %vm1734, %vm1735
      %v1737 = vsel %vm1736, %v1729, %v1733
      %v1738 = vand.u32 2147483647, %v1665
      %vm1739 = vcmp.eq.f32.partialorder %v1738, 8.507059e+37
      %v1740 = vand.u32 %v1665, 2147483648
      %v1741 = vor.u32 1.1754944e-38, %v1740
      %v1742 = vsel %vm1739, %v1741, %v1737
      %v1743 = vmul.f32 %v1634, %v1742
      %v1744 = vrcp.pop %v1668
      %v1745 = vmul.f32 %v1668, %v1744
      %v1746 = vsub.f32 1.0, %v1745
      %v1747 = vmul.f32 %v1744, %v1746
      %v1748 = vadd.f32 %v1744, %v1747
      %vm1749 = vweird.f32 %v1668
      %vm1750 = vweird.f32 %v1744
      %vm1751 = vmor %vm1749, %vm1750
      %v1752 = vsel %vm1751, %v1744, %v1748
      %v1753 = vand.u32 2147483647, %v1668
      %vm1754 = vcmp.eq.f32.partialorder %v1753, 8.507059e+37
      %v1755 = vand.u32 %v1668, 2147483648
      %v1756 = vor.u32 1.1754944e-38, %v1755
      %v1757 = vsel %vm1754, %v1756, %v1752
      %v1758 = vmul.f32 %v1636, %v1757
      %v1759 = vrcp.pop %v1671
      %v1760 = vmul.f32 %v1671, %v1759
      %v1761 = vsub.f32 1.0, %v1760
      %v1762 = vmul.f32 %v1759, %v1761
      %v1763 = vadd.f32 %v1759, %v1762
      %vm1764 = vweird.f32 %v1671
      %vm1765 = vweird.f32 %v1759
      %vm1766 = vmor %vm1764, %vm1765
      %v1767 = vsel %vm1766, %v1759, %v1763
      %v1768 = vand.u32 2147483647, %v1671
      %vm1769 = vcmp.eq.f32.partialorder %v1768, 8.507059e+37
      %v1770 = vand.u32 %v1671, 2147483648
      %v1771 = vor.u32 1.1754944e-38, %v1770
      %v1772 = vsel %vm1769, %v1771, %v1767
      %v1773 = vmul.f32 %v1638, %v1772
      %v1774 = vrcp.pop %v1674
      %v1775 = vmul.f32 %v1674, %v1774
      %v1776 = vsub.f32 1.0, %v1775
      %v1777 = vmul.f32 %v1774, %v1776
      %v1778 = vadd.f32 %v1774, %v1777
      %vm1779 = vweird.f32 %v1674
      %vm1780 = vweird.f32 %v1774
      %vm1781 = vmor %vm1779, %vm1780
      %v1782 = vsel %vm1781, %v1774, %v1778
      %v1783 = vand.u32 2147483647, %v1674
      %vm1784 = vcmp.eq.f32.partialorder %v1783, 8.507059e+37
      %v1785 = vand.u32 %v1674, 2147483648
      %v1786 = vor.u32 1.1754944e-38, %v1785
      %v1787 = vsel %vm1784, %v1786, %v1782
      %v1788 = vmul.f32 %v1640, %v1787
      %v1789 = vrcp.pop %v1677
      %v1790 = vmul.f32 %v1677, %v1789
      %v1791 = vsub.f32 1.0, %v1790
      %v1792 = vmul.f32 %v1789, %v1791
      %v1793 = vadd.f32 %v1789, %v1792
      %vm1794 = vweird.f32 %v1677
      %vm1795 = vweird.f32 %v1789
      %vm1796 = vmor %vm1794, %vm1795
      %v1797 = vsel %vm1796, %v1789, %v1793
      %v1798 = vand.u32 2147483647, %v1677
      %vm1799 = vcmp.eq.f32.partialorder %v1798, 8.507059e+37
      %v1800 = vand.u32 %v1677, 2147483648
      %v1801 = vor.u32 1.1754944e-38, %v1800
      %v1802 = vsel %vm1799, %v1801, %v1797
      %v1803 = vmul.f32 %v1642, %v1802
      %v1804 = vrcp.pop %v1680
      %v1805 = vmul.f32 %v1680, %v1804
      %v1806 = vsub.f32 1.0, %v1805
      %v1807 = vmul.f32 %v1804, %v1806
      %v1808 = vadd.f32 %v1804, %v1807
      %vm1809 = vweird.f32 %v1680
      %vm1810 = vweird.f32 %v1804
      %vm1811 = vmor %vm1809, %vm1810
      %v1812 = vsel %vm1811, %v1804, %v1808
      %v1813 = vand.u32 2147483647, %v1680
      %vm1814 = vcmp.eq.f32.partialorder %v1813, 8.507059e+37
      %v1815 = vand.u32 %v1680, 2147483648
      %v1816 = vor.u32 1.1754944e-38, %v1815
      %v1817 = vsel %vm1814, %v1816, %v1812
      %v1818 = vmul.f32 %v1644, %v1817
      %v1819 = vrcp.pop %v1683
      %v1820 = vmul.f32 %v1683, %v1819
      %v1821 = vsub.f32 1.0, %v1820
      %v1822 = vmul.f32 %v1819, %v1821
      %v1823 = vadd.f32 %v1819, %v1822
      %vm1824 = vweird.f32 %v1683
      %vm1825 = vweird.f32 %v1819
      %vm1826 = vmor %vm1824, %vm1825
      %v1827 = vsel %vm1826, %v1819, %v1823
      %v1828 = vand.u32 2147483647, %v1683
      %vm1829 = vcmp.eq.f32.partialorder %v1828, 8.507059e+37
      %v1830 = vand.u32 %v1683, 2147483648
      %v1831 = vor.u32 1.1754944e-38, %v1830
      %v1832 = vsel %vm1829, %v1831, %v1827
      %v1833 = vmul.f32 %v1646, %v1832
      %v1834 = vrcp.pop %v1686
      %v1835 = vmul.f32 %v1686, %v1834
      %v1836 = vsub.f32 1.0, %v1835
      %v1837 = vmul.f32 %v1834, %v1836
      %v1838 = vadd.f32 %v1834, %v1837
      %vm1839 = vweird.f32 %v1686
      %vm1840 = vweird.f32 %v1834
      %vm1841 = vmor %vm1839, %vm1840
      %v1842 = vsel %vm1841, %v1834, %v1838
      %v1843 = vand.u32 2147483647, %v1686
      %vm1844 = vcmp.eq.f32.partialorder %v1843, 8.507059e+37
      %v1845 = vand.u32 %v1686, 2147483648
      %v1846 = vor.u32 1.1754944e-38, %v1845
      %v1847 = vsel %vm1844, %v1846, %v1842
      %v1848 = vmul.f32 %v1648, %v1847
      %v1849 = vrcp.pop %v1689
      %v1850 = vmul.f32 %v1689, %v1849
      %v1851 = vsub.f32 1.0, %v1850
      %v1852 = vmul.f32 %v1849, %v1851
      %v1853 = vadd.f32 %v1849, %v1852
      %vm1854 = vweird.f32 %v1689
      %vm1855 = vweird.f32 %v1849
      %vm1856 = vmor %vm1854, %vm1855
      %v1857 = vsel %vm1856, %v1849, %v1853
      %v1858 = vand.u32 2147483647, %v1689
      %vm1859 = vcmp.eq.f32.partialorder %v1858, 8.507059e+37
      %v1860 = vand.u32 %v1689, 2147483648
      %v1861 = vor.u32 1.1754944e-38, %v1860
      %v1862 = vsel %vm1859, %v1861, %v1857
      %v1863 = vmul.f32 %v1650, %v1862
      %v1864 = vrcp.pop %v1692
      %v1865 = vmul.f32 %v1692, %v1864
      %v1866 = vsub.f32 1.0, %v1865
      %v1867 = vmul.f32 %v1864, %v1866
      %v1868 = vadd.f32 %v1864, %v1867
      %vm1869 = vweird.f32 %v1692
      %vm1870 = vweird.f32 %v1864
      %vm1871 = vmor %vm1869, %vm1870
      %v1872 = vsel %vm1871, %v1864, %v1868
      %v1873 = vand.u32 2147483647, %v1692
      %vm1874 = vcmp.eq.f32.partialorder %v1873, 8.507059e+37
      %v1875 = vand.u32 %v1692, 2147483648
      %v1876 = vor.u32 1.1754944e-38, %v1875
      %v1877 = vsel %vm1874, %v1876, %v1872
      %v1878 = vmul.f32 %v1652, %v1877
      %v1879 = vrcp.pop %v1695
      %v1880 = vmul.f32 %v1695, %v1879
      %v1881 = vsub.f32 1.0, %v1880
      %v1882 = vmul.f32 %v1879, %v1881
      %v1883 = vadd.f32 %v1879, %v1882
      %vm1884 = vweird.f32 %v1695
      %vm1885 = vweird.f32 %v1879
      %vm1886 = vmor %vm1884, %vm1885
      %v1887 = vsel %vm1886, %v1879, %v1883
      %v1888 = vand.u32 2147483647, %v1695
      %vm1889 = vcmp.eq.f32.partialorder %v1888, 8.507059e+37
      %v1890 = vand.u32 %v1695, 2147483648
      %v1891 = vor.u32 1.1754944e-38, %v1890
      %v1892 = vsel %vm1889, %v1891, %v1887
      %v1893 = vmul.f32 %v1654, %v1892
      %v1894 = vrcp.pop %v1698
      %v1895 = vmul.f32 %v1698, %v1894
      %v1896 = vsub.f32 1.0, %v1895
      %v1897 = vmul.f32 %v1894, %v1896
      %v1898 = vadd.f32 %v1894, %v1897
      %vm1899 = vweird.f32 %v1698
      %vm1900 = vweird.f32 %v1894
      %vm1901 = vmor %vm1899, %vm1900
      %v1902 = vsel %vm1901, %v1894, %v1898
      %v1903 = vand.u32 2147483647, %v1698
      %vm1904 = vcmp.eq.f32.partialorder %v1903, 8.507059e+37
      %v1905 = vand.u32 %v1698, 2147483648
      %v1906 = vor.u32 1.1754944e-38, %v1905
      %v1907 = vsel %vm1904, %v1906, %v1902
      %v1908 = vmul.f32 %v1656, %v1907
      %v1909 = vmul.f32 %v1713, 0.5
      %v1910 = vmul.f32 %v1728, 0.5
      %v1911 = vmul.f32 %v1743, 0.5
      %v1912 = vmul.f32 %v1758, 0.5
      %v1913 = vmul.f32 %v1773, 0.5
      %v1914 = vmul.f32 %v1788, 0.5
      %v1915 = vmul.f32 %v1803, 0.5
      %v1916 = vmul.f32 %v1818, 0.5
      %v1917 = vmul.f32 %v1833, 0.5
      %v1918 = vmul.f32 %v1848, 0.5
      %v1919 = vmul.f32 %v1863, 0.5
      %v1920 = vmul.f32 %v1878, 0.5
      %v1921 = vmul.f32 %v1893, 0.5
      %v1922 = vmul.f32 %v1908, 0.5
      %v1923 = vmul.f32 %v263, %v1909
      %v1924 = vmul.f32 %v264, %v1910
      %v1925 = vmul.f32 %v265, %v1911
      %v1926 = vmul.f32 %v266, %v1912
      %v1927 = vmul.f32 %v267, %v1913
      %v1928 = vmul.f32 %v268, %v1914
      %v1929 = vmul.f32 %v269, %v1915
      %v1930 = vmul.f32 %v270, %v1916
      %v1931 = vmul.f32 %v271, %v1917
      %v1932 = vmul.f32 %v272, %v1918
      %v1933 = vmul.f32 %v273, %v1919
      %v1934 = vmul.f32 %v274, %v1920
      %v1935 = vmul.f32 %v275, %v1921
      %v1936 = vmul.f32 %v276, %v1922
      %1937 = vxpose.xlu0.b32.start [1/16] %v1923, 128
      %1938 = vxpose.xlu0.b32.cont [2/16] %v1924, 128
      %1939 = vxpose.xlu0.b32.cont [3/16] 0.0, 128
      %1940 = vxpose.xlu0.b32.cont [4/16] 0.0, 128
      %1941 = vxpose.xlu0.b32.cont [5/16] 0.0, 128
      %1942 = vxpose.xlu0.b32.cont [6/16] 0.0, 128
      %1943 = vxpose.xlu0.b32.cont [7/16] 0.0, 128
      %1944 = vxpose.xlu0.b32.cont [8/16] 0.0, 128
      %1945 = vxpose.xlu0.b32.cont [9/16] 0.0, 128
      %1946 = vxpose.xlu0.b32.cont [10/16] 0.0, 128
      %1947 = vxpose.xlu0.b32.cont [11/16] 0.0, 128
      %1948 = vxpose.xlu0.b32.cont [12/16] 0.0, 128
      %1949 = vxpose.xlu0.b32.cont [13/16] 0.0, 128
      %1950 = vxpose.xlu0.b32.cont [14/16] 0.0, 128
      %1951 = vxpose.xlu0.b32.cont [15/16] 0.0, 128
      %1952 = vxpose.xlu0.b32.end [16/16] 0.0, 128
      %v1953 = vpop.trf.xlu0
      %v1954 = vpop.trf.xlu0
      %v1955 = vpop.trf.xlu0
      %v1956 = vpop.trf.xlu0
      %v1957 = vpop.trf.xlu0
      %v1958 = vpop.trf.xlu0
      %v1959 = vpop.trf.xlu0
      %v1960 = vpop.trf.xlu0
      %v1961 = vpop.trf.xlu0
      %v1962 = vpop.trf.xlu0
      %v1963 = vpop.trf.xlu0
      %v1964 = vpop.trf.xlu0
      %v1965 = vpop.trf.xlu0
      %v1966 = vpop.trf.xlu0
      %v1967 = vpop.trf.xlu0
      %v1968 = vpop.trf.xlu0
      %1969 = vxpose.xlu0.b32.start [1/16] %v1925, 128
      %1970 = vxpose.xlu0.b32.cont [2/16] %v1926, 128
      %1971 = vxpose.xlu0.b32.cont [3/16] 0.0, 128
      %1972 = vxpose.xlu0.b32.cont [4/16] 0.0, 128
      %1973 = vxpose.xlu0.b32.cont [5/16] 0.0, 128
      %1974 = vxpose.xlu0.b32.cont [6/16] 0.0, 128
      %1975 = vxpose.xlu0.b32.cont [7/16] 0.0, 128
      %1976 = vxpose.xlu0.b32.cont [8/16] 0.0, 128
      %1977 = vxpose.xlu0.b32.cont [9/16] 0.0, 128
      %1978 = vxpose.xlu0.b32.cont [10/16] 0.0, 128
      %1979 = vxpose.xlu0.b32.cont [11/16] 0.0, 128
      %1980 = vxpose.xlu0.b32.cont [12/16] 0.0, 128
      %1981 = vxpose.xlu0.b32.cont [13/16] 0.0, 128
      %1982 = vxpose.xlu0.b32.cont [14/16] 0.0, 128
      %1983 = vxpose.xlu0.b32.cont [15/16] 0.0, 128
      %1984 = vxpose.xlu0.b32.end [16/16] 0.0, 128
      %v1985 = vpop.trf.xlu0
      %v1986 = vpop.trf.xlu0
      %v1987 = vpop.trf.xlu0
      %v1988 = vpop.trf.xlu0
      %v1989 = vpop.trf.xlu0
      %v1990 = vpop.trf.xlu0
      %v1991 = vpop.trf.xlu0
      %v1992 = vpop.trf.xlu0
      %v1993 = vpop.trf.xlu0
      %v1994 = vpop.trf.xlu0
      %v1995 = vpop.trf.xlu0
      %v1996 = vpop.trf.xlu0
      %v1997 = vpop.trf.xlu0
      %v1998 = vpop.trf.xlu0
      %v1999 = vpop.trf.xlu0
      %v2000 = vpop.trf.xlu0
      %2001 = vxpose.xlu0.b32.start [1/16] %v1927, 128
      %2002 = vxpose.xlu0.b32.cont [2/16] %v1928, 128
      %2003 = vxpose.xlu0.b32.cont [3/16] 0.0, 128
      %2004 = vxpose.xlu0.b32.cont [4/16] 0.0, 128
      %2005 = vxpose.xlu0.b32.cont [5/16] 0.0, 128
      %2006 = vxpose.xlu0.b32.cont [6/16] 0.0, 128
      %2007 = vxpose.xlu0.b32.cont [7/16] 0.0, 128
      %2008 = vxpose.xlu0.b32.cont [8/16] 0.0, 128
      %2009 = vxpose.xlu0.b32.cont [9/16] 0.0, 128
      %2010 = vxpose.xlu0.b32.cont [10/16] 0.0, 128
      %2011 = vxpose.xlu0.b32.cont [11/16] 0.0, 128
      %2012 = vxpose.xlu0.b32.cont [12/16] 0.0, 128
      %2013 = vxpose.xlu0.b32.cont [13/16] 0.0, 128
      %2014 = vxpose.xlu0.b32.cont [14/16] 0.0, 128
      %2015 = vxpose.xlu0.b32.cont [15/16] 0.0, 128
      %2016 = vxpose.xlu0.b32.end [16/16] 0.0, 128
      %v2017 = vpop.trf.xlu0
      %v2018 = vpop.trf.xlu0
      %v2019 = vpop.trf.xlu0
      %v2020 = vpop.trf.xlu0
      %v2021 = vpop.trf.xlu0
      %v2022 = vpop.trf.xlu0
      %v2023 = vpop.trf.xlu0
      %v2024 = vpop.trf.xlu0
      %v2025 = vpop.trf.xlu0
      %v2026 = vpop.trf.xlu0
      %v2027 = vpop.trf.xlu0
      %v2028 = vpop.trf.xlu0
      %v2029 = vpop.trf.xlu0
      %v2030 = vpop.trf.xlu0
      %v2031 = vpop.trf.xlu0
      %v2032 = vpop.trf.xlu0
      %2033 = vxpose.xlu0.b32.start [1/16] %v1929, 128
      %2034 = vxpose.xlu0.b32.cont [2/16] %v1930, 128
      %2035 = vxpose.xlu0.b32.cont [3/16] 0.0, 128
      %2036 = vxpose.xlu0.b32.cont [4/16] 0.0, 128
      %2037 = vxpose.xlu0.b32.cont [5/16] 0.0, 128
      %2038 = vxpose.xlu0.b32.cont [6/16] 0.0, 128
      %2039 = vxpose.xlu0.b32.cont [7/16] 0.0, 128
      %2040 = vxpose.xlu0.b32.cont [8/16] 0.0, 128
      %2041 = vxpose.xlu0.b32.cont [9/16] 0.0, 128
      %2042 = vxpose.xlu0.b32.cont [10/16] 0.0, 128
      %2043 = vxpose.xlu0.b32.cont [11/16] 0.0, 128
      %2044 = vxpose.xlu0.b32.cont [12/16] 0.0, 128
      %2045 = vxpose.xlu0.b32.cont [13/16] 0.0, 128
      %2046 = vxpose.xlu0.b32.cont [14/16] 0.0, 128
      %2047 = vxpose.xlu0.b32.cont [15/16] 0.0, 128
      %2048 = vxpose.xlu0.b32.end [16/16] 0.0, 128
      %v2049 = vpop.trf.xlu0
      %v2050 = vpop.trf.xlu0
      %v2051 = vpop.trf.xlu0
      %v2052 = vpop.trf.xlu0
      %v2053 = vpop.trf.xlu0
      %v2054 = vpop.trf.xlu0
      %v2055 = vpop.trf.xlu0
      %v2056 = vpop.trf.xlu0
      %v2057 = vpop.trf.xlu0
      %v2058 = vpop.trf.xlu0
      %v2059 = vpop.trf.xlu0
      %v2060 = vpop.trf.xlu0
      %v2061 = vpop.trf.xlu0
      %v2062 = vpop.trf.xlu0
      %v2063 = vpop.trf.xlu0
      %v2064 = vpop.trf.xlu0
      %2065 = vxpose.xlu0.b32.start [1/16] %v1931, 128
      %2066 = vxpose.xlu0.b32.cont [2/16] %v1932, 128
      %2067 = vxpose.xlu0.b32.cont [3/16] 0.0, 128
      %2068 = vxpose.xlu0.b32.cont [4/16] 0.0, 128
      %2069 = vxpose.xlu0.b32.cont [5/16] 0.0, 128
      %2070 = vxpose.xlu0.b32.cont [6/16] 0.0, 128
      %2071 = vxpose.xlu0.b32.cont [7/16] 0.0, 128
      %2072 = vxpose.xlu0.b32.cont [8/16] 0.0, 128
      %2073 = vxpose.xlu0.b32.cont [9/16] 0.0, 128
      %2074 = vxpose.xlu0.b32.cont [10/16] 0.0, 128
      %2075 = vxpose.xlu0.b32.cont [11/16] 0.0, 128
      %2076 = vxpose.xlu0.b32.cont [12/16] 0.0, 128
      %2077 = vxpose.xlu0.b32.cont [13/16] 0.0, 128
      %2078 = vxpose.xlu0.b32.cont [14/16] 0.0, 128
      %2079 = vxpose.xlu0.b32.cont [15/16] 0.0, 128
      %2080 = vxpose.xlu0.b32.end [16/16] 0.0, 128
      %v2081 = vpop.trf.xlu0
      %v2082 = vpop.trf.xlu0
      %v2083 = vpop.trf.xlu0
      %v2084 = vpop.trf.xlu0
      %v2085 = vpop.trf.xlu0
      %v2086 = vpop.trf.xlu0
      %v2087 = vpop.trf.xlu0
      %v2088 = vpop.trf.xlu0
      %v2089 = vpop.trf.xlu0
      %v2090 = vpop.trf.xlu0
      %v2091 = vpop.trf.xlu0
      %v2092 = vpop.trf.xlu0
      %v2093 = vpop.trf.xlu0
      %v2094 = vpop.trf.xlu0
      %v2095 = vpop.trf.xlu0
      %v2096 = vpop.trf.xlu0
      %2097 = vxpose.xlu0.b32.start [1/16] %v1933, 128
      %2098 = vxpose.xlu0.b32.cont [2/16] %v1934, 128
      %2099 = vxpose.xlu0.b32.cont [3/16] 0.0, 128
      %2100 = vxpose.xlu0.b32.cont [4/16] 0.0, 128
      %2101 = vxpose.xlu0.b32.cont [5/16] 0.0, 128
      %2102 = vxpose.xlu0.b32.cont [6/16] 0.0, 128
      %2103 = vxpose.xlu0.b32.cont [7/16] 0.0, 128
      %2104 = vxpose.xlu0.b32.cont [8/16] 0.0, 128
      %2105 = vxpose.xlu0.b32.cont [9/16] 0.0, 128
      %2106 = vxpose.xlu0.b32.cont [10/16] 0.0, 128
      %2107 = vxpose.xlu0.b32.cont [11/16] 0.0, 128
      %2108 = vxpose.xlu0.b32.cont [12/16] 0.0, 128
      %2109 = vxpose.xlu0.b32.cont [13/16] 0.0, 128
      %2110 = vxpose.xlu0.b32.cont [14/16] 0.0, 128
      %2111 = vxpose.xlu0.b32.cont [15/16] 0.0, 128
      %2112 = vxpose.xlu0.b32.end [16/16] 0.0, 128
      %v2113 = vpop.trf.xlu0
      %v2114 = vpop.trf.xlu0
      %v2115 = vpop.trf.xlu0
      %v2116 = vpop.trf.xlu0
      %v2117 = vpop.trf.xlu0
      %v2118 = vpop.trf.xlu0
      %v2119 = vpop.trf.xlu0
      %v2120 = vpop.trf.xlu0
      %v2121 = vpop.trf.xlu0
      %v2122 = vpop.trf.xlu0
      %v2123 = vpop.trf.xlu0
      %v2124 = vpop.trf.xlu0
      %v2125 = vpop.trf.xlu0
      %v2126 = vpop.trf.xlu0
      %v2127 = vpop.trf.xlu0
      %v2128 = vpop.trf.xlu0
      %2129 = vxpose.xlu0.b32.start [1/16] %v1935, 128
      %2130 = vxpose.xlu0.b32.cont [2/16] %v1936, 128
      %2131 = vxpose.xlu0.b32.cont [3/16] 0.0, 128
      %2132 = vxpose.xlu0.b32.cont [4/16] 0.0, 128
      %2133 = vxpose.xlu0.b32.cont [5/16] 0.0, 128
      %2134 = vxpose.xlu0.b32.cont [6/16] 0.0, 128
      %2135 = vxpose.xlu0.b32.cont [7/16] 0.0, 128
      %2136 = vxpose.xlu0.b32.cont [8/16] 0.0, 128
      %2137 = vxpose.xlu0.b32.cont [9/16] 0.0, 128
      %2138 = vxpose.xlu0.b32.cont [10/16] 0.0, 128
      %2139 = vxpose.xlu0.b32.cont [11/16] 0.0, 128
      %2140 = vxpose.xlu0.b32.cont [12/16] 0.0, 128
      %2141 = vxpose.xlu0.b32.cont [13/16] 0.0, 128
      %2142 = vxpose.xlu0.b32.cont [14/16] 0.0, 128
      %2143 = vxpose.xlu0.b32.cont [15/16] 0.0, 128
      %2144 = vxpose.xlu0.b32.end [16/16] 0.0, 128
      %v2145 = vpop.trf.xlu0
      %v2146 = vpop.trf.xlu0
      %v2147 = vpop.trf.xlu0
      %v2148 = vpop.trf.xlu0
      %v2149 = vpop.trf.xlu0
      %v2150 = vpop.trf.xlu0
      %v2151 = vpop.trf.xlu0
      %v2152 = vpop.trf.xlu0
      %v2153 = vpop.trf.xlu0
      %v2154 = vpop.trf.xlu0
      %v2155 = vpop.trf.xlu0
      %v2156 = vpop.trf.xlu0
      %v2157 = vpop.trf.xlu0
      %v2158 = vpop.trf.xlu0
      %v2159 = vpop.trf.xlu0
      %v2160 = vpop.trf.xlu0
      %v2162 = vsel %vm500, %v1953, 0
      %v2165 = vsel %vm500, %v1954, 0
      %2167 = vmatpush.msra.mxu0 0.0
      %2168 = vmatpush.msra.mxu0 0.0
      %2169 = vmatpush.msra.mxu0 0.0
      %2170 = vmatpush.msra.mxu0 0.0
      %2171 = vmatpush.msra.mxu0 0.0
      %2172 = vmatpush.msra.mxu0 0.0
      %2173 = vmatpush.msra.mxu0 0.0
      %2174 = vmatpush.msra.mxu0 0.0
      %2175 = vmatpush.msra.mxu0 0.0
      %2176 = vmatpush.msra.mxu0 0.0
      %2177 = vmatpush.msra.mxu0 0.0
      %2178 = vmatpush.msra.mxu0 0.0
      %2179 = vmatpush.msra.mxu0 0.0
      %2180 = vmatpush.msra.mxu0 0.0
      %2181 = vmatpush.msra.mxu0 %v246
      %2182 = vmatpush.msra.mxu0 %v245
      %2183 = vmatmul.f32.gmra.mxu0 %v2162
      %v2184 = vpop.f32.mrf.mxu0
      %v2185 = vadd.f32 0.0, %v2184
      %2186 = vmatmul.f32.gmra.mxu0 %v2165
      %v2187 = vpop.f32.mrf.mxu0
      %v2188 = vadd.f32 0.0, %v2187
      %2189 = vdwg.mxu0
      %v2191 = vsel %vm500, %v1985, 0
      %v2194 = vsel %vm500, %v1986, 0
      %2196 = vmatpush.msra.mxu0 0.0
      %2197 = vmatpush.msra.mxu0 0.0
      %2198 = vmatpush.msra.mxu0 0.0
      %2199 = vmatpush.msra.mxu0 0.0
      %2200 = vmatpush.msra.mxu0 0.0
      %2201 = vmatpush.msra.mxu0 0.0
      %2202 = vmatpush.msra.mxu0 0.0
      %2203 = vmatpush.msra.mxu0 0.0
      %2204 = vmatpush.msra.mxu0 0.0
      %2205 = vmatpush.msra.mxu0 0.0
      %2206 = vmatpush.msra.mxu0 0.0
      %2207 = vmatpush.msra.mxu0 0.0
      %2208 = vmatpush.msra.mxu0 0.0
      %2209 = vmatpush.msra.mxu0 0.0
      %2210 = vmatpush.msra.mxu0 %v1343
      %2211 = vmatpush.msra.mxu0 %v1342
      %2212 = vmatmul.f32.gmra.mxu0 %v2191
      %v2213 = vpop.f32.mrf.mxu0
      %v2214 = vadd.f32 0.0, %v2213
      %2215 = vmatmul.f32.gmra.mxu0 %v2194
      %v2216 = vpop.f32.mrf.mxu0
      %v2217 = vadd.f32 0.0, %v2216
      %2218 = vdwg.mxu0
      %v2220 = vsel %vm500, %v2017, 0
      %v2223 = vsel %vm500, %v2018, 0
      %2225 = vmatpush.msra.mxu0 0.0
      %2226 = vmatpush.msra.mxu0 0.0
      %2227 = vmatpush.msra.mxu0 0.0
      %2228 = vmatpush.msra.mxu0 0.0
      %2229 = vmatpush.msra.mxu0 0.0
      %2230 = vmatpush.msra.mxu0 0.0
      %2231 = vmatpush.msra.mxu0 0.0
      %2232 = vmatpush.msra.mxu0 0.0
      %2233 = vmatpush.msra.mxu0 0.0
      %2234 = vmatpush.msra.mxu0 0.0
      %2235 = vmatpush.msra.mxu0 0.0
      %2236 = vmatpush.msra.mxu0 0.0
      %2237 = vmatpush.msra.mxu0 0.0
      %2238 = vmatpush.msra.mxu0 0.0
      %2239 = vmatpush.msra.mxu0 %v1345
      %2240 = vmatpush.msra.mxu0 %v1344
      %2241 = vmatmul.f32.gmra.mxu0 %v2220
      %v2242 = vpop.f32.mrf.mxu0
      %v2243 = vadd.f32 0.0, %v2242
      %2244 = vmatmul.f32.gmra.mxu0 %v2223
      %v2245 = vpop.f32.mrf.mxu0
      %v2246 = vadd.f32 0.0, %v2245
      %2247 = vdwg.mxu0
      %v2249 = vsel %vm500, %v2049, 0
      %v2252 = vsel %vm500, %v2050, 0
      %2254 = vmatpush.msra.mxu0 0.0
      %2255 = vmatpush.msra.mxu0 0.0
      %2256 = vmatpush.msra.mxu0 0.0
      %2257 = vmatpush.msra.mxu0 0.0
      %2258 = vmatpush.msra.mxu0 0.0
      %2259 = vmatpush.msra.mxu0 0.0
      %2260 = vmatpush.msra.mxu0 0.0
      %2261 = vmatpush.msra.mxu0 0.0
      %2262 = vmatpush.msra.mxu0 0.0
      %2263 = vmatpush.msra.mxu0 0.0
      %2264 = vmatpush.msra.mxu0 0.0
      %2265 = vmatpush.msra.mxu0 0.0
      %2266 = vmatpush.msra.mxu0 0.0
      %2267 = vmatpush.msra.mxu0 0.0
      %2268 = vmatpush.msra.mxu0 %v1347
      %2269 = vmatpush.msra.mxu0 %v1346
      %2270 = vmatmul.f32.gmra.mxu0 %v2249
      %v2271 = vpop.f32.mrf.mxu0
      %v2272 = vadd.f32 0.0, %v2271
      %2273 = vmatmul.f32.gmra.mxu0 %v2252
      %v2274 = vpop.f32.mrf.mxu0
      %v2275 = vadd.f32 0.0, %v2274
      %2276 = vdwg.mxu0
      %v2278 = vsel %vm500, %v2081, 0
      %v2281 = vsel %vm500, %v2082, 0
      %2283 = vmatpush.msra.mxu0 0.0
      %2284 = vmatpush.msra.mxu0 0.0
      %2285 = vmatpush.msra.mxu0 0.0
      %2286 = vmatpush.msra.mxu0 0.0
      %2287 = vmatpush.msra.mxu0 0.0
      %2288 = vmatpush.msra.mxu0 0.0
      %2289 = vmatpush.msra.mxu0 0.0
      %2290 = vmatpush.msra.mxu0 0.0
      %2291 = vmatpush.msra.mxu0 0.0
      %2292 = vmatpush.msra.mxu0 0.0
      %2293 = vmatpush.msra.mxu0 0.0
      %2294 = vmatpush.msra.mxu0 0.0
      %2295 = vmatpush.msra.mxu0 0.0
      %2296 = vmatpush.msra.mxu0 0.0
      %2297 = vmatpush.msra.mxu0 %v1349
      %2298 = vmatpush.msra.mxu0 %v1348
      %2299 = vmatmul.f32.gmra.mxu0 %v2278
      %v2300 = vpop.f32.mrf.mxu0
      %v2301 = vadd.f32 0.0, %v2300
      %2302 = vmatmul.f32.gmra.mxu0 %v2281
      %v2303 = vpop.f32.mrf.mxu0
      %v2304 = vadd.f32 0.0, %v2303
      %2305 = vdwg.mxu0
      %v2307 = vsel %vm500, %v2113, 0
      %v2310 = vsel %vm500, %v2114, 0
      %2312 = vmatpush.msra.mxu0 0.0
      %2313 = vmatpush.msra.mxu0 0.0
      %2314 = vmatpush.msra.mxu0 0.0
      %2315 = vmatpush.msra.mxu0 0.0
      %2316 = vmatpush.msra.mxu0 0.0
      %2317 = vmatpush.msra.mxu0 0.0
      %2318 = vmatpush.msra.mxu0 0.0
      %2319 = vmatpush.msra.mxu0 0.0
      %2320 = vmatpush.msra.mxu0 0.0
      %2321 = vmatpush.msra.mxu0 0.0
      %2322 = vmatpush.msra.mxu0 0.0
      %2323 = vmatpush.msra.mxu0 0.0
      %2324 = vmatpush.msra.mxu0 0.0
      %2325 = vmatpush.msra.mxu0 0.0
      %2326 = vmatpush.msra.mxu0 %v1351
      %2327 = vmatpush.msra.mxu0 %v1350
      %2328 = vmatmul.f32.gmra.mxu0 %v2307
      %v2329 = vpop.f32.mrf.mxu0
      %v2330 = vadd.f32 0.0, %v2329
      %2331 = vmatmul.f32.gmra.mxu0 %v2310
      %v2332 = vpop.f32.mrf.mxu0
      %v2333 = vadd.f32 0.0, %v2332
      %2334 = vdwg.mxu0
      %v2336 = vsel %vm500, %v2145, 0
      %v2339 = vsel %vm500, %v2146, 0
      %2341 = vmatpush.msra.mxu0 0.0
      %2342 = vmatpush.msra.mxu0 0.0
      %2343 = vmatpush.msra.mxu0 0.0
      %2344 = vmatpush.msra.mxu0 0.0
      %2345 = vmatpush.msra.mxu0 0.0
      %2346 = vmatpush.msra.mxu0 0.0
      %2347 = vmatpush.msra.mxu0 0.0
      %2348 = vmatpush.msra.mxu0 0.0
      %2349 = vmatpush.msra.mxu0 0.0
      %2350 = vmatpush.msra.mxu0 0.0
      %2351 = vmatpush.msra.mxu0 0.0
      %2352 = vmatpush.msra.mxu0 0.0
      %2353 = vmatpush.msra.mxu0 0.0
      %2354 = vmatpush.msra.mxu0 0.0
      %2355 = vmatpush.msra.mxu0 %v1353
      %2356 = vmatpush.msra.mxu0 %v1352
      %2357 = vmatmul.f32.gmra.mxu0 %v2336
      %v2358 = vpop.f32.mrf.mxu0
      %v2359 = vadd.f32 0.0, %v2358
      %2360 = vmatmul.f32.gmra.mxu0 %v2339
      %v2361 = vpop.f32.mrf.mxu0
      %v2362 = vadd.f32 0.0, %v2361
      %2363 = vdwg.mxu0
      %v2364 = vmul.f32 %v1295, %v1342
      %v2365 = vmul.f32 %v1300, %v1343
      %v2366 = vmul.f32 %v1295, %v1344
      %v2367 = vmul.f32 %v1300, %v1345
      %v2368 = vmul.f32 %v1295, %v1346
      %v2369 = vmul.f32 %v1300, %v1347
      %v2370 = vmul.f32 %v1295, %v1348
      %v2371 = vmul.f32 %v1300, %v1349
      %v2372 = vmul.f32 %v1295, %v1350
      %v2373 = vmul.f32 %v1300, %v1351
      %v2374 = vmul.f32 %v1295, %v1352
      %v2375 = vmul.f32 %v1300, %v1353
      %v2376 = vmul.f32 %v1295, %v1354
      %v2377 = vmul.f32 %v1300, %v1355
      %v2378 = vmul.f32 %v1321, %v2185
      %v2379 = vmul.f32 %v1326, %v2188
      %v2380 = vmul.f32 %v1321, %v2214
      %v2381 = vmul.f32 %v1326, %v2217
      %v2382 = vmul.f32 %v1321, %v2243
      %v2383 = vmul.f32 %v1326, %v2246
      %v2384 = vmul.f32 %v1321, %v2272
      %v2385 = vmul.f32 %v1326, %v2275
      %v2386 = vmul.f32 %v1321, %v2301
      %v2387 = vmul.f32 %v1326, %v2304
      %v2388 = vmul.f32 %v1321, %v2330
      %v2389 = vmul.f32 %v1326, %v2333
      %v2390 = vmul.f32 %v1321, %v2359
      %v2391 = vmul.f32 %v1326, %v2362
      %v2392 = vadd.f32 %v2364, %v2378
      %v2393 = vadd.f32 %v2365, %v2379
      %v2394 = vadd.f32 %v2366, %v2380
      %v2395 = vadd.f32 %v2367, %v2381
      %v2396 = vadd.f32 %v2368, %v2382
      %v2397 = vadd.f32 %v2369, %v2383
      %v2398 = vadd.f32 %v2370, %v2384
      %v2399 = vadd.f32 %v2371, %v2385
      %v2400 = vadd.f32 %v2372, %v2386
      %v2401 = vadd.f32 %v2373, %v2387
      %v2402 = vadd.f32 %v2374, %v2388
      %v2403 = vadd.f32 %v2375, %v2389
      %v2404 = vadd.f32 %v2376, %v2390
      %v2405 = vadd.f32 %v2377, %v2391
      %v2407 = vsel %vm282, %v2392, 0
      %v2410 = vsel %vm282, %v2393, 0
      %2412 = vmatpush.xpose.msra.mxu0 0.0
      %2413 = vmatpush.xpose.msra.mxu0 0.0
      %2414 = vmatpush.xpose.msra.mxu0 0.0
      %2415 = vmatpush.xpose.msra.mxu0 0.0
      %2416 = vmatpush.xpose.msra.mxu0 0.0
      %2417 = vmatpush.xpose.msra.mxu0 0.0
      %2418 = vmatpush.xpose.msra.mxu0 0.0
      %2419 = vmatpush.xpose.msra.mxu0 0.0
      %2420 = vmatpush.xpose.msra.mxu0 0.0
      %2421 = vmatpush.xpose.msra.mxu0 0.0
      %2422 = vmatpush.xpose.msra.mxu0 0.0
      %2423 = vmatpush.xpose.msra.mxu0 0.0
      %2424 = vmatpush.xpose.msra.mxu0 0.0
      %2425 = vmatpush.xpose.msra.mxu0 0.0
      %2426 = vmatpush.xpose.msra.mxu0 %v2410
      %2427 = vmatpush.xpose.msra.mxu0 %v2407
      %2428 = vmatmul.f32.gmra.mxu0 %v2407
      %v2429 = vpop.f32.mrf.mxu0
      %v2430 = vadd.f32 0.0, %v2429
      %2431 = vmatmul.f32.gmra.mxu0 %v2410
      %v2432 = vpop.f32.mrf.mxu0
      %v2433 = vadd.f32 0.0, %v2432
      %2434 = vdwg.mxu0
      %v2436 = vsel %vm282, %v2394, 0
      %v2439 = vsel %vm282, %v2395, 0
      %2441 = vmatpush.xpose.msra.mxu0 0.0
      %2442 = vmatpush.xpose.msra.mxu0 0.0
      %2443 = vmatpush.xpose.msra.mxu0 0.0
      %2444 = vmatpush.xpose.msra.mxu0 0.0
      %2445 = vmatpush.xpose.msra.mxu0 0.0
      %2446 = vmatpush.xpose.msra.mxu0 0.0
      %2447 = vmatpush.xpose.msra.mxu0 0.0
      %2448 = vmatpush.xpose.msra.mxu0 0.0
      %2449 = vmatpush.xpose.msra.mxu0 0.0
      %2450 = vmatpush.xpose.msra.mxu0 0.0
      %2451 = vmatpush.xpose.msra.mxu0 0.0
      %2452 = vmatpush.xpose.msra.mxu0 0.0
      %2453 = vmatpush.xpose.msra.mxu0 0.0
      %2454 = vmatpush.xpose.msra.mxu0 0.0
      %2455 = vmatpush.xpose.msra.mxu0 %v2439
      %2456 = vmatpush.xpose.msra.mxu0 %v2436
      %2457 = vmatmul.f32.gmra.mxu0 %v2436
      %v2458 = vpop.f32.mrf.mxu0
      %v2459 = vadd.f32 0.0, %v2458
      %2460 = vmatmul.f32.gmra.mxu0 %v2439
      %v2461 = vpop.f32.mrf.mxu0
      %v2462 = vadd.f32 0.0, %v2461
      %2463 = vdwg.mxu0
      %v2465 = vsel %vm282, %v2396, 0
      %v2468 = vsel %vm282, %v2397, 0
      %2470 = vmatpush.xpose.msra.mxu0 0.0
      %2471 = vmatpush.xpose.msra.mxu0 0.0
      %2472 = vmatpush.xpose.msra.mxu0 0.0
      %2473 = vmatpush.xpose.msra.mxu0 0.0
      %2474 = vmatpush.xpose.msra.mxu0 0.0
      %2475 = vmatpush.xpose.msra.mxu0 0.0
      %2476 = vmatpush.xpose.msra.mxu0 0.0
      %2477 = vmatpush.xpose.msra.mxu0 0.0
      %2478 = vmatpush.xpose.msra.mxu0 0.0
      %2479 = vmatpush.xpose.msra.mxu0 0.0
      %2480 = vmatpush.xpose.msra.mxu0 0.0
      %2481 = vmatpush.xpose.msra.mxu0 0.0
      %2482 = vmatpush.xpose.msra.mxu0 0.0
      %2483 = vmatpush.xpose.msra.mxu0 0.0
      %2484 = vmatpush.xpose.msra.mxu0 %v2468
      %2485 = vmatpush.xpose.msra.mxu0 %v2465
      %2486 = vmatmul.f32.gmra.mxu0 %v2465
      %v2487 = vpop.f32.mrf.mxu0
      %v2488 = vadd.f32 0.0, %v2487
      %2489 = vmatmul.f32.gmra.mxu0 %v2468
      %v2490 = vpop.f32.mrf.mxu0
      %v2491 = vadd.f32 0.0, %v2490
      %2492 = vdwg.mxu0
      %v2494 = vsel %vm282, %v2398, 0
      %v2497 = vsel %vm282, %v2399, 0
      %2499 = vmatpush.xpose.msra.mxu0 0.0
      %2500 = vmatpush.xpose.msra.mxu0 0.0
      %2501 = vmatpush.xpose.msra.mxu0 0.0
      %2502 = vmatpush.xpose.msra.mxu0 0.0
      %2503 = vmatpush.xpose.msra.mxu0 0.0
      %2504 = vmatpush.xpose.msra.mxu0 0.0
      %2505 = vmatpush.xpose.msra.mxu0 0.0
      %2506 = vmatpush.xpose.msra.mxu0 0.0
      %2507 = vmatpush.xpose.msra.mxu0 0.0
      %2508 = vmatpush.xpose.msra.mxu0 0.0
      %2509 = vmatpush.xpose.msra.mxu0 0.0
      %2510 = vmatpush.xpose.msra.mxu0 0.0
      %2511 = vmatpush.xpose.msra.mxu0 0.0
      %2512 = vmatpush.xpose.msra.mxu0 0.0
      %2513 = vmatpush.xpose.msra.mxu0 %v2497
      %2514 = vmatpush.xpose.msra.mxu0 %v2494
      %2515 = vmatmul.f32.gmra.mxu0 %v2494
      %v2516 = vpop.f32.mrf.mxu0
      %v2517 = vadd.f32 0.0, %v2516
      %2518 = vmatmul.f32.gmra.mxu0 %v2497
      %v2519 = vpop.f32.mrf.mxu0
      %v2520 = vadd.f32 0.0, %v2519
      %2521 = vdwg.mxu0
      %v2523 = vsel %vm282, %v2400, 0
      %v2526 = vsel %vm282, %v2401, 0
      %2528 = vmatpush.xpose.msra.mxu0 0.0
      %2529 = vmatpush.xpose.msra.mxu0 0.0
      %2530 = vmatpush.xpose.msra.mxu0 0.0
      %2531 = vmatpush.xpose.msra.mxu0 0.0
      %2532 = vmatpush.xpose.msra.mxu0 0.0
      %2533 = vmatpush.xpose.msra.mxu0 0.0
      %2534 = vmatpush.xpose.msra.mxu0 0.0
      %2535 = vmatpush.xpose.msra.mxu0 0.0
      %2536 = vmatpush.xpose.msra.mxu0 0.0
      %2537 = vmatpush.xpose.msra.mxu0 0.0
      %2538 = vmatpush.xpose.msra.mxu0 0.0
      %2539 = vmatpush.xpose.msra.mxu0 0.0
      %2540 = vmatpush.xpose.msra.mxu0 0.0
      %2541 = vmatpush.xpose.msra.mxu0 0.0
      %2542 = vmatpush.xpose.msra.mxu0 %v2526
      %2543 = vmatpush.xpose.msra.mxu0 %v2523
      %2544 = vmatmul.f32.gmra.mxu0 %v2523
      %v2545 = vpop.f32.mrf.mxu0
      %v2546 = vadd.f32 0.0, %v2545
      %2547 = vmatmul.f32.gmra.mxu0 %v2526
      %v2548 = vpop.f32.mrf.mxu0
      %v2549 = vadd.f32 0.0, %v2548
      %2550 = vdwg.mxu0
      %v2552 = vsel %vm282, %v2402, 0
      %v2555 = vsel %vm282, %v2403, 0
      %2557 = vmatpush.xpose.msra.mxu0 0.0
      %2558 = vmatpush.xpose.msra.mxu0 0.0
      %2559 = vmatpush.xpose.msra.mxu0 0.0
      %2560 = vmatpush.xpose.msra.mxu0 0.0
      %2561 = vmatpush.xpose.msra.mxu0 0.0
      %2562 = vmatpush.xpose.msra.mxu0 0.0
      %2563 = vmatpush.xpose.msra.mxu0 0.0
      %2564 = vmatpush.xpose.msra.mxu0 0.0
      %2565 = vmatpush.xpose.msra.mxu0 0.0
      %2566 = vmatpush.xpose.msra.mxu0 0.0
      %2567 = vmatpush.xpose.msra.mxu0 0.0
      %2568 = vmatpush.xpose.msra.mxu0 0.0
      %2569 = vmatpush.xpose.msra.mxu0 0.0
      %2570 = vmatpush.xpose.msra.mxu0 0.0
      %2571 = vmatpush.xpose.msra.mxu0 %v2555
      %2572 = vmatpush.xpose.msra.mxu0 %v2552
      %2573 = vmatmul.f32.gmra.mxu0 %v2552
      %v2574 = vpop.f32.mrf.mxu0
      %v2575 = vadd.f32 0.0, %v2574
      %2576 = vmatmul.f32.gmra.mxu0 %v2555
      %v2577 = vpop.f32.mrf.mxu0
      %v2578 = vadd.f32 0.0, %v2577
      %2579 = vdwg.mxu0
      %v2581 = vsel %vm282, %v2404, 0
      %v2584 = vsel %vm282, %v2405, 0
      %2586 = vmatpush.xpose.msra.mxu0 0.0
      %2587 = vmatpush.xpose.msra.mxu0 0.0
      %2588 = vmatpush.xpose.msra.mxu0 0.0
      %2589 = vmatpush.xpose.msra.mxu0 0.0
      %2590 = vmatpush.xpose.msra.mxu0 0.0
      %2591 = vmatpush.xpose.msra.mxu0 0.0
      %2592 = vmatpush.xpose.msra.mxu0 0.0
      %2593 = vmatpush.xpose.msra.mxu0 0.0
      %2594 = vmatpush.xpose.msra.mxu0 0.0
      %2595 = vmatpush.xpose.msra.mxu0 0.0
      %2596 = vmatpush.xpose.msra.mxu0 0.0
      %2597 = vmatpush.xpose.msra.mxu0 0.0
      %2598 = vmatpush.xpose.msra.mxu0 0.0
      %2599 = vmatpush.xpose.msra.mxu0 0.0
      %2600 = vmatpush.xpose.msra.mxu0 %v2584
      %2601 = vmatpush.xpose.msra.mxu0 %v2581
      %2602 = vmatmul.f32.gmra.mxu0 %v2581
      %v2603 = vpop.f32.mrf.mxu0
      %v2604 = vadd.f32 0.0, %v2603
      %2605 = vmatmul.f32.gmra.mxu0 %v2584
      %v2606 = vpop.f32.mrf.mxu0
      %v2607 = vadd.f32 0.0, %v2606
      %2608 = vdwg.mxu0
      %v2609 = vmul.f32 %v2430, 0.5
      %v2610 = vmul.f32 %v2433, 0.5
      %v2611 = vmul.f32 %v2459, 0.5
      %v2612 = vmul.f32 %v2462, 0.5
      %v2613 = vmul.f32 %v2488, 0.5
      %v2614 = vmul.f32 %v2491, 0.5
      %v2615 = vmul.f32 %v2517, 0.5
      %v2616 = vmul.f32 %v2520, 0.5
      %v2617 = vmul.f32 %v2546, 0.5
      %v2618 = vmul.f32 %v2549, 0.5
      %v2619 = vmul.f32 %v2575, 0.5
      %v2620 = vmul.f32 %v2578, 0.5
      %v2621 = vmul.f32 %v2604, 0.5
      %v2622 = vmul.f32 %v2607, 0.5
      %v2623 = vsel %vm500, %v2609, -inf
      %2624 = vmax.xlane.f32.xlu0 %v2623
      %v2625 = vpop.xlane.xlu0 %2624
      %v2626 = vsel %vm500, %v2610, -inf
      %2627 = vmax.xlane.f32.xlu0 %v2626
      %v2628 = vpop.xlane.xlu0 %2627
      %v2629 = vsel %vm500, %v2611, -inf
      %2630 = vmax.xlane.f32.xlu0 %v2629
      %v2631 = vpop.xlane.xlu0 %2630
      %v2632 = vsel %vm500, %v2612, -inf
      %2633 = vmax.xlane.f32.xlu0 %v2632
      %v2634 = vpop.xlane.xlu0 %2633
      %v2635 = vsel %vm500, %v2613, -inf
      %2636 = vmax.xlane.f32.xlu0 %v2635
      %v2637 = vpop.xlane.xlu0 %2636
      %v2638 = vsel %vm500, %v2614, -inf
      %2639 = vmax.xlane.f32.xlu0 %v2638
      %v2640 = vpop.xlane.xlu0 %2639
      %v2641 = vsel %vm500, %v2615, -inf
      %2642 = vmax.xlane.f32.xlu0 %v2641
      %v2643 = vpop.xlane.xlu0 %2642
      %v2644 = vsel %vm500, %v2616, -inf
      %2645 = vmax.xlane.f32.xlu0 %v2644
      %v2646 = vpop.xlane.xlu0 %2645
      %v2647 = vsel %vm500, %v2617, -inf
      %2648 = vmax.xlane.f32.xlu0 %v2647
      %v2649 = vpop.xlane.xlu0 %2648
      %v2650 = vsel %vm500, %v2618, -inf
      %2651 = vmax.xlane.f32.xlu0 %v2650
      %v2652 = vpop.xlane.xlu0 %2651
      %v2653 = vsel %vm500, %v2619, -inf
      %2654 = vmax.xlane.f32.xlu0 %v2653
      %v2655 = vpop.xlane.xlu0 %2654
      %v2656 = vsel %vm500, %v2620, -inf
      %2657 = vmax.xlane.f32.xlu0 %v2656
      %v2658 = vpop.xlane.xlu0 %2657
      %v2659 = vsel %vm500, %v2621, -inf
      %2660 = vmax.xlane.f32.xlu0 %v2659
      %v2661 = vpop.xlane.xlu0 %2660
      %v2662 = vsel %vm500, %v2622, -inf
      %2663 = vmax.xlane.f32.xlu0 %v2662
      %v2664 = vpop.xlane.xlu0 %2663
      %v2665 = vsub.f32 %v2609, %v2625
      %v2666 = vsub.f32 %v2610, %v2628
      %v2667 = vsub.f32 %v2611, %v2631
      %v2668 = vsub.f32 %v2612, %v2634
      %v2669 = vsub.f32 %v2613, %v2637
      %v2670 = vsub.f32 %v2614, %v2640
      %v2671 = vsub.f32 %v2615, %v2643
      %v2672 = vsub.f32 %v2616, %v2646
      %v2673 = vsub.f32 %v2617, %v2649
      %v2674 = vsub.f32 %v2618, %v2652
      %v2675 = vsub.f32 %v2619, %v2655
      %v2676 = vsub.f32 %v2620, %v2658
      %v2677 = vsub.f32 %v2621, %v2661
      %v2678 = vsub.f32 %v2622, %v2664
      %v2679 = vmul.f32 %v2665, 1.442695
      %v2680 = vpow.pop %v2679
      %v2681 = vmul.f32 %v2666, 1.442695
      %v2682 = vpow.pop %v2681
      %v2683 = vmul.f32 %v2667, 1.442695
      %v2684 = vpow.pop %v2683
      %v2685 = vmul.f32 %v2668, 1.442695
      %v2686 = vpow.pop %v2685
      %v2687 = vmul.f32 %v2669, 1.442695
      %v2688 = vpow.pop %v2687
      %v2689 = vmul.f32 %v2670, 1.442695
      %v2690 = vpow.pop %v2689
      %v2691 = vmul.f32 %v2671, 1.442695
      %v2692 = vpow.pop %v2691
      %v2693 = vmul.f32 %v2672, 1.442695
      %v2694 = vpow.pop %v2693
      %v2695 = vmul.f32 %v2673, 1.442695
      %v2696 = vpow.pop %v2695
      %v2697 = vmul.f32 %v2674, 1.442695
      %v2698 = vpow.pop %v2697
      %v2699 = vmul.f32 %v2675, 1.442695
      %v2700 = vpow.pop %v2699
      %v2701 = vmul.f32 %v2676, 1.442695
      %v2702 = vpow.pop %v2701
      %v2703 = vmul.f32 %v2677, 1.442695
      %v2704 = vpow.pop %v2703
      %v2705 = vmul.f32 %v2678, 1.442695
      %v2706 = vpow.pop %v2705
      %v2707 = vsel %vm500, %v2680, 0.0
      %2708 = vadd.xlane.f32.xlu0 %v2707
      %v2709 = vpop.xlane.xlu0 %2708
      %v2710 = vsel %vm500, %v2682, 0.0
      %2711 = vadd.xlane.f32.xlu0 %v2710
      %v2712 = vpop.xlane.xlu0 %2711
      %v2713 = vsel %vm500, %v2684, 0.0
      %2714 = vadd.xlane.f32.xlu0 %v2713
      %v2715 = vpop.xlane.xlu0 %2714
      %v2716 = vsel %vm500, %v2686, 0.0
      %2717 = vadd.xlane.f32.xlu0 %v2716
      %v2718 = vpop.xlane.xlu0 %2717
      %v2719 = vsel %vm500, %v2688, 0.0
      %2720 = vadd.xlane.f32.xlu0 %v2719
      %v2721 = vpop.xlane.xlu0 %2720
      %v2722 = vsel %vm500, %v2690, 0.0
      %2723 = vadd.xlane.f32.xlu0 %v2722
      %v2724 = vpop.xlane.xlu0 %2723
      %v2725 = vsel %vm500, %v2692, 0.0
      %2726 = vadd.xlane.f32.xlu0 %v2725
      %v2727 = vpop.xlane.xlu0 %2726
      %v2728 = vsel %vm500, %v2694, 0.0
      %2729 = vadd.xlane.f32.xlu0 %v2728
      %v2730 = vpop.xlane.xlu0 %2729
      %v2731 = vsel %vm500, %v2696, 0.0
      %2732 = vadd.xlane.f32.xlu0 %v2731
      %v2733 = vpop.xlane.xlu0 %2732
      %v2734 = vsel %vm500, %v2698, 0.0
      %2735 = vadd.xlane.f32.xlu0 %v2734
      %v2736 = vpop.xlane.xlu0 %2735
      %v2737 = vsel %vm500, %v2700, 0.0
      %2738 = vadd.xlane.f32.xlu0 %v2737
      %v2739 = vpop.xlane.xlu0 %2738
      %v2740 = vsel %vm500, %v2702, 0.0
      %2741 = vadd.xlane.f32.xlu0 %v2740
      %v2742 = vpop.xlane.xlu0 %2741
      %v2743 = vsel %vm500, %v2704, 0.0
      %2744 = vadd.xlane.f32.xlu0 %v2743
      %v2745 = vpop.xlane.xlu0 %2744
      %v2746 = vsel %vm500, %v2706, 0.0
      %2747 = vadd.xlane.f32.xlu0 %v2746
      %v2748 = vpop.xlane.xlu0 %2747
      %v2749 = vrcp.pop %v2709
      %v2750 = vmul.f32 %v2709, %v2749
      %v2751 = vsub.f32 1.0, %v2750
      %v2752 = vmul.f32 %v2749, %v2751
      %v2753 = vadd.f32 %v2749, %v2752
      %vm2754 = vweird.f32 %v2709
      %vm2755 = vweird.f32 %v2749
      %vm2756 = vmor %vm2754, %vm2755
      %v2757 = vsel %vm2756, %v2749, %v2753
      %v2758 = vand.u32 2147483647, %v2709
      %vm2759 = vcmp.eq.f32.partialorder %v2758, 8.507059e+37
      %v2760 = vand.u32 %v2709, 2147483648
      %v2761 = vor.u32 1.1754944e-38, %v2760
      %v2762 = vsel %vm2759, %v2761, %v2757
      %v2763 = vmul.f32 %v2680, %v2762
      %v2764 = vrcp.pop %v2712
      %v2765 = vmul.f32 %v2712, %v2764
      %v2766 = vsub.f32 1.0, %v2765
      %v2767 = vmul.f32 %v2764, %v2766
      %v2768 = vadd.f32 %v2764, %v2767
      %vm2769 = vweird.f32 %v2712
      %vm2770 = vweird.f32 %v2764
      %vm2771 = vmor %vm2769, %vm2770
      %v2772 = vsel %vm2771, %v2764, %v2768
      %v2773 = vand.u32 2147483647, %v2712
      %vm2774 = vcmp.eq.f32.partialorder %v2773, 8.507059e+37
      %v2775 = vand.u32 %v2712, 2147483648
      %v2776 = vor.u32 1.1754944e-38, %v2775
      %v2777 = vsel %vm2774, %v2776, %v2772
      %v2778 = vmul.f32 %v2682, %v2777
      %v2779 = vrcp.pop %v2715
      %v2780 = vmul.f32 %v2715, %v2779
      %v2781 = vsub.f32 1.0, %v2780
      %v2782 = vmul.f32 %v2779, %v2781
      %v2783 = vadd.f32 %v2779, %v2782
      %vm2784 = vweird.f32 %v2715
      %vm2785 = vweird.f32 %v2779
      %vm2786 = vmor %vm2784, %vm2785
      %v2787 = vsel %vm2786, %v2779, %v2783
      %v2788 = vand.u32 2147483647, %v2715
      %vm2789 = vcmp.eq.f32.partialorder %v2788, 8.507059e+37
      %v2790 = vand.u32 %v2715, 2147483648
      %v2791 = vor.u32 1.1754944e-38, %v2790
      %v2792 = vsel %vm2789, %v2791, %v2787
      %v2793 = vmul.f32 %v2684, %v2792
      %v2794 = vrcp.pop %v2718
      %v2795 = vmul.f32 %v2718, %v2794
      %v2796 = vsub.f32 1.0, %v2795
      %v2797 = vmul.f32 %v2794, %v2796
      %v2798 = vadd.f32 %v2794, %v2797
      %vm2799 = vweird.f32 %v2718
      %vm2800 = vweird.f32 %v2794
      %vm2801 = vmor %vm2799, %vm2800
      %v2802 = vsel %vm2801, %v2794, %v2798
      %v2803 = vand.u32 2147483647, %v2718
      %vm2804 = vcmp.eq.f32.partialorder %v2803, 8.507059e+37
      %v2805 = vand.u32 %v2718, 2147483648
      %v2806 = vor.u32 1.1754944e-38, %v2805
      %v2807 = vsel %vm2804, %v2806, %v2802
      %v2808 = vmul.f32 %v2686, %v2807
      %v2809 = vrcp.pop %v2721
      %v2810 = vmul.f32 %v2721, %v2809
      %v2811 = vsub.f32 1.0, %v2810
      %v2812 = vmul.f32 %v2809, %v2811
      %v2813 = vadd.f32 %v2809, %v2812
      %vm2814 = vweird.f32 %v2721
      %vm2815 = vweird.f32 %v2809
      %vm2816 = vmor %vm2814, %vm2815
      %v2817 = vsel %vm2816, %v2809, %v2813
      %v2818 = vand.u32 2147483647, %v2721
      %vm2819 = vcmp.eq.f32.partialorder %v2818, 8.507059e+37
      %v2820 = vand.u32 %v2721, 2147483648
      %v2821 = vor.u32 1.1754944e-38, %v2820
      %v2822 = vsel %vm2819, %v2821, %v2817
      %v2823 = vmul.f32 %v2688, %v2822
      %v2824 = vrcp.pop %v2724
      %v2825 = vmul.f32 %v2724, %v2824
      %v2826 = vsub.f32 1.0, %v2825
      %v2827 = vmul.f32 %v2824, %v2826
      %v2828 = vadd.f32 %v2824, %v2827
      %vm2829 = vweird.f32 %v2724
      %vm2830 = vweird.f32 %v2824
      %vm2831 = vmor %vm2829, %vm2830
      %v2832 = vsel %vm2831, %v2824, %v2828
      %v2833 = vand.u32 2147483647, %v2724
      %vm2834 = vcmp.eq.f32.partialorder %v2833, 8.507059e+37
      %v2835 = vand.u32 %v2724, 2147483648
      %v2836 = vor.u32 1.1754944e-38, %v2835
      %v2837 = vsel %vm2834, %v2836, %v2832
      %v2838 = vmul.f32 %v2690, %v2837
      %v2839 = vrcp.pop %v2727
      %v2840 = vmul.f32 %v2727, %v2839
      %v2841 = vsub.f32 1.0, %v2840
      %v2842 = vmul.f32 %v2839, %v2841
      %v2843 = vadd.f32 %v2839, %v2842
      %vm2844 = vweird.f32 %v2727
      %vm2845 = vweird.f32 %v2839
      %vm2846 = vmor %vm2844, %vm2845
      %v2847 = vsel %vm2846, %v2839, %v2843
      %v2848 = vand.u32 2147483647, %v2727
      %vm2849 = vcmp.eq.f32.partialorder %v2848, 8.507059e+37
      %v2850 = vand.u32 %v2727, 2147483648
      %v2851 = vor.u32 1.1754944e-38, %v2850
      %v2852 = vsel %vm2849, %v2851, %v2847
      %v2853 = vmul.f32 %v2692, %v2852
      %v2854 = vrcp.pop %v2730
      %v2855 = vmul.f32 %v2730, %v2854
      %v2856 = vsub.f32 1.0, %v2855
      %v2857 = vmul.f32 %v2854, %v2856
      %v2858 = vadd.f32 %v2854, %v2857
      %vm2859 = vweird.f32 %v2730
      %vm2860 = vweird.f32 %v2854
      %vm2861 = vmor %vm2859, %vm2860
      %v2862 = vsel %vm2861, %v2854, %v2858
      %v2863 = vand.u32 2147483647, %v2730
      %vm2864 = vcmp.eq.f32.partialorder %v2863, 8.507059e+37
      %v2865 = vand.u32 %v2730, 2147483648
      %v2866 = vor.u32 1.1754944e-38, %v2865
      %v2867 = vsel %vm2864, %v2866, %v2862
      %v2868 = vmul.f32 %v2694, %v2867
      %v2869 = vrcp.pop %v2733
      %v2870 = vmul.f32 %v2733, %v2869
      %v2871 = vsub.f32 1.0, %v2870
      %v2872 = vmul.f32 %v2869, %v2871
      %v2873 = vadd.f32 %v2869, %v2872
      %vm2874 = vweird.f32 %v2733
      %vm2875 = vweird.f32 %v2869
      %vm2876 = vmor %vm2874, %vm2875
      %v2877 = vsel %vm2876, %v2869, %v2873
      %v2878 = vand.u32 2147483647, %v2733
      %vm2879 = vcmp.eq.f32.partialorder %v2878, 8.507059e+37
      %v2880 = vand.u32 %v2733, 2147483648
      %v2881 = vor.u32 1.1754944e-38, %v2880
      %v2882 = vsel %vm2879, %v2881, %v2877
      %v2883 = vmul.f32 %v2696, %v2882
      %v2884 = vrcp.pop %v2736
      %v2885 = vmul.f32 %v2736, %v2884
      %v2886 = vsub.f32 1.0, %v2885
      %v2887 = vmul.f32 %v2884, %v2886
      %v2888 = vadd.f32 %v2884, %v2887
      %vm2889 = vweird.f32 %v2736
      %vm2890 = vweird.f32 %v2884
      %vm2891 = vmor %vm2889, %vm2890
      %v2892 = vsel %vm2891, %v2884, %v2888
      %v2893 = vand.u32 2147483647, %v2736
      %vm2894 = vcmp.eq.f32.partialorder %v2893, 8.507059e+37
      %v2895 = vand.u32 %v2736, 2147483648
      %v2896 = vor.u32 1.1754944e-38, %v2895
      %v2897 = vsel %vm2894, %v2896, %v2892
      %v2898 = vmul.f32 %v2698, %v2897
      %v2899 = vrcp.pop %v2739
      %v2900 = vmul.f32 %v2739, %v2899
      %v2901 = vsub.f32 1.0, %v2900
      %v2902 = vmul.f32 %v2899, %v2901
      %v2903 = vadd.f32 %v2899, %v2902
      %vm2904 = vweird.f32 %v2739
      %vm2905 = vweird.f32 %v2899
      %vm2906 = vmor %vm2904, %vm2905
      %v2907 = vsel %vm2906, %v2899, %v2903
      %v2908 = vand.u32 2147483647, %v2739
      %vm2909 = vcmp.eq.f32.partialorder %v2908, 8.507059e+37
      %v2910 = vand.u32 %v2739, 2147483648
      %v2911 = vor.u32 1.1754944e-38, %v2910
      %v2912 = vsel %vm2909, %v2911, %v2907
      %v2913 = vmul.f32 %v2700, %v2912
      %v2914 = vrcp.pop %v2742
      %v2915 = vmul.f32 %v2742, %v2914
      %v2916 = vsub.f32 1.0, %v2915
      %v2917 = vmul.f32 %v2914, %v2916
      %v2918 = vadd.f32 %v2914, %v2917
      %vm2919 = vweird.f32 %v2742
      %vm2920 = vweird.f32 %v2914
      %vm2921 = vmor %vm2919, %vm2920
      %v2922 = vsel %vm2921, %v2914, %v2918
      %v2923 = vand.u32 2147483647, %v2742
      %vm2924 = vcmp.eq.f32.partialorder %v2923, 8.507059e+37
      %v2925 = vand.u32 %v2742, 2147483648
      %v2926 = vor.u32 1.1754944e-38, %v2925
      %v2927 = vsel %vm2924, %v2926, %v2922
      %v2928 = vmul.f32 %v2702, %v2927
      %v2929 = vrcp.pop %v2745
      %v2930 = vmul.f32 %v2745, %v2929
      %v2931 = vsub.f32 1.0, %v2930
      %v2932 = vmul.f32 %v2929, %v2931
      %v2933 = vadd.f32 %v2929, %v2932
      %vm2934 = vweird.f32 %v2745
      %vm2935 = vweird.f32 %v2929
      %vm2936 = vmor %vm2934, %vm2935
      %v2937 = vsel %vm2936, %v2929, %v2933
      %v2938 = vand.u32 2147483647, %v2745
      %vm2939 = vcmp.eq.f32.partialorder %v2938, 8.507059e+37
      %v2940 = vand.u32 %v2745, 2147483648
      %v2941 = vor.u32 1.1754944e-38, %v2940
      %v2942 = vsel %vm2939, %v2941, %v2937
      %v2943 = vmul.f32 %v2704, %v2942
      %v2944 = vrcp.pop %v2748
      %v2945 = vmul.f32 %v2748, %v2944
      %v2946 = vsub.f32 1.0, %v2945
      %v2947 = vmul.f32 %v2944, %v2946
      %v2948 = vadd.f32 %v2944, %v2947
      %vm2949 = vweird.f32 %v2748
      %vm2950 = vweird.f32 %v2944
      %vm2951 = vmor %vm2949, %vm2950
      %v2952 = vsel %vm2951, %v2944, %v2948
      %v2953 = vand.u32 2147483647, %v2748
      %vm2954 = vcmp.eq.f32.partialorder %v2953, 8.507059e+37
      %v2955 = vand.u32 %v2748, 2147483648
      %v2956 = vor.u32 1.1754944e-38, %v2955
      %v2957 = vsel %vm2954, %v2956, %v2952
      %v2958 = vmul.f32 %v2706, %v2957
      %v2959 = vmul.f32 %v2763, 0.5
      %v2960 = vmul.f32 %v2778, 0.5
      %v2961 = vmul.f32 %v2793, 0.5
      %v2962 = vmul.f32 %v2808, 0.5
      %v2963 = vmul.f32 %v2823, 0.5
      %v2964 = vmul.f32 %v2838, 0.5
      %v2965 = vmul.f32 %v2853, 0.5
      %v2966 = vmul.f32 %v2868, 0.5
      %v2967 = vmul.f32 %v2883, 0.5
      %v2968 = vmul.f32 %v2898, 0.5
      %v2969 = vmul.f32 %v2913, 0.5
      %v2970 = vmul.f32 %v2928, 0.5
      %v2971 = vmul.f32 %v2943, 0.5
      %v2972 = vmul.f32 %v2958, 0.5
      %v2973 = vmul.f32 %v263, %v2959
      %v2974 = vmul.f32 %v264, %v2960
      %v2975 = vmul.f32 %v265, %v2961
      %v2976 = vmul.f32 %v266, %v2962
      %v2977 = vmul.f32 %v267, %v2963
      %v2978 = vmul.f32 %v268, %v2964
      %v2979 = vmul.f32 %v269, %v2965
      %v2980 = vmul.f32 %v270, %v2966
      %v2981 = vmul.f32 %v271, %v2967
      %v2982 = vmul.f32 %v272, %v2968
      %v2983 = vmul.f32 %v273, %v2969
      %v2984 = vmul.f32 %v274, %v2970
      %v2985 = vmul.f32 %v275, %v2971
      %v2986 = vmul.f32 %v276, %v2972
      %2987 = vxpose.xlu0.b32.start [1/16] %v2973, 128
      %2988 = vxpose.xlu0.b32.cont [2/16] %v2974, 128
      %2989 = vxpose.xlu0.b32.cont [3/16] 0.0, 128
      %2990 = vxpose.xlu0.b32.cont [4/16] 0.0, 128
      %2991 = vxpose.xlu0.b32.cont [5/16] 0.0, 128
      %2992 = vxpose.xlu0.b32.cont [6/16] 0.0, 128
      %2993 = vxpose.xlu0.b32.cont [7/16] 0.0, 128
      %2994 = vxpose.xlu0.b32.cont [8/16] 0.0, 128
      %2995 = vxpose.xlu0.b32.cont [9/16] 0.0, 128
      %2996 = vxpose.xlu0.b32.cont [10/16] 0.0, 128
      %2997 = vxpose.xlu0.b32.cont [11/16] 0.0, 128
      %2998 = vxpose.xlu0.b32.cont [12/16] 0.0, 128
      %2999 = vxpose.xlu0.b32.cont [13/16] 0.0, 128
      %3000 = vxpose.xlu0.b32.cont [14/16] 0.0, 128
      %3001 = vxpose.xlu0.b32.cont [15/16] 0.0, 128
      %3002 = vxpose.xlu0.b32.end [16/16] 0.0, 128
      %v3003 = vpop.trf.xlu0
      %v3004 = vpop.trf.xlu0
      %v3005 = vpop.trf.xlu0
      %v3006 = vpop.trf.xlu0
      %v3007 = vpop.trf.xlu0
      %v3008 = vpop.trf.xlu0
      %v3009 = vpop.trf.xlu0
      %v3010 = vpop.trf.xlu0
      %v3011 = vpop.trf.xlu0
      %v3012 = vpop.trf.xlu0
      %v3013 = vpop.trf.xlu0
      %v3014 = vpop.trf.xlu0
      %v3015 = vpop.trf.xlu0
      %v3016 = vpop.trf.xlu0
      %v3017 = vpop.trf.xlu0
      %v3018 = vpop.trf.xlu0
      %3019 = vxpose.xlu0.b32.start [1/16] %v2975, 128
      %3020 = vxpose.xlu0.b32.cont [2/16] %v2976, 128
      %3021 = vxpose.xlu0.b32.cont [3/16] 0.0, 128
      %3022 = vxpose.xlu0.b32.cont [4/16] 0.0, 128
      %3023 = vxpose.xlu0.b32.cont [5/16] 0.0, 128
      %3024 = vxpose.xlu0.b32.cont [6/16] 0.0, 128
      %3025 = vxpose.xlu0.b32.cont [7/16] 0.0, 128
      %3026 = vxpose.xlu0.b32.cont [8/16] 0.0, 128
      %3027 = vxpose.xlu0.b32.cont [9/16] 0.0, 128
      %3028 = vxpose.xlu0.b32.cont [10/16] 0.0, 128
      %3029 = vxpose.xlu0.b32.cont [11/16] 0.0, 128
      %3030 = vxpose.xlu0.b32.cont [12/16] 0.0, 128
      %3031 = vxpose.xlu0.b32.cont [13/16] 0.0, 128
      %3032 = vxpose.xlu0.b32.cont [14/16] 0.0, 128
      %3033 = vxpose.xlu0.b32.cont [15/16] 0.0, 128
      %3034 = vxpose.xlu0.b32.end [16/16] 0.0, 128
      %v3035 = vpop.trf.xlu0
      %v3036 = vpop.trf.xlu0
      %v3037 = vpop.trf.xlu0
      %v3038 = vpop.trf.xlu0
      %v3039 = vpop.trf.xlu0
      %v3040 = vpop.trf.xlu0
      %v3041 = vpop.trf.xlu0
      %v3042 = vpop.trf.xlu0
      %v3043 = vpop.trf.xlu0
      %v3044 = vpop.trf.xlu0
      %v3045 = vpop.trf.xlu0
      %v3046 = vpop.trf.xlu0
      %v3047 = vpop.trf.xlu0
      %v3048 = vpop.trf.xlu0
      %v3049 = vpop.trf.xlu0
      %v3050 = vpop.trf.xlu0
      %3051 = vxpose.xlu0.b32.start [1/16] %v2977, 128
      %3052 = vxpose.xlu0.b32.cont [2/16] %v2978, 128
      %3053 = vxpose.xlu0.b32.cont [3/16] 0.0, 128
      %3054 = vxpose.xlu0.b32.cont [4/16] 0.0, 128
      %3055 = vxpose.xlu0.b32.cont [5/16] 0.0, 128
      %3056 = vxpose.xlu0.b32.cont [6/16] 0.0, 128
      %3057 = vxpose.xlu0.b32.cont [7/16] 0.0, 128
      %3058 = vxpose.xlu0.b32.cont [8/16] 0.0, 128
      %3059 = vxpose.xlu0.b32.cont [9/16] 0.0, 128
      %3060 = vxpose.xlu0.b32.cont [10/16] 0.0, 128
      %3061 = vxpose.xlu0.b32.cont [11/16] 0.0, 128
      %3062 = vxpose.xlu0.b32.cont [12/16] 0.0, 128
      %3063 = vxpose.xlu0.b32.cont [13/16] 0.0, 128
      %3064 = vxpose.xlu0.b32.cont [14/16] 0.0, 128
      %3065 = vxpose.xlu0.b32.cont [15/16] 0.0, 128
      %3066 = vxpose.xlu0.b32.end [16/16] 0.0, 128
      %v3067 = vpop.trf.xlu0
      %v3068 = vpop.trf.xlu0
      %v3069 = vpop.trf.xlu0
      %v3070 = vpop.trf.xlu0
      %v3071 = vpop.trf.xlu0
      %v3072 = vpop.trf.xlu0
      %v3073 = vpop.trf.xlu0
      %v3074 = vpop.trf.xlu0
      %v3075 = vpop.trf.xlu0
      %v3076 = vpop.trf.xlu0
      %v3077 = vpop.trf.xlu0
      %v3078 = vpop.trf.xlu0
      %v3079 = vpop.trf.xlu0
      %v3080 = vpop.trf.xlu0
      %v3081 = vpop.trf.xlu0
      %v3082 = vpop.trf.xlu0
      %3083 = vxpose.xlu0.b32.start [1/16] %v2979, 128
      %3084 = vxpose.xlu0.b32.cont [2/16] %v2980, 128
      %3085 = vxpose.xlu0.b32.cont [3/16] 0.0, 128
      %3086 = vxpose.xlu0.b32.cont [4/16] 0.0, 128
      %3087 = vxpose.xlu0.b32.cont [5/16] 0.0, 128
      %3088 = vxpose.xlu0.b32.cont [6/16] 0.0, 128
      %3089 = vxpose.xlu0.b32.cont [7/16] 0.0, 128
      %3090 = vxpose.xlu0.b32.cont [8/16] 0.0, 128
      %3091 = vxpose.xlu0.b32.cont [9/16] 0.0, 128
      %3092 = vxpose.xlu0.b32.cont [10/16] 0.0, 128
      %3093 = vxpose.xlu0.b32.cont [11/16] 0.0, 128
      %3094 = vxpose.xlu0.b32.cont [12/16] 0.0, 128
      %3095 = vxpose.xlu0.b32.cont [13/16] 0.0, 128
      %3096 = vxpose.xlu0.b32.cont [14/16] 0.0, 128
      %3097 = vxpose.xlu0.b32.cont [15/16] 0.0, 128
      %3098 = vxpose.xlu0.b32.end [16/16] 0.0, 128
      %v3099 = vpop.trf.xlu0
      %v3100 = vpop.trf.xlu0
      %v3101 = vpop.trf.xlu0
      %v3102 = vpop.trf.xlu0
      %v3103 = vpop.trf.xlu0
      %v3104 = vpop.trf.xlu0
      %v3105 = vpop.trf.xlu0
      %v3106 = vpop.trf.xlu0
      %v3107 = vpop.trf.xlu0
      %v3108 = vpop.trf.xlu0
      %v3109 = vpop.trf.xlu0
      %v3110 = vpop.trf.xlu0
      %v3111 = vpop.trf.xlu0
      %v3112 = vpop.trf.xlu0
      %v3113 = vpop.trf.xlu0
      %v3114 = vpop.trf.xlu0
      %3115 = vxpose.xlu0.b32.start [1/16] %v2981, 128
      %3116 = vxpose.xlu0.b32.cont [2/16] %v2982, 128
      %3117 = vxpose.xlu0.b32.cont [3/16] 0.0, 128
      %3118 = vxpose.xlu0.b32.cont [4/16] 0.0, 128
      %3119 = vxpose.xlu0.b32.cont [5/16] 0.0, 128
      %3120 = vxpose.xlu0.b32.cont [6/16] 0.0, 128
      %3121 = vxpose.xlu0.b32.cont [7/16] 0.0, 128
      %3122 = vxpose.xlu0.b32.cont [8/16] 0.0, 128
      %3123 = vxpose.xlu0.b32.cont [9/16] 0.0, 128
      %3124 = vxpose.xlu0.b32.cont [10/16] 0.0, 128
      %3125 = vxpose.xlu0.b32.cont [11/16] 0.0, 128
      %3126 = vxpose.xlu0.b32.cont [12/16] 0.0, 128
      %3127 = vxpose.xlu0.b32.cont [13/16] 0.0, 128
      %3128 = vxpose.xlu0.b32.cont [14/16] 0.0, 128
      %3129 = vxpose.xlu0.b32.cont [15/16] 0.0, 128
      %3130 = vxpose.xlu0.b32.end [16/16] 0.0, 128
      %v3131 = vpop.trf.xlu0
      %v3132 = vpop.trf.xlu0
      %v3133 = vpop.trf.xlu0
      %v3134 = vpop.trf.xlu0
      %v3135 = vpop.trf.xlu0
      %v3136 = vpop.trf.xlu0
      %v3137 = vpop.trf.xlu0
      %v3138 = vpop.trf.xlu0
      %v3139 = vpop.trf.xlu0
      %v3140 = vpop.trf.xlu0
      %v3141 = vpop.trf.xlu0
      %v3142 = vpop.trf.xlu0
      %v3143 = vpop.trf.xlu0
      %v3144 = vpop.trf.xlu0
      %v3145 = vpop.trf.xlu0
      %v3146 = vpop.trf.xlu0
      %3147 = vxpose.xlu0.b32.start [1/16] %v2983, 128
      %3148 = vxpose.xlu0.b32.cont [2/16] %v2984, 128
      %3149 = vxpose.xlu0.b32.cont [3/16] 0.0, 128
      %3150 = vxpose.xlu0.b32.cont [4/16] 0.0, 128
      %3151 = vxpose.xlu0.b32.cont [5/16] 0.0, 128
      %3152 = vxpose.xlu0.b32.cont [6/16] 0.0, 128
      %3153 = vxpose.xlu0.b32.cont [7/16] 0.0, 128
      %3154 = vxpose.xlu0.b32.cont [8/16] 0.0, 128
      %3155 = vxpose.xlu0.b32.cont [9/16] 0.0, 128
      %3156 = vxpose.xlu0.b32.cont [10/16] 0.0, 128
      %3157 = vxpose.xlu0.b32.cont [11/16] 0.0, 128
      %3158 = vxpose.xlu0.b32.cont [12/16] 0.0, 128
      %3159 = vxpose.xlu0.b32.cont [13/16] 0.0, 128
      %3160 = vxpose.xlu0.b32.cont [14/16] 0.0, 128
      %3161 = vxpose.xlu0.b32.cont [15/16] 0.0, 128
      %3162 = vxpose.xlu0.b32.end [16/16] 0.0, 128
      %v3163 = vpop.trf.xlu0
      %v3164 = vpop.trf.xlu0
      %v3165 = vpop.trf.xlu0
      %v3166 = vpop.trf.xlu0
      %v3167 = vpop.trf.xlu0
      %v3168 = vpop.trf.xlu0
      %v3169 = vpop.trf.xlu0
      %v3170 = vpop.trf.xlu0
      %v3171 = vpop.trf.xlu0
      %v3172 = vpop.trf.xlu0
      %v3173 = vpop.trf.xlu0
      %v3174 = vpop.trf.xlu0
      %v3175 = vpop.trf.xlu0
      %v3176 = vpop.trf.xlu0
      %v3177 = vpop.trf.xlu0
      %v3178 = vpop.trf.xlu0
      %3179 = vxpose.xlu0.b32.start [1/16] %v2985, 128
      %3180 = vxpose.xlu0.b32.cont [2/16] %v2986, 128
      %3181 = vxpose.xlu0.b32.cont [3/16] 0.0, 128
      %3182 = vxpose.xlu0.b32.cont [4/16] 0.0, 128
      %3183 = vxpose.xlu0.b32.cont [5/16] 0.0, 128
      %3184 = vxpose.xlu0.b32.cont [6/16] 0.0, 128
      %3185 = vxpose.xlu0.b32.cont [7/16] 0.0, 128
      %3186 = vxpose.xlu0.b32.cont [8/16] 0.0, 128
      %3187 = vxpose.xlu0.b32.cont [9/16] 0.0, 128
      %3188 = vxpose.xlu0.b32.cont [10/16] 0.0, 128
      %3189 = vxpose.xlu0.b32.cont [11/16] 0.0, 128
      %3190 = vxpose.xlu0.b32.cont [12/16] 0.0, 128
      %3191 = vxpose.xlu0.b32.cont [13/16] 0.0, 128
      %3192 = vxpose.xlu0.b32.cont [14/16] 0.0, 128
      %3193 = vxpose.xlu0.b32.cont [15/16] 0.0, 128
      %3194 = vxpose.xlu0.b32.end [16/16] 0.0, 128
      %v3195 = vpop.trf.xlu0
      %v3196 = vpop.trf.xlu0
      %v3197 = vpop.trf.xlu0
      %v3198 = vpop.trf.xlu0
      %v3199 = vpop.trf.xlu0
      %v3200 = vpop.trf.xlu0
      %v3201 = vpop.trf.xlu0
      %v3202 = vpop.trf.xlu0
      %v3203 = vpop.trf.xlu0
      %v3204 = vpop.trf.xlu0
      %v3205 = vpop.trf.xlu0
      %v3206 = vpop.trf.xlu0
      %v3207 = vpop.trf.xlu0
      %v3208 = vpop.trf.xlu0
      %v3209 = vpop.trf.xlu0
      %v3210 = vpop.trf.xlu0
      %v3212 = vsel %vm500, %v3003, 0
      %v3215 = vsel %vm500, %v3004, 0
      %3217 = vmatpush.msra.mxu0 0.0
      %3218 = vmatpush.msra.mxu0 0.0
      %3219 = vmatpush.msra.mxu0 0.0
      %3220 = vmatpush.msra.mxu0 0.0
      %3221 = vmatpush.msra.mxu0 0.0
      %3222 = vmatpush.msra.mxu0 0.0
      %3223 = vmatpush.msra.mxu0 0.0
      %3224 = vmatpush.msra.mxu0 0.0
      %3225 = vmatpush.msra.mxu0 0.0
      %3226 = vmatpush.msra.mxu0 0.0
      %3227 = vmatpush.msra.mxu0 0.0
      %3228 = vmatpush.msra.mxu0 0.0
      %3229 = vmatpush.msra.mxu0 0.0
      %3230 = vmatpush.msra.mxu0 0.0
      %3231 = vmatpush.msra.mxu0 %v246
      %3232 = vmatpush.msra.mxu0 %v245
      %3233 = vmatmul.f32.gmra.mxu0 %v3212
      %v3234 = vpop.f32.mrf.mxu0
      %v3235 = vadd.f32 0.0, %v3234
      %3236 = vmatmul.f32.gmra.mxu0 %v3215
      %v3237 = vpop.f32.mrf.mxu0
      %v3238 = vadd.f32 0.0, %v3237
      %3239 = vdwg.mxu0
      %v3241 = vsel %vm500, %v3035, 0
      %v3244 = vsel %vm500, %v3036, 0
      %3246 = vmatpush.msra.mxu0 0.0
      %3247 = vmatpush.msra.mxu0 0.0
      %3248 = vmatpush.msra.mxu0 0.0
      %3249 = vmatpush.msra.mxu0 0.0
      %3250 = vmatpush.msra.mxu0 0.0
      %3251 = vmatpush.msra.mxu0 0.0
      %3252 = vmatpush.msra.mxu0 0.0
      %3253 = vmatpush.msra.mxu0 0.0
      %3254 = vmatpush.msra.mxu0 0.0
      %3255 = vmatpush.msra.mxu0 0.0
      %3256 = vmatpush.msra.mxu0 0.0
      %3257 = vmatpush.msra.mxu0 0.0
      %3258 = vmatpush.msra.mxu0 0.0
      %3259 = vmatpush.msra.mxu0 0.0
      %3260 = vmatpush.msra.mxu0 %v2393
      %3261 = vmatpush.msra.mxu0 %v2392
      %3262 = vmatmul.f32.gmra.mxu0 %v3241
      %v3263 = vpop.f32.mrf.mxu0
      %v3264 = vadd.f32 0.0, %v3263
      %3265 = vmatmul.f32.gmra.mxu0 %v3244
      %v3266 = vpop.f32.mrf.mxu0
      %v3267 = vadd.f32 0.0, %v3266
      %3268 = vdwg.mxu0
      %v3270 = vsel %vm500, %v3067, 0
      %v3273 = vsel %vm500, %v3068, 0
      %3275 = vmatpush.msra.mxu0 0.0
      %3276 = vmatpush.msra.mxu0 0.0
      %3277 = vmatpush.msra.mxu0 0.0
      %3278 = vmatpush.msra.mxu0 0.0
      %3279 = vmatpush.msra.mxu0 0.0
      %3280 = vmatpush.msra.mxu0 0.0
      %3281 = vmatpush.msra.mxu0 0.0
      %3282 = vmatpush.msra.mxu0 0.0
      %3283 = vmatpush.msra.mxu0 0.0
      %3284 = vmatpush.msra.mxu0 0.0
      %3285 = vmatpush.msra.mxu0 0.0
      %3286 = vmatpush.msra.mxu0 0.0
      %3287 = vmatpush.msra.mxu0 0.0
      %3288 = vmatpush.msra.mxu0 0.0
      %3289 = vmatpush.msra.mxu0 %v2395
      %3290 = vmatpush.msra.mxu0 %v2394
      %3291 = vmatmul.f32.gmra.mxu0 %v3270
      %v3292 = vpop.f32.mrf.mxu0
      %v3293 = vadd.f32 0.0, %v3292
      %3294 = vmatmul.f32.gmra.mxu0 %v3273
      %v3295 = vpop.f32.mrf.mxu0
      %v3296 = vadd.f32 0.0, %v3295
      %3297 = vdwg.mxu0
      %v3299 = vsel %vm500, %v3099, 0
      %v3302 = vsel %vm500, %v3100, 0
      %3304 = vmatpush.msra.mxu0 0.0
      %3305 = vmatpush.msra.mxu0 0.0
      %3306 = vmatpush.msra.mxu0 0.0
      %3307 = vmatpush.msra.mxu0 0.0
      %3308 = vmatpush.msra.mxu0 0.0
      %3309 = vmatpush.msra.mxu0 0.0
      %3310 = vmatpush.msra.mxu0 0.0
      %3311 = vmatpush.msra.mxu0 0.0
      %3312 = vmatpush.msra.mxu0 0.0
      %3313 = vmatpush.msra.mxu0 0.0
      %3314 = vmatpush.msra.mxu0 0.0
      %3315 = vmatpush.msra.mxu0 0.0
      %3316 = vmatpush.msra.mxu0 0.0
      %3317 = vmatpush.msra.mxu0 0.0
      %3318 = vmatpush.msra.mxu0 %v2397
      %3319 = vmatpush.msra.mxu0 %v2396
      %3320 = vmatmul.f32.gmra.mxu0 %v3299
      %v3321 = vpop.f32.mrf.mxu0
      %v3322 = vadd.f32 0.0, %v3321
      %3323 = vmatmul.f32.gmra.mxu0 %v3302
      %v3324 = vpop.f32.mrf.mxu0
      %v3325 = vadd.f32 0.0, %v3324
      %3326 = vdwg.mxu0
      %v3328 = vsel %vm500, %v3131, 0
      %v3331 = vsel %vm500, %v3132, 0
      %3333 = vmatpush.msra.mxu0 0.0
      %3334 = vmatpush.msra.mxu0 0.0
      %3335 = vmatpush.msra.mxu0 0.0
      %3336 = vmatpush.msra.mxu0 0.0
      %3337 = vmatpush.msra.mxu0 0.0
      %3338 = vmatpush.msra.mxu0 0.0
      %3339 = vmatpush.msra.mxu0 0.0
      %3340 = vmatpush.msra.mxu0 0.0
      %3341 = vmatpush.msra.mxu0 0.0
      %3342 = vmatpush.msra.mxu0 0.0
      %3343 = vmatpush.msra.mxu0 0.0
      %3344 = vmatpush.msra.mxu0 0.0
      %3345 = vmatpush.msra.mxu0 0.0
      %3346 = vmatpush.msra.mxu0 0.0
      %3347 = vmatpush.msra.mxu0 %v2399
      %3348 = vmatpush.msra.mxu0 %v2398
      %3349 = vmatmul.f32.gmra.mxu0 %v3328
      %v3350 = vpop.f32.mrf.mxu0
      %v3351 = vadd.f32 0.0, %v3350
      %3352 = vmatmul.f32.gmra.mxu0 %v3331
      %v3353 = vpop.f32.mrf.mxu0
      %v3354 = vadd.f32 0.0, %v3353
      %3355 = vdwg.mxu0
      %v3357 = vsel %vm500, %v3163, 0
      %v3360 = vsel %vm500, %v3164, 0
      %3362 = vmatpush.msra.mxu0 0.0
      %3363 = vmatpush.msra.mxu0 0.0
      %3364 = vmatpush.msra.mxu0 0.0
      %3365 = vmatpush.msra.mxu0 0.0
      %3366 = vmatpush.msra.mxu0 0.0
      %3367 = vmatpush.msra.mxu0 0.0
      %3368 = vmatpush.msra.mxu0 0.0
      %3369 = vmatpush.msra.mxu0 0.0
      %3370 = vmatpush.msra.mxu0 0.0
      %3371 = vmatpush.msra.mxu0 0.0
      %3372 = vmatpush.msra.mxu0 0.0
      %3373 = vmatpush.msra.mxu0 0.0
      %3374 = vmatpush.msra.mxu0 0.0
      %3375 = vmatpush.msra.mxu0 0.0
      %3376 = vmatpush.msra.mxu0 %v2401
      %3377 = vmatpush.msra.mxu0 %v2400
      %3378 = vmatmul.f32.gmra.mxu0 %v3357
      %v3379 = vpop.f32.mrf.mxu0
      %v3380 = vadd.f32 0.0, %v3379
      %3381 = vmatmul.f32.gmra.mxu0 %v3360
      %v3382 = vpop.f32.mrf.mxu0
      %v3383 = vadd.f32 0.0, %v3382
      %3384 = vdwg.mxu0
      %v3386 = vsel %vm500, %v3195, 0
      %v3389 = vsel %vm500, %v3196, 0
      %3391 = vmatpush.msra.mxu0 0.0
      %3392 = vmatpush.msra.mxu0 0.0
      %3393 = vmatpush.msra.mxu0 0.0
      %3394 = vmatpush.msra.mxu0 0.0
      %3395 = vmatpush.msra.mxu0 0.0
      %3396 = vmatpush.msra.mxu0 0.0
      %3397 = vmatpush.msra.mxu0 0.0
      %3398 = vmatpush.msra.mxu0 0.0
      %3399 = vmatpush.msra.mxu0 0.0
      %3400 = vmatpush.msra.mxu0 0.0
      %3401 = vmatpush.msra.mxu0 0.0
      %3402 = vmatpush.msra.mxu0 0.0
      %3403 = vmatpush.msra.mxu0 0.0
      %3404 = vmatpush.msra.mxu0 0.0
      %3405 = vmatpush.msra.mxu0 %v2403
      %3406 = vmatpush.msra.mxu0 %v2402
      %3407 = vmatmul.f32.gmra.mxu0 %v3386
      %v3408 = vpop.f32.mrf.mxu0
      %v3409 = vadd.f32 0.0, %v3408
      %3410 = vmatmul.f32.gmra.mxu0 %v3389
      %v3411 = vpop.f32.mrf.mxu0
      %v3412 = vadd.f32 0.0, %v3411
      %3413 = vdwg.mxu0
      %v3414 = vmul.f32 %v1295, %v2392
      %v3415 = vmul.f32 %v1300, %v2393
      %v3416 = vmul.f32 %v1295, %v2394
      %v3417 = vmul.f32 %v1300, %v2395
      %v3418 = vmul.f32 %v1295, %v2396
      %v3419 = vmul.f32 %v1300, %v2397
      %v3420 = vmul.f32 %v1295, %v2398
      %v3421 = vmul.f32 %v1300, %v2399
      %v3422 = vmul.f32 %v1295, %v2400
      %v3423 = vmul.f32 %v1300, %v2401
      %v3424 = vmul.f32 %v1295, %v2402
      %v3425 = vmul.f32 %v1300, %v2403
      %v3426 = vmul.f32 %v1295, %v2404
      %v3427 = vmul.f32 %v1300, %v2405
      %v3428 = vmul.f32 %v1321, %v3235
      %v3429 = vmul.f32 %v1326, %v3238
      %v3430 = vmul.f32 %v1321, %v3264
      %v3431 = vmul.f32 %v1326, %v3267
      %v3432 = vmul.f32 %v1321, %v3293
      %v3433 = vmul.f32 %v1326, %v3296
      %v3434 = vmul.f32 %v1321, %v3322
      %v3435 = vmul.f32 %v1326, %v3325
      %v3436 = vmul.f32 %v1321, %v3351
      %v3437 = vmul.f32 %v1326, %v3354
      %v3438 = vmul.f32 %v1321, %v3380
      %v3439 = vmul.f32 %v1326, %v3383
      %v3440 = vmul.f32 %v1321, %v3409
      %v3441 = vmul.f32 %v1326, %v3412
      %v3442 = vadd.f32 %v3414, %v3428
      %v3443 = vadd.f32 %v3415, %v3429
      %v3444 = vadd.f32 %v3416, %v3430
      %v3445 = vadd.f32 %v3417, %v3431
      %v3446 = vadd.f32 %v3418, %v3432
      %v3447 = vadd.f32 %v3419, %v3433
      %v3448 = vadd.f32 %v3420, %v3434
      %v3449 = vadd.f32 %v3421, %v3435
      %v3450 = vadd.f32 %v3422, %v3436
      %v3451 = vadd.f32 %v3423, %v3437
      %v3452 = vadd.f32 %v3424, %v3438
      %v3453 = vadd.f32 %v3425, %v3439
      %v3454 = vadd.f32 %v3426, %v3440
      %v3455 = vadd.f32 %v3427, %v3441
      %v3457 = vsel %vm282, %v3442, 0
      %v3460 = vsel %vm282, %v3443, 0
      %3462 = vmatpush.xpose.msra.mxu0 0.0
      %3463 = vmatpush.xpose.msra.mxu0 0.0
      %3464 = vmatpush.xpose.msra.mxu0 0.0
      %3465 = vmatpush.xpose.msra.mxu0 0.0
      %3466 = vmatpush.xpose.msra.mxu0 0.0
      %3467 = vmatpush.xpose.msra.mxu0 0.0
      %3468 = vmatpush.xpose.msra.mxu0 0.0
      %3469 = vmatpush.xpose.msra.mxu0 0.0
      %3470 = vmatpush.xpose.msra.mxu0 0.0
      %3471 = vmatpush.xpose.msra.mxu0 0.0
      %3472 = vmatpush.xpose.msra.mxu0 0.0
      %3473 = vmatpush.xpose.msra.mxu0 0.0
      %3474 = vmatpush.xpose.msra.mxu0 0.0
      %3475 = vmatpush.xpose.msra.mxu0 0.0
      %3476 = vmatpush.xpose.msra.mxu0 %v3460
      %3477 = vmatpush.xpose.msra.mxu0 %v3457
      %3478 = vmatmul.f32.gmra.mxu0 %v3457
      %v3479 = vpop.f32.mrf.mxu0
      %v3480 = vadd.f32 0.0, %v3479
      %3481 = vmatmul.f32.gmra.mxu0 %v3460
      %v3482 = vpop.f32.mrf.mxu0
      %v3483 = vadd.f32 0.0, %v3482
      %3484 = vdwg.mxu0
      %v3486 = vsel %vm282, %v3444, 0
      %v3489 = vsel %vm282, %v3445, 0
      %3491 = vmatpush.xpose.msra.mxu0 0.0
      %3492 = vmatpush.xpose.msra.mxu0 0.0
      %3493 = vmatpush.xpose.msra.mxu0 0.0
      %3494 = vmatpush.xpose.msra.mxu0 0.0
      %3495 = vmatpush.xpose.msra.mxu0 0.0
      %3496 = vmatpush.xpose.msra.mxu0 0.0
      %3497 = vmatpush.xpose.msra.mxu0 0.0
      %3498 = vmatpush.xpose.msra.mxu0 0.0
      %3499 = vmatpush.xpose.msra.mxu0 0.0
      %3500 = vmatpush.xpose.msra.mxu0 0.0
      %3501 = vmatpush.xpose.msra.mxu0 0.0
      %3502 = vmatpush.xpose.msra.mxu0 0.0
      %3503 = vmatpush.xpose.msra.mxu0 0.0
      %3504 = vmatpush.xpose.msra.mxu0 0.0
      %3505 = vmatpush.xpose.msra.mxu0 %v3489
      %3506 = vmatpush.xpose.msra.mxu0 %v3486
      %3507 = vmatmul.f32.gmra.mxu0 %v3486
      %v3508 = vpop.f32.mrf.mxu0
      %v3509 = vadd.f32 0.0, %v3508
      %3510 = vmatmul.f32.gmra.mxu0 %v3489
      %v3511 = vpop.f32.mrf.mxu0
      %v3512 = vadd.f32 0.0, %v3511
      %3513 = vdwg.mxu0
      %v3515 = vsel %vm282, %v3446, 0
      %v3518 = vsel %vm282, %v3447, 0
      %3520 = vmatpush.xpose.msra.mxu0 0.0
      %3521 = vmatpush.xpose.msra.mxu0 0.0
      %3522 = vmatpush.xpose.msra.mxu0 0.0
      %3523 = vmatpush.xpose.msra.mxu0 0.0
      %3524 = vmatpush.xpose.msra.mxu0 0.0
      %3525 = vmatpush.xpose.msra.mxu0 0.0
      %3526 = vmatpush.xpose.msra.mxu0 0.0
      %3527 = vmatpush.xpose.msra.mxu0 0.0
      %3528 = vmatpush.xpose.msra.mxu0 0.0
      %3529 = vmatpush.xpose.msra.mxu0 0.0
      %3530 = vmatpush.xpose.msra.mxu0 0.0
      %3531 = vmatpush.xpose.msra.mxu0 0.0
      %3532 = vmatpush.xpose.msra.mxu0 0.0
      %3533 = vmatpush.xpose.msra.mxu0 0.0
      %3534 = vmatpush.xpose.msra.mxu0 %v3518
      %3535 = vmatpush.xpose.msra.mxu0 %v3515
      %3536 = vmatmul.f32.gmra.mxu0 %v3515
      %v3537 = vpop.f32.mrf.mxu0
      %v3538 = vadd.f32 0.0, %v3537
      %3539 = vmatmul.f32.gmra.mxu0 %v3518
      %v3540 = vpop.f32.mrf.mxu0
      %v3541 = vadd.f32 0.0, %v3540
      %3542 = vdwg.mxu0
      %v3544 = vsel %vm282, %v3448, 0
      %v3547 = vsel %vm282, %v3449, 0
      %3549 = vmatpush.xpose.msra.mxu0 0.0
      %3550 = vmatpush.xpose.msra.mxu0 0.0
      %3551 = vmatpush.xpose.msra.mxu0 0.0
      %3552 = vmatpush.xpose.msra.mxu0 0.0
      %3553 = vmatpush.xpose.msra.mxu0 0.0
      %3554 = vmatpush.xpose.msra.mxu0 0.0
      %3555 = vmatpush.xpose.msra.mxu0 0.0
      %3556 = vmatpush.xpose.msra.mxu0 0.0
      %3557 = vmatpush.xpose.msra.mxu0 0.0
      %3558 = vmatpush.xpose.msra.mxu0 0.0
      %3559 = vmatpush.xpose.msra.mxu0 0.0
      %3560 = vmatpush.xpose.msra.mxu0 0.0
      %3561 = vmatpush.xpose.msra.mxu0 0.0
      %3562 = vmatpush.xpose.msra.mxu0 0.0
      %3563 = vmatpush.xpose.msra.mxu0 %v3547
      %3564 = vmatpush.xpose.msra.mxu0 %v3544
      %3565 = vmatmul.f32.gmra.mxu0 %v3544
      %v3566 = vpop.f32.mrf.mxu0
      %v3567 = vadd.f32 0.0, %v3566
      %3568 = vmatmul.f32.gmra.mxu0 %v3547
      %v3569 = vpop.f32.mrf.mxu0
      %v3570 = vadd.f32 0.0, %v3569
      %3571 = vdwg.mxu0
      %v3573 = vsel %vm282, %v3450, 0
      %v3576 = vsel %vm282, %v3451, 0
      %3578 = vmatpush.xpose.msra.mxu0 0.0
      %3579 = vmatpush.xpose.msra.mxu0 0.0
      %3580 = vmatpush.xpose.msra.mxu0 0.0
      %3581 = vmatpush.xpose.msra.mxu0 0.0
      %3582 = vmatpush.xpose.msra.mxu0 0.0
      %3583 = vmatpush.xpose.msra.mxu0 0.0
      %3584 = vmatpush.xpose.msra.mxu0 0.0
      %3585 = vmatpush.xpose.msra.mxu0 0.0
      %3586 = vmatpush.xpose.msra.mxu0 0.0
      %3587 = vmatpush.xpose.msra.mxu0 0.0
      %3588 = vmatpush.xpose.msra.mxu0 0.0
      %3589 = vmatpush.xpose.msra.mxu0 0.0
      %3590 = vmatpush.xpose.msra.mxu0 0.0
      %3591 = vmatpush.xpose.msra.mxu0 0.0
      %3592 = vmatpush.xpose.msra.mxu0 %v3576
      %3593 = vmatpush.xpose.msra.mxu0 %v3573
      %3594 = vmatmul.f32.gmra.mxu0 %v3573
      %v3595 = vpop.f32.mrf.mxu0
      %v3596 = vadd.f32 0.0, %v3595
      %3597 = vmatmul.f32.gmra.mxu0 %v3576
      %v3598 = vpop.f32.mrf.mxu0
      %v3599 = vadd.f32 0.0, %v3598
      %3600 = vdwg.mxu0
      %v3602 = vsel %vm282, %v3452, 0
      %v3605 = vsel %vm282, %v3453, 0
      %3607 = vmatpush.xpose.msra.mxu0 0.0
      %3608 = vmatpush.xpose.msra.mxu0 0.0
      %3609 = vmatpush.xpose.msra.mxu0 0.0
      %3610 = vmatpush.xpose.msra.mxu0 0.0
      %3611 = vmatpush.xpose.msra.mxu0 0.0
      %3612 = vmatpush.xpose.msra.mxu0 0.0
      %3613 = vmatpush.xpose.msra.mxu0 0.0
      %3614 = vmatpush.xpose.msra.mxu0 0.0
      %3615 = vmatpush.xpose.msra.mxu0 0.0
      %3616 = vmatpush.xpose.msra.mxu0 0.0
      %3617 = vmatpush.xpose.msra.mxu0 0.0
      %3618 = vmatpush.xpose.msra.mxu0 0.0
      %3619 = vmatpush.xpose.msra.mxu0 0.0
      %3620 = vmatpush.xpose.msra.mxu0 0.0
      %3621 = vmatpush.xpose.msra.mxu0 %v3605
      %3622 = vmatpush.xpose.msra.mxu0 %v3602
      %3623 = vmatmul.f32.gmra.mxu0 %v3602
      %v3624 = vpop.f32.mrf.mxu0
      %v3625 = vadd.f32 0.0, %v3624
      %3626 = vmatmul.f32.gmra.mxu0 %v3605
      %v3627 = vpop.f32.mrf.mxu0
      %v3628 = vadd.f32 0.0, %v3627
      %3629 = vdwg.mxu0
      %v3631 = vsel %vm282, %v3454, 0
      %v3634 = vsel %vm282, %v3455, 0
      %3636 = vmatpush.xpose.msra.mxu0 0.0
      %3637 = vmatpush.xpose.msra.mxu0 0.0
      %3638 = vmatpush.xpose.msra.mxu0 0.0
      %3639 = vmatpush.xpose.msra.mxu0 0.0
      %3640 = vmatpush.xpose.msra.mxu0 0.0
      %3641 = vmatpush.xpose.msra.mxu0 0.0
      %3642 = vmatpush.xpose.msra.mxu0 0.0
      %3643 = vmatpush.xpose.msra.mxu0 0.0
      %3644 = vmatpush.xpose.msra.mxu0 0.0
      %3645 = vmatpush.xpose.msra.mxu0 0.0
      %3646 = vmatpush.xpose.msra.mxu0 0.0
      %3647 = vmatpush.xpose.msra.mxu0 0.0
      %3648 = vmatpush.xpose.msra.mxu0 0.0
      %3649 = vmatpush.xpose.msra.mxu0 0.0
      %3650 = vmatpush.xpose.msra.mxu0 %v3634
      %3651 = vmatpush.xpose.msra.mxu0 %v3631
      %3652 = vmatmul.f32.gmra.mxu0 %v3631
      %v3653 = vpop.f32.mrf.mxu0
      %v3654 = vadd.f32 0.0, %v3653
      %3655 = vmatmul.f32.gmra.mxu0 %v3634
      %v3656 = vpop.f32.mrf.mxu0
      %v3657 = vadd.f32 0.0, %v3656
      %3658 = vdwg.mxu0
      %v3659 = vmul.f32 %v3480, 0.5
      %v3660 = vmul.f32 %v3483, 0.5
      %v3661 = vmul.f32 %v3509, 0.5
      %v3662 = vmul.f32 %v3512, 0.5
      %v3663 = vmul.f32 %v3538, 0.5
      %v3664 = vmul.f32 %v3541, 0.5
      %v3665 = vmul.f32 %v3567, 0.5
      %v3666 = vmul.f32 %v3570, 0.5
      %v3667 = vmul.f32 %v3596, 0.5
      %v3668 = vmul.f32 %v3599, 0.5
      %v3669 = vmul.f32 %v3625, 0.5
      %v3670 = vmul.f32 %v3628, 0.5
      %v3671 = vmul.f32 %v3654, 0.5
      %v3672 = vmul.f32 %v3657, 0.5
      %v3673 = vsel %vm500, %v3659, -inf
      %3674 = vmax.xlane.f32.xlu0 %v3673
      %v3675 = vpop.xlane.xlu0 %3674
      %v3676 = vsel %vm500, %v3660, -inf
      %3677 = vmax.xlane.f32.xlu0 %v3676
      %v3678 = vpop.xlane.xlu0 %3677
      %v3679 = vsel %vm500, %v3661, -inf
      %3680 = vmax.xlane.f32.xlu0 %v3679
      %v3681 = vpop.xlane.xlu0 %3680
      %v3682 = vsel %vm500, %v3662, -inf
      %3683 = vmax.xlane.f32.xlu0 %v3682
      %v3684 = vpop.xlane.xlu0 %3683
      %v3685 = vsel %vm500, %v3663, -inf
      %3686 = vmax.xlane.f32.xlu0 %v3685
      %v3687 = vpop.xlane.xlu0 %3686
      %v3688 = vsel %vm500, %v3664, -inf
      %3689 = vmax.xlane.f32.xlu0 %v3688
      %v3690 = vpop.xlane.xlu0 %3689
      %v3691 = vsel %vm500, %v3665, -inf
      %3692 = vmax.xlane.f32.xlu0 %v3691
      %v3693 = vpop.xlane.xlu0 %3692
      %v3694 = vsel %vm500, %v3666, -inf
      %3695 = vmax.xlane.f32.xlu0 %v3694
      %v3696 = vpop.xlane.xlu0 %3695
      %v3697 = vsel %vm500, %v3667, -inf
      %3698 = vmax.xlane.f32.xlu0 %v3697
      %v3699 = vpop.xlane.xlu0 %3698
      %v3700 = vsel %vm500, %v3668, -inf
      %3701 = vmax.xlane.f32.xlu0 %v3700
      %v3702 = vpop.xlane.xlu0 %3701
      %v3703 = vsel %vm500, %v3669, -inf
      %3704 = vmax.xlane.f32.xlu0 %v3703
      %v3705 = vpop.xlane.xlu0 %3704
      %v3706 = vsel %vm500, %v3670, -inf
      %3707 = vmax.xlane.f32.xlu0 %v3706
      %v3708 = vpop.xlane.xlu0 %3707
      %v3709 = vsel %vm500, %v3671, -inf
      %3710 = vmax.xlane.f32.xlu0 %v3709
      %v3711 = vpop.xlane.xlu0 %3710
      %v3712 = vsel %vm500, %v3672, -inf
      %3713 = vmax.xlane.f32.xlu0 %v3712
      %v3714 = vpop.xlane.xlu0 %3713
      %v3715 = vsub.f32 %v3659, %v3675
      %v3716 = vsub.f32 %v3660, %v3678
      %v3717 = vsub.f32 %v3661, %v3681
      %v3718 = vsub.f32 %v3662, %v3684
      %v3719 = vsub.f32 %v3663, %v3687
      %v3720 = vsub.f32 %v3664, %v3690
      %v3721 = vsub.f32 %v3665, %v3693
      %v3722 = vsub.f32 %v3666, %v3696
      %v3723 = vsub.f32 %v3667, %v3699
      %v3724 = vsub.f32 %v3668, %v3702
      %v3725 = vsub.f32 %v3669, %v3705
      %v3726 = vsub.f32 %v3670, %v3708
      %v3727 = vsub.f32 %v3671, %v3711
      %v3728 = vsub.f32 %v3672, %v3714
      %v3729 = vmul.f32 %v3715, 1.442695
      %v3730 = vpow.pop %v3729
      %v3731 = vmul.f32 %v3716, 1.442695
      %v3732 = vpow.pop %v3731
      %v3733 = vmul.f32 %v3717, 1.442695
      %v3734 = vpow.pop %v3733
      %v3735 = vmul.f32 %v3718, 1.442695
      %v3736 = vpow.pop %v3735
      %v3737 = vmul.f32 %v3719, 1.442695
      %v3738 = vpow.pop %v3737
      %v3739 = vmul.f32 %v3720, 1.442695
      %v3740 = vpow.pop %v3739
      %v3741 = vmul.f32 %v3721, 1.442695
      %v3742 = vpow.pop %v3741
      %v3743 = vmul.f32 %v3722, 1.442695
      %v3744 = vpow.pop %v3743
      %v3745 = vmul.f32 %v3723, 1.442695
      %v3746 = vpow.pop %v3745
      %v3747 = vmul.f32 %v3724, 1.442695
      %v3748 = vpow.pop %v3747
      %v3749 = vmul.f32 %v3725, 1.442695
      %v3750 = vpow.pop %v3749
      %v3751 = vmul.f32 %v3726, 1.442695
      %v3752 = vpow.pop %v3751
      %v3753 = vmul.f32 %v3727, 1.442695
      %v3754 = vpow.pop %v3753
      %v3755 = vmul.f32 %v3728, 1.442695
      %v3756 = vpow.pop %v3755
      %v3757 = vsel %vm500, %v3730, 0.0
      %3758 = vadd.xlane.f32.xlu0 %v3757
      %v3759 = vpop.xlane.xlu0 %3758
      %v3760 = vsel %vm500, %v3732, 0.0
      %3761 = vadd.xlane.f32.xlu0 %v3760
      %v3762 = vpop.xlane.xlu0 %3761
      %v3763 = vsel %vm500, %v3734, 0.0
      %3764 = vadd.xlane.f32.xlu0 %v3763
      %v3765 = vpop.xlane.xlu0 %3764
      %v3766 = vsel %vm500, %v3736, 0.0
      %3767 = vadd.xlane.f32.xlu0 %v3766
      %v3768 = vpop.xlane.xlu0 %3767
      %v3769 = vsel %vm500, %v3738, 0.0
      %3770 = vadd.xlane.f32.xlu0 %v3769
      %v3771 = vpop.xlane.xlu0 %3770
      %v3772 = vsel %vm500, %v3740, 0.0
      %3773 = vadd.xlane.f32.xlu0 %v3772
      %v3774 = vpop.xlane.xlu0 %3773
      %v3775 = vsel %vm500, %v3742, 0.0
      %3776 = vadd.xlane.f32.xlu0 %v3775
      %v3777 = vpop.xlane.xlu0 %3776
      %v3778 = vsel %vm500, %v3744, 0.0
      %3779 = vadd.xlane.f32.xlu0 %v3778
      %v3780 = vpop.xlane.xlu0 %3779
      %v3781 = vsel %vm500, %v3746, 0.0
      %3782 = vadd.xlane.f32.xlu0 %v3781
      %v3783 = vpop.xlane.xlu0 %3782
      %v3784 = vsel %vm500, %v3748, 0.0
      %3785 = vadd.xlane.f32.xlu0 %v3784
      %v3786 = vpop.xlane.xlu0 %3785
      %v3787 = vsel %vm500, %v3750, 0.0
      %3788 = vadd.xlane.f32.xlu0 %v3787
      %v3789 = vpop.xlane.xlu0 %3788
      %v3790 = vsel %vm500, %v3752, 0.0
      %3791 = vadd.xlane.f32.xlu0 %v3790
      %v3792 = vpop.xlane.xlu0 %3791
      %v3793 = vsel %vm500, %v3754, 0.0
      %3794 = vadd.xlane.f32.xlu0 %v3793
      %v3795 = vpop.xlane.xlu0 %3794
      %v3796 = vsel %vm500, %v3756, 0.0
      %3797 = vadd.xlane.f32.xlu0 %v3796
      %v3798 = vpop.xlane.xlu0 %3797
      %v3799 = vrcp.pop %v3759
      %v3800 = vmul.f32 %v3759, %v3799
      %v3801 = vsub.f32 1.0, %v3800
      %v3802 = vmul.f32 %v3799, %v3801
      %v3803 = vadd.f32 %v3799, %v3802
      %vm3804 = vweird.f32 %v3759
      %vm3805 = vweird.f32 %v3799
      %vm3806 = vmor %vm3804, %vm3805
      %v3807 = vsel %vm3806, %v3799, %v3803
      %v3808 = vand.u32 2147483647, %v3759
      %vm3809 = vcmp.eq.f32.partialorder %v3808, 8.507059e+37
      %v3810 = vand.u32 %v3759, 2147483648
      %v3811 = vor.u32 1.1754944e-38, %v3810
      %v3812 = vsel %vm3809, %v3811, %v3807
      %v3813 = vmul.f32 %v3730, %v3812
      %v3814 = vrcp.pop %v3762
      %v3815 = vmul.f32 %v3762, %v3814
      %v3816 = vsub.f32 1.0, %v3815
      %v3817 = vmul.f32 %v3814, %v3816
      %v3818 = vadd.f32 %v3814, %v3817
      %vm3819 = vweird.f32 %v3762
      %vm3820 = vweird.f32 %v3814
      %vm3821 = vmor %vm3819, %vm3820
      %v3822 = vsel %vm3821, %v3814, %v3818
      %v3823 = vand.u32 2147483647, %v3762
      %vm3824 = vcmp.eq.f32.partialorder %v3823, 8.507059e+37
      %v3825 = vand.u32 %v3762, 2147483648
      %v3826 = vor.u32 1.1754944e-38, %v3825
      %v3827 = vsel %vm3824, %v3826, %v3822
      %v3828 = vmul.f32 %v3732, %v3827
      %v3829 = vrcp.pop %v3765
      %v3830 = vmul.f32 %v3765, %v3829
      %v3831 = vsub.f32 1.0, %v3830
      %v3832 = vmul.f32 %v3829, %v3831
      %v3833 = vadd.f32 %v3829, %v3832
      %vm3834 = vweird.f32 %v3765
      %vm3835 = vweird.f32 %v3829
      %vm3836 = vmor %vm3834, %vm3835
      %v3837 = vsel %vm3836, %v3829, %v3833
      %v3838 = vand.u32 2147483647, %v3765
      %vm3839 = vcmp.eq.f32.partialorder %v3838, 8.507059e+37
      %v3840 = vand.u32 %v3765, 2147483648
      %v3841 = vor.u32 1.1754944e-38, %v3840
      %v3842 = vsel %vm3839, %v3841, %v3837
      %v3843 = vmul.f32 %v3734, %v3842
      %v3844 = vrcp.pop %v3768
      %v3845 = vmul.f32 %v3768, %v3844
      %v3846 = vsub.f32 1.0, %v3845
      %v3847 = vmul.f32 %v3844, %v3846
      %v3848 = vadd.f32 %v3844, %v3847
      %vm3849 = vweird.f32 %v3768
      %vm3850 = vweird.f32 %v3844
      %vm3851 = vmor %vm3849, %vm3850
      %v3852 = vsel %vm3851, %v3844, %v3848
      %v3853 = vand.u32 2147483647, %v3768
      %vm3854 = vcmp.eq.f32.partialorder %v3853, 8.507059e+37
      %v3855 = vand.u32 %v3768, 2147483648
      %v3856 = vor.u32 1.1754944e-38, %v3855
      %v3857 = vsel %vm3854, %v3856, %v3852
      %v3858 = vmul.f32 %v3736, %v3857
      %v3859 = vrcp.pop %v3771
      %v3860 = vmul.f32 %v3771, %v3859
      %v3861 = vsub.f32 1.0, %v3860
      %v3862 = vmul.f32 %v3859, %v3861
      %v3863 = vadd.f32 %v3859, %v3862
      %vm3864 = vweird.f32 %v3771
      %vm3865 = vweird.f32 %v3859
      %vm3866 = vmor %vm3864, %vm3865
      %v3867 = vsel %vm3866, %v3859, %v3863
      %v3868 = vand.u32 2147483647, %v3771
      %vm3869 = vcmp.eq.f32.partialorder %v3868, 8.507059e+37
      %v3870 = vand.u32 %v3771, 2147483648
      %v3871 = vor.u32 1.1754944e-38, %v3870
      %v3872 = vsel %vm3869, %v3871, %v3867
      %v3873 = vmul.f32 %v3738, %v3872
      %v3874 = vrcp.pop %v3774
      %v3875 = vmul.f32 %v3774, %v3874
      %v3876 = vsub.f32 1.0, %v3875
      %v3877 = vmul.f32 %v3874, %v3876
      %v3878 = vadd.f32 %v3874, %v3877
      %vm3879 = vweird.f32 %v3774
      %vm3880 = vweird.f32 %v3874
      %vm3881 = vmor %vm3879, %vm3880
      %v3882 = vsel %vm3881, %v3874, %v3878
      %v3883 = vand.u32 2147483647, %v3774
      %vm3884 = vcmp.eq.f32.partialorder %v3883, 8.507059e+37
      %v3885 = vand.u32 %v3774, 2147483648
      %v3886 = vor.u32 1.1754944e-38, %v3885
      %v3887 = vsel %vm3884, %v3886, %v3882
      %v3888 = vmul.f32 %v3740, %v3887
      %v3889 = vrcp.pop %v3777
      %v3890 = vmul.f32 %v3777, %v3889
      %v3891 = vsub.f32 1.0, %v3890
      %v3892 = vmul.f32 %v3889, %v3891
      %v3893 = vadd.f32 %v3889, %v3892
      %vm3894 = vweird.f32 %v3777
      %vm3895 = vweird.f32 %v3889
      %vm3896 = vmor %vm3894, %vm3895
      %v3897 = vsel %vm3896, %v3889, %v3893
      %v3898 = vand.u32 2147483647, %v3777
      %vm3899 = vcmp.eq.f32.partialorder %v3898, 8.507059e+37
      %v3900 = vand.u32 %v3777, 2147483648
      %v3901 = vor.u32 1.1754944e-38, %v3900
      %v3902 = vsel %vm3899, %v3901, %v3897
      %v3903 = vmul.f32 %v3742, %v3902
      %v3904 = vrcp.pop %v3780
      %v3905 = vmul.f32 %v3780, %v3904
      %v3906 = vsub.f32 1.0, %v3905
      %v3907 = vmul.f32 %v3904, %v3906
      %v3908 = vadd.f32 %v3904, %v3907
      %vm3909 = vweird.f32 %v3780
      %vm3910 = vweird.f32 %v3904
      %vm3911 = vmor %vm3909, %vm3910
      %v3912 = vsel %vm3911, %v3904, %v3908
      %v3913 = vand.u32 2147483647, %v3780
      %vm3914 = vcmp.eq.f32.partialorder %v3913, 8.507059e+37
      %v3915 = vand.u32 %v3780, 2147483648
      %v3916 = vor.u32 1.1754944e-38, %v3915
      %v3917 = vsel %vm3914, %v3916, %v3912
      %v3918 = vmul.f32 %v3744, %v3917
      %v3919 = vrcp.pop %v3783
      %v3920 = vmul.f32 %v3783, %v3919
      %v3921 = vsub.f32 1.0, %v3920
      %v3922 = vmul.f32 %v3919, %v3921
      %v3923 = vadd.f32 %v3919, %v3922
      %vm3924 = vweird.f32 %v3783
      %vm3925 = vweird.f32 %v3919
      %vm3926 = vmor %vm3924, %vm3925
      %v3927 = vsel %vm3926, %v3919, %v3923
      %v3928 = vand.u32 2147483647, %v3783
      %vm3929 = vcmp.eq.f32.partialorder %v3928, 8.507059e+37
      %v3930 = vand.u32 %v3783, 2147483648
      %v3931 = vor.u32 1.1754944e-38, %v3930
      %v3932 = vsel %vm3929, %v3931, %v3927
      %v3933 = vmul.f32 %v3746, %v3932
      %v3934 = vrcp.pop %v3786
      %v3935 = vmul.f32 %v3786, %v3934
      %v3936 = vsub.f32 1.0, %v3935
      %v3937 = vmul.f32 %v3934, %v3936
      %v3938 = vadd.f32 %v3934, %v3937
      %vm3939 = vweird.f32 %v3786
      %vm3940 = vweird.f32 %v3934
      %vm3941 = vmor %vm3939, %vm3940
      %v3942 = vsel %vm3941, %v3934, %v3938
      %v3943 = vand.u32 2147483647, %v3786
      %vm3944 = vcmp.eq.f32.partialorder %v3943, 8.507059e+37
      %v3945 = vand.u32 %v3786, 2147483648
      %v3946 = vor.u32 1.1754944e-38, %v3945
      %v3947 = vsel %vm3944, %v3946, %v3942
      %v3948 = vmul.f32 %v3748, %v3947
      %v3949 = vrcp.pop %v3789
      %v3950 = vmul.f32 %v3789, %v3949
      %v3951 = vsub.f32 1.0, %v3950
      %v3952 = vmul.f32 %v3949, %v3951
      %v3953 = vadd.f32 %v3949, %v3952
      %vm3954 = vweird.f32 %v3789
      %vm3955 = vweird.f32 %v3949
      %vm3956 = vmor %vm3954, %vm3955
      %v3957 = vsel %vm3956, %v3949, %v3953
      %v3958 = vand.u32 2147483647, %v3789
      %vm3959 = vcmp.eq.f32.partialorder %v3958, 8.507059e+37
      %v3960 = vand.u32 %v3789, 2147483648
      %v3961 = vor.u32 1.1754944e-38, %v3960
      %v3962 = vsel %vm3959, %v3961, %v3957
      %v3963 = vmul.f32 %v3750, %v3962
      %v3964 = vrcp.pop %v3792
      %v3965 = vmul.f32 %v3792, %v3964
      %v3966 = vsub.f32 1.0, %v3965
      %v3967 = vmul.f32 %v3964, %v3966
      %v3968 = vadd.f32 %v3964, %v3967
      %vm3969 = vweird.f32 %v3792
      %vm3970 = vweird.f32 %v3964
      %vm3971 = vmor %vm3969, %vm3970
      %v3972 = vsel %vm3971, %v3964, %v3968
      %v3973 = vand.u32 2147483647, %v3792
      %vm3974 = vcmp.eq.f32.partialorder %v3973, 8.507059e+37
      %v3975 = vand.u32 %v3792, 2147483648
      %v3976 = vor.u32 1.1754944e-38, %v3975
      %v3977 = vsel %vm3974, %v3976, %v3972
      %v3978 = vmul.f32 %v3752, %v3977
      %v3979 = vrcp.pop %v3795
      %v3980 = vmul.f32 %v3795, %v3979
      %v3981 = vsub.f32 1.0, %v3980
      %v3982 = vmul.f32 %v3979, %v3981
      %v3983 = vadd.f32 %v3979, %v3982
      %vm3984 = vweird.f32 %v3795
      %vm3985 = vweird.f32 %v3979
      %vm3986 = vmor %vm3984, %vm3985
      %v3987 = vsel %vm3986, %v3979, %v3983
      %v3988 = vand.u32 2147483647, %v3795
      %vm3989 = vcmp.eq.f32.partialorder %v3988, 8.507059e+37
      %v3990 = vand.u32 %v3795, 2147483648
      %v3991 = vor.u32 1.1754944e-38, %v3990
      %v3992 = vsel %vm3989, %v3991, %v3987
      %v3993 = vmul.f32 %v3754, %v3992
      %v3994 = vrcp.pop %v3798
      %v3995 = vmul.f32 %v3798, %v3994
      %v3996 = vsub.f32 1.0, %v3995
      %v3997 = vmul.f32 %v3994, %v3996
      %v3998 = vadd.f32 %v3994, %v3997
      %vm3999 = vweird.f32 %v3798
      %vm4000 = vweird.f32 %v3994
      %vm4001 = vmor %vm3999, %vm4000
      %v4002 = vsel %vm4001, %v3994, %v3998
      %v4003 = vand.u32 2147483647, %v3798
      %vm4004 = vcmp.eq.f32.partialorder %v4003, 8.507059e+37
      %v4005 = vand.u32 %v3798, 2147483648
      %v4006 = vor.u32 1.1754944e-38, %v4005
      %v4007 = vsel %vm4004, %v4006, %v4002
      %v4008 = vmul.f32 %v3756, %v4007
      %v4009 = vmul.f32 %v3813, 0.5
      %v4010 = vmul.f32 %v3828, 0.5
      %v4011 = vmul.f32 %v3843, 0.5
      %v4012 = vmul.f32 %v3858, 0.5
      %v4013 = vmul.f32 %v3873, 0.5
      %v4014 = vmul.f32 %v3888, 0.5
      %v4015 = vmul.f32 %v3903, 0.5
      %v4016 = vmul.f32 %v3918, 0.5
      %v4017 = vmul.f32 %v3933, 0.5
      %v4018 = vmul.f32 %v3948, 0.5
      %v4019 = vmul.f32 %v3963, 0.5
      %v4020 = vmul.f32 %v3978, 0.5
      %v4021 = vmul.f32 %v3993, 0.5
      %v4022 = vmul.f32 %v4008, 0.5
      %v4023 = vmul.f32 %v263, %v4009
      %v4024 = vmul.f32 %v264, %v4010
      %v4025 = vmul.f32 %v265, %v4011
      %v4026 = vmul.f32 %v266, %v4012
      %v4027 = vmul.f32 %v267, %v4013
      %v4028 = vmul.f32 %v268, %v4014
      %v4029 = vmul.f32 %v269, %v4015
      %v4030 = vmul.f32 %v270, %v4016
      %v4031 = vmul.f32 %v271, %v4017
      %v4032 = vmul.f32 %v272, %v4018
      %v4033 = vmul.f32 %v273, %v4019
      %v4034 = vmul.f32 %v274, %v4020
      %v4035 = vmul.f32 %v275, %v4021
      %v4036 = vmul.f32 %v276, %v4022
      %4037 = vxpose.xlu0.b32.start [1/16] %v4023, 128
      %4038 = vxpose.xlu0.b32.cont [2/16] %v4024, 128
      %4039 = vxpose.xlu0.b32.cont [3/16] 0.0, 128
      %4040 = vxpose.xlu0.b32.cont [4/16] 0.0, 128
      %4041 = vxpose.xlu0.b32.cont [5/16] 0.0, 128
      %4042 = vxpose.xlu0.b32.cont [6/16] 0.0, 128
      %4043 = vxpose.xlu0.b32.cont [7/16] 0.0, 128
      %4044 = vxpose.xlu0.b32.cont [8/16] 0.0, 128
      %4045 = vxpose.xlu0.b32.cont [9/16] 0.0, 128
      %4046 = vxpose.xlu0.b32.cont [10/16] 0.0, 128
      %4047 = vxpose.xlu0.b32.cont [11/16] 0.0, 128
      %4048 = vxpose.xlu0.b32.cont [12/16] 0.0, 128
      %4049 = vxpose.xlu0.b32.cont [13/16] 0.0, 128
      %4050 = vxpose.xlu0.b32.cont [14/16] 0.0, 128
      %4051 = vxpose.xlu0.b32.cont [15/16] 0.0, 128
      %4052 = vxpose.xlu0.b32.end [16/16] 0.0, 128
      %v4053 = vpop.trf.xlu0
      %v4054 = vpop.trf.xlu0
      %v4055 = vpop.trf.xlu0
      %v4056 = vpop.trf.xlu0
      %v4057 = vpop.trf.xlu0
      %v4058 = vpop.trf.xlu0
      %v4059 = vpop.trf.xlu0
      %v4060 = vpop.trf.xlu0
      %v4061 = vpop.trf.xlu0
      %v4062 = vpop.trf.xlu0
      %v4063 = vpop.trf.xlu0
      %v4064 = vpop.trf.xlu0
      %v4065 = vpop.trf.xlu0
      %v4066 = vpop.trf.xlu0
      %v4067 = vpop.trf.xlu0
      %v4068 = vpop.trf.xlu0
      %4069 = vxpose.xlu0.b32.start [1/16] %v4025, 128
      %4070 = vxpose.xlu0.b32.cont [2/16] %v4026, 128
      %4071 = vxpose.xlu0.b32.cont [3/16] 0.0, 128
      %4072 = vxpose.xlu0.b32.cont [4/16] 0.0, 128
      %4073 = vxpose.xlu0.b32.cont [5/16] 0.0, 128
      %4074 = vxpose.xlu0.b32.cont [6/16] 0.0, 128
      %4075 = vxpose.xlu0.b32.cont [7/16] 0.0, 128
      %4076 = vxpose.xlu0.b32.cont [8/16] 0.0, 128
      %4077 = vxpose.xlu0.b32.cont [9/16] 0.0, 128
      %4078 = vxpose.xlu0.b32.cont [10/16] 0.0, 128
      %4079 = vxpose.xlu0.b32.cont [11/16] 0.0, 128
      %4080 = vxpose.xlu0.b32.cont [12/16] 0.0, 128
      %4081 = vxpose.xlu0.b32.cont [13/16] 0.0, 128
      %4082 = vxpose.xlu0.b32.cont [14/16] 0.0, 128
      %4083 = vxpose.xlu0.b32.cont [15/16] 0.0, 128
      %4084 = vxpose.xlu0.b32.end [16/16] 0.0, 128
      %v4085 = vpop.trf.xlu0
      %v4086 = vpop.trf.xlu0
      %v4087 = vpop.trf.xlu0
      %v4088 = vpop.trf.xlu0
      %v4089 = vpop.trf.xlu0
      %v4090 = vpop.trf.xlu0
      %v4091 = vpop.trf.xlu0
      %v4092 = vpop.trf.xlu0
      %v4093 = vpop.trf.xlu0
      %v4094 = vpop.trf.xlu0
      %v4095 = vpop.trf.xlu0
      %v4096 = vpop.trf.xlu0
      %v4097 = vpop.trf.xlu0
      %v4098 = vpop.trf.xlu0
      %v4099 = vpop.trf.xlu0
      %v4100 = vpop.trf.xlu0
      %4101 = vxpose.xlu0.b32.start [1/16] %v4027, 128
      %4102 = vxpose.xlu0.b32.cont [2/16] %v4028, 128
      %4103 = vxpose.xlu0.b32.cont [3/16] 0.0, 128
      %4104 = vxpose.xlu0.b32.cont [4/16] 0.0, 128
      %4105 = vxpose.xlu0.b32.cont [5/16] 0.0, 128
      %4106 = vxpose.xlu0.b32.cont [6/16] 0.0, 128
      %4107 = vxpose.xlu0.b32.cont [7/16] 0.0, 128
      %4108 = vxpose.xlu0.b32.cont [8/16] 0.0, 128
      %4109 = vxpose.xlu0.b32.cont [9/16] 0.0, 128
      %4110 = vxpose.xlu0.b32.cont [10/16] 0.0, 128
      %4111 = vxpose.xlu0.b32.cont [11/16] 0.0, 128
      %4112 = vxpose.xlu0.b32.cont [12/16] 0.0, 128
      %4113 = vxpose.xlu0.b32.cont [13/16] 0.0, 128
      %4114 = vxpose.xlu0.b32.cont [14/16] 0.0, 128
      %4115 = vxpose.xlu0.b32.cont [15/16] 0.0, 128
      %4116 = vxpose.xlu0.b32.end [16/16] 0.0, 128
      %v4117 = vpop.trf.xlu0
      %v4118 = vpop.trf.xlu0
      %v4119 = vpop.trf.xlu0
      %v4120 = vpop.trf.xlu0
      %v4121 = vpop.trf.xlu0
      %v4122 = vpop.trf.xlu0
      %v4123 = vpop.trf.xlu0
      %v4124 = vpop.trf.xlu0
      %v4125 = vpop.trf.xlu0
      %v4126 = vpop.trf.xlu0
      %v4127 = vpop.trf.xlu0
      %v4128 = vpop.trf.xlu0
      %v4129 = vpop.trf.xlu0
      %v4130 = vpop.trf.xlu0
      %v4131 = vpop.trf.xlu0
      %v4132 = vpop.trf.xlu0
      %4133 = vxpose.xlu0.b32.start [1/16] %v4029, 128
      %4134 = vxpose.xlu0.b32.cont [2/16] %v4030, 128
      %4135 = vxpose.xlu0.b32.cont [3/16] 0.0, 128
      %4136 = vxpose.xlu0.b32.cont [4/16] 0.0, 128
      %4137 = vxpose.xlu0.b32.cont [5/16] 0.0, 128
      %4138 = vxpose.xlu0.b32.cont [6/16] 0.0, 128
      %4139 = vxpose.xlu0.b32.cont [7/16] 0.0, 128
      %4140 = vxpose.xlu0.b32.cont [8/16] 0.0, 128
      %4141 = vxpose.xlu0.b32.cont [9/16] 0.0, 128
      %4142 = vxpose.xlu0.b32.cont [10/16] 0.0, 128
      %4143 = vxpose.xlu0.b32.cont [11/16] 0.0, 128
      %4144 = vxpose.xlu0.b32.cont [12/16] 0.0, 128
      %4145 = vxpose.xlu0.b32.cont [13/16] 0.0, 128
      %4146 = vxpose.xlu0.b32.cont [14/16] 0.0, 128
      %4147 = vxpose.xlu0.b32.cont [15/16] 0.0, 128
      %4148 = vxpose.xlu0.b32.end [16/16] 0.0, 128
      %v4149 = vpop.trf.xlu0
      %v4150 = vpop.trf.xlu0
      %v4151 = vpop.trf.xlu0
      %v4152 = vpop.trf.xlu0
      %v4153 = vpop.trf.xlu0
      %v4154 = vpop.trf.xlu0
      %v4155 = vpop.trf.xlu0
      %v4156 = vpop.trf.xlu0
      %v4157 = vpop.trf.xlu0
      %v4158 = vpop.trf.xlu0
      %v4159 = vpop.trf.xlu0
      %v4160 = vpop.trf.xlu0
      %v4161 = vpop.trf.xlu0
      %v4162 = vpop.trf.xlu0
      %v4163 = vpop.trf.xlu0
      %v4164 = vpop.trf.xlu0
      %4165 = vxpose.xlu0.b32.start [1/16] %v4031, 128
      %4166 = vxpose.xlu0.b32.cont [2/16] %v4032, 128
      %4167 = vxpose.xlu0.b32.cont [3/16] 0.0, 128
      %4168 = vxpose.xlu0.b32.cont [4/16] 0.0, 128
      %4169 = vxpose.xlu0.b32.cont [5/16] 0.0, 128
      %4170 = vxpose.xlu0.b32.cont [6/16] 0.0, 128
      %4171 = vxpose.xlu0.b32.cont [7/16] 0.0, 128
      %4172 = vxpose.xlu0.b32.cont [8/16] 0.0, 128
      %4173 = vxpose.xlu0.b32.cont [9/16] 0.0, 128
      %4174 = vxpose.xlu0.b32.cont [10/16] 0.0, 128
      %4175 = vxpose.xlu0.b32.cont [11/16] 0.0, 128
      %4176 = vxpose.xlu0.b32.cont [12/16] 0.0, 128
      %4177 = vxpose.xlu0.b32.cont [13/16] 0.0, 128
      %4178 = vxpose.xlu0.b32.cont [14/16] 0.0, 128
      %4179 = vxpose.xlu0.b32.cont [15/16] 0.0, 128
      %4180 = vxpose.xlu0.b32.end [16/16] 0.0, 128
      %v4181 = vpop.trf.xlu0
      %v4182 = vpop.trf.xlu0
      %v4183 = vpop.trf.xlu0
      %v4184 = vpop.trf.xlu0
      %v4185 = vpop.trf.xlu0
      %v4186 = vpop.trf.xlu0
      %v4187 = vpop.trf.xlu0
      %v4188 = vpop.trf.xlu0
      %v4189 = vpop.trf.xlu0
      %v4190 = vpop.trf.xlu0
      %v4191 = vpop.trf.xlu0
      %v4192 = vpop.trf.xlu0
      %v4193 = vpop.trf.xlu0
      %v4194 = vpop.trf.xlu0
      %v4195 = vpop.trf.xlu0
      %v4196 = vpop.trf.xlu0
      %4197 = vxpose.xlu0.b32.start [1/16] %v4033, 128
      %4198 = vxpose.xlu0.b32.cont [2/16] %v4034, 128
      %4199 = vxpose.xlu0.b32.cont [3/16] 0.0, 128
      %4200 = vxpose.xlu0.b32.cont [4/16] 0.0, 128
      %4201 = vxpose.xlu0.b32.cont [5/16] 0.0, 128
      %4202 = vxpose.xlu0.b32.cont [6/16] 0.0, 128
      %4203 = vxpose.xlu0.b32.cont [7/16] 0.0, 128
      %4204 = vxpose.xlu0.b32.cont [8/16] 0.0, 128
      %4205 = vxpose.xlu0.b32.cont [9/16] 0.0, 128
      %4206 = vxpose.xlu0.b32.cont [10/16] 0.0, 128
      %4207 = vxpose.xlu0.b32.cont [11/16] 0.0, 128
      %4208 = vxpose.xlu0.b32.cont [12/16] 0.0, 128
      %4209 = vxpose.xlu0.b32.cont [13/16] 0.0, 128
      %4210 = vxpose.xlu0.b32.cont [14/16] 0.0, 128
      %4211 = vxpose.xlu0.b32.cont [15/16] 0.0, 128
      %4212 = vxpose.xlu0.b32.end [16/16] 0.0, 128
      %v4213 = vpop.trf.xlu0
      %v4214 = vpop.trf.xlu0
      %v4215 = vpop.trf.xlu0
      %v4216 = vpop.trf.xlu0
      %v4217 = vpop.trf.xlu0
      %v4218 = vpop.trf.xlu0
      %v4219 = vpop.trf.xlu0
      %v4220 = vpop.trf.xlu0
      %v4221 = vpop.trf.xlu0
      %v4222 = vpop.trf.xlu0
      %v4223 = vpop.trf.xlu0
      %v4224 = vpop.trf.xlu0
      %v4225 = vpop.trf.xlu0
      %v4226 = vpop.trf.xlu0
      %v4227 = vpop.trf.xlu0
      %v4228 = vpop.trf.xlu0
      %4229 = vxpose.xlu0.b32.start [1/16] %v4035, 128
      %4230 = vxpose.xlu0.b32.cont [2/16] %v4036, 128
      %4231 = vxpose.xlu0.b32.cont [3/16] 0.0, 128
      %4232 = vxpose.xlu0.b32.cont [4/16] 0.0, 128
      %4233 = vxpose.xlu0.b32.cont [5/16] 0.0, 128
      %4234 = vxpose.xlu0.b32.cont [6/16] 0.0, 128
      %4235 = vxpose.xlu0.b32.cont [7/16] 0.0, 128
      %4236 = vxpose.xlu0.b32.cont [8/16] 0.0, 128
      %4237 = vxpose.xlu0.b32.cont [9/16] 0.0, 128
      %4238 = vxpose.xlu0.b32.cont [10/16] 0.0, 128
      %4239 = vxpose.xlu0.b32.cont [11/16] 0.0, 128
      %4240 = vxpose.xlu0.b32.cont [12/16] 0.0, 128
      %4241 = vxpose.xlu0.b32.cont [13/16] 0.0, 128
      %4242 = vxpose.xlu0.b32.cont [14/16] 0.0, 128
      %4243 = vxpose.xlu0.b32.cont [15/16] 0.0, 128
      %4244 = vxpose.xlu0.b32.end [16/16] 0.0, 128
      %v4245 = vpop.trf.xlu0
      %v4246 = vpop.trf.xlu0
      %v4247 = vpop.trf.xlu0
      %v4248 = vpop.trf.xlu0
      %v4249 = vpop.trf.xlu0
      %v4250 = vpop.trf.xlu0
      %v4251 = vpop.trf.xlu0
      %v4252 = vpop.trf.xlu0
      %v4253 = vpop.trf.xlu0
      %v4254 = vpop.trf.xlu0
      %v4255 = vpop.trf.xlu0
      %v4256 = vpop.trf.xlu0
      %v4257 = vpop.trf.xlu0
      %v4258 = vpop.trf.xlu0
      %v4259 = vpop.trf.xlu0
      %v4260 = vpop.trf.xlu0
      %v4262 = vsel %vm500, %v4053, 0
      %v4265 = vsel %vm500, %v4054, 0
      %4267 = vmatpush.msra.mxu0 0.0
      %4268 = vmatpush.msra.mxu0 0.0
      %4269 = vmatpush.msra.mxu0 0.0
      %4270 = vmatpush.msra.mxu0 0.0
      %4271 = vmatpush.msra.mxu0 0.0
      %4272 = vmatpush.msra.mxu0 0.0
      %4273 = vmatpush.msra.mxu0 0.0
      %4274 = vmatpush.msra.mxu0 0.0
      %4275 = vmatpush.msra.mxu0 0.0
      %4276 = vmatpush.msra.mxu0 0.0
      %4277 = vmatpush.msra.mxu0 0.0
      %4278 = vmatpush.msra.mxu0 0.0
      %4279 = vmatpush.msra.mxu0 0.0
      %4280 = vmatpush.msra.mxu0 0.0
      %4281 = vmatpush.msra.mxu0 %v246
      %4282 = vmatpush.msra.mxu0 %v245
      %4283 = vmatmul.f32.gmra.mxu0 %v4262
      %v4284 = vpop.f32.mrf.mxu0
      %v4285 = vadd.f32 0.0, %v4284
      %4286 = vmatmul.f32.gmra.mxu0 %v4265
      %v4287 = vpop.f32.mrf.mxu0
      %v4288 = vadd.f32 0.0, %v4287
      %4289 = vdwg.mxu0
      %v4291 = vsel %vm500, %v4085, 0
      %v4294 = vsel %vm500, %v4086, 0
      %4296 = vmatpush.msra.mxu0 0.0
      %4297 = vmatpush.msra.mxu0 0.0
      %4298 = vmatpush.msra.mxu0 0.0
      %4299 = vmatpush.msra.mxu0 0.0
      %4300 = vmatpush.msra.mxu0 0.0
      %4301 = vmatpush.msra.mxu0 0.0
      %4302 = vmatpush.msra.mxu0 0.0
      %4303 = vmatpush.msra.mxu0 0.0
      %4304 = vmatpush.msra.mxu0 0.0
      %4305 = vmatpush.msra.mxu0 0.0
      %4306 = vmatpush.msra.mxu0 0.0
      %4307 = vmatpush.msra.mxu0 0.0
      %4308 = vmatpush.msra.mxu0 0.0
      %4309 = vmatpush.msra.mxu0 0.0
      %4310 = vmatpush.msra.mxu0 %v3443
      %4311 = vmatpush.msra.mxu0 %v3442
      %4312 = vmatmul.f32.gmra.mxu0 %v4291
      %v4313 = vpop.f32.mrf.mxu0
      %v4314 = vadd.f32 0.0, %v4313
      %4315 = vmatmul.f32.gmra.mxu0 %v4294
      %v4316 = vpop.f32.mrf.mxu0
      %v4317 = vadd.f32 0.0, %v4316
      %4318 = vdwg.mxu0
      %v4320 = vsel %vm500, %v4117, 0
      %v4323 = vsel %vm500, %v4118, 0
      %4325 = vmatpush.msra.mxu0 0.0
      %4326 = vmatpush.msra.mxu0 0.0
      %4327 = vmatpush.msra.mxu0 0.0
      %4328 = vmatpush.msra.mxu0 0.0
      %4329 = vmatpush.msra.mxu0 0.0
      %4330 = vmatpush.msra.mxu0 0.0
      %4331 = vmatpush.msra.mxu0 0.0
      %4332 = vmatpush.msra.mxu0 0.0
      %4333 = vmatpush.msra.mxu0 0.0
      %4334 = vmatpush.msra.mxu0 0.0
      %4335 = vmatpush.msra.mxu0 0.0
      %4336 = vmatpush.msra.mxu0 0.0
      %4337 = vmatpush.msra.mxu0 0.0
      %4338 = vmatpush.msra.mxu0 0.0
      %4339 = vmatpush.msra.mxu0 %v3445
      %4340 = vmatpush.msra.mxu0 %v3444
      %4341 = vmatmul.f32.gmra.mxu0 %v4320
      %v4342 = vpop.f32.mrf.mxu0
      %v4343 = vadd.f32 0.0, %v4342
      %4344 = vmatmul.f32.gmra.mxu0 %v4323
      %v4345 = vpop.f32.mrf.mxu0
      %v4346 = vadd.f32 0.0, %v4345
      %4347 = vdwg.mxu0
      %v4349 = vsel %vm500, %v4149, 0
      %v4352 = vsel %vm500, %v4150, 0
      %4354 = vmatpush.msra.mxu0 0.0
      %4355 = vmatpush.msra.mxu0 0.0
      %4356 = vmatpush.msra.mxu0 0.0
      %4357 = vmatpush.msra.mxu0 0.0
      %4358 = vmatpush.msra.mxu0 0.0
      %4359 = vmatpush.msra.mxu0 0.0
      %4360 = vmatpush.msra.mxu0 0.0
      %4361 = vmatpush.msra.mxu0 0.0
      %4362 = vmatpush.msra.mxu0 0.0
      %4363 = vmatpush.msra.mxu0 0.0
      %4364 = vmatpush.msra.mxu0 0.0
      %4365 = vmatpush.msra.mxu0 0.0
      %4366 = vmatpush.msra.mxu0 0.0
      %4367 = vmatpush.msra.mxu0 0.0
      %4368 = vmatpush.msra.mxu0 %v3447
      %4369 = vmatpush.msra.mxu0 %v3446
      %4370 = vmatmul.f32.gmra.mxu0 %v4349
      %v4371 = vpop.f32.mrf.mxu0
      %v4372 = vadd.f32 0.0, %v4371
      %4373 = vmatmul.f32.gmra.mxu0 %v4352
      %v4374 = vpop.f32.mrf.mxu0
      %v4375 = vadd.f32 0.0, %v4374
      %4376 = vdwg.mxu0
      %v4378 = vsel %vm500, %v4181, 0
      %v4381 = vsel %vm500, %v4182, 0
      %4383 = vmatpush.msra.mxu0 0.0
      %4384 = vmatpush.msra.mxu0 0.0
      %4385 = vmatpush.msra.mxu0 0.0
      %4386 = vmatpush.msra.mxu0 0.0
      %4387 = vmatpush.msra.mxu0 0.0
      %4388 = vmatpush.msra.mxu0 0.0
      %4389 = vmatpush.msra.mxu0 0.0
      %4390 = vmatpush.msra.mxu0 0.0
      %4391 = vmatpush.msra.mxu0 0.0
      %4392 = vmatpush.msra.mxu0 0.0
      %4393 = vmatpush.msra.mxu0 0.0
      %4394 = vmatpush.msra.mxu0 0.0
      %4395 = vmatpush.msra.mxu0 0.0
      %4396 = vmatpush.msra.mxu0 0.0
      %4397 = vmatpush.msra.mxu0 %v3449
      %4398 = vmatpush.msra.mxu0 %v3448
      %4399 = vmatmul.f32.gmra.mxu0 %v4378
      %v4400 = vpop.f32.mrf.mxu0
      %v4401 = vadd.f32 0.0, %v4400
      %4402 = vmatmul.f32.gmra.mxu0 %v4381
      %v4403 = vpop.f32.mrf.mxu0
      %v4404 = vadd.f32 0.0, %v4403
      %4405 = vdwg.mxu0
      %v4407 = vsel %vm500, %v4213, 0
      %v4410 = vsel %vm500, %v4214, 0
      %4412 = vmatpush.msra.mxu0 0.0
      %4413 = vmatpush.msra.mxu0 0.0
      %4414 = vmatpush.msra.mxu0 0.0
      %4415 = vmatpush.msra.mxu0 0.0
      %4416 = vmatpush.msra.mxu0 0.0
      %4417 = vmatpush.msra.mxu0 0.0
      %4418 = vmatpush.msra.mxu0 0.0
      %4419 = vmatpush.msra.mxu0 0.0
      %4420 = vmatpush.msra.mxu0 0.0
      %4421 = vmatpush.msra.mxu0 0.0
      %4422 = vmatpush.msra.mxu0 0.0
      %4423 = vmatpush.msra.mxu0 0.0
      %4424 = vmatpush.msra.mxu0 0.0
      %4425 = vmatpush.msra.mxu0 0.0
      %4426 = vmatpush.msra.mxu0 %v3451
      %4427 = vmatpush.msra.mxu0 %v3450
      %4428 = vmatmul.f32.gmra.mxu0 %v4407
      %v4429 = vpop.f32.mrf.mxu0
      %v4430 = vadd.f32 0.0, %v4429
      %4431 = vmatmul.f32.gmra.mxu0 %v4410
      %v4432 = vpop.f32.mrf.mxu0
      %v4433 = vadd.f32 0.0, %v4432
      %4434 = vdwg.mxu0
      %v4436 = vsel %vm500, %v4245, 0
      %v4439 = vsel %vm500, %v4246, 0
      %4441 = vmatpush.msra.mxu0 0.0
      %4442 = vmatpush.msra.mxu0 0.0
      %4443 = vmatpush.msra.mxu0 0.0
      %4444 = vmatpush.msra.mxu0 0.0
      %4445 = vmatpush.msra.mxu0 0.0
      %4446 = vmatpush.msra.mxu0 0.0
      %4447 = vmatpush.msra.mxu0 0.0
      %4448 = vmatpush.msra.mxu0 0.0
      %4449 = vmatpush.msra.mxu0 0.0
      %4450 = vmatpush.msra.mxu0 0.0
      %4451 = vmatpush.msra.mxu0 0.0
      %4452 = vmatpush.msra.mxu0 0.0
      %4453 = vmatpush.msra.mxu0 0.0
      %4454 = vmatpush.msra.mxu0 0.0
      %4455 = vmatpush.msra.mxu0 %v3453
      %4456 = vmatpush.msra.mxu0 %v3452
      %4457 = vmatmul.f32.gmra.mxu0 %v4436
      %v4458 = vpop.f32.mrf.mxu0
      %v4459 = vadd.f32 0.0, %v4458
      %4460 = vmatmul.f32.gmra.mxu0 %v4439
      %v4461 = vpop.f32.mrf.mxu0
      %v4462 = vadd.f32 0.0, %v4461
      %4463 = vdwg.mxu0
      %v4464 = vmul.f32 %v1295, %v3442
      %v4465 = vmul.f32 %v1300, %v3443
      %v4466 = vmul.f32 %v1295, %v3444
      %v4467 = vmul.f32 %v1300, %v3445
      %v4468 = vmul.f32 %v1295, %v3446
      %v4469 = vmul.f32 %v1300, %v3447
      %v4470 = vmul.f32 %v1295, %v3448
      %v4471 = vmul.f32 %v1300, %v3449
      %v4472 = vmul.f32 %v1295, %v3450
      %v4473 = vmul.f32 %v1300, %v3451
      %v4474 = vmul.f32 %v1295, %v3452
      %v4475 = vmul.f32 %v1300, %v3453
      %v4476 = vmul.f32 %v1295, %v3454
      %v4477 = vmul.f32 %v1300, %v3455
      %v4478 = vmul.f32 %v1321, %v4285
      %v4479 = vmul.f32 %v1326, %v4288
      %v4480 = vmul.f32 %v1321, %v4314
      %v4481 = vmul.f32 %v1326, %v4317
      %v4482 = vmul.f32 %v1321, %v4343
      %v4483 = vmul.f32 %v1326, %v4346
      %v4484 = vmul.f32 %v1321, %v4372
      %v4485 = vmul.f32 %v1326, %v4375
      %v4486 = vmul.f32 %v1321, %v4401
      %v4487 = vmul.f32 %v1326, %v4404
      %v4488 = vmul.f32 %v1321, %v4430
      %v4489 = vmul.f32 %v1326, %v4433
      %v4490 = vmul.f32 %v1321, %v4459
      %v4491 = vmul.f32 %v1326, %v4462
      %v4492 = vadd.f32 %v4464, %v4478
      %v4493 = vadd.f32 %v4465, %v4479
      %v4494 = vadd.f32 %v4466, %v4480
      %v4495 = vadd.f32 %v4467, %v4481
      %v4496 = vadd.f32 %v4468, %v4482
      %v4497 = vadd.f32 %v4469, %v4483
      %v4498 = vadd.f32 %v4470, %v4484
      %v4499 = vadd.f32 %v4471, %v4485
      %v4500 = vadd.f32 %v4472, %v4486
      %v4501 = vadd.f32 %v4473, %v4487
      %v4502 = vadd.f32 %v4474, %v4488
      %v4503 = vadd.f32 %v4475, %v4489
      %v4504 = vadd.f32 %v4476, %v4490
      %v4505 = vadd.f32 %v4477, %v4491
      %v4507 = vsel %vm282, %v4492, 0
      %v4510 = vsel %vm282, %v4493, 0
      %4512 = vmatpush.xpose.msra.mxu0 0.0
      %4513 = vmatpush.xpose.msra.mxu0 0.0
      %4514 = vmatpush.xpose.msra.mxu0 0.0
      %4515 = vmatpush.xpose.msra.mxu0 0.0
      %4516 = vmatpush.xpose.msra.mxu0 0.0
      %4517 = vmatpush.xpose.msra.mxu0 0.0
      %4518 = vmatpush.xpose.msra.mxu0 0.0
      %4519 = vmatpush.xpose.msra.mxu0 0.0
      %4520 = vmatpush.xpose.msra.mxu0 0.0
      %4521 = vmatpush.xpose.msra.mxu0 0.0
      %4522 = vmatpush.xpose.msra.mxu0 0.0
      %4523 = vmatpush.xpose.msra.mxu0 0.0
      %4524 = vmatpush.xpose.msra.mxu0 0.0
      %4525 = vmatpush.xpose.msra.mxu0 0.0
      %4526 = vmatpush.xpose.msra.mxu0 %v4510
      %4527 = vmatpush.xpose.msra.mxu0 %v4507
      %4528 = vmatmul.f32.gmra.mxu0 %v4507
      %v4529 = vpop.f32.mrf.mxu0
      %v4530 = vadd.f32 0.0, %v4529
      %4531 = vmatmul.f32.gmra.mxu0 %v4510
      %v4532 = vpop.f32.mrf.mxu0
      %v4533 = vadd.f32 0.0, %v4532
      %4534 = vdwg.mxu0
      %v4536 = vsel %vm282, %v4494, 0
      %v4539 = vsel %vm282, %v4495, 0
      %4541 = vmatpush.xpose.msra.mxu0 0.0
      %4542 = vmatpush.xpose.msra.mxu0 0.0
      %4543 = vmatpush.xpose.msra.mxu0 0.0
      %4544 = vmatpush.xpose.msra.mxu0 0.0
      %4545 = vmatpush.xpose.msra.mxu0 0.0
      %4546 = vmatpush.xpose.msra.mxu0 0.0
      %4547 = vmatpush.xpose.msra.mxu0 0.0
      %4548 = vmatpush.xpose.msra.mxu0 0.0
      %4549 = vmatpush.xpose.msra.mxu0 0.0
      %4550 = vmatpush.xpose.msra.mxu0 0.0
      %4551 = vmatpush.xpose.msra.mxu0 0.0
      %4552 = vmatpush.xpose.msra.mxu0 0.0
      %4553 = vmatpush.xpose.msra.mxu0 0.0
      %4554 = vmatpush.xpose.msra.mxu0 0.0
      %4555 = vmatpush.xpose.msra.mxu0 %v4539
      %4556 = vmatpush.xpose.msra.mxu0 %v4536
      %4557 = vmatmul.f32.gmra.mxu0 %v4536
      %v4558 = vpop.f32.mrf.mxu0
      %v4559 = vadd.f32 0.0, %v4558
      %4560 = vmatmul.f32.gmra.mxu0 %v4539
      %v4561 = vpop.f32.mrf.mxu0
      %v4562 = vadd.f32 0.0, %v4561
      %4563 = vdwg.mxu0
      %v4565 = vsel %vm282, %v4496, 0
      %v4568 = vsel %vm282, %v4497, 0
      %4570 = vmatpush.xpose.msra.mxu0 0.0
      %4571 = vmatpush.xpose.msra.mxu0 0.0
      %4572 = vmatpush.xpose.msra.mxu0 0.0
      %4573 = vmatpush.xpose.msra.mxu0 0.0
      %4574 = vmatpush.xpose.msra.mxu0 0.0
      %4575 = vmatpush.xpose.msra.mxu0 0.0
      %4576 = vmatpush.xpose.msra.mxu0 0.0
      %4577 = vmatpush.xpose.msra.mxu0 0.0
      %4578 = vmatpush.xpose.msra.mxu0 0.0
      %4579 = vmatpush.xpose.msra.mxu0 0.0
      %4580 = vmatpush.xpose.msra.mxu0 0.0
      %4581 = vmatpush.xpose.msra.mxu0 0.0
      %4582 = vmatpush.xpose.msra.mxu0 0.0
      %4583 = vmatpush.xpose.msra.mxu0 0.0
      %4584 = vmatpush.xpose.msra.mxu0 %v4568
      %4585 = vmatpush.xpose.msra.mxu0 %v4565
      %4586 = vmatmul.f32.gmra.mxu0 %v4565
      %v4587 = vpop.f32.mrf.mxu0
      %v4588 = vadd.f32 0.0, %v4587
      %4589 = vmatmul.f32.gmra.mxu0 %v4568
      %v4590 = vpop.f32.mrf.mxu0
      %v4591 = vadd.f32 0.0, %v4590
      %4592 = vdwg.mxu0
      %v4594 = vsel %vm282, %v4498, 0
      %v4597 = vsel %vm282, %v4499, 0
      %4599 = vmatpush.xpose.msra.mxu0 0.0
      %4600 = vmatpush.xpose.msra.mxu0 0.0
      %4601 = vmatpush.xpose.msra.mxu0 0.0
      %4602 = vmatpush.xpose.msra.mxu0 0.0
      %4603 = vmatpush.xpose.msra.mxu0 0.0
      %4604 = vmatpush.xpose.msra.mxu0 0.0
      %4605 = vmatpush.xpose.msra.mxu0 0.0
      %4606 = vmatpush.xpose.msra.mxu0 0.0
      %4607 = vmatpush.xpose.msra.mxu0 0.0
      %4608 = vmatpush.xpose.msra.mxu0 0.0
      %4609 = vmatpush.xpose.msra.mxu0 0.0
      %4610 = vmatpush.xpose.msra.mxu0 0.0
      %4611 = vmatpush.xpose.msra.mxu0 0.0
      %4612 = vmatpush.xpose.msra.mxu0 0.0
      %4613 = vmatpush.xpose.msra.mxu0 %v4597
      %4614 = vmatpush.xpose.msra.mxu0 %v4594
      %4615 = vmatmul.f32.gmra.mxu0 %v4594
      %v4616 = vpop.f32.mrf.mxu0
      %v4617 = vadd.f32 0.0, %v4616
      %4618 = vmatmul.f32.gmra.mxu0 %v4597
      %v4619 = vpop.f32.mrf.mxu0
      %v4620 = vadd.f32 0.0, %v4619
      %4621 = vdwg.mxu0
      %v4623 = vsel %vm282, %v4500, 0
      %v4626 = vsel %vm282, %v4501, 0
      %4628 = vmatpush.xpose.msra.mxu0 0.0
      %4629 = vmatpush.xpose.msra.mxu0 0.0
      %4630 = vmatpush.xpose.msra.mxu0 0.0
      %4631 = vmatpush.xpose.msra.mxu0 0.0
      %4632 = vmatpush.xpose.msra.mxu0 0.0
      %4633 = vmatpush.xpose.msra.mxu0 0.0
      %4634 = vmatpush.xpose.msra.mxu0 0.0
      %4635 = vmatpush.xpose.msra.mxu0 0.0
      %4636 = vmatpush.xpose.msra.mxu0 0.0
      %4637 = vmatpush.xpose.msra.mxu0 0.0
      %4638 = vmatpush.xpose.msra.mxu0 0.0
      %4639 = vmatpush.xpose.msra.mxu0 0.0
      %4640 = vmatpush.xpose.msra.mxu0 0.0
      %4641 = vmatpush.xpose.msra.mxu0 0.0
      %4642 = vmatpush.xpose.msra.mxu0 %v4626
      %4643 = vmatpush.xpose.msra.mxu0 %v4623
      %4644 = vmatmul.f32.gmra.mxu0 %v4623
      %v4645 = vpop.f32.mrf.mxu0
      %v4646 = vadd.f32 0.0, %v4645
      %4647 = vmatmul.f32.gmra.mxu0 %v4626
      %v4648 = vpop.f32.mrf.mxu0
      %v4649 = vadd.f32 0.0, %v4648
      %4650 = vdwg.mxu0
      %v4652 = vsel %vm282, %v4502, 0
      %v4655 = vsel %vm282, %v4503, 0
      %4657 = vmatpush.xpose.msra.mxu0 0.0
      %4658 = vmatpush.xpose.msra.mxu0 0.0
      %4659 = vmatpush.xpose.msra.mxu0 0.0
      %4660 = vmatpush.xpose.msra.mxu0 0.0
      %4661 = vmatpush.xpose.msra.mxu0 0.0
      %4662 = vmatpush.xpose.msra.mxu0 0.0
      %4663 = vmatpush.xpose.msra.mxu0 0.0
      %4664 = vmatpush.xpose.msra.mxu0 0.0
      %4665 = vmatpush.xpose.msra.mxu0 0.0
      %4666 = vmatpush.xpose.msra.mxu0 0.0
      %4667 = vmatpush.xpose.msra.mxu0 0.0
      %4668 = vmatpush.xpose.msra.mxu0 0.0
      %4669 = vmatpush.xpose.msra.mxu0 0.0
      %4670 = vmatpush.xpose.msra.mxu0 0.0
      %4671 = vmatpush.xpose.msra.mxu0 %v4655
      %4672 = vmatpush.xpose.msra.mxu0 %v4652
      %4673 = vmatmul.f32.gmra.mxu0 %v4652
      %v4674 = vpop.f32.mrf.mxu0
      %v4675 = vadd.f32 0.0, %v4674
      %4676 = vmatmul.f32.gmra.mxu0 %v4655
      %v4677 = vpop.f32.mrf.mxu0
      %v4678 = vadd.f32 0.0, %v4677
      %4679 = vdwg.mxu0
      %v4681 = vsel %vm282, %v4504, 0
      %v4684 = vsel %vm282, %v4505, 0
      %4686 = vmatpush.xpose.msra.mxu0 0.0
      %4687 = vmatpush.xpose.msra.mxu0 0.0
      %4688 = vmatpush.xpose.msra.mxu0 0.0
      %4689 = vmatpush.xpose.msra.mxu0 0.0
      %4690 = vmatpush.xpose.msra.mxu0 0.0
      %4691 = vmatpush.xpose.msra.mxu0 0.0
      %4692 = vmatpush.xpose.msra.mxu0 0.0
      %4693 = vmatpush.xpose.msra.mxu0 0.0
      %4694 = vmatpush.xpose.msra.mxu0 0.0
      %4695 = vmatpush.xpose.msra.mxu0 0.0
      %4696 = vmatpush.xpose.msra.mxu0 0.0
      %4697 = vmatpush.xpose.msra.mxu0 0.0
      %4698 = vmatpush.xpose.msra.mxu0 0.0
      %4699 = vmatpush.xpose.msra.mxu0 0.0
      %4700 = vmatpush.xpose.msra.mxu0 %v4684
      %4701 = vmatpush.xpose.msra.mxu0 %v4681
      %4702 = vmatmul.f32.gmra.mxu0 %v4681
      %v4703 = vpop.f32.mrf.mxu0
      %v4704 = vadd.f32 0.0, %v4703
      %4705 = vmatmul.f32.gmra.mxu0 %v4684
      %v4706 = vpop.f32.mrf.mxu0
      %v4707 = vadd.f32 0.0, %v4706
      %4708 = vdwg.mxu0
      %v4709 = vmul.f32 %v4530, 0.5
      %v4710 = vmul.f32 %v4533, 0.5
      %v4711 = vmul.f32 %v4559, 0.5
      %v4712 = vmul.f32 %v4562, 0.5
      %v4713 = vmul.f32 %v4588, 0.5
      %v4714 = vmul.f32 %v4591, 0.5
      %v4715 = vmul.f32 %v4617, 0.5
      %v4716 = vmul.f32 %v4620, 0.5
      %v4717 = vmul.f32 %v4646, 0.5
      %v4718 = vmul.f32 %v4649, 0.5
      %v4719 = vmul.f32 %v4675, 0.5
      %v4720 = vmul.f32 %v4678, 0.5
      %v4721 = vmul.f32 %v4704, 0.5
      %v4722 = vmul.f32 %v4707, 0.5
      %v4723 = vsel %vm500, %v4709, -inf
      %4724 = vmax.xlane.f32.xlu0 %v4723
      %v4725 = vpop.xlane.xlu0 %4724
      %v4726 = vsel %vm500, %v4710, -inf
      %4727 = vmax.xlane.f32.xlu0 %v4726
      %v4728 = vpop.xlane.xlu0 %4727
      %v4729 = vsel %vm500, %v4711, -inf
      %4730 = vmax.xlane.f32.xlu0 %v4729
      %v4731 = vpop.xlane.xlu0 %4730
      %v4732 = vsel %vm500, %v4712, -inf
      %4733 = vmax.xlane.f32.xlu0 %v4732
      %v4734 = vpop.xlane.xlu0 %4733
      %v4735 = vsel %vm500, %v4713, -inf
      %4736 = vmax.xlane.f32.xlu0 %v4735
      %v4737 = vpop.xlane.xlu0 %4736
      %v4738 = vsel %vm500, %v4714, -inf
      %4739 = vmax.xlane.f32.xlu0 %v4738
      %v4740 = vpop.xlane.xlu0 %4739
      %v4741 = vsel %vm500, %v4715, -inf
      %4742 = vmax.xlane.f32.xlu0 %v4741
      %v4743 = vpop.xlane.xlu0 %4742
      %v4744 = vsel %vm500, %v4716, -inf
      %4745 = vmax.xlane.f32.xlu0 %v4744
      %v4746 = vpop.xlane.xlu0 %4745
      %v4747 = vsel %vm500, %v4717, -inf
      %4748 = vmax.xlane.f32.xlu0 %v4747
      %v4749 = vpop.xlane.xlu0 %4748
      %v4750 = vsel %vm500, %v4718, -inf
      %4751 = vmax.xlane.f32.xlu0 %v4750
      %v4752 = vpop.xlane.xlu0 %4751
      %v4753 = vsel %vm500, %v4719, -inf
      %4754 = vmax.xlane.f32.xlu0 %v4753
      %v4755 = vpop.xlane.xlu0 %4754
      %v4756 = vsel %vm500, %v4720, -inf
      %4757 = vmax.xlane.f32.xlu0 %v4756
      %v4758 = vpop.xlane.xlu0 %4757
      %v4759 = vsel %vm500, %v4721, -inf
      %4760 = vmax.xlane.f32.xlu0 %v4759
      %v4761 = vpop.xlane.xlu0 %4760
      %v4762 = vsel %vm500, %v4722, -inf
      %4763 = vmax.xlane.f32.xlu0 %v4762
      %v4764 = vpop.xlane.xlu0 %4763
      %v4765 = vsub.f32 %v4709, %v4725
      %v4766 = vsub.f32 %v4710, %v4728
      %v4767 = vsub.f32 %v4711, %v4731
      %v4768 = vsub.f32 %v4712, %v4734
      %v4769 = vsub.f32 %v4713, %v4737
      %v4770 = vsub.f32 %v4714, %v4740
      %v4771 = vsub.f32 %v4715, %v4743
      %v4772 = vsub.f32 %v4716, %v4746
      %v4773 = vsub.f32 %v4717, %v4749
      %v4774 = vsub.f32 %v4718, %v4752
      %v4775 = vsub.f32 %v4719, %v4755
      %v4776 = vsub.f32 %v4720, %v4758
      %v4777 = vsub.f32 %v4721, %v4761
      %v4778 = vsub.f32 %v4722, %v4764
      %v4779 = vmul.f32 %v4765, 1.442695
      %v4780 = vpow.pop %v4779
      %v4781 = vmul.f32 %v4766, 1.442695
      %v4782 = vpow.pop %v4781
      %v4783 = vmul.f32 %v4767, 1.442695
      %v4784 = vpow.pop %v4783
      %v4785 = vmul.f32 %v4768, 1.442695
      %v4786 = vpow.pop %v4785
      %v4787 = vmul.f32 %v4769, 1.442695
      %v4788 = vpow.pop %v4787
      %v4789 = vmul.f32 %v4770, 1.442695
      %v4790 = vpow.pop %v4789
      %v4791 = vmul.f32 %v4771, 1.442695
      %v4792 = vpow.pop %v4791
      %v4793 = vmul.f32 %v4772, 1.442695
      %v4794 = vpow.pop %v4793
      %v4795 = vmul.f32 %v4773, 1.442695
      %v4796 = vpow.pop %v4795
      %v4797 = vmul.f32 %v4774, 1.442695
      %v4798 = vpow.pop %v4797
      %v4799 = vmul.f32 %v4775, 1.442695
      %v4800 = vpow.pop %v4799
      %v4801 = vmul.f32 %v4776, 1.442695
      %v4802 = vpow.pop %v4801
      %v4803 = vmul.f32 %v4777, 1.442695
      %v4804 = vpow.pop %v4803
      %v4805 = vmul.f32 %v4778, 1.442695
      %v4806 = vpow.pop %v4805
      %v4807 = vsel %vm500, %v4780, 0.0
      %4808 = vadd.xlane.f32.xlu0 %v4807
      %v4809 = vpop.xlane.xlu0 %4808
      %v4810 = vsel %vm500, %v4782, 0.0
      %4811 = vadd.xlane.f32.xlu0 %v4810
      %v4812 = vpop.xlane.xlu0 %4811
      %v4813 = vsel %vm500, %v4784, 0.0
      %4814 = vadd.xlane.f32.xlu0 %v4813
      %v4815 = vpop.xlane.xlu0 %4814
      %v4816 = vsel %vm500, %v4786, 0.0
      %4817 = vadd.xlane.f32.xlu0 %v4816
      %v4818 = vpop.xlane.xlu0 %4817
      %v4819 = vsel %vm500, %v4788, 0.0
      %4820 = vadd.xlane.f32.xlu0 %v4819
      %v4821 = vpop.xlane.xlu0 %4820
      %v4822 = vsel %vm500, %v4790, 0.0
      %4823 = vadd.xlane.f32.xlu0 %v4822
      %v4824 = vpop.xlane.xlu0 %4823
      %v4825 = vsel %vm500, %v4792, 0.0
      %4826 = vadd.xlane.f32.xlu0 %v4825
      %v4827 = vpop.xlane.xlu0 %4826
      %v4828 = vsel %vm500, %v4794, 0.0
      %4829 = vadd.xlane.f32.xlu0 %v4828
      %v4830 = vpop.xlane.xlu0 %4829
      %v4831 = vsel %vm500, %v4796, 0.0
      %4832 = vadd.xlane.f32.xlu0 %v4831
      %v4833 = vpop.xlane.xlu0 %4832
      %v4834 = vsel %vm500, %v4798, 0.0
      %4835 = vadd.xlane.f32.xlu0 %v4834
      %v4836 = vpop.xlane.xlu0 %4835
      %v4837 = vsel %vm500, %v4800, 0.0
      %4838 = vadd.xlane.f32.xlu0 %v4837
      %v4839 = vpop.xlane.xlu0 %4838
      %v4840 = vsel %vm500, %v4802, 0.0
      %4841 = vadd.xlane.f32.xlu0 %v4840
      %v4842 = vpop.xlane.xlu0 %4841
      %v4843 = vsel %vm500, %v4804, 0.0
      %4844 = vadd.xlane.f32.xlu0 %v4843
      %v4845 = vpop.xlane.xlu0 %4844
      %v4846 = vsel %vm500, %v4806, 0.0
      %4847 = vadd.xlane.f32.xlu0 %v4846
      %v4848 = vpop.xlane.xlu0 %4847
      %v4849 = vrcp.pop %v4809
      %v4850 = vmul.f32 %v4809, %v4849
      %v4851 = vsub.f32 1.0, %v4850
      %v4852 = vmul.f32 %v4849, %v4851
      %v4853 = vadd.f32 %v4849, %v4852
      %vm4854 = vweird.f32 %v4809
      %vm4855 = vweird.f32 %v4849
      %vm4856 = vmor %vm4854, %vm4855
      %v4857 = vsel %vm4856, %v4849, %v4853
      %v4858 = vand.u32 2147483647, %v4809
      %vm4859 = vcmp.eq.f32.partialorder %v4858, 8.507059e+37
      %v4860 = vand.u32 %v4809, 2147483648
      %v4861 = vor.u32 1.1754944e-38, %v4860
      %v4862 = vsel %vm4859, %v4861, %v4857
      %v4863 = vmul.f32 %v4780, %v4862
      %v4864 = vrcp.pop %v4812
      %v4865 = vmul.f32 %v4812, %v4864
      %v4866 = vsub.f32 1.0, %v4865
      %v4867 = vmul.f32 %v4864, %v4866
      %v4868 = vadd.f32 %v4864, %v4867
      %vm4869 = vweird.f32 %v4812
      %vm4870 = vweird.f32 %v4864
      %vm4871 = vmor %vm4869, %vm4870
      %v4872 = vsel %vm4871, %v4864, %v4868
      %v4873 = vand.u32 2147483647, %v4812
      %vm4874 = vcmp.eq.f32.partialorder %v4873, 8.507059e+37
      %v4875 = vand.u32 %v4812, 2147483648
      %v4876 = vor.u32 1.1754944e-38, %v4875
      %v4877 = vsel %vm4874, %v4876, %v4872
      %v4878 = vmul.f32 %v4782, %v4877
      %v4879 = vrcp.pop %v4815
      %v4880 = vmul.f32 %v4815, %v4879
      %v4881 = vsub.f32 1.0, %v4880
      %v4882 = vmul.f32 %v4879, %v4881
      %v4883 = vadd.f32 %v4879, %v4882
      %vm4884 = vweird.f32 %v4815
      %vm4885 = vweird.f32 %v4879
      %vm4886 = vmor %vm4884, %vm4885
      %v4887 = vsel %vm4886, %v4879, %v4883
      %v4888 = vand.u32 2147483647, %v4815
      %vm4889 = vcmp.eq.f32.partialorder %v4888, 8.507059e+37
      %v4890 = vand.u32 %v4815, 2147483648
      %v4891 = vor.u32 1.1754944e-38, %v4890
      %v4892 = vsel %vm4889, %v4891, %v4887
      %v4893 = vmul.f32 %v4784, %v4892
      %v4894 = vrcp.pop %v4818
      %v4895 = vmul.f32 %v4818, %v4894
      %v4896 = vsub.f32 1.0, %v4895
      %v4897 = vmul.f32 %v4894, %v4896
      %v4898 = vadd.f32 %v4894, %v4897
      %vm4899 = vweird.f32 %v4818
      %vm4900 = vweird.f32 %v4894
      %vm4901 = vmor %vm4899, %vm4900
      %v4902 = vsel %vm4901, %v4894, %v4898
      %v4903 = vand.u32 2147483647, %v4818
      %vm4904 = vcmp.eq.f32.partialorder %v4903, 8.507059e+37
      %v4905 = vand.u32 %v4818, 2147483648
      %v4906 = vor.u32 1.1754944e-38, %v4905
      %v4907 = vsel %vm4904, %v4906, %v4902
      %v4908 = vmul.f32 %v4786, %v4907
      %v4909 = vrcp.pop %v4821
      %v4910 = vmul.f32 %v4821, %v4909
      %v4911 = vsub.f32 1.0, %v4910
      %v4912 = vmul.f32 %v4909, %v4911
      %v4913 = vadd.f32 %v4909, %v4912
      %vm4914 = vweird.f32 %v4821
      %vm4915 = vweird.f32 %v4909
      %vm4916 = vmor %vm4914, %vm4915
      %v4917 = vsel %vm4916, %v4909, %v4913
      %v4918 = vand.u32 2147483647, %v4821
      %vm4919 = vcmp.eq.f32.partialorder %v4918, 8.507059e+37
      %v4920 = vand.u32 %v4821, 2147483648
      %v4921 = vor.u32 1.1754944e-38, %v4920
      %v4922 = vsel %vm4919, %v4921, %v4917
      %v4923 = vmul.f32 %v4788, %v4922
      %v4924 = vrcp.pop %v4824
      %v4925 = vmul.f32 %v4824, %v4924
      %v4926 = vsub.f32 1.0, %v4925
      %v4927 = vmul.f32 %v4924, %v4926
      %v4928 = vadd.f32 %v4924, %v4927
      %vm4929 = vweird.f32 %v4824
      %vm4930 = vweird.f32 %v4924
      %vm4931 = vmor %vm4929, %vm4930
      %v4932 = vsel %vm4931, %v4924, %v4928
      %v4933 = vand.u32 2147483647, %v4824
      %vm4934 = vcmp.eq.f32.partialorder %v4933, 8.507059e+37
      %v4935 = vand.u32 %v4824, 2147483648
      %v4936 = vor.u32 1.1754944e-38, %v4935
      %v4937 = vsel %vm4934, %v4936, %v4932
      %v4938 = vmul.f32 %v4790, %v4937
      %v4939 = vrcp.pop %v4827
      %v4940 = vmul.f32 %v4827, %v4939
      %v4941 = vsub.f32 1.0, %v4940
      %v4942 = vmul.f32 %v4939, %v4941
      %v4943 = vadd.f32 %v4939, %v4942
      %vm4944 = vweird.f32 %v4827
      %vm4945 = vweird.f32 %v4939
      %vm4946 = vmor %vm4944, %vm4945
      %v4947 = vsel %vm4946, %v4939, %v4943
      %v4948 = vand.u32 2147483647, %v4827
      %vm4949 = vcmp.eq.f32.partialorder %v4948, 8.507059e+37
      %v4950 = vand.u32 %v4827, 2147483648
      %v4951 = vor.u32 1.1754944e-38, %v4950
      %v4952 = vsel %vm4949, %v4951, %v4947
      %v4953 = vmul.f32 %v4792, %v4952
      %v4954 = vrcp.pop %v4830
      %v4955 = vmul.f32 %v4830, %v4954
      %v4956 = vsub.f32 1.0, %v4955
      %v4957 = vmul.f32 %v4954, %v4956
      %v4958 = vadd.f32 %v4954, %v4957
      %vm4959 = vweird.f32 %v4830
      %vm4960 = vweird.f32 %v4954
      %vm4961 = vmor %vm4959, %vm4960
      %v4962 = vsel %vm4961, %v4954, %v4958
      %v4963 = vand.u32 2147483647, %v4830
      %vm4964 = vcmp.eq.f32.partialorder %v4963, 8.507059e+37
      %v4965 = vand.u32 %v4830, 2147483648
      %v4966 = vor.u32 1.1754944e-38, %v4965
      %v4967 = vsel %vm4964, %v4966, %v4962
      %v4968 = vmul.f32 %v4794, %v4967
      %v4969 = vrcp.pop %v4833
      %v4970 = vmul.f32 %v4833, %v4969
      %v4971 = vsub.f32 1.0, %v4970
      %v4972 = vmul.f32 %v4969, %v4971
      %v4973 = vadd.f32 %v4969, %v4972
      %vm4974 = vweird.f32 %v4833
      %vm4975 = vweird.f32 %v4969
      %vm4976 = vmor %vm4974, %vm4975
      %v4977 = vsel %vm4976, %v4969, %v4973
      %v4978 = vand.u32 2147483647, %v4833
      %vm4979 = vcmp.eq.f32.partialorder %v4978, 8.507059e+37
      %v4980 = vand.u32 %v4833, 2147483648
      %v4981 = vor.u32 1.1754944e-38, %v4980
      %v4982 = vsel %vm4979, %v4981, %v4977
      %v4983 = vmul.f32 %v4796, %v4982
      %v4984 = vrcp.pop %v4836
      %v4985 = vmul.f32 %v4836, %v4984
      %v4986 = vsub.f32 1.0, %v4985
      %v4987 = vmul.f32 %v4984, %v4986
      %v4988 = vadd.f32 %v4984, %v4987
      %vm4989 = vweird.f32 %v4836
      %vm4990 = vweird.f32 %v4984
      %vm4991 = vmor %vm4989, %vm4990
      %v4992 = vsel %vm4991, %v4984, %v4988
      %v4993 = vand.u32 2147483647, %v4836
      %vm4994 = vcmp.eq.f32.partialorder %v4993, 8.507059e+37
      %v4995 = vand.u32 %v4836, 2147483648
      %v4996 = vor.u32 1.1754944e-38, %v4995
      %v4997 = vsel %vm4994, %v4996, %v4992
      %v4998 = vmul.f32 %v4798, %v4997
      %v4999 = vrcp.pop %v4839
      %v5000 = vmul.f32 %v4839, %v4999
      %v5001 = vsub.f32 1.0, %v5000
      %v5002 = vmul.f32 %v4999, %v5001
      %v5003 = vadd.f32 %v4999, %v5002
      %vm5004 = vweird.f32 %v4839
      %vm5005 = vweird.f32 %v4999
      %vm5006 = vmor %vm5004, %vm5005
      %v5007 = vsel %vm5006, %v4999, %v5003
      %v5008 = vand.u32 2147483647, %v4839
      %vm5009 = vcmp.eq.f32.partialorder %v5008, 8.507059e+37
      %v5010 = vand.u32 %v4839, 2147483648
      %v5011 = vor.u32 1.1754944e-38, %v5010
      %v5012 = vsel %vm5009, %v5011, %v5007
      %v5013 = vmul.f32 %v4800, %v5012
      %v5014 = vrcp.pop %v4842
      %v5015 = vmul.f32 %v4842, %v5014
      %v5016 = vsub.f32 1.0, %v5015
      %v5017 = vmul.f32 %v5014, %v5016
      %v5018 = vadd.f32 %v5014, %v5017
      %vm5019 = vweird.f32 %v4842
      %vm5020 = vweird.f32 %v5014
      %vm5021 = vmor %vm5019, %vm5020
      %v5022 = vsel %vm5021, %v5014, %v5018
      %v5023 = vand.u32 2147483647, %v4842
      %vm5024 = vcmp.eq.f32.partialorder %v5023, 8.507059e+37
      %v5025 = vand.u32 %v4842, 2147483648
      %v5026 = vor.u32 1.1754944e-38, %v5025
      %v5027 = vsel %vm5024, %v5026, %v5022
      %v5028 = vmul.f32 %v4802, %v5027
      %v5029 = vrcp.pop %v4845
      %v5030 = vmul.f32 %v4845, %v5029
      %v5031 = vsub.f32 1.0, %v5030
      %v5032 = vmul.f32 %v5029, %v5031
      %v5033 = vadd.f32 %v5029, %v5032
      %vm5034 = vweird.f32 %v4845
      %vm5035 = vweird.f32 %v5029
      %vm5036 = vmor %vm5034, %vm5035
      %v5037 = vsel %vm5036, %v5029, %v5033
      %v5038 = vand.u32 2147483647, %v4845
      %vm5039 = vcmp.eq.f32.partialorder %v5038, 8.507059e+37
      %v5040 = vand.u32 %v4845, 2147483648
      %v5041 = vor.u32 1.1754944e-38, %v5040
      %v5042 = vsel %vm5039, %v5041, %v5037
      %v5043 = vmul.f32 %v4804, %v5042
      %v5044 = vrcp.pop %v4848
      %v5045 = vmul.f32 %v4848, %v5044
      %v5046 = vsub.f32 1.0, %v5045
      %v5047 = vmul.f32 %v5044, %v5046
      %v5048 = vadd.f32 %v5044, %v5047
      %vm5049 = vweird.f32 %v4848
      %vm5050 = vweird.f32 %v5044
      %vm5051 = vmor %vm5049, %vm5050
      %v5052 = vsel %vm5051, %v5044, %v5048
      %v5053 = vand.u32 2147483647, %v4848
      %vm5054 = vcmp.eq.f32.partialorder %v5053, 8.507059e+37
      %v5055 = vand.u32 %v4848, 2147483648
      %v5056 = vor.u32 1.1754944e-38, %v5055
      %v5057 = vsel %vm5054, %v5056, %v5052
      %v5058 = vmul.f32 %v4806, %v5057
      %v5059 = vmul.f32 %v4863, 0.5
      %v5060 = vmul.f32 %v4878, 0.5
      %v5061 = vmul.f32 %v4893, 0.5
      %v5062 = vmul.f32 %v4908, 0.5
      %v5063 = vmul.f32 %v4923, 0.5
      %v5064 = vmul.f32 %v4938, 0.5
      %v5065 = vmul.f32 %v4953, 0.5
      %v5066 = vmul.f32 %v4968, 0.5
      %v5067 = vmul.f32 %v4983, 0.5
      %v5068 = vmul.f32 %v4998, 0.5
      %v5069 = vmul.f32 %v5013, 0.5
      %v5070 = vmul.f32 %v5028, 0.5
      %v5071 = vmul.f32 %v5043, 0.5
      %v5072 = vmul.f32 %v5058, 0.5
      %v5073 = vmul.f32 %v263, %v5059
      %v5074 = vmul.f32 %v264, %v5060
      %v5075 = vmul.f32 %v265, %v5061
      %v5076 = vmul.f32 %v266, %v5062
      %v5077 = vmul.f32 %v267, %v5063
      %v5078 = vmul.f32 %v268, %v5064
      %v5079 = vmul.f32 %v269, %v5065
      %v5080 = vmul.f32 %v270, %v5066
      %v5081 = vmul.f32 %v271, %v5067
      %v5082 = vmul.f32 %v272, %v5068
      %v5083 = vmul.f32 %v273, %v5069
      %v5084 = vmul.f32 %v274, %v5070
      %v5085 = vmul.f32 %v275, %v5071
      %v5086 = vmul.f32 %v276, %v5072
      %5087 = vxpose.xlu0.b32.start [1/16] %v5073, 128
      %5088 = vxpose.xlu0.b32.cont [2/16] %v5074, 128
      %5089 = vxpose.xlu0.b32.cont [3/16] 0.0, 128
      %5090 = vxpose.xlu0.b32.cont [4/16] 0.0, 128
      %5091 = vxpose.xlu0.b32.cont [5/16] 0.0, 128
      %5092 = vxpose.xlu0.b32.cont [6/16] 0.0, 128
      %5093 = vxpose.xlu0.b32.cont [7/16] 0.0, 128
      %5094 = vxpose.xlu0.b32.cont [8/16] 0.0, 128
      %5095 = vxpose.xlu0.b32.cont [9/16] 0.0, 128
      %5096 = vxpose.xlu0.b32.cont [10/16] 0.0, 128
      %5097 = vxpose.xlu0.b32.cont [11/16] 0.0, 128
      %5098 = vxpose.xlu0.b32.cont [12/16] 0.0, 128
      %5099 = vxpose.xlu0.b32.cont [13/16] 0.0, 128
      %5100 = vxpose.xlu0.b32.cont [14/16] 0.0, 128
      %5101 = vxpose.xlu0.b32.cont [15/16] 0.0, 128
      %5102 = vxpose.xlu0.b32.end [16/16] 0.0, 128
      %v5103 = vpop.trf.xlu0
      %v5104 = vpop.trf.xlu0
      %v5105 = vpop.trf.xlu0
      %v5106 = vpop.trf.xlu0
      %v5107 = vpop.trf.xlu0
      %v5108 = vpop.trf.xlu0
      %v5109 = vpop.trf.xlu0
      %v5110 = vpop.trf.xlu0
      %v5111 = vpop.trf.xlu0
      %v5112 = vpop.trf.xlu0
      %v5113 = vpop.trf.xlu0
      %v5114 = vpop.trf.xlu0
      %v5115 = vpop.trf.xlu0
      %v5116 = vpop.trf.xlu0
      %v5117 = vpop.trf.xlu0
      %v5118 = vpop.trf.xlu0
      %5119 = vxpose.xlu0.b32.start [1/16] %v5075, 128
      %5120 = vxpose.xlu0.b32.cont [2/16] %v5076, 128
      %5121 = vxpose.xlu0.b32.cont [3/16] 0.0, 128
      %5122 = vxpose.xlu0.b32.cont [4/16] 0.0, 128
      %5123 = vxpose.xlu0.b32.cont [5/16] 0.0, 128
      %5124 = vxpose.xlu0.b32.cont [6/16] 0.0, 128
      %5125 = vxpose.xlu0.b32.cont [7/16] 0.0, 128
      %5126 = vxpose.xlu0.b32.cont [8/16] 0.0, 128
      %5127 = vxpose.xlu0.b32.cont [9/16] 0.0, 128
      %5128 = vxpose.xlu0.b32.cont [10/16] 0.0, 128
      %5129 = vxpose.xlu0.b32.cont [11/16] 0.0, 128
      %5130 = vxpose.xlu0.b32.cont [12/16] 0.0, 128
      %5131 = vxpose.xlu0.b32.cont [13/16] 0.0, 128
      %5132 = vxpose.xlu0.b32.cont [14/16] 0.0, 128
      %5133 = vxpose.xlu0.b32.cont [15/16] 0.0, 128
      %5134 = vxpose.xlu0.b32.end [16/16] 0.0, 128
      %v5135 = vpop.trf.xlu0
      %v5136 = vpop.trf.xlu0
      %v5137 = vpop.trf.xlu0
      %v5138 = vpop.trf.xlu0
      %v5139 = vpop.trf.xlu0
      %v5140 = vpop.trf.xlu0
      %v5141 = vpop.trf.xlu0
      %v5142 = vpop.trf.xlu0
      %v5143 = vpop.trf.xlu0
      %v5144 = vpop.trf.xlu0
      %v5145 = vpop.trf.xlu0
      %v5146 = vpop.trf.xlu0
      %v5147 = vpop.trf.xlu0
      %v5148 = vpop.trf.xlu0
      %v5149 = vpop.trf.xlu0
      %v5150 = vpop.trf.xlu0
      %5151 = vxpose.xlu0.b32.start [1/16] %v5077, 128
      %5152 = vxpose.xlu0.b32.cont [2/16] %v5078, 128
      %5153 = vxpose.xlu0.b32.cont [3/16] 0.0, 128
      %5154 = vxpose.xlu0.b32.cont [4/16] 0.0, 128
      %5155 = vxpose.xlu0.b32.cont [5/16] 0.0, 128
      %5156 = vxpose.xlu0.b32.cont [6/16] 0.0, 128
      %5157 = vxpose.xlu0.b32.cont [7/16] 0.0, 128
      %5158 = vxpose.xlu0.b32.cont [8/16] 0.0, 128
      %5159 = vxpose.xlu0.b32.cont [9/16] 0.0, 128
      %5160 = vxpose.xlu0.b32.cont [10/16] 0.0, 128
      %5161 = vxpose.xlu0.b32.cont [11/16] 0.0, 128
      %5162 = vxpose.xlu0.b32.cont [12/16] 0.0, 128
      %5163 = vxpose.xlu0.b32.cont [13/16] 0.0, 128
      %5164 = vxpose.xlu0.b32.cont [14/16] 0.0, 128
      %5165 = vxpose.xlu0.b32.cont [15/16] 0.0, 128
      %5166 = vxpose.xlu0.b32.end [16/16] 0.0, 128
      %v5167 = vpop.trf.xlu0
      %v5168 = vpop.trf.xlu0
      %v5169 = vpop.trf.xlu0
      %v5170 = vpop.trf.xlu0
      %v5171 = vpop.trf.xlu0
      %v5172 = vpop.trf.xlu0
      %v5173 = vpop.trf.xlu0
      %v5174 = vpop.trf.xlu0
      %v5175 = vpop.trf.xlu0
      %v5176 = vpop.trf.xlu0
      %v5177 = vpop.trf.xlu0
      %v5178 = vpop.trf.xlu0
      %v5179 = vpop.trf.xlu0
      %v5180 = vpop.trf.xlu0
      %v5181 = vpop.trf.xlu0
      %v5182 = vpop.trf.xlu0
      %5183 = vxpose.xlu0.b32.start [1/16] %v5079, 128
      %5184 = vxpose.xlu0.b32.cont [2/16] %v5080, 128
      %5185 = vxpose.xlu0.b32.cont [3/16] 0.0, 128
      %5186 = vxpose.xlu0.b32.cont [4/16] 0.0, 128
      %5187 = vxpose.xlu0.b32.cont [5/16] 0.0, 128
      %5188 = vxpose.xlu0.b32.cont [6/16] 0.0, 128
      %5189 = vxpose.xlu0.b32.cont [7/16] 0.0, 128
      %5190 = vxpose.xlu0.b32.cont [8/16] 0.0, 128
      %5191 = vxpose.xlu0.b32.cont [9/16] 0.0, 128
      %5192 = vxpose.xlu0.b32.cont [10/16] 0.0, 128
      %5193 = vxpose.xlu0.b32.cont [11/16] 0.0, 128
      %5194 = vxpose.xlu0.b32.cont [12/16] 0.0, 128
      %5195 = vxpose.xlu0.b32.cont [13/16] 0.0, 128
      %5196 = vxpose.xlu0.b32.cont [14/16] 0.0, 128
      %5197 = vxpose.xlu0.b32.cont [15/16] 0.0, 128
      %5198 = vxpose.xlu0.b32.end [16/16] 0.0, 128
      %v5199 = vpop.trf.xlu0
      %v5200 = vpop.trf.xlu0
      %v5201 = vpop.trf.xlu0
      %v5202 = vpop.trf.xlu0
      %v5203 = vpop.trf.xlu0
      %v5204 = vpop.trf.xlu0
      %v5205 = vpop.trf.xlu0
      %v5206 = vpop.trf.xlu0
      %v5207 = vpop.trf.xlu0
      %v5208 = vpop.trf.xlu0
      %v5209 = vpop.trf.xlu0
      %v5210 = vpop.trf.xlu0
      %v5211 = vpop.trf.xlu0
      %v5212 = vpop.trf.xlu0
      %v5213 = vpop.trf.xlu0
      %v5214 = vpop.trf.xlu0
      %5215 = vxpose.xlu0.b32.start [1/16] %v5081, 128
      %5216 = vxpose.xlu0.b32.cont [2/16] %v5082, 128
      %5217 = vxpose.xlu0.b32.cont [3/16] 0.0, 128
      %5218 = vxpose.xlu0.b32.cont [4/16] 0.0, 128
      %5219 = vxpose.xlu0.b32.cont [5/16] 0.0, 128
      %5220 = vxpose.xlu0.b32.cont [6/16] 0.0, 128
      %5221 = vxpose.xlu0.b32.cont [7/16] 0.0, 128
      %5222 = vxpose.xlu0.b32.cont [8/16] 0.0, 128
      %5223 = vxpose.xlu0.b32.cont [9/16] 0.0, 128
      %5224 = vxpose.xlu0.b32.cont [10/16] 0.0, 128
      %5225 = vxpose.xlu0.b32.cont [11/16] 0.0, 128
      %5226 = vxpose.xlu0.b32.cont [12/16] 0.0, 128
      %5227 = vxpose.xlu0.b32.cont [13/16] 0.0, 128
      %5228 = vxpose.xlu0.b32.cont [14/16] 0.0, 128
      %5229 = vxpose.xlu0.b32.cont [15/16] 0.0, 128
      %5230 = vxpose.xlu0.b32.end [16/16] 0.0, 128
      %v5231 = vpop.trf.xlu0
      %v5232 = vpop.trf.xlu0
      %v5233 = vpop.trf.xlu0
      %v5234 = vpop.trf.xlu0
      %v5235 = vpop.trf.xlu0
      %v5236 = vpop.trf.xlu0
      %v5237 = vpop.trf.xlu0
      %v5238 = vpop.trf.xlu0
      %v5239 = vpop.trf.xlu0
      %v5240 = vpop.trf.xlu0
      %v5241 = vpop.trf.xlu0
      %v5242 = vpop.trf.xlu0
      %v5243 = vpop.trf.xlu0
      %v5244 = vpop.trf.xlu0
      %v5245 = vpop.trf.xlu0
      %v5246 = vpop.trf.xlu0
      %5247 = vxpose.xlu0.b32.start [1/16] %v5083, 128
      %5248 = vxpose.xlu0.b32.cont [2/16] %v5084, 128
      %5249 = vxpose.xlu0.b32.cont [3/16] 0.0, 128
      %5250 = vxpose.xlu0.b32.cont [4/16] 0.0, 128
      %5251 = vxpose.xlu0.b32.cont [5/16] 0.0, 128
      %5252 = vxpose.xlu0.b32.cont [6/16] 0.0, 128
      %5253 = vxpose.xlu0.b32.cont [7/16] 0.0, 128
      %5254 = vxpose.xlu0.b32.cont [8/16] 0.0, 128
      %5255 = vxpose.xlu0.b32.cont [9/16] 0.0, 128
      %5256 = vxpose.xlu0.b32.cont [10/16] 0.0, 128
      %5257 = vxpose.xlu0.b32.cont [11/16] 0.0, 128
      %5258 = vxpose.xlu0.b32.cont [12/16] 0.0, 128
      %5259 = vxpose.xlu0.b32.cont [13/16] 0.0, 128
      %5260 = vxpose.xlu0.b32.cont [14/16] 0.0, 128
      %5261 = vxpose.xlu0.b32.cont [15/16] 0.0, 128
      %5262 = vxpose.xlu0.b32.end [16/16] 0.0, 128
      %v5263 = vpop.trf.xlu0
      %v5264 = vpop.trf.xlu0
      %v5265 = vpop.trf.xlu0
      %v5266 = vpop.trf.xlu0
      %v5267 = vpop.trf.xlu0
      %v5268 = vpop.trf.xlu0
      %v5269 = vpop.trf.xlu0
      %v5270 = vpop.trf.xlu0
      %v5271 = vpop.trf.xlu0
      %v5272 = vpop.trf.xlu0
      %v5273 = vpop.trf.xlu0
      %v5274 = vpop.trf.xlu0
      %v5275 = vpop.trf.xlu0
      %v5276 = vpop.trf.xlu0
      %v5277 = vpop.trf.xlu0
      %v5278 = vpop.trf.xlu0
      %5279 = vxpose.xlu0.b32.start [1/16] %v5085, 128
      %5280 = vxpose.xlu0.b32.cont [2/16] %v5086, 128
      %5281 = vxpose.xlu0.b32.cont [3/16] 0.0, 128
      %5282 = vxpose.xlu0.b32.cont [4/16] 0.0, 128
      %5283 = vxpose.xlu0.b32.cont [5/16] 0.0, 128
      %5284 = vxpose.xlu0.b32.cont [6/16] 0.0, 128
      %5285 = vxpose.xlu0.b32.cont [7/16] 0.0, 128
      %5286 = vxpose.xlu0.b32.cont [8/16] 0.0, 128
      %5287 = vxpose.xlu0.b32.cont [9/16] 0.0, 128
      %5288 = vxpose.xlu0.b32.cont [10/16] 0.0, 128
      %5289 = vxpose.xlu0.b32.cont [11/16] 0.0, 128
      %5290 = vxpose.xlu0.b32.cont [12/16] 0.0, 128
      %5291 = vxpose.xlu0.b32.cont [13/16] 0.0, 128
      %5292 = vxpose.xlu0.b32.cont [14/16] 0.0, 128
      %5293 = vxpose.xlu0.b32.cont [15/16] 0.0, 128
      %5294 = vxpose.xlu0.b32.end [16/16] 0.0, 128
      %v5295 = vpop.trf.xlu0
      %v5296 = vpop.trf.xlu0
      %v5297 = vpop.trf.xlu0
      %v5298 = vpop.trf.xlu0
      %v5299 = vpop.trf.xlu0
      %v5300 = vpop.trf.xlu0
      %v5301 = vpop.trf.xlu0
      %v5302 = vpop.trf.xlu0
      %v5303 = vpop.trf.xlu0
      %v5304 = vpop.trf.xlu0
      %v5305 = vpop.trf.xlu0
      %v5306 = vpop.trf.xlu0
      %v5307 = vpop.trf.xlu0
      %v5308 = vpop.trf.xlu0
      %v5309 = vpop.trf.xlu0
      %v5310 = vpop.trf.xlu0
      %v5312 = vsel %vm500, %v5103, 0
      %v5315 = vsel %vm500, %v5104, 0
      %5317 = vmatpush.msra.mxu0 0.0
      %5318 = vmatpush.msra.mxu0 0.0
      %5319 = vmatpush.msra.mxu0 0.0
      %5320 = vmatpush.msra.mxu0 0.0
      %5321 = vmatpush.msra.mxu0 0.0
      %5322 = vmatpush.msra.mxu0 0.0
      %5323 = vmatpush.msra.mxu0 0.0
      %5324 = vmatpush.msra.mxu0 0.0
      %5325 = vmatpush.msra.mxu0 0.0
      %5326 = vmatpush.msra.mxu0 0.0
      %5327 = vmatpush.msra.mxu0 0.0
      %5328 = vmatpush.msra.mxu0 0.0
      %5329 = vmatpush.msra.mxu0 0.0
      %5330 = vmatpush.msra.mxu0 0.0
      %5331 = vmatpush.msra.mxu0 %v246
      %5332 = vmatpush.msra.mxu0 %v245
      %5333 = vmatmul.f32.gmra.mxu0 %v5312
      %v5334 = vpop.f32.mrf.mxu0
      %v5335 = vadd.f32 0.0, %v5334
      %5336 = vmatmul.f32.gmra.mxu0 %v5315
      %v5337 = vpop.f32.mrf.mxu0
      %v5338 = vadd.f32 0.0, %v5337
      %5339 = vdwg.mxu0
      %v5341 = vsel %vm500, %v5135, 0
      %v5344 = vsel %vm500, %v5136, 0
      %5346 = vmatpush.msra.mxu0 0.0
      %5347 = vmatpush.msra.mxu0 0.0
      %5348 = vmatpush.msra.mxu0 0.0
      %5349 = vmatpush.msra.mxu0 0.0
      %5350 = vmatpush.msra.mxu0 0.0
      %5351 = vmatpush.msra.mxu0 0.0
      %5352 = vmatpush.msra.mxu0 0.0
      %5353 = vmatpush.msra.mxu0 0.0
      %5354 = vmatpush.msra.mxu0 0.0
      %5355 = vmatpush.msra.mxu0 0.0
      %5356 = vmatpush.msra.mxu0 0.0
      %5357 = vmatpush.msra.mxu0 0.0
      %5358 = vmatpush.msra.mxu0 0.0
      %5359 = vmatpush.msra.mxu0 0.0
      %5360 = vmatpush.msra.mxu0 %v4493
      %5361 = vmatpush.msra.mxu0 %v4492
      %5362 = vmatmul.f32.gmra.mxu0 %v5341
      %v5363 = vpop.f32.mrf.mxu0
      %v5364 = vadd.f32 0.0, %v5363
      %5365 = vmatmul.f32.gmra.mxu0 %v5344
      %v5366 = vpop.f32.mrf.mxu0
      %v5367 = vadd.f32 0.0, %v5366
      %5368 = vdwg.mxu0
      %v5370 = vsel %vm500, %v5167, 0
      %v5373 = vsel %vm500, %v5168, 0
      %5375 = vmatpush.msra.mxu0 0.0
      %5376 = vmatpush.msra.mxu0 0.0
      %5377 = vmatpush.msra.mxu0 0.0
      %5378 = vmatpush.msra.mxu0 0.0
      %5379 = vmatpush.msra.mxu0 0.0
      %5380 = vmatpush.msra.mxu0 0.0
      %5381 = vmatpush.msra.mxu0 0.0
      %5382 = vmatpush.msra.mxu0 0.0
      %5383 = vmatpush.msra.mxu0 0.0
      %5384 = vmatpush.msra.mxu0 0.0
      %5385 = vmatpush.msra.mxu0 0.0
      %5386 = vmatpush.msra.mxu0 0.0
      %5387 = vmatpush.msra.mxu0 0.0
      %5388 = vmatpush.msra.mxu0 0.0
      %5389 = vmatpush.msra.mxu0 %v4495
      %5390 = vmatpush.msra.mxu0 %v4494
      %5391 = vmatmul.f32.gmra.mxu0 %v5370
      %v5392 = vpop.f32.mrf.mxu0
      %v5393 = vadd.f32 0.0, %v5392
      %5394 = vmatmul.f32.gmra.mxu0 %v5373
      %v5395 = vpop.f32.mrf.mxu0
      %v5396 = vadd.f32 0.0, %v5395
      %5397 = vdwg.mxu0
      %v5399 = vsel %vm500, %v5199, 0
      %v5402 = vsel %vm500, %v5200, 0
      %5404 = vmatpush.msra.mxu0 0.0
      %5405 = vmatpush.msra.mxu0 0.0
      %5406 = vmatpush.msra.mxu0 0.0
      %5407 = vmatpush.msra.mxu0 0.0
      %5408 = vmatpush.msra.mxu0 0.0
      %5409 = vmatpush.msra.mxu0 0.0
      %5410 = vmatpush.msra.mxu0 0.0
      %5411 = vmatpush.msra.mxu0 0.0
      %5412 = vmatpush.msra.mxu0 0.0
      %5413 = vmatpush.msra.mxu0 0.0
      %5414 = vmatpush.msra.mxu0 0.0
      %5415 = vmatpush.msra.mxu0 0.0
      %5416 = vmatpush.msra.mxu0 0.0
      %5417 = vmatpush.msra.mxu0 0.0
      %5418 = vmatpush.msra.mxu0 %v4497
      %5419 = vmatpush.msra.mxu0 %v4496
      %5420 = vmatmul.f32.gmra.mxu0 %v5399
      %v5421 = vpop.f32.mrf.mxu0
      %v5422 = vadd.f32 0.0, %v5421
      %5423 = vmatmul.f32.gmra.mxu0 %v5402
      %v5424 = vpop.f32.mrf.mxu0
      %v5425 = vadd.f32 0.0, %v5424
      %5426 = vdwg.mxu0
      %v5428 = vsel %vm500, %v5231, 0
      %v5431 = vsel %vm500, %v5232, 0
      %5433 = vmatpush.msra.mxu0 0.0
      %5434 = vmatpush.msra.mxu0 0.0
      %5435 = vmatpush.msra.mxu0 0.0
      %5436 = vmatpush.msra.mxu0 0.0
      %5437 = vmatpush.msra.mxu0 0.0
      %5438 = vmatpush.msra.mxu0 0.0
      %5439 = vmatpush.msra.mxu0 0.0
      %5440 = vmatpush.msra.mxu0 0.0
      %5441 = vmatpush.msra.mxu0 0.0
      %5442 = vmatpush.msra.mxu0 0.0
      %5443 = vmatpush.msra.mxu0 0.0
      %5444 = vmatpush.msra.mxu0 0.0
      %5445 = vmatpush.msra.mxu0 0.0
      %5446 = vmatpush.msra.mxu0 0.0
      %5447 = vmatpush.msra.mxu0 %v4499
      %5448 = vmatpush.msra.mxu0 %v4498
      %5449 = vmatmul.f32.gmra.mxu0 %v5428
      %v5450 = vpop.f32.mrf.mxu0
      %v5451 = vadd.f32 0.0, %v5450
      %5452 = vmatmul.f32.gmra.mxu0 %v5431
      %v5453 = vpop.f32.mrf.mxu0
      %v5454 = vadd.f32 0.0, %v5453
      %5455 = vdwg.mxu0
      %v5457 = vsel %vm500, %v5263, 0
      %v5460 = vsel %vm500, %v5264, 0
      %5462 = vmatpush.msra.mxu0 0.0
      %5463 = vmatpush.msra.mxu0 0.0
      %5464 = vmatpush.msra.mxu0 0.0
      %5465 = vmatpush.msra.mxu0 0.0
      %5466 = vmatpush.msra.mxu0 0.0
      %5467 = vmatpush.msra.mxu0 0.0
      %5468 = vmatpush.msra.mxu0 0.0
      %5469 = vmatpush.msra.mxu0 0.0
      %5470 = vmatpush.msra.mxu0 0.0
      %5471 = vmatpush.msra.mxu0 0.0
      %5472 = vmatpush.msra.mxu0 0.0
      %5473 = vmatpush.msra.mxu0 0.0
      %5474 = vmatpush.msra.mxu0 0.0
      %5475 = vmatpush.msra.mxu0 0.0
      %5476 = vmatpush.msra.mxu0 %v4501
      %5477 = vmatpush.msra.mxu0 %v4500
      %5478 = vmatmul.f32.gmra.mxu0 %v5457
      %v5479 = vpop.f32.mrf.mxu0
      %v5480 = vadd.f32 0.0, %v5479
      %5481 = vmatmul.f32.gmra.mxu0 %v5460
      %v5482 = vpop.f32.mrf.mxu0
      %v5483 = vadd.f32 0.0, %v5482
      %5484 = vdwg.mxu0
      %v5486 = vsel %vm500, %v5295, 0
      %v5489 = vsel %vm500, %v5296, 0
      %5491 = vmatpush.msra.mxu0 0.0
      %5492 = vmatpush.msra.mxu0 0.0
      %5493 = vmatpush.msra.mxu0 0.0
      %5494 = vmatpush.msra.mxu0 0.0
      %5495 = vmatpush.msra.mxu0 0.0
      %5496 = vmatpush.msra.mxu0 0.0
      %5497 = vmatpush.msra.mxu0 0.0
      %5498 = vmatpush.msra.mxu0 0.0
      %5499 = vmatpush.msra.mxu0 0.0
      %5500 = vmatpush.msra.mxu0 0.0
      %5501 = vmatpush.msra.mxu0 0.0
      %5502 = vmatpush.msra.mxu0 0.0
      %5503 = vmatpush.msra.mxu0 0.0
      %5504 = vmatpush.msra.mxu0 0.0
      %5505 = vmatpush.msra.mxu0 %v4503
      %5506 = vmatpush.msra.mxu0 %v4502
      %5507 = vmatmul.f32.gmra.mxu0 %v5486
      %v5508 = vpop.f32.mrf.mxu0
      %v5509 = vadd.f32 0.0, %v5508
      %5510 = vmatmul.f32.gmra.mxu0 %v5489
      %v5511 = vpop.f32.mrf.mxu0
      %v5512 = vadd.f32 0.0, %v5511
      %5513 = vdwg.mxu0
      %v5514 = vmul.f32 %v1295, %v4492
      %v5515 = vmul.f32 %v1300, %v4493
      %v5516 = vmul.f32 %v1295, %v4494
      %v5517 = vmul.f32 %v1300, %v4495
      %v5518 = vmul.f32 %v1295, %v4496
      %v5519 = vmul.f32 %v1300, %v4497
      %v5520 = vmul.f32 %v1295, %v4498
      %v5521 = vmul.f32 %v1300, %v4499
      %v5522 = vmul.f32 %v1295, %v4500
      %v5523 = vmul.f32 %v1300, %v4501
      %v5524 = vmul.f32 %v1295, %v4502
      %v5525 = vmul.f32 %v1300, %v4503
      %v5526 = vmul.f32 %v1295, %v4504
      %v5527 = vmul.f32 %v1300, %v4505
      %v5528 = vmul.f32 %v1321, %v5335
      %v5529 = vmul.f32 %v1326, %v5338
      %v5530 = vmul.f32 %v1321, %v5364
      %v5531 = vmul.f32 %v1326, %v5367
      %v5532 = vmul.f32 %v1321, %v5393
      %v5533 = vmul.f32 %v1326, %v5396
      %v5534 = vmul.f32 %v1321, %v5422
      %v5535 = vmul.f32 %v1326, %v5425
      %v5536 = vmul.f32 %v1321, %v5451
      %v5537 = vmul.f32 %v1326, %v5454
      %v5538 = vmul.f32 %v1321, %v5480
      %v5539 = vmul.f32 %v1326, %v5483
      %v5540 = vmul.f32 %v1321, %v5509
      %v5541 = vmul.f32 %v1326, %v5512
      %v5542 = vadd.f32 %v5514, %v5528
      %v5543 = vadd.f32 %v5515, %v5529
      %v5544 = vadd.f32 %v5516, %v5530
      %v5545 = vadd.f32 %v5517, %v5531
      %v5546 = vadd.f32 %v5518, %v5532
      %v5547 = vadd.f32 %v5519, %v5533
      %v5548 = vadd.f32 %v5520, %v5534
      %v5549 = vadd.f32 %v5521, %v5535
      %v5550 = vadd.f32 %v5522, %v5536
      %v5551 = vadd.f32 %v5523, %v5537
      %v5552 = vadd.f32 %v5524, %v5538
      %v5553 = vadd.f32 %v5525, %v5539
      %v5554 = vadd.f32 %v5526, %v5540
      %v5555 = vadd.f32 %v5527, %v5541
      %v5557 = vsel %vm282, %v5542, 0
      %v5560 = vsel %vm282, %v5543, 0
      %5562 = vmatpush.xpose.msra.mxu0 0.0
      %5563 = vmatpush.xpose.msra.mxu0 0.0
      %5564 = vmatpush.xpose.msra.mxu0 0.0
      %5565 = vmatpush.xpose.msra.mxu0 0.0
      %5566 = vmatpush.xpose.msra.mxu0 0.0
      %5567 = vmatpush.xpose.msra.mxu0 0.0
      %5568 = vmatpush.xpose.msra.mxu0 0.0
      %5569 = vmatpush.xpose.msra.mxu0 0.0
      %5570 = vmatpush.xpose.msra.mxu0 0.0
      %5571 = vmatpush.xpose.msra.mxu0 0.0
      %5572 = vmatpush.xpose.msra.mxu0 0.0
      %5573 = vmatpush.xpose.msra.mxu0 0.0
      %5574 = vmatpush.xpose.msra.mxu0 0.0
      %5575 = vmatpush.xpose.msra.mxu0 0.0
      %5576 = vmatpush.xpose.msra.mxu0 %v5560
      %5577 = vmatpush.xpose.msra.mxu0 %v5557
      %5578 = vmatmul.f32.gmra.mxu0 %v5557
      %v5579 = vpop.f32.mrf.mxu0
      %v5580 = vadd.f32 0.0, %v5579
      %5581 = vmatmul.f32.gmra.mxu0 %v5560
      %v5582 = vpop.f32.mrf.mxu0
      %v5583 = vadd.f32 0.0, %v5582
      %5584 = vdwg.mxu0
      %v5586 = vsel %vm282, %v5544, 0
      %v5589 = vsel %vm282, %v5545, 0
      %5591 = vmatpush.xpose.msra.mxu0 0.0
      %5592 = vmatpush.xpose.msra.mxu0 0.0
      %5593 = vmatpush.xpose.msra.mxu0 0.0
      %5594 = vmatpush.xpose.msra.mxu0 0.0
      %5595 = vmatpush.xpose.msra.mxu0 0.0
      %5596 = vmatpush.xpose.msra.mxu0 0.0
      %5597 = vmatpush.xpose.msra.mxu0 0.0
      %5598 = vmatpush.xpose.msra.mxu0 0.0
      %5599 = vmatpush.xpose.msra.mxu0 0.0
      %5600 = vmatpush.xpose.msra.mxu0 0.0
      %5601 = vmatpush.xpose.msra.mxu0 0.0
      %5602 = vmatpush.xpose.msra.mxu0 0.0
      %5603 = vmatpush.xpose.msra.mxu0 0.0
      %5604 = vmatpush.xpose.msra.mxu0 0.0
      %5605 = vmatpush.xpose.msra.mxu0 %v5589
      %5606 = vmatpush.xpose.msra.mxu0 %v5586
      %5607 = vmatmul.f32.gmra.mxu0 %v5586
      %v5608 = vpop.f32.mrf.mxu0
      %v5609 = vadd.f32 0.0, %v5608
      %5610 = vmatmul.f32.gmra.mxu0 %v5589
      %v5611 = vpop.f32.mrf.mxu0
      %v5612 = vadd.f32 0.0, %v5611
      %5613 = vdwg.mxu0
      %v5615 = vsel %vm282, %v5546, 0
      %v5618 = vsel %vm282, %v5547, 0
      %5620 = vmatpush.xpose.msra.mxu0 0.0
      %5621 = vmatpush.xpose.msra.mxu0 0.0
      %5622 = vmatpush.xpose.msra.mxu0 0.0
      %5623 = vmatpush.xpose.msra.mxu0 0.0
      %5624 = vmatpush.xpose.msra.mxu0 0.0
      %5625 = vmatpush.xpose.msra.mxu0 0.0
      %5626 = vmatpush.xpose.msra.mxu0 0.0
      %5627 = vmatpush.xpose.msra.mxu0 0.0
      %5628 = vmatpush.xpose.msra.mxu0 0.0
      %5629 = vmatpush.xpose.msra.mxu0 0.0
      %5630 = vmatpush.xpose.msra.mxu0 0.0
      %5631 = vmatpush.xpose.msra.mxu0 0.0
      %5632 = vmatpush.xpose.msra.mxu0 0.0
      %5633 = vmatpush.xpose.msra.mxu0 0.0
      %5634 = vmatpush.xpose.msra.mxu0 %v5618
      %5635 = vmatpush.xpose.msra.mxu0 %v5615
      %5636 = vmatmul.f32.gmra.mxu0 %v5615
      %v5637 = vpop.f32.mrf.mxu0
      %v5638 = vadd.f32 0.0, %v5637
      %5639 = vmatmul.f32.gmra.mxu0 %v5618
      %v5640 = vpop.f32.mrf.mxu0
      %v5641 = vadd.f32 0.0, %v5640
      %5642 = vdwg.mxu0
      %v5644 = vsel %vm282, %v5548, 0
      %v5647 = vsel %vm282, %v5549, 0
      %5649 = vmatpush.xpose.msra.mxu0 0.0
      %5650 = vmatpush.xpose.msra.mxu0 0.0
      %5651 = vmatpush.xpose.msra.mxu0 0.0
      %5652 = vmatpush.xpose.msra.mxu0 0.0
      %5653 = vmatpush.xpose.msra.mxu0 0.0
      %5654 = vmatpush.xpose.msra.mxu0 0.0
      %5655 = vmatpush.xpose.msra.mxu0 0.0
      %5656 = vmatpush.xpose.msra.mxu0 0.0
      %5657 = vmatpush.xpose.msra.mxu0 0.0
      %5658 = vmatpush.xpose.msra.mxu0 0.0
      %5659 = vmatpush.xpose.msra.mxu0 0.0
      %5660 = vmatpush.xpose.msra.mxu0 0.0
      %5661 = vmatpush.xpose.msra.mxu0 0.0
      %5662 = vmatpush.xpose.msra.mxu0 0.0
      %5663 = vmatpush.xpose.msra.mxu0 %v5647
      %5664 = vmatpush.xpose.msra.mxu0 %v5644
      %5665 = vmatmul.f32.gmra.mxu0 %v5644
      %v5666 = vpop.f32.mrf.mxu0
      %v5667 = vadd.f32 0.0, %v5666
      %5668 = vmatmul.f32.gmra.mxu0 %v5647
      %v5669 = vpop.f32.mrf.mxu0
      %v5670 = vadd.f32 0.0, %v5669
      %5671 = vdwg.mxu0
      %v5673 = vsel %vm282, %v5550, 0
      %v5676 = vsel %vm282, %v5551, 0
      %5678 = vmatpush.xpose.msra.mxu0 0.0
      %5679 = vmatpush.xpose.msra.mxu0 0.0
      %5680 = vmatpush.xpose.msra.mxu0 0.0
      %5681 = vmatpush.xpose.msra.mxu0 0.0
      %5682 = vmatpush.xpose.msra.mxu0 0.0
      %5683 = vmatpush.xpose.msra.mxu0 0.0
      %5684 = vmatpush.xpose.msra.mxu0 0.0
      %5685 = vmatpush.xpose.msra.mxu0 0.0
      %5686 = vmatpush.xpose.msra.mxu0 0.0
      %5687 = vmatpush.xpose.msra.mxu0 0.0
      %5688 = vmatpush.xpose.msra.mxu0 0.0
      %5689 = vmatpush.xpose.msra.mxu0 0.0
      %5690 = vmatpush.xpose.msra.mxu0 0.0
      %5691 = vmatpush.xpose.msra.mxu0 0.0
      %5692 = vmatpush.xpose.msra.mxu0 %v5676
      %5693 = vmatpush.xpose.msra.mxu0 %v5673
      %5694 = vmatmul.f32.gmra.mxu0 %v5673
      %v5695 = vpop.f32.mrf.mxu0
      %v5696 = vadd.f32 0.0, %v5695
      %5697 = vmatmul.f32.gmra.mxu0 %v5676
      %v5698 = vpop.f32.mrf.mxu0
      %v5699 = vadd.f32 0.0, %v5698
      %5700 = vdwg.mxu0
      %v5702 = vsel %vm282, %v5552, 0
      %v5705 = vsel %vm282, %v5553, 0
      %5707 = vmatpush.xpose.msra.mxu0 0.0
      %5708 = vmatpush.xpose.msra.mxu0 0.0
      %5709 = vmatpush.xpose.msra.mxu0 0.0
      %5710 = vmatpush.xpose.msra.mxu0 0.0
      %5711 = vmatpush.xpose.msra.mxu0 0.0
      %5712 = vmatpush.xpose.msra.mxu0 0.0
      %5713 = vmatpush.xpose.msra.mxu0 0.0
      %5714 = vmatpush.xpose.msra.mxu0 0.0
      %5715 = vmatpush.xpose.msra.mxu0 0.0
      %5716 = vmatpush.xpose.msra.mxu0 0.0
      %5717 = vmatpush.xpose.msra.mxu0 0.0
      %5718 = vmatpush.xpose.msra.mxu0 0.0
      %5719 = vmatpush.xpose.msra.mxu0 0.0
      %5720 = vmatpush.xpose.msra.mxu0 0.0
      %5721 = vmatpush.xpose.msra.mxu0 %v5705
      %5722 = vmatpush.xpose.msra.mxu0 %v5702
      %5723 = vmatmul.f32.gmra.mxu0 %v5702
      %v5724 = vpop.f32.mrf.mxu0
      %v5725 = vadd.f32 0.0, %v5724
      %5726 = vmatmul.f32.gmra.mxu0 %v5705
      %v5727 = vpop.f32.mrf.mxu0
      %v5728 = vadd.f32 0.0, %v5727
      %5729 = vdwg.mxu0
      %v5731 = vsel %vm282, %v5554, 0
      %v5734 = vsel %vm282, %v5555, 0
      %5736 = vmatpush.xpose.msra.mxu0 0.0
      %5737 = vmatpush.xpose.msra.mxu0 0.0
      %5738 = vmatpush.xpose.msra.mxu0 0.0
      %5739 = vmatpush.xpose.msra.mxu0 0.0
      %5740 = vmatpush.xpose.msra.mxu0 0.0
      %5741 = vmatpush.xpose.msra.mxu0 0.0
      %5742 = vmatpush.xpose.msra.mxu0 0.0
      %5743 = vmatpush.xpose.msra.mxu0 0.0
      %5744 = vmatpush.xpose.msra.mxu0 0.0
      %5745 = vmatpush.xpose.msra.mxu0 0.0
      %5746 = vmatpush.xpose.msra.mxu0 0.0
      %5747 = vmatpush.xpose.msra.mxu0 0.0
      %5748 = vmatpush.xpose.msra.mxu0 0.0
      %5749 = vmatpush.xpose.msra.mxu0 0.0
      %5750 = vmatpush.xpose.msra.mxu0 %v5734
      %5751 = vmatpush.xpose.msra.mxu0 %v5731
      %5752 = vmatmul.f32.gmra.mxu0 %v5731
      %v5753 = vpop.f32.mrf.mxu0
      %v5754 = vadd.f32 0.0, %v5753
      %5755 = vmatmul.f32.gmra.mxu0 %v5734
      %v5756 = vpop.f32.mrf.mxu0
      %v5757 = vadd.f32 0.0, %v5756
      %5758 = vdwg.mxu0
      %v5759 = vmul.f32 %v5580, 0.5
      %v5760 = vmul.f32 %v5583, 0.5
      %v5761 = vmul.f32 %v5609, 0.5
      %v5762 = vmul.f32 %v5612, 0.5
      %v5763 = vmul.f32 %v5638, 0.5
      %v5764 = vmul.f32 %v5641, 0.5
      %v5765 = vmul.f32 %v5667, 0.5
      %v5766 = vmul.f32 %v5670, 0.5
      %v5767 = vmul.f32 %v5696, 0.5
      %v5768 = vmul.f32 %v5699, 0.5
      %v5769 = vmul.f32 %v5725, 0.5
      %v5770 = vmul.f32 %v5728, 0.5
      %v5771 = vmul.f32 %v5754, 0.5
      %v5772 = vmul.f32 %v5757, 0.5
      %v5773 = vsel %vm500, %v5759, -inf
      %5774 = vmax.xlane.f32.xlu0 %v5773
      %v5775 = vpop.xlane.xlu0 %5774
      %v5776 = vsel %vm500, %v5760, -inf
      %5777 = vmax.xlane.f32.xlu0 %v5776
      %v5778 = vpop.xlane.xlu0 %5777
      %v5779 = vsel %vm500, %v5761, -inf
      %5780 = vmax.xlane.f32.xlu0 %v5779
      %v5781 = vpop.xlane.xlu0 %5780
      %v5782 = vsel %vm500, %v5762, -inf
      %5783 = vmax.xlane.f32.xlu0 %v5782
      %v5784 = vpop.xlane.xlu0 %5783
      %v5785 = vsel %vm500, %v5763, -inf
      %5786 = vmax.xlane.f32.xlu0 %v5785
      %v5787 = vpop.xlane.xlu0 %5786
      %v5788 = vsel %vm500, %v5764, -inf
      %5789 = vmax.xlane.f32.xlu0 %v5788
      %v5790 = vpop.xlane.xlu0 %5789
      %v5791 = vsel %vm500, %v5765, -inf
      %5792 = vmax.xlane.f32.xlu0 %v5791
      %v5793 = vpop.xlane.xlu0 %5792
      %v5794 = vsel %vm500, %v5766, -inf
      %5795 = vmax.xlane.f32.xlu0 %v5794
      %v5796 = vpop.xlane.xlu0 %5795
      %v5797 = vsel %vm500, %v5767, -inf
      %5798 = vmax.xlane.f32.xlu0 %v5797
      %v5799 = vpop.xlane.xlu0 %5798
      %v5800 = vsel %vm500, %v5768, -inf
      %5801 = vmax.xlane.f32.xlu0 %v5800
      %v5802 = vpop.xlane.xlu0 %5801
      %v5803 = vsel %vm500, %v5769, -inf
      %5804 = vmax.xlane.f32.xlu0 %v5803
      %v5805 = vpop.xlane.xlu0 %5804
      %v5806 = vsel %vm500, %v5770, -inf
      %5807 = vmax.xlane.f32.xlu0 %v5806
      %v5808 = vpop.xlane.xlu0 %5807
      %v5809 = vsel %vm500, %v5771, -inf
      %5810 = vmax.xlane.f32.xlu0 %v5809
      %v5811 = vpop.xlane.xlu0 %5810
      %v5812 = vsel %vm500, %v5772, -inf
      %5813 = vmax.xlane.f32.xlu0 %v5812
      %v5814 = vpop.xlane.xlu0 %5813
      %v5815 = vsub.f32 %v5759, %v5775
      %v5816 = vsub.f32 %v5760, %v5778
      %v5817 = vsub.f32 %v5761, %v5781
      %v5818 = vsub.f32 %v5762, %v5784
      %v5819 = vsub.f32 %v5763, %v5787
      %v5820 = vsub.f32 %v5764, %v5790
      %v5821 = vsub.f32 %v5765, %v5793
      %v5822 = vsub.f32 %v5766, %v5796
      %v5823 = vsub.f32 %v5767, %v5799
      %v5824 = vsub.f32 %v5768, %v5802
      %v5825 = vsub.f32 %v5769, %v5805
      %v5826 = vsub.f32 %v5770, %v5808
      %v5827 = vsub.f32 %v5771, %v5811
      %v5828 = vsub.f32 %v5772, %v5814
      %v5829 = vmul.f32 %v5815, 1.442695
      %v5830 = vpow.pop %v5829
      %v5831 = vmul.f32 %v5816, 1.442695
      %v5832 = vpow.pop %v5831
      %v5833 = vmul.f32 %v5817, 1.442695
      %v5834 = vpow.pop %v5833
      %v5835 = vmul.f32 %v5818, 1.442695
      %v5836 = vpow.pop %v5835
      %v5837 = vmul.f32 %v5819, 1.442695
      %v5838 = vpow.pop %v5837
      %v5839 = vmul.f32 %v5820, 1.442695
      %v5840 = vpow.pop %v5839
      %v5841 = vmul.f32 %v5821, 1.442695
      %v5842 = vpow.pop %v5841
      %v5843 = vmul.f32 %v5822, 1.442695
      %v5844 = vpow.pop %v5843
      %v5845 = vmul.f32 %v5823, 1.442695
      %v5846 = vpow.pop %v5845
      %v5847 = vmul.f32 %v5824, 1.442695
      %v5848 = vpow.pop %v5847
      %v5849 = vmul.f32 %v5825, 1.442695
      %v5850 = vpow.pop %v5849
      %v5851 = vmul.f32 %v5826, 1.442695
      %v5852 = vpow.pop %v5851
      %v5853 = vmul.f32 %v5827, 1.442695
      %v5854 = vpow.pop %v5853
      %v5855 = vmul.f32 %v5828, 1.442695
      %v5856 = vpow.pop %v5855
      %v5857 = vsel %vm500, %v5830, 0.0
      %5858 = vadd.xlane.f32.xlu0 %v5857
      %v5859 = vpop.xlane.xlu0 %5858
      %v5860 = vsel %vm500, %v5832, 0.0
      %5861 = vadd.xlane.f32.xlu0 %v5860
      %v5862 = vpop.xlane.xlu0 %5861
      %v5863 = vsel %vm500, %v5834, 0.0
      %5864 = vadd.xlane.f32.xlu0 %v5863
      %v5865 = vpop.xlane.xlu0 %5864
      %v5866 = vsel %vm500, %v5836, 0.0
      %5867 = vadd.xlane.f32.xlu0 %v5866
      %v5868 = vpop.xlane.xlu0 %5867
      %v5869 = vsel %vm500, %v5838, 0.0
      %5870 = vadd.xlane.f32.xlu0 %v5869
      %v5871 = vpop.xlane.xlu0 %5870
      %v5872 = vsel %vm500, %v5840, 0.0
      %5873 = vadd.xlane.f32.xlu0 %v5872
      %v5874 = vpop.xlane.xlu0 %5873
      %v5875 = vsel %vm500, %v5842, 0.0
      %5876 = vadd.xlane.f32.xlu0 %v5875
      %v5877 = vpop.xlane.xlu0 %5876
      %v5878 = vsel %vm500, %v5844, 0.0
      %5879 = vadd.xlane.f32.xlu0 %v5878
      %v5880 = vpop.xlane.xlu0 %5879
      %v5881 = vsel %vm500, %v5846, 0.0
      %5882 = vadd.xlane.f32.xlu0 %v5881
      %v5883 = vpop.xlane.xlu0 %5882
      %v5884 = vsel %vm500, %v5848, 0.0
      %5885 = vadd.xlane.f32.xlu0 %v5884
      %v5886 = vpop.xlane.xlu0 %5885
      %v5887 = vsel %vm500, %v5850, 0.0
      %5888 = vadd.xlane.f32.xlu0 %v5887
      %v5889 = vpop.xlane.xlu0 %5888
      %v5890 = vsel %vm500, %v5852, 0.0
      %5891 = vadd.xlane.f32.xlu0 %v5890
      %v5892 = vpop.xlane.xlu0 %5891
      %v5893 = vsel %vm500, %v5854, 0.0
      %5894 = vadd.xlane.f32.xlu0 %v5893
      %v5895 = vpop.xlane.xlu0 %5894
      %v5896 = vsel %vm500, %v5856, 0.0
      %5897 = vadd.xlane.f32.xlu0 %v5896
      %v5898 = vpop.xlane.xlu0 %5897
      %v5899 = vrcp.pop %v5859
      %v5900 = vmul.f32 %v5859, %v5899
      %v5901 = vsub.f32 1.0, %v5900
      %v5902 = vmul.f32 %v5899, %v5901
      %v5903 = vadd.f32 %v5899, %v5902
      %vm5904 = vweird.f32 %v5859
      %vm5905 = vweird.f32 %v5899
      %vm5906 = vmor %vm5904, %vm5905
      %v5907 = vsel %vm5906, %v5899, %v5903
      %v5908 = vand.u32 2147483647, %v5859
      %vm5909 = vcmp.eq.f32.partialorder %v5908, 8.507059e+37
      %v5910 = vand.u32 %v5859, 2147483648
      %v5911 = vor.u32 1.1754944e-38, %v5910
      %v5912 = vsel %vm5909, %v5911, %v5907
      %v5913 = vmul.f32 %v5830, %v5912
      %v5914 = vrcp.pop %v5862
      %v5915 = vmul.f32 %v5862, %v5914
      %v5916 = vsub.f32 1.0, %v5915
      %v5917 = vmul.f32 %v5914, %v5916
      %v5918 = vadd.f32 %v5914, %v5917
      %vm5919 = vweird.f32 %v5862
      %vm5920 = vweird.f32 %v5914
      %vm5921 = vmor %vm5919, %vm5920
      %v5922 = vsel %vm5921, %v5914, %v5918
      %v5923 = vand.u32 2147483647, %v5862
      %vm5924 = vcmp.eq.f32.partialorder %v5923, 8.507059e+37
      %v5925 = vand.u32 %v5862, 2147483648
      %v5926 = vor.u32 1.1754944e-38, %v5925
      %v5927 = vsel %vm5924, %v5926, %v5922
      %v5928 = vmul.f32 %v5832, %v5927
      %v5929 = vrcp.pop %v5865
      %v5930 = vmul.f32 %v5865, %v5929
      %v5931 = vsub.f32 1.0, %v5930
      %v5932 = vmul.f32 %v5929, %v5931
      %v5933 = vadd.f32 %v5929, %v5932
      %vm5934 = vweird.f32 %v5865
      %vm5935 = vweird.f32 %v5929
      %vm5936 = vmor %vm5934, %vm5935
      %v5937 = vsel %vm5936, %v5929, %v5933
      %v5938 = vand.u32 2147483647, %v5865
      %vm5939 = vcmp.eq.f32.partialorder %v5938, 8.507059e+37
      %v5940 = vand.u32 %v5865, 2147483648
      %v5941 = vor.u32 1.1754944e-38, %v5940
      %v5942 = vsel %vm5939, %v5941, %v5937
      %v5943 = vmul.f32 %v5834, %v5942
      %v5944 = vrcp.pop %v5868
      %v5945 = vmul.f32 %v5868, %v5944
      %v5946 = vsub.f32 1.0, %v5945
      %v5947 = vmul.f32 %v5944, %v5946
      %v5948 = vadd.f32 %v5944, %v5947
      %vm5949 = vweird.f32 %v5868
      %vm5950 = vweird.f32 %v5944
      %vm5951 = vmor %vm5949, %vm5950
      %v5952 = vsel %vm5951, %v5944, %v5948
      %v5953 = vand.u32 2147483647, %v5868
      %vm5954 = vcmp.eq.f32.partialorder %v5953, 8.507059e+37
      %v5955 = vand.u32 %v5868, 2147483648
      %v5956 = vor.u32 1.1754944e-38, %v5955
      %v5957 = vsel %vm5954, %v5956, %v5952
      %v5958 = vmul.f32 %v5836, %v5957
      %v5959 = vrcp.pop %v5871
      %v5960 = vmul.f32 %v5871, %v5959
      %v5961 = vsub.f32 1.0, %v5960
      %v5962 = vmul.f32 %v5959, %v5961
      %v5963 = vadd.f32 %v5959, %v5962
      %vm5964 = vweird.f32 %v5871
      %vm5965 = vweird.f32 %v5959
      %vm5966 = vmor %vm5964, %vm5965
      %v5967 = vsel %vm5966, %v5959, %v5963
      %v5968 = vand.u32 2147483647, %v5871
      %vm5969 = vcmp.eq.f32.partialorder %v5968, 8.507059e+37
      %v5970 = vand.u32 %v5871, 2147483648
      %v5971 = vor.u32 1.1754944e-38, %v5970
      %v5972 = vsel %vm5969, %v5971, %v5967
      %v5973 = vmul.f32 %v5838, %v5972
      %v5974 = vrcp.pop %v5874
      %v5975 = vmul.f32 %v5874, %v5974
      %v5976 = vsub.f32 1.0, %v5975
      %v5977 = vmul.f32 %v5974, %v5976
      %v5978 = vadd.f32 %v5974, %v5977
      %vm5979 = vweird.f32 %v5874
      %vm5980 = vweird.f32 %v5974
      %vm5981 = vmor %vm5979, %vm5980
      %v5982 = vsel %vm5981, %v5974, %v5978
      %v5983 = vand.u32 2147483647, %v5874
      %vm5984 = vcmp.eq.f32.partialorder %v5983, 8.507059e+37
      %v5985 = vand.u32 %v5874, 2147483648
      %v5986 = vor.u32 1.1754944e-38, %v5985
      %v5987 = vsel %vm5984, %v5986, %v5982
      %v5988 = vmul.f32 %v5840, %v5987
      %v5989 = vrcp.pop %v5877
      %v5990 = vmul.f32 %v5877, %v5989
      %v5991 = vsub.f32 1.0, %v5990
      %v5992 = vmul.f32 %v5989, %v5991
      %v5993 = vadd.f32 %v5989, %v5992
      %vm5994 = vweird.f32 %v5877
      %vm5995 = vweird.f32 %v5989
      %vm5996 = vmor %vm5994, %vm5995
      %v5997 = vsel %vm5996, %v5989, %v5993
      %v5998 = vand.u32 2147483647, %v5877
      %vm5999 = vcmp.eq.f32.partialorder %v5998, 8.507059e+37
      %v6000 = vand.u32 %v5877, 2147483648
      %v6001 = vor.u32 1.1754944e-38, %v6000
      %v6002 = vsel %vm5999, %v6001, %v5997
      %v6003 = vmul.f32 %v5842, %v6002
      %v6004 = vrcp.pop %v5880
      %v6005 = vmul.f32 %v5880, %v6004
      %v6006 = vsub.f32 1.0, %v6005
      %v6007 = vmul.f32 %v6004, %v6006
      %v6008 = vadd.f32 %v6004, %v6007
      %vm6009 = vweird.f32 %v5880
      %vm6010 = vweird.f32 %v6004
      %vm6011 = vmor %vm6009, %vm6010
      %v6012 = vsel %vm6011, %v6004, %v6008
      %v6013 = vand.u32 2147483647, %v5880
      %vm6014 = vcmp.eq.f32.partialorder %v6013, 8.507059e+37
      %v6015 = vand.u32 %v5880, 2147483648
      %v6016 = vor.u32 1.1754944e-38, %v6015
      %v6017 = vsel %vm6014, %v6016, %v6012
      %v6018 = vmul.f32 %v5844, %v6017
      %v6019 = vrcp.pop %v5883
      %v6020 = vmul.f32 %v5883, %v6019
      %v6021 = vsub.f32 1.0, %v6020
      %v6022 = vmul.f32 %v6019, %v6021
      %v6023 = vadd.f32 %v6019, %v6022
      %vm6024 = vweird.f32 %v5883
      %vm6025 = vweird.f32 %v6019
      %vm6026 = vmor %vm6024, %vm6025
      %v6027 = vsel %vm6026, %v6019, %v6023
      %v6028 = vand.u32 2147483647, %v5883
      %vm6029 = vcmp.eq.f32.partialorder %v6028, 8.507059e+37
      %v6030 = vand.u32 %v5883, 2147483648
      %v6031 = vor.u32 1.1754944e-38, %v6030
      %v6032 = vsel %vm6029, %v6031, %v6027
      %v6033 = vmul.f32 %v5846, %v6032
      %v6034 = vrcp.pop %v5886
      %v6035 = vmul.f32 %v5886, %v6034
      %v6036 = vsub.f32 1.0, %v6035
      %v6037 = vmul.f32 %v6034, %v6036
      %v6038 = vadd.f32 %v6034, %v6037
      %vm6039 = vweird.f32 %v5886
      %vm6040 = vweird.f32 %v6034
      %vm6041 = vmor %vm6039, %vm6040
      %v6042 = vsel %vm6041, %v6034, %v6038
      %v6043 = vand.u32 2147483647, %v5886
      %vm6044 = vcmp.eq.f32.partialorder %v6043, 8.507059e+37
      %v6045 = vand.u32 %v5886, 2147483648
      %v6046 = vor.u32 1.1754944e-38, %v6045
      %v6047 = vsel %vm6044, %v6046, %v6042
      %v6048 = vmul.f32 %v5848, %v6047
      %v6049 = vrcp.pop %v5889
      %v6050 = vmul.f32 %v5889, %v6049
      %v6051 = vsub.f32 1.0, %v6050
      %v6052 = vmul.f32 %v6049, %v6051
      %v6053 = vadd.f32 %v6049, %v6052
      %vm6054 = vweird.f32 %v5889
      %vm6055 = vweird.f32 %v6049
      %vm6056 = vmor %vm6054, %vm6055
      %v6057 = vsel %vm6056, %v6049, %v6053
      %v6058 = vand.u32 2147483647, %v5889
      %vm6059 = vcmp.eq.f32.partialorder %v6058, 8.507059e+37
      %v6060 = vand.u32 %v5889, 2147483648
      %v6061 = vor.u32 1.1754944e-38, %v6060
      %v6062 = vsel %vm6059, %v6061, %v6057
      %v6063 = vmul.f32 %v5850, %v6062
      %v6064 = vrcp.pop %v5892
      %v6065 = vmul.f32 %v5892, %v6064
      %v6066 = vsub.f32 1.0, %v6065
      %v6067 = vmul.f32 %v6064, %v6066
      %v6068 = vadd.f32 %v6064, %v6067
      %vm6069 = vweird.f32 %v5892
      %vm6070 = vweird.f32 %v6064
      %vm6071 = vmor %vm6069, %vm6070
      %v6072 = vsel %vm6071, %v6064, %v6068
      %v6073 = vand.u32 2147483647, %v5892
      %vm6074 = vcmp.eq.f32.partialorder %v6073, 8.507059e+37
      %v6075 = vand.u32 %v5892, 2147483648
      %v6076 = vor.u32 1.1754944e-38, %v6075
      %v6077 = vsel %vm6074, %v6076, %v6072
      %v6078 = vmul.f32 %v5852, %v6077
      %v6079 = vrcp.pop %v5895
      %v6080 = vmul.f32 %v5895, %v6079
      %v6081 = vsub.f32 1.0, %v6080
      %v6082 = vmul.f32 %v6079, %v6081
      %v6083 = vadd.f32 %v6079, %v6082
      %vm6084 = vweird.f32 %v5895
      %vm6085 = vweird.f32 %v6079
      %vm6086 = vmor %vm6084, %vm6085
      %v6087 = vsel %vm6086, %v6079, %v6083
      %v6088 = vand.u32 2147483647, %v5895
      %vm6089 = vcmp.eq.f32.partialorder %v6088, 8.507059e+37
      %v6090 = vand.u32 %v5895, 2147483648
      %v6091 = vor.u32 1.1754944e-38, %v6090
      %v6092 = vsel %vm6089, %v6091, %v6087
      %v6093 = vmul.f32 %v5854, %v6092
      %v6094 = vrcp.pop %v5898
      %v6095 = vmul.f32 %v5898, %v6094
      %v6096 = vsub.f32 1.0, %v6095
      %v6097 = vmul.f32 %v6094, %v6096
      %v6098 = vadd.f32 %v6094, %v6097
      %vm6099 = vweird.f32 %v5898
      %vm6100 = vweird.f32 %v6094
      %vm6101 = vmor %vm6099, %vm6100
      %v6102 = vsel %vm6101, %v6094, %v6098
      %v6103 = vand.u32 2147483647, %v5898
      %vm6104 = vcmp.eq.f32.partialorder %v6103, 8.507059e+37
      %v6105 = vand.u32 %v5898, 2147483648
      %v6106 = vor.u32 1.1754944e-38, %v6105
      %v6107 = vsel %vm6104, %v6106, %v6102
      %v6108 = vmul.f32 %v5856, %v6107
      %v6109 = vmul.f32 %v5913, 0.5
      %v6110 = vmul.f32 %v5928, 0.5
      %v6111 = vmul.f32 %v5943, 0.5
      %v6112 = vmul.f32 %v5958, 0.5
      %v6113 = vmul.f32 %v5973, 0.5
      %v6114 = vmul.f32 %v5988, 0.5
      %v6115 = vmul.f32 %v6003, 0.5
      %v6116 = vmul.f32 %v6018, 0.5
      %v6117 = vmul.f32 %v6033, 0.5
      %v6118 = vmul.f32 %v6048, 0.5
      %v6119 = vmul.f32 %v6063, 0.5
      %v6120 = vmul.f32 %v6078, 0.5
      %v6121 = vmul.f32 %v6093, 0.5
      %v6122 = vmul.f32 %v6108, 0.5
      %v6123 = vmul.f32 %v263, %v6109
      %v6124 = vmul.f32 %v264, %v6110
      %v6125 = vmul.f32 %v265, %v6111
      %v6126 = vmul.f32 %v266, %v6112
      %v6127 = vmul.f32 %v267, %v6113
      %v6128 = vmul.f32 %v268, %v6114
      %v6129 = vmul.f32 %v269, %v6115
      %v6130 = vmul.f32 %v270, %v6116
      %v6131 = vmul.f32 %v271, %v6117
      %v6132 = vmul.f32 %v272, %v6118
      %v6133 = vmul.f32 %v273, %v6119
      %v6134 = vmul.f32 %v274, %v6120
      %v6135 = vmul.f32 %v275, %v6121
      %v6136 = vmul.f32 %v276, %v6122
      %6137 = vxpose.xlu0.b32.start [1/16] %v6123, 128
      %6138 = vxpose.xlu0.b32.cont [2/16] %v6124, 128
      %6139 = vxpose.xlu0.b32.cont [3/16] 0.0, 128
      %6140 = vxpose.xlu0.b32.cont [4/16] 0.0, 128
      %6141 = vxpose.xlu0.b32.cont [5/16] 0.0, 128
      %6142 = vxpose.xlu0.b32.cont [6/16] 0.0, 128
      %6143 = vxpose.xlu0.b32.cont [7/16] 0.0, 128
      %6144 = vxpose.xlu0.b32.cont [8/16] 0.0, 128
      %6145 = vxpose.xlu0.b32.cont [9/16] 0.0, 128
      %6146 = vxpose.xlu0.b32.cont [10/16] 0.0, 128
      %6147 = vxpose.xlu0.b32.cont [11/16] 0.0, 128
      %6148 = vxpose.xlu0.b32.cont [12/16] 0.0, 128
      %6149 = vxpose.xlu0.b32.cont [13/16] 0.0, 128
      %6150 = vxpose.xlu0.b32.cont [14/16] 0.0, 128
      %6151 = vxpose.xlu0.b32.cont [15/16] 0.0, 128
      %6152 = vxpose.xlu0.b32.end [16/16] 0.0, 128
      %v6153 = vpop.trf.xlu0
      %v6154 = vpop.trf.xlu0
      %v6155 = vpop.trf.xlu0
      %v6156 = vpop.trf.xlu0
      %v6157 = vpop.trf.xlu0
      %v6158 = vpop.trf.xlu0
      %v6159 = vpop.trf.xlu0
      %v6160 = vpop.trf.xlu0
      %v6161 = vpop.trf.xlu0
      %v6162 = vpop.trf.xlu0
      %v6163 = vpop.trf.xlu0
      %v6164 = vpop.trf.xlu0
      %v6165 = vpop.trf.xlu0
      %v6166 = vpop.trf.xlu0
      %v6167 = vpop.trf.xlu0
      %v6168 = vpop.trf.xlu0
      %6169 = vxpose.xlu0.b32.start [1/16] %v6125, 128
      %6170 = vxpose.xlu0.b32.cont [2/16] %v6126, 128
      %6171 = vxpose.xlu0.b32.cont [3/16] 0.0, 128
      %6172 = vxpose.xlu0.b32.cont [4/16] 0.0, 128
      %6173 = vxpose.xlu0.b32.cont [5/16] 0.0, 128
      %6174 = vxpose.xlu0.b32.cont [6/16] 0.0, 128
      %6175 = vxpose.xlu0.b32.cont [7/16] 0.0, 128
      %6176 = vxpose.xlu0.b32.cont [8/16] 0.0, 128
      %6177 = vxpose.xlu0.b32.cont [9/16] 0.0, 128
      %6178 = vxpose.xlu0.b32.cont [10/16] 0.0, 128
      %6179 = vxpose.xlu0.b32.cont [11/16] 0.0, 128
      %6180 = vxpose.xlu0.b32.cont [12/16] 0.0, 128
      %6181 = vxpose.xlu0.b32.cont [13/16] 0.0, 128
      %6182 = vxpose.xlu0.b32.cont [14/16] 0.0, 128
      %6183 = vxpose.xlu0.b32.cont [15/16] 0.0, 128
      %6184 = vxpose.xlu0.b32.end [16/16] 0.0, 128
      %v6185 = vpop.trf.xlu0
      %v6186 = vpop.trf.xlu0
      %v6187 = vpop.trf.xlu0
      %v6188 = vpop.trf.xlu0
      %v6189 = vpop.trf.xlu0
      %v6190 = vpop.trf.xlu0
      %v6191 = vpop.trf.xlu0
      %v6192 = vpop.trf.xlu0
      %v6193 = vpop.trf.xlu0
      %v6194 = vpop.trf.xlu0
      %v6195 = vpop.trf.xlu0
      %v6196 = vpop.trf.xlu0
      %v6197 = vpop.trf.xlu0
      %v6198 = vpop.trf.xlu0
      %v6199 = vpop.trf.xlu0
      %v6200 = vpop.trf.xlu0
      %6201 = vxpose.xlu0.b32.start [1/16] %v6127, 128
      %6202 = vxpose.xlu0.b32.cont [2/16] %v6128, 128
      %6203 = vxpose.xlu0.b32.cont [3/16] 0.0, 128
      %6204 = vxpose.xlu0.b32.cont [4/16] 0.0, 128
      %6205 = vxpose.xlu0.b32.cont [5/16] 0.0, 128
      %6206 = vxpose.xlu0.b32.cont [6/16] 0.0, 128
      %6207 = vxpose.xlu0.b32.cont [7/16] 0.0, 128
      %6208 = vxpose.xlu0.b32.cont [8/16] 0.0, 128
      %6209 = vxpose.xlu0.b32.cont [9/16] 0.0, 128
      %6210 = vxpose.xlu0.b32.cont [10/16] 0.0, 128
      %6211 = vxpose.xlu0.b32.cont [11/16] 0.0, 128
      %6212 = vxpose.xlu0.b32.cont [12/16] 0.0, 128
      %6213 = vxpose.xlu0.b32.cont [13/16] 0.0, 128
      %6214 = vxpose.xlu0.b32.cont [14/16] 0.0, 128
      %6215 = vxpose.xlu0.b32.cont [15/16] 0.0, 128
      %6216 = vxpose.xlu0.b32.end [16/16] 0.0, 128
      %v6217 = vpop.trf.xlu0
      %v6218 = vpop.trf.xlu0
      %v6219 = vpop.trf.xlu0
      %v6220 = vpop.trf.xlu0
      %v6221 = vpop.trf.xlu0
      %v6222 = vpop.trf.xlu0
      %v6223 = vpop.trf.xlu0
      %v6224 = vpop.trf.xlu0
      %v6225 = vpop.trf.xlu0
      %v6226 = vpop.trf.xlu0
      %v6227 = vpop.trf.xlu0
      %v6228 = vpop.trf.xlu0
      %v6229 = vpop.trf.xlu0
      %v6230 = vpop.trf.xlu0
      %v6231 = vpop.trf.xlu0
      %v6232 = vpop.trf.xlu0
      %6233 = vxpose.xlu0.b32.start [1/16] %v6129, 128
      %6234 = vxpose.xlu0.b32.cont [2/16] %v6130, 128
      %6235 = vxpose.xlu0.b32.cont [3/16] 0.0, 128
      %6236 = vxpose.xlu0.b32.cont [4/16] 0.0, 128
      %6237 = vxpose.xlu0.b32.cont [5/16] 0.0, 128
      %6238 = vxpose.xlu0.b32.cont [6/16] 0.0, 128
      %6239 = vxpose.xlu0.b32.cont [7/16] 0.0, 128
      %6240 = vxpose.xlu0.b32.cont [8/16] 0.0, 128
      %6241 = vxpose.xlu0.b32.cont [9/16] 0.0, 128
      %6242 = vxpose.xlu0.b32.cont [10/16] 0.0, 128
      %6243 = vxpose.xlu0.b32.cont [11/16] 0.0, 128
      %6244 = vxpose.xlu0.b32.cont [12/16] 0.0, 128
      %6245 = vxpose.xlu0.b32.cont [13/16] 0.0, 128
      %6246 = vxpose.xlu0.b32.cont [14/16] 0.0, 128
      %6247 = vxpose.xlu0.b32.cont [15/16] 0.0, 128
      %6248 = vxpose.xlu0.b32.end [16/16] 0.0, 128
      %v6249 = vpop.trf.xlu0
      %v6250 = vpop.trf.xlu0
      %v6251 = vpop.trf.xlu0
      %v6252 = vpop.trf.xlu0
      %v6253 = vpop.trf.xlu0
      %v6254 = vpop.trf.xlu0
      %v6255 = vpop.trf.xlu0
      %v6256 = vpop.trf.xlu0
      %v6257 = vpop.trf.xlu0
      %v6258 = vpop.trf.xlu0
      %v6259 = vpop.trf.xlu0
      %v6260 = vpop.trf.xlu0
      %v6261 = vpop.trf.xlu0
      %v6262 = vpop.trf.xlu0
      %v6263 = vpop.trf.xlu0
      %v6264 = vpop.trf.xlu0
      %6265 = vxpose.xlu0.b32.start [1/16] %v6131, 128
      %6266 = vxpose.xlu0.b32.cont [2/16] %v6132, 128
      %6267 = vxpose.xlu0.b32.cont [3/16] 0.0, 128
      %6268 = vxpose.xlu0.b32.cont [4/16] 0.0, 128
      %6269 = vxpose.xlu0.b32.cont [5/16] 0.0, 128
      %6270 = vxpose.xlu0.b32.cont [6/16] 0.0, 128
      %6271 = vxpose.xlu0.b32.cont [7/16] 0.0, 128
      %6272 = vxpose.xlu0.b32.cont [8/16] 0.0, 128
      %6273 = vxpose.xlu0.b32.cont [9/16] 0.0, 128
      %6274 = vxpose.xlu0.b32.cont [10/16] 0.0, 128
      %6275 = vxpose.xlu0.b32.cont [11/16] 0.0, 128
      %6276 = vxpose.xlu0.b32.cont [12/16] 0.0, 128
      %6277 = vxpose.xlu0.b32.cont [13/16] 0.0, 128
      %6278 = vxpose.xlu0.b32.cont [14/16] 0.0, 128
      %6279 = vxpose.xlu0.b32.cont [15/16] 0.0, 128
      %6280 = vxpose.xlu0.b32.end [16/16] 0.0, 128
      %v6281 = vpop.trf.xlu0
      %v6282 = vpop.trf.xlu0
      %v6283 = vpop.trf.xlu0
      %v6284 = vpop.trf.xlu0
      %v6285 = vpop.trf.xlu0
      %v6286 = vpop.trf.xlu0
      %v6287 = vpop.trf.xlu0
      %v6288 = vpop.trf.xlu0
      %v6289 = vpop.trf.xlu0
      %v6290 = vpop.trf.xlu0
      %v6291 = vpop.trf.xlu0
      %v6292 = vpop.trf.xlu0
      %v6293 = vpop.trf.xlu0
      %v6294 = vpop.trf.xlu0
      %v6295 = vpop.trf.xlu0
      %v6296 = vpop.trf.xlu0
      %6297 = vxpose.xlu0.b32.start [1/16] %v6133, 128
      %6298 = vxpose.xlu0.b32.cont [2/16] %v6134, 128
      %6299 = vxpose.xlu0.b32.cont [3/16] 0.0, 128
      %6300 = vxpose.xlu0.b32.cont [4/16] 0.0, 128
      %6301 = vxpose.xlu0.b32.cont [5/16] 0.0, 128
      %6302 = vxpose.xlu0.b32.cont [6/16] 0.0, 128
      %6303 = vxpose.xlu0.b32.cont [7/16] 0.0, 128
      %6304 = vxpose.xlu0.b32.cont [8/16] 0.0, 128
      %6305 = vxpose.xlu0.b32.cont [9/16] 0.0, 128
      %6306 = vxpose.xlu0.b32.cont [10/16] 0.0, 128
      %6307 = vxpose.xlu0.b32.cont [11/16] 0.0, 128
      %6308 = vxpose.xlu0.b32.cont [12/16] 0.0, 128
      %6309 = vxpose.xlu0.b32.cont [13/16] 0.0, 128
      %6310 = vxpose.xlu0.b32.cont [14/16] 0.0, 128
      %6311 = vxpose.xlu0.b32.cont [15/16] 0.0, 128
      %6312 = vxpose.xlu0.b32.end [16/16] 0.0, 128
      %v6313 = vpop.trf.xlu0
      %v6314 = vpop.trf.xlu0
      %v6315 = vpop.trf.xlu0
      %v6316 = vpop.trf.xlu0
      %v6317 = vpop.trf.xlu0
      %v6318 = vpop.trf.xlu0
      %v6319 = vpop.trf.xlu0
      %v6320 = vpop.trf.xlu0
      %v6321 = vpop.trf.xlu0
      %v6322 = vpop.trf.xlu0
      %v6323 = vpop.trf.xlu0
      %v6324 = vpop.trf.xlu0
      %v6325 = vpop.trf.xlu0
      %v6326 = vpop.trf.xlu0
      %v6327 = vpop.trf.xlu0
      %v6328 = vpop.trf.xlu0
      %6329 = vxpose.xlu0.b32.start [1/16] %v6135, 128
      %6330 = vxpose.xlu0.b32.cont [2/16] %v6136, 128
      %6331 = vxpose.xlu0.b32.cont [3/16] 0.0, 128
      %6332 = vxpose.xlu0.b32.cont [4/16] 0.0, 128
      %6333 = vxpose.xlu0.b32.cont [5/16] 0.0, 128
      %6334 = vxpose.xlu0.b32.cont [6/16] 0.0, 128
      %6335 = vxpose.xlu0.b32.cont [7/16] 0.0, 128
      %6336 = vxpose.xlu0.b32.cont [8/16] 0.0, 128
      %6337 = vxpose.xlu0.b32.cont [9/16] 0.0, 128
      %6338 = vxpose.xlu0.b32.cont [10/16] 0.0, 128
      %6339 = vxpose.xlu0.b32.cont [11/16] 0.0, 128
      %6340 = vxpose.xlu0.b32.cont [12/16] 0.0, 128
      %6341 = vxpose.xlu0.b32.cont [13/16] 0.0, 128
      %6342 = vxpose.xlu0.b32.cont [14/16] 0.0, 128
      %6343 = vxpose.xlu0.b32.cont [15/16] 0.0, 128
      %6344 = vxpose.xlu0.b32.end [16/16] 0.0, 128
      %v6345 = vpop.trf.xlu0
      %v6346 = vpop.trf.xlu0
      %v6347 = vpop.trf.xlu0
      %v6348 = vpop.trf.xlu0
      %v6349 = vpop.trf.xlu0
      %v6350 = vpop.trf.xlu0
      %v6351 = vpop.trf.xlu0
      %v6352 = vpop.trf.xlu0
      %v6353 = vpop.trf.xlu0
      %v6354 = vpop.trf.xlu0
      %v6355 = vpop.trf.xlu0
      %v6356 = vpop.trf.xlu0
      %v6357 = vpop.trf.xlu0
      %v6358 = vpop.trf.xlu0
      %v6359 = vpop.trf.xlu0
      %v6360 = vpop.trf.xlu0
      %v6362 = vsel %vm500, %v6153, 0
      %v6365 = vsel %vm500, %v6154, 0
      %6367 = vmatpush.msra.mxu0 0.0
      %6368 = vmatpush.msra.mxu0 0.0
      %6369 = vmatpush.msra.mxu0 0.0
      %6370 = vmatpush.msra.mxu0 0.0
      %6371 = vmatpush.msra.mxu0 0.0
      %6372 = vmatpush.msra.mxu0 0.0
      %6373 = vmatpush.msra.mxu0 0.0
      %6374 = vmatpush.msra.mxu0 0.0
      %6375 = vmatpush.msra.mxu0 0.0
      %6376 = vmatpush.msra.mxu0 0.0
      %6377 = vmatpush.msra.mxu0 0.0
      %6378 = vmatpush.msra.mxu0 0.0
      %6379 = vmatpush.msra.mxu0 0.0
      %6380 = vmatpush.msra.mxu0 0.0
      %6381 = vmatpush.msra.mxu0 %v246
      %6382 = vmatpush.msra.mxu0 %v245
      %6383 = vmatmul.f32.gmra.mxu0 %v6362
      %v6384 = vpop.f32.mrf.mxu0
      %v6385 = vadd.f32 0.0, %v6384
      %6386 = vmatmul.f32.gmra.mxu0 %v6365
      %v6387 = vpop.f32.mrf.mxu0
      %v6388 = vadd.f32 0.0, %v6387
      %6389 = vdwg.mxu0
      %v6391 = vsel %vm500, %v6185, 0
      %v6394 = vsel %vm500, %v6186, 0
      %6396 = vmatpush.msra.mxu0 0.0
      %6397 = vmatpush.msra.mxu0 0.0
      %6398 = vmatpush.msra.mxu0 0.0
      %6399 = vmatpush.msra.mxu0 0.0
      %6400 = vmatpush.msra.mxu0 0.0
      %6401 = vmatpush.msra.mxu0 0.0
      %6402 = vmatpush.msra.mxu0 0.0
      %6403 = vmatpush.msra.mxu0 0.0
      %6404 = vmatpush.msra.mxu0 0.0
      %6405 = vmatpush.msra.mxu0 0.0
      %6406 = vmatpush.msra.mxu0 0.0
      %6407 = vmatpush.msra.mxu0 0.0
      %6408 = vmatpush.msra.mxu0 0.0
      %6409 = vmatpush.msra.mxu0 0.0
      %6410 = vmatpush.msra.mxu0 %v5543
      %6411 = vmatpush.msra.mxu0 %v5542
      %6412 = vmatmul.f32.gmra.mxu0 %v6391
      %v6413 = vpop.f32.mrf.mxu0
      %v6414 = vadd.f32 0.0, %v6413
      %6415 = vmatmul.f32.gmra.mxu0 %v6394
      %v6416 = vpop.f32.mrf.mxu0
      %v6417 = vadd.f32 0.0, %v6416
      %6418 = vdwg.mxu0
      %v6420 = vsel %vm500, %v6217, 0
      %v6423 = vsel %vm500, %v6218, 0
      %6425 = vmatpush.msra.mxu0 0.0
      %6426 = vmatpush.msra.mxu0 0.0
      %6427 = vmatpush.msra.mxu0 0.0
      %6428 = vmatpush.msra.mxu0 0.0
      %6429 = vmatpush.msra.mxu0 0.0
      %6430 = vmatpush.msra.mxu0 0.0
      %6431 = vmatpush.msra.mxu0 0.0
      %6432 = vmatpush.msra.mxu0 0.0
      %6433 = vmatpush.msra.mxu0 0.0
      %6434 = vmatpush.msra.mxu0 0.0
      %6435 = vmatpush.msra.mxu0 0.0
      %6436 = vmatpush.msra.mxu0 0.0
      %6437 = vmatpush.msra.mxu0 0.0
      %6438 = vmatpush.msra.mxu0 0.0
      %6439 = vmatpush.msra.mxu0 %v5545
      %6440 = vmatpush.msra.mxu0 %v5544
      %6441 = vmatmul.f32.gmra.mxu0 %v6420
      %v6442 = vpop.f32.mrf.mxu0
      %v6443 = vadd.f32 0.0, %v6442
      %6444 = vmatmul.f32.gmra.mxu0 %v6423
      %v6445 = vpop.f32.mrf.mxu0
      %v6446 = vadd.f32 0.0, %v6445
      %6447 = vdwg.mxu0
      %v6449 = vsel %vm500, %v6249, 0
      %v6452 = vsel %vm500, %v6250, 0
      %6454 = vmatpush.msra.mxu0 0.0
      %6455 = vmatpush.msra.mxu0 0.0
      %6456 = vmatpush.msra.mxu0 0.0
      %6457 = vmatpush.msra.mxu0 0.0
      %6458 = vmatpush.msra.mxu0 0.0
      %6459 = vmatpush.msra.mxu0 0.0
      %6460 = vmatpush.msra.mxu0 0.0
      %6461 = vmatpush.msra.mxu0 0.0
      %6462 = vmatpush.msra.mxu0 0.0
      %6463 = vmatpush.msra.mxu0 0.0
      %6464 = vmatpush.msra.mxu0 0.0
      %6465 = vmatpush.msra.mxu0 0.0
      %6466 = vmatpush.msra.mxu0 0.0
      %6467 = vmatpush.msra.mxu0 0.0
      %6468 = vmatpush.msra.mxu0 %v5547
      %6469 = vmatpush.msra.mxu0 %v5546
      %6470 = vmatmul.f32.gmra.mxu0 %v6449
      %v6471 = vpop.f32.mrf.mxu0
      %v6472 = vadd.f32 0.0, %v6471
      %6473 = vmatmul.f32.gmra.mxu0 %v6452
      %v6474 = vpop.f32.mrf.mxu0
      %v6475 = vadd.f32 0.0, %v6474
      %6476 = vdwg.mxu0
      %v6478 = vsel %vm500, %v6281, 0
      %v6481 = vsel %vm500, %v6282, 0
      %6483 = vmatpush.msra.mxu0 0.0
      %6484 = vmatpush.msra.mxu0 0.0
      %6485 = vmatpush.msra.mxu0 0.0
      %6486 = vmatpush.msra.mxu0 0.0
      %6487 = vmatpush.msra.mxu0 0.0
      %6488 = vmatpush.msra.mxu0 0.0
      %6489 = vmatpush.msra.mxu0 0.0
      %6490 = vmatpush.msra.mxu0 0.0
      %6491 = vmatpush.msra.mxu0 0.0
      %6492 = vmatpush.msra.mxu0 0.0
      %6493 = vmatpush.msra.mxu0 0.0
      %6494 = vmatpush.msra.mxu0 0.0
      %6495 = vmatpush.msra.mxu0 0.0
      %6496 = vmatpush.msra.mxu0 0.0
      %6497 = vmatpush.msra.mxu0 %v5549
      %6498 = vmatpush.msra.mxu0 %v5548
      %6499 = vmatmul.f32.gmra.mxu0 %v6478
      %v6500 = vpop.f32.mrf.mxu0
      %v6501 = vadd.f32 0.0, %v6500
      %6502 = vmatmul.f32.gmra.mxu0 %v6481
      %v6503 = vpop.f32.mrf.mxu0
      %v6504 = vadd.f32 0.0, %v6503
      %6505 = vdwg.mxu0
      %v6507 = vsel %vm500, %v6313, 0
      %v6510 = vsel %vm500, %v6314, 0
      %6512 = vmatpush.msra.mxu0 0.0
      %6513 = vmatpush.msra.mxu0 0.0
      %6514 = vmatpush.msra.mxu0 0.0
      %6515 = vmatpush.msra.mxu0 0.0
      %6516 = vmatpush.msra.mxu0 0.0
      %6517 = vmatpush.msra.mxu0 0.0
      %6518 = vmatpush.msra.mxu0 0.0
      %6519 = vmatpush.msra.mxu0 0.0
      %6520 = vmatpush.msra.mxu0 0.0
      %6521 = vmatpush.msra.mxu0 0.0
      %6522 = vmatpush.msra.mxu0 0.0
      %6523 = vmatpush.msra.mxu0 0.0
      %6524 = vmatpush.msra.mxu0 0.0
      %6525 = vmatpush.msra.mxu0 0.0
      %6526 = vmatpush.msra.mxu0 %v5551
      %6527 = vmatpush.msra.mxu0 %v5550
      %6528 = vmatmul.f32.gmra.mxu0 %v6507
      %v6529 = vpop.f32.mrf.mxu0
      %v6530 = vadd.f32 0.0, %v6529
      %6531 = vmatmul.f32.gmra.mxu0 %v6510
      %v6532 = vpop.f32.mrf.mxu0
      %v6533 = vadd.f32 0.0, %v6532
      %6534 = vdwg.mxu0
      %v6536 = vsel %vm500, %v6345, 0
      %v6539 = vsel %vm500, %v6346, 0
      %6541 = vmatpush.msra.mxu0 0.0
      %6542 = vmatpush.msra.mxu0 0.0
      %6543 = vmatpush.msra.mxu0 0.0
      %6544 = vmatpush.msra.mxu0 0.0
      %6545 = vmatpush.msra.mxu0 0.0
      %6546 = vmatpush.msra.mxu0 0.0
      %6547 = vmatpush.msra.mxu0 0.0
      %6548 = vmatpush.msra.mxu0 0.0
      %6549 = vmatpush.msra.mxu0 0.0
      %6550 = vmatpush.msra.mxu0 0.0
      %6551 = vmatpush.msra.mxu0 0.0
      %6552 = vmatpush.msra.mxu0 0.0
      %6553 = vmatpush.msra.mxu0 0.0
      %6554 = vmatpush.msra.mxu0 0.0
      %6555 = vmatpush.msra.mxu0 %v5553
      %6556 = vmatpush.msra.mxu0 %v5552
      %6557 = vmatmul.f32.gmra.mxu0 %v6536
      %v6558 = vpop.f32.mrf.mxu0
      %v6559 = vadd.f32 0.0, %v6558
      %6560 = vmatmul.f32.gmra.mxu0 %v6539
      %v6561 = vpop.f32.mrf.mxu0
      %v6562 = vadd.f32 0.0, %v6561
      %6563 = vdwg.mxu0
      %v6564 = vmul.f32 %v1295, %v5542
      %v6565 = vmul.f32 %v1300, %v5543
      %v6566 = vmul.f32 %v1295, %v5544
      %v6567 = vmul.f32 %v1300, %v5545
      %v6568 = vmul.f32 %v1295, %v5546
      %v6569 = vmul.f32 %v1300, %v5547
      %v6570 = vmul.f32 %v1295, %v5548
      %v6571 = vmul.f32 %v1300, %v5549
      %v6572 = vmul.f32 %v1295, %v5550
      %v6573 = vmul.f32 %v1300, %v5551
      %v6574 = vmul.f32 %v1295, %v5552
      %v6575 = vmul.f32 %v1300, %v5553
      %v6576 = vmul.f32 %v1295, %v5554
      %v6577 = vmul.f32 %v1300, %v5555
      %v6578 = vmul.f32 %v1321, %v6385
      %v6579 = vmul.f32 %v1326, %v6388
      %v6580 = vmul.f32 %v1321, %v6414
      %v6581 = vmul.f32 %v1326, %v6417
      %v6582 = vmul.f32 %v1321, %v6443
      %v6583 = vmul.f32 %v1326, %v6446
      %v6584 = vmul.f32 %v1321, %v6472
      %v6585 = vmul.f32 %v1326, %v6475
      %v6586 = vmul.f32 %v1321, %v6501
      %v6587 = vmul.f32 %v1326, %v6504
      %v6588 = vmul.f32 %v1321, %v6530
      %v6589 = vmul.f32 %v1326, %v6533
      %v6590 = vmul.f32 %v1321, %v6559
      %v6591 = vmul.f32 %v1326, %v6562
      %v6592 = vadd.f32 %v6564, %v6578
      %v6593 = vadd.f32 %v6565, %v6579
      %v6594 = vadd.f32 %v6566, %v6580
      %v6595 = vadd.f32 %v6567, %v6581
      %v6596 = vadd.f32 %v6568, %v6582
      %v6597 = vadd.f32 %v6569, %v6583
      %v6598 = vadd.f32 %v6570, %v6584
      %v6599 = vadd.f32 %v6571, %v6585
      %v6600 = vadd.f32 %v6572, %v6586
      %v6601 = vadd.f32 %v6573, %v6587
      %v6602 = vadd.f32 %v6574, %v6588
      %v6603 = vadd.f32 %v6575, %v6589
      %v6604 = vadd.f32 %v6576, %v6590
      %v6605 = vadd.f32 %v6577, %v6591
      %v6607 = vsel %vm282, %v6592, 0
      %v6610 = vsel %vm282, %v6593, 0
      %6612 = vmatpush.xpose.msra.mxu0 0.0
      %6613 = vmatpush.xpose.msra.mxu0 0.0
      %6614 = vmatpush.xpose.msra.mxu0 0.0
      %6615 = vmatpush.xpose.msra.mxu0 0.0
      %6616 = vmatpush.xpose.msra.mxu0 0.0
      %6617 = vmatpush.xpose.msra.mxu0 0.0
      %6618 = vmatpush.xpose.msra.mxu0 0.0
      %6619 = vmatpush.xpose.msra.mxu0 0.0
      %6620 = vmatpush.xpose.msra.mxu0 0.0
      %6621 = vmatpush.xpose.msra.mxu0 0.0
      %6622 = vmatpush.xpose.msra.mxu0 0.0
      %6623 = vmatpush.xpose.msra.mxu0 0.0
      %6624 = vmatpush.xpose.msra.mxu0 0.0
      %6625 = vmatpush.xpose.msra.mxu0 0.0
      %6626 = vmatpush.xpose.msra.mxu0 %v6610
      %6627 = vmatpush.xpose.msra.mxu0 %v6607
      %6628 = vmatmul.f32.gmra.mxu0 %v6607
      %v6629 = vpop.f32.mrf.mxu0
      %v6630 = vadd.f32 0.0, %v6629
      %6631 = vmatmul.f32.gmra.mxu0 %v6610
      %v6632 = vpop.f32.mrf.mxu0
      %v6633 = vadd.f32 0.0, %v6632
      %6634 = vdwg.mxu0
      %v6636 = vsel %vm282, %v6594, 0
      %v6639 = vsel %vm282, %v6595, 0
      %6641 = vmatpush.xpose.msra.mxu0 0.0
      %6642 = vmatpush.xpose.msra.mxu0 0.0
      %6643 = vmatpush.xpose.msra.mxu0 0.0
      %6644 = vmatpush.xpose.msra.mxu0 0.0
      %6645 = vmatpush.xpose.msra.mxu0 0.0
      %6646 = vmatpush.xpose.msra.mxu0 0.0
      %6647 = vmatpush.xpose.msra.mxu0 0.0
      %6648 = vmatpush.xpose.msra.mxu0 0.0
      %6649 = vmatpush.xpose.msra.mxu0 0.0
      %6650 = vmatpush.xpose.msra.mxu0 0.0
      %6651 = vmatpush.xpose.msra.mxu0 0.0
      %6652 = vmatpush.xpose.msra.mxu0 0.0
      %6653 = vmatpush.xpose.msra.mxu0 0.0
      %6654 = vmatpush.xpose.msra.mxu0 0.0
      %6655 = vmatpush.xpose.msra.mxu0 %v6639
      %6656 = vmatpush.xpose.msra.mxu0 %v6636
      %6657 = vmatmul.f32.gmra.mxu0 %v6636
      %v6658 = vpop.f32.mrf.mxu0
      %v6659 = vadd.f32 0.0, %v6658
      %6660 = vmatmul.f32.gmra.mxu0 %v6639
      %v6661 = vpop.f32.mrf.mxu0
      %v6662 = vadd.f32 0.0, %v6661
      %6663 = vdwg.mxu0
      %v6665 = vsel %vm282, %v6596, 0
      %v6668 = vsel %vm282, %v6597, 0
      %6670 = vmatpush.xpose.msra.mxu0 0.0
      %6671 = vmatpush.xpose.msra.mxu0 0.0
      %6672 = vmatpush.xpose.msra.mxu0 0.0
      %6673 = vmatpush.xpose.msra.mxu0 0.0
      %6674 = vmatpush.xpose.msra.mxu0 0.0
      %6675 = vmatpush.xpose.msra.mxu0 0.0
      %6676 = vmatpush.xpose.msra.mxu0 0.0
      %6677 = vmatpush.xpose.msra.mxu0 0.0
      %6678 = vmatpush.xpose.msra.mxu0 0.0
      %6679 = vmatpush.xpose.msra.mxu0 0.0
      %6680 = vmatpush.xpose.msra.mxu0 0.0
      %6681 = vmatpush.xpose.msra.mxu0 0.0
      %6682 = vmatpush.xpose.msra.mxu0 0.0
      %6683 = vmatpush.xpose.msra.mxu0 0.0
      %6684 = vmatpush.xpose.msra.mxu0 %v6668
      %6685 = vmatpush.xpose.msra.mxu0 %v6665
      %6686 = vmatmul.f32.gmra.mxu0 %v6665
      %v6687 = vpop.f32.mrf.mxu0
      %v6688 = vadd.f32 0.0, %v6687
      %6689 = vmatmul.f32.gmra.mxu0 %v6668
      %v6690 = vpop.f32.mrf.mxu0
      %v6691 = vadd.f32 0.0, %v6690
      %6692 = vdwg.mxu0
      %v6694 = vsel %vm282, %v6598, 0
      %v6697 = vsel %vm282, %v6599, 0
      %6699 = vmatpush.xpose.msra.mxu0 0.0
      %6700 = vmatpush.xpose.msra.mxu0 0.0
      %6701 = vmatpush.xpose.msra.mxu0 0.0
      %6702 = vmatpush.xpose.msra.mxu0 0.0
      %6703 = vmatpush.xpose.msra.mxu0 0.0
      %6704 = vmatpush.xpose.msra.mxu0 0.0
      %6705 = vmatpush.xpose.msra.mxu0 0.0
      %6706 = vmatpush.xpose.msra.mxu0 0.0
      %6707 = vmatpush.xpose.msra.mxu0 0.0
      %6708 = vmatpush.xpose.msra.mxu0 0.0
      %6709 = vmatpush.xpose.msra.mxu0 0.0
      %6710 = vmatpush.xpose.msra.mxu0 0.0
      %6711 = vmatpush.xpose.msra.mxu0 0.0
      %6712 = vmatpush.xpose.msra.mxu0 0.0
      %6713 = vmatpush.xpose.msra.mxu0 %v6697
      %6714 = vmatpush.xpose.msra.mxu0 %v6694
      %6715 = vmatmul.f32.gmra.mxu0 %v6694
      %v6716 = vpop.f32.mrf.mxu0
      %v6717 = vadd.f32 0.0, %v6716
      %6718 = vmatmul.f32.gmra.mxu0 %v6697
      %v6719 = vpop.f32.mrf.mxu0
      %v6720 = vadd.f32 0.0, %v6719
      %6721 = vdwg.mxu0
      %v6723 = vsel %vm282, %v6600, 0
      %v6726 = vsel %vm282, %v6601, 0
      %6728 = vmatpush.xpose.msra.mxu0 0.0
      %6729 = vmatpush.xpose.msra.mxu0 0.0
      %6730 = vmatpush.xpose.msra.mxu0 0.0
      %6731 = vmatpush.xpose.msra.mxu0 0.0
      %6732 = vmatpush.xpose.msra.mxu0 0.0
      %6733 = vmatpush.xpose.msra.mxu0 0.0
      %6734 = vmatpush.xpose.msra.mxu0 0.0
      %6735 = vmatpush.xpose.msra.mxu0 0.0
      %6736 = vmatpush.xpose.msra.mxu0 0.0
      %6737 = vmatpush.xpose.msra.mxu0 0.0
      %6738 = vmatpush.xpose.msra.mxu0 0.0
      %6739 = vmatpush.xpose.msra.mxu0 0.0
      %6740 = vmatpush.xpose.msra.mxu0 0.0
      %6741 = vmatpush.xpose.msra.mxu0 0.0
      %6742 = vmatpush.xpose.msra.mxu0 %v6726
      %6743 = vmatpush.xpose.msra.mxu0 %v6723
      %6744 = vmatmul.f32.gmra.mxu0 %v6723
      %v6745 = vpop.f32.mrf.mxu0
      %v6746 = vadd.f32 0.0, %v6745
      %6747 = vmatmul.f32.gmra.mxu0 %v6726
      %v6748 = vpop.f32.mrf.mxu0
      %v6749 = vadd.f32 0.0, %v6748
      %6750 = vdwg.mxu0
      %v6752 = vsel %vm282, %v6602, 0
      %v6755 = vsel %vm282, %v6603, 0
      %6757 = vmatpush.xpose.msra.mxu0 0.0
      %6758 = vmatpush.xpose.msra.mxu0 0.0
      %6759 = vmatpush.xpose.msra.mxu0 0.0
      %6760 = vmatpush.xpose.msra.mxu0 0.0
      %6761 = vmatpush.xpose.msra.mxu0 0.0
      %6762 = vmatpush.xpose.msra.mxu0 0.0
      %6763 = vmatpush.xpose.msra.mxu0 0.0
      %6764 = vmatpush.xpose.msra.mxu0 0.0
      %6765 = vmatpush.xpose.msra.mxu0 0.0
      %6766 = vmatpush.xpose.msra.mxu0 0.0
      %6767 = vmatpush.xpose.msra.mxu0 0.0
      %6768 = vmatpush.xpose.msra.mxu0 0.0
      %6769 = vmatpush.xpose.msra.mxu0 0.0
      %6770 = vmatpush.xpose.msra.mxu0 0.0
      %6771 = vmatpush.xpose.msra.mxu0 %v6755
      %6772 = vmatpush.xpose.msra.mxu0 %v6752
      %6773 = vmatmul.f32.gmra.mxu0 %v6752
      %v6774 = vpop.f32.mrf.mxu0
      %v6775 = vadd.f32 0.0, %v6774
      %6776 = vmatmul.f32.gmra.mxu0 %v6755
      %v6777 = vpop.f32.mrf.mxu0
      %v6778 = vadd.f32 0.0, %v6777
      %6779 = vdwg.mxu0
      %v6781 = vsel %vm282, %v6604, 0
      %v6784 = vsel %vm282, %v6605, 0
      %6786 = vmatpush.xpose.msra.mxu0 0.0
      %6787 = vmatpush.xpose.msra.mxu0 0.0
      %6788 = vmatpush.xpose.msra.mxu0 0.0
      %6789 = vmatpush.xpose.msra.mxu0 0.0
      %6790 = vmatpush.xpose.msra.mxu0 0.0
      %6791 = vmatpush.xpose.msra.mxu0 0.0
      %6792 = vmatpush.xpose.msra.mxu0 0.0
      %6793 = vmatpush.xpose.msra.mxu0 0.0
      %6794 = vmatpush.xpose.msra.mxu0 0.0
      %6795 = vmatpush.xpose.msra.mxu0 0.0
      %6796 = vmatpush.xpose.msra.mxu0 0.0
      %6797 = vmatpush.xpose.msra.mxu0 0.0
      %6798 = vmatpush.xpose.msra.mxu0 0.0
      %6799 = vmatpush.xpose.msra.mxu0 0.0
      %6800 = vmatpush.xpose.msra.mxu0 %v6784
      %6801 = vmatpush.xpose.msra.mxu0 %v6781
      %6802 = vmatmul.f32.gmra.mxu0 %v6781
      %v6803 = vpop.f32.mrf.mxu0
      %v6804 = vadd.f32 0.0, %v6803
      %6805 = vmatmul.f32.gmra.mxu0 %v6784
      %v6806 = vpop.f32.mrf.mxu0
      %v6807 = vadd.f32 0.0, %v6806
      %6808 = vdwg.mxu0
      %v6809 = vmul.f32 %v6630, 0.5
      %v6810 = vmul.f32 %v6633, 0.5
      %v6811 = vmul.f32 %v6659, 0.5
      %v6812 = vmul.f32 %v6662, 0.5
      %v6813 = vmul.f32 %v6688, 0.5
      %v6814 = vmul.f32 %v6691, 0.5
      %v6815 = vmul.f32 %v6717, 0.5
      %v6816 = vmul.f32 %v6720, 0.5
      %v6817 = vmul.f32 %v6746, 0.5
      %v6818 = vmul.f32 %v6749, 0.5
      %v6819 = vmul.f32 %v6775, 0.5
      %v6820 = vmul.f32 %v6778, 0.5
      %v6821 = vmul.f32 %v6804, 0.5
      %v6822 = vmul.f32 %v6807, 0.5
      %v6823 = vsel %vm500, %v6809, -inf
      %6824 = vmax.xlane.f32.xlu0 %v6823
      %v6825 = vpop.xlane.xlu0 %6824
      %v6826 = vsel %vm500, %v6810, -inf
      %6827 = vmax.xlane.f32.xlu0 %v6826
      %v6828 = vpop.xlane.xlu0 %6827
      %v6829 = vsel %vm500, %v6811, -inf
      %6830 = vmax.xlane.f32.xlu0 %v6829
      %v6831 = vpop.xlane.xlu0 %6830
      %v6832 = vsel %vm500, %v6812, -inf
      %6833 = vmax.xlane.f32.xlu0 %v6832
      %v6834 = vpop.xlane.xlu0 %6833
      %v6835 = vsel %vm500, %v6813, -inf
      %6836 = vmax.xlane.f32.xlu0 %v6835
      %v6837 = vpop.xlane.xlu0 %6836
      %v6838 = vsel %vm500, %v6814, -inf
      %6839 = vmax.xlane.f32.xlu0 %v6838
      %v6840 = vpop.xlane.xlu0 %6839
      %v6841 = vsel %vm500, %v6815, -inf
      %6842 = vmax.xlane.f32.xlu0 %v6841
      %v6843 = vpop.xlane.xlu0 %6842
      %v6844 = vsel %vm500, %v6816, -inf
      %6845 = vmax.xlane.f32.xlu0 %v6844
      %v6846 = vpop.xlane.xlu0 %6845
      %v6847 = vsel %vm500, %v6817, -inf
      %6848 = vmax.xlane.f32.xlu0 %v6847
      %v6849 = vpop.xlane.xlu0 %6848
      %v6850 = vsel %vm500, %v6818, -inf
      %6851 = vmax.xlane.f32.xlu0 %v6850
      %v6852 = vpop.xlane.xlu0 %6851
      %v6853 = vsel %vm500, %v6819, -inf
      %6854 = vmax.xlane.f32.xlu0 %v6853
      %v6855 = vpop.xlane.xlu0 %6854
      %v6856 = vsel %vm500, %v6820, -inf
      %6857 = vmax.xlane.f32.xlu0 %v6856
      %v6858 = vpop.xlane.xlu0 %6857
      %v6859 = vsel %vm500, %v6821, -inf
      %6860 = vmax.xlane.f32.xlu0 %v6859
      %v6861 = vpop.xlane.xlu0 %6860
      %v6862 = vsel %vm500, %v6822, -inf
      %6863 = vmax.xlane.f32.xlu0 %v6862
      %v6864 = vpop.xlane.xlu0 %6863
      %v6865 = vsub.f32 %v6809, %v6825
      %v6866 = vsub.f32 %v6810, %v6828
      %v6867 = vsub.f32 %v6811, %v6831
      %v6868 = vsub.f32 %v6812, %v6834
      %v6869 = vsub.f32 %v6813, %v6837
      %v6870 = vsub.f32 %v6814, %v6840
      %v6871 = vsub.f32 %v6815, %v6843
      %v6872 = vsub.f32 %v6816, %v6846
      %v6873 = vsub.f32 %v6817, %v6849
      %v6874 = vsub.f32 %v6818, %v6852
      %v6875 = vsub.f32 %v6819, %v6855
      %v6876 = vsub.f32 %v6820, %v6858
      %v6877 = vsub.f32 %v6821, %v6861
      %v6878 = vsub.f32 %v6822, %v6864
      %v6879 = vmul.f32 %v6865, 1.442695
      %v6880 = vpow.pop %v6879
      %v6881 = vmul.f32 %v6866, 1.442695
      %v6882 = vpow.pop %v6881
      %v6883 = vmul.f32 %v6867, 1.442695
      %v6884 = vpow.pop %v6883
      %v6885 = vmul.f32 %v6868, 1.442695
      %v6886 = vpow.pop %v6885
      %v6887 = vmul.f32 %v6869, 1.442695
      %v6888 = vpow.pop %v6887
      %v6889 = vmul.f32 %v6870, 1.442695
      %v6890 = vpow.pop %v6889
      %v6891 = vmul.f32 %v6871, 1.442695
      %v6892 = vpow.pop %v6891
      %v6893 = vmul.f32 %v6872, 1.442695
      %v6894 = vpow.pop %v6893
      %v6895 = vmul.f32 %v6873, 1.442695
      %v6896 = vpow.pop %v6895
      %v6897 = vmul.f32 %v6874, 1.442695
      %v6898 = vpow.pop %v6897
      %v6899 = vmul.f32 %v6875, 1.442695
      %v6900 = vpow.pop %v6899
      %v6901 = vmul.f32 %v6876, 1.442695
      %v6902 = vpow.pop %v6901
      %v6903 = vmul.f32 %v6877, 1.442695
      %v6904 = vpow.pop %v6903
      %v6905 = vmul.f32 %v6878, 1.442695
      %v6906 = vpow.pop %v6905
      %v6907 = vsel %vm500, %v6880, 0.0
      %6908 = vadd.xlane.f32.xlu0 %v6907
      %v6909 = vpop.xlane.xlu0 %6908
      %v6910 = vsel %vm500, %v6882, 0.0
      %6911 = vadd.xlane.f32.xlu0 %v6910
      %v6912 = vpop.xlane.xlu0 %6911
      %v6913 = vsel %vm500, %v6884, 0.0
      %6914 = vadd.xlane.f32.xlu0 %v6913
      %v6915 = vpop.xlane.xlu0 %6914
      %v6916 = vsel %vm500, %v6886, 0.0
      %6917 = vadd.xlane.f32.xlu0 %v6916
      %v6918 = vpop.xlane.xlu0 %6917
      %v6919 = vsel %vm500, %v6888, 0.0
      %6920 = vadd.xlane.f32.xlu0 %v6919
      %v6921 = vpop.xlane.xlu0 %6920
      %v6922 = vsel %vm500, %v6890, 0.0
      %6923 = vadd.xlane.f32.xlu0 %v6922
      %v6924 = vpop.xlane.xlu0 %6923
      %v6925 = vsel %vm500, %v6892, 0.0
      %6926 = vadd.xlane.f32.xlu0 %v6925
      %v6927 = vpop.xlane.xlu0 %6926
      %v6928 = vsel %vm500, %v6894, 0.0
      %6929 = vadd.xlane.f32.xlu0 %v6928
      %v6930 = vpop.xlane.xlu0 %6929
      %v6931 = vsel %vm500, %v6896, 0.0
      %6932 = vadd.xlane.f32.xlu0 %v6931
      %v6933 = vpop.xlane.xlu0 %6932
      %v6934 = vsel %vm500, %v6898, 0.0
      %6935 = vadd.xlane.f32.xlu0 %v6934
      %v6936 = vpop.xlane.xlu0 %6935
      %v6937 = vsel %vm500, %v6900, 0.0
      %6938 = vadd.xlane.f32.xlu0 %v6937
      %v6939 = vpop.xlane.xlu0 %6938
      %v6940 = vsel %vm500, %v6902, 0.0
      %6941 = vadd.xlane.f32.xlu0 %v6940
      %v6942 = vpop.xlane.xlu0 %6941
      %v6943 = vsel %vm500, %v6904, 0.0
      %6944 = vadd.xlane.f32.xlu0 %v6943
      %v6945 = vpop.xlane.xlu0 %6944
      %v6946 = vsel %vm500, %v6906, 0.0
      %6947 = vadd.xlane.f32.xlu0 %v6946
      %v6948 = vpop.xlane.xlu0 %6947
      %v6949 = vrcp.pop %v6909
      %v6950 = vmul.f32 %v6909, %v6949
      %v6951 = vsub.f32 1.0, %v6950
      %v6952 = vmul.f32 %v6949, %v6951
      %v6953 = vadd.f32 %v6949, %v6952
      %vm6954 = vweird.f32 %v6909
      %vm6955 = vweird.f32 %v6949
      %vm6956 = vmor %vm6954, %vm6955
      %v6957 = vsel %vm6956, %v6949, %v6953
      %v6958 = vand.u32 2147483647, %v6909
      %vm6959 = vcmp.eq.f32.partialorder %v6958, 8.507059e+37
      %v6960 = vand.u32 %v6909, 2147483648
      %v6961 = vor.u32 1.1754944e-38, %v6960
      %v6962 = vsel %vm6959, %v6961, %v6957
      %v6963 = vmul.f32 %v6880, %v6962
      %v6964 = vrcp.pop %v6912
      %v6965 = vmul.f32 %v6912, %v6964
      %v6966 = vsub.f32 1.0, %v6965
      %v6967 = vmul.f32 %v6964, %v6966
      %v6968 = vadd.f32 %v6964, %v6967
      %vm6969 = vweird.f32 %v6912
      %vm6970 = vweird.f32 %v6964
      %vm6971 = vmor %vm6969, %vm6970
      %v6972 = vsel %vm6971, %v6964, %v6968
      %v6973 = vand.u32 2147483647, %v6912
      %vm6974 = vcmp.eq.f32.partialorder %v6973, 8.507059e+37
      %v6975 = vand.u32 %v6912, 2147483648
      %v6976 = vor.u32 1.1754944e-38, %v6975
      %v6977 = vsel %vm6974, %v6976, %v6972
      %v6978 = vmul.f32 %v6882, %v6977
      %v6979 = vrcp.pop %v6915
      %v6980 = vmul.f32 %v6915, %v6979
      %v6981 = vsub.f32 1.0, %v6980
      %v6982 = vmul.f32 %v6979, %v6981
      %v6983 = vadd.f32 %v6979, %v6982
      %vm6984 = vweird.f32 %v6915
      %vm6985 = vweird.f32 %v6979
      %vm6986 = vmor %vm6984, %vm6985
      %v6987 = vsel %vm6986, %v6979, %v6983
      %v6988 = vand.u32 2147483647, %v6915
      %vm6989 = vcmp.eq.f32.partialorder %v6988, 8.507059e+37
      %v6990 = vand.u32 %v6915, 2147483648
      %v6991 = vor.u32 1.1754944e-38, %v6990
      %v6992 = vsel %vm6989, %v6991, %v6987
      %v6993 = vmul.f32 %v6884, %v6992
      %v6994 = vrcp.pop %v6918
      %v6995 = vmul.f32 %v6918, %v6994
      %v6996 = vsub.f32 1.0, %v6995
      %v6997 = vmul.f32 %v6994, %v6996
      %v6998 = vadd.f32 %v6994, %v6997
      %vm6999 = vweird.f32 %v6918
      %vm7000 = vweird.f32 %v6994
      %vm7001 = vmor %vm6999, %vm7000
      %v7002 = vsel %vm7001, %v6994, %v6998
      %v7003 = vand.u32 2147483647, %v6918
      %vm7004 = vcmp.eq.f32.partialorder %v7003, 8.507059e+37
      %v7005 = vand.u32 %v6918, 2147483648
      %v7006 = vor.u32 1.1754944e-38, %v7005
      %v7007 = vsel %vm7004, %v7006, %v7002
      %v7008 = vmul.f32 %v6886, %v7007
      %v7009 = vrcp.pop %v6921
      %v7010 = vmul.f32 %v6921, %v7009
      %v7011 = vsub.f32 1.0, %v7010
      %v7012 = vmul.f32 %v7009, %v7011
      %v7013 = vadd.f32 %v7009, %v7012
      %vm7014 = vweird.f32 %v6921
      %vm7015 = vweird.f32 %v7009
      %vm7016 = vmor %vm7014, %vm7015
      %v7017 = vsel %vm7016, %v7009, %v7013
      %v7018 = vand.u32 2147483647, %v6921
      %vm7019 = vcmp.eq.f32.partialorder %v7018, 8.507059e+37
      %v7020 = vand.u32 %v6921, 2147483648
      %v7021 = vor.u32 1.1754944e-38, %v7020
      %v7022 = vsel %vm7019, %v7021, %v7017
      %v7023 = vmul.f32 %v6888, %v7022
      %v7024 = vrcp.pop %v6924
      %v7025 = vmul.f32 %v6924, %v7024
      %v7026 = vsub.f32 1.0, %v7025
      %v7027 = vmul.f32 %v7024, %v7026
      %v7028 = vadd.f32 %v7024, %v7027
      %vm7029 = vweird.f32 %v6924
      %vm7030 = vweird.f32 %v7024
      %vm7031 = vmor %vm7029, %vm7030
      %v7032 = vsel %vm7031, %v7024, %v7028
      %v7033 = vand.u32 2147483647, %v6924
      %vm7034 = vcmp.eq.f32.partialorder %v7033, 8.507059e+37
      %v7035 = vand.u32 %v6924, 2147483648
      %v7036 = vor.u32 1.1754944e-38, %v7035
      %v7037 = vsel %vm7034, %v7036, %v7032
      %v7038 = vmul.f32 %v6890, %v7037
      %v7039 = vrcp.pop %v6927
      %v7040 = vmul.f32 %v6927, %v7039
      %v7041 = vsub.f32 1.0, %v7040
      %v7042 = vmul.f32 %v7039, %v7041
      %v7043 = vadd.f32 %v7039, %v7042
      %vm7044 = vweird.f32 %v6927
      %vm7045 = vweird.f32 %v7039
      %vm7046 = vmor %vm7044, %vm7045
      %v7047 = vsel %vm7046, %v7039, %v7043
      %v7048 = vand.u32 2147483647, %v6927
      %vm7049 = vcmp.eq.f32.partialorder %v7048, 8.507059e+37
      %v7050 = vand.u32 %v6927, 2147483648
      %v7051 = vor.u32 1.1754944e-38, %v7050
      %v7052 = vsel %vm7049, %v7051, %v7047
      %v7053 = vmul.f32 %v6892, %v7052
      %v7054 = vrcp.pop %v6930
      %v7055 = vmul.f32 %v6930, %v7054
      %v7056 = vsub.f32 1.0, %v7055
      %v7057 = vmul.f32 %v7054, %v7056
      %v7058 = vadd.f32 %v7054, %v7057
      %vm7059 = vweird.f32 %v6930
      %vm7060 = vweird.f32 %v7054
      %vm7061 = vmor %vm7059, %vm7060
      %v7062 = vsel %vm7061, %v7054, %v7058
      %v7063 = vand.u32 2147483647, %v6930
      %vm7064 = vcmp.eq.f32.partialorder %v7063, 8.507059e+37
      %v7065 = vand.u32 %v6930, 2147483648
      %v7066 = vor.u32 1.1754944e-38, %v7065
      %v7067 = vsel %vm7064, %v7066, %v7062
      %v7068 = vmul.f32 %v6894, %v7067
      %v7069 = vrcp.pop %v6933
      %v7070 = vmul.f32 %v6933, %v7069
      %v7071 = vsub.f32 1.0, %v7070
      %v7072 = vmul.f32 %v7069, %v7071
      %v7073 = vadd.f32 %v7069, %v7072
      %vm7074 = vweird.f32 %v6933
      %vm7075 = vweird.f32 %v7069
      %vm7076 = vmor %vm7074, %vm7075
      %v7077 = vsel %vm7076, %v7069, %v7073
      %v7078 = vand.u32 2147483647, %v6933
      %vm7079 = vcmp.eq.f32.partialorder %v7078, 8.507059e+37
      %v7080 = vand.u32 %v6933, 2147483648
      %v7081 = vor.u32 1.1754944e-38, %v7080
      %v7082 = vsel %vm7079, %v7081, %v7077
      %v7083 = vmul.f32 %v6896, %v7082
      %v7084 = vrcp.pop %v6936
      %v7085 = vmul.f32 %v6936, %v7084
      %v7086 = vsub.f32 1.0, %v7085
      %v7087 = vmul.f32 %v7084, %v7086
      %v7088 = vadd.f32 %v7084, %v7087
      %vm7089 = vweird.f32 %v6936
      %vm7090 = vweird.f32 %v7084
      %vm7091 = vmor %vm7089, %vm7090
      %v7092 = vsel %vm7091, %v7084, %v7088
      %v7093 = vand.u32 2147483647, %v6936
      %vm7094 = vcmp.eq.f32.partialorder %v7093, 8.507059e+37
      %v7095 = vand.u32 %v6936, 2147483648
      %v7096 = vor.u32 1.1754944e-38, %v7095
      %v7097 = vsel %vm7094, %v7096, %v7092
      %v7098 = vmul.f32 %v6898, %v7097
      %v7099 = vrcp.pop %v6939
      %v7100 = vmul.f32 %v6939, %v7099
      %v7101 = vsub.f32 1.0, %v7100
      %v7102 = vmul.f32 %v7099, %v7101
      %v7103 = vadd.f32 %v7099, %v7102
      %vm7104 = vweird.f32 %v6939
      %vm7105 = vweird.f32 %v7099
      %vm7106 = vmor %vm7104, %vm7105
      %v7107 = vsel %vm7106, %v7099, %v7103
      %v7108 = vand.u32 2147483647, %v6939
      %vm7109 = vcmp.eq.f32.partialorder %v7108, 8.507059e+37
      %v7110 = vand.u32 %v6939, 2147483648
      %v7111 = vor.u32 1.1754944e-38, %v7110
      %v7112 = vsel %vm7109, %v7111, %v7107
      %v7113 = vmul.f32 %v6900, %v7112
      %v7114 = vrcp.pop %v6942
      %v7115 = vmul.f32 %v6942, %v7114
      %v7116 = vsub.f32 1.0, %v7115
      %v7117 = vmul.f32 %v7114, %v7116
      %v7118 = vadd.f32 %v7114, %v7117
      %vm7119 = vweird.f32 %v6942
      %vm7120 = vweird.f32 %v7114
      %vm7121 = vmor %vm7119, %vm7120
      %v7122 = vsel %vm7121, %v7114, %v7118
      %v7123 = vand.u32 2147483647, %v6942
      %vm7124 = vcmp.eq.f32.partialorder %v7123, 8.507059e+37
      %v7125 = vand.u32 %v6942, 2147483648
      %v7126 = vor.u32 1.1754944e-38, %v7125
      %v7127 = vsel %vm7124, %v7126, %v7122
      %v7128 = vmul.f32 %v6902, %v7127
      %v7129 = vrcp.pop %v6945
      %v7130 = vmul.f32 %v6945, %v7129
      %v7131 = vsub.f32 1.0, %v7130
      %v7132 = vmul.f32 %v7129, %v7131
      %v7133 = vadd.f32 %v7129, %v7132
      %vm7134 = vweird.f32 %v6945
      %vm7135 = vweird.f32 %v7129
      %vm7136 = vmor %vm7134, %vm7135
      %v7137 = vsel %vm7136, %v7129, %v7133
      %v7138 = vand.u32 2147483647, %v6945
      %vm7139 = vcmp.eq.f32.partialorder %v7138, 8.507059e+37
      %v7140 = vand.u32 %v6945, 2147483648
      %v7141 = vor.u32 1.1754944e-38, %v7140
      %v7142 = vsel %vm7139, %v7141, %v7137
      %v7143 = vmul.f32 %v6904, %v7142
      %v7144 = vrcp.pop %v6948
      %v7145 = vmul.f32 %v6948, %v7144
      %v7146 = vsub.f32 1.0, %v7145
      %v7147 = vmul.f32 %v7144, %v7146
      %v7148 = vadd.f32 %v7144, %v7147
      %vm7149 = vweird.f32 %v6948
      %vm7150 = vweird.f32 %v7144
      %vm7151 = vmor %vm7149, %vm7150
      %v7152 = vsel %vm7151, %v7144, %v7148
      %v7153 = vand.u32 2147483647, %v6948
      %vm7154 = vcmp.eq.f32.partialorder %v7153, 8.507059e+37
      %v7155 = vand.u32 %v6948, 2147483648
      %v7156 = vor.u32 1.1754944e-38, %v7155
      %v7157 = vsel %vm7154, %v7156, %v7152
      %v7158 = vmul.f32 %v6906, %v7157
      %v7159 = vmul.f32 %v6963, 0.5
      %v7160 = vmul.f32 %v6978, 0.5
      %v7161 = vmul.f32 %v6993, 0.5
      %v7162 = vmul.f32 %v7008, 0.5
      %v7163 = vmul.f32 %v7023, 0.5
      %v7164 = vmul.f32 %v7038, 0.5
      %v7165 = vmul.f32 %v7053, 0.5
      %v7166 = vmul.f32 %v7068, 0.5
      %v7167 = vmul.f32 %v7083, 0.5
      %v7168 = vmul.f32 %v7098, 0.5
      %v7169 = vmul.f32 %v7113, 0.5
      %v7170 = vmul.f32 %v7128, 0.5
      %v7171 = vmul.f32 %v7143, 0.5
      %v7172 = vmul.f32 %v7158, 0.5
      %v7173 = vmul.f32 %v263, %v7159
      %v7174 = vmul.f32 %v264, %v7160
      %v7175 = vmul.f32 %v265, %v7161
      %v7176 = vmul.f32 %v266, %v7162
      %v7177 = vmul.f32 %v267, %v7163
      %v7178 = vmul.f32 %v268, %v7164
      %v7179 = vmul.f32 %v269, %v7165
      %v7180 = vmul.f32 %v270, %v7166
      %v7181 = vmul.f32 %v271, %v7167
      %v7182 = vmul.f32 %v272, %v7168
      %v7183 = vmul.f32 %v273, %v7169
      %v7184 = vmul.f32 %v274, %v7170
      %v7185 = vmul.f32 %v275, %v7171
      %v7186 = vmul.f32 %v276, %v7172
      %7187 = vxpose.xlu0.b32.start [1/16] %v7173, 128
      %7188 = vxpose.xlu0.b32.cont [2/16] %v7174, 128
      %7189 = vxpose.xlu0.b32.cont [3/16] 0.0, 128
      %7190 = vxpose.xlu0.b32.cont [4/16] 0.0, 128
      %7191 = vxpose.xlu0.b32.cont [5/16] 0.0, 128
      %7192 = vxpose.xlu0.b32.cont [6/16] 0.0, 128
      %7193 = vxpose.xlu0.b32.cont [7/16] 0.0, 128
      %7194 = vxpose.xlu0.b32.cont [8/16] 0.0, 128
      %7195 = vxpose.xlu0.b32.cont [9/16] 0.0, 128
      %7196 = vxpose.xlu0.b32.cont [10/16] 0.0, 128
      %7197 = vxpose.xlu0.b32.cont [11/16] 0.0, 128
      %7198 = vxpose.xlu0.b32.cont [12/16] 0.0, 128
      %7199 = vxpose.xlu0.b32.cont [13/16] 0.0, 128
      %7200 = vxpose.xlu0.b32.cont [14/16] 0.0, 128
      %7201 = vxpose.xlu0.b32.cont [15/16] 0.0, 128
      %7202 = vxpose.xlu0.b32.end [16/16] 0.0, 128
      %v7203 = vpop.trf.xlu0
      %v7204 = vpop.trf.xlu0
      %v7205 = vpop.trf.xlu0
      %v7206 = vpop.trf.xlu0
      %v7207 = vpop.trf.xlu0
      %v7208 = vpop.trf.xlu0
      %v7209 = vpop.trf.xlu0
      %v7210 = vpop.trf.xlu0
      %v7211 = vpop.trf.xlu0
      %v7212 = vpop.trf.xlu0
      %v7213 = vpop.trf.xlu0
      %v7214 = vpop.trf.xlu0
      %v7215 = vpop.trf.xlu0
      %v7216 = vpop.trf.xlu0
      %v7217 = vpop.trf.xlu0
      %v7218 = vpop.trf.xlu0
      %7219 = vxpose.xlu0.b32.start [1/16] %v7175, 128
      %7220 = vxpose.xlu0.b32.cont [2/16] %v7176, 128
      %7221 = vxpose.xlu0.b32.cont [3/16] 0.0, 128
      %7222 = vxpose.xlu0.b32.cont [4/16] 0.0, 128
      %7223 = vxpose.xlu0.b32.cont [5/16] 0.0, 128
      %7224 = vxpose.xlu0.b32.cont [6/16] 0.0, 128
      %7225 = vxpose.xlu0.b32.cont [7/16] 0.0, 128
      %7226 = vxpose.xlu0.b32.cont [8/16] 0.0, 128
      %7227 = vxpose.xlu0.b32.cont [9/16] 0.0, 128
      %7228 = vxpose.xlu0.b32.cont [10/16] 0.0, 128
      %7229 = vxpose.xlu0.b32.cont [11/16] 0.0, 128
      %7230 = vxpose.xlu0.b32.cont [12/16] 0.0, 128
      %7231 = vxpose.xlu0.b32.cont [13/16] 0.0, 128
      %7232 = vxpose.xlu0.b32.cont [14/16] 0.0, 128
      %7233 = vxpose.xlu0.b32.cont [15/16] 0.0, 128
      %7234 = vxpose.xlu0.b32.end [16/16] 0.0, 128
      %v7235 = vpop.trf.xlu0
      %v7236 = vpop.trf.xlu0
      %v7237 = vpop.trf.xlu0
      %v7238 = vpop.trf.xlu0
      %v7239 = vpop.trf.xlu0
      %v7240 = vpop.trf.xlu0
      %v7241 = vpop.trf.xlu0
      %v7242 = vpop.trf.xlu0
      %v7243 = vpop.trf.xlu0
      %v7244 = vpop.trf.xlu0
      %v7245 = vpop.trf.xlu0
      %v7246 = vpop.trf.xlu0
      %v7247 = vpop.trf.xlu0
      %v7248 = vpop.trf.xlu0
      %v7249 = vpop.trf.xlu0
      %v7250 = vpop.trf.xlu0
      %7251 = vxpose.xlu0.b32.start [1/16] %v7177, 128
      %7252 = vxpose.xlu0.b32.cont [2/16] %v7178, 128
      %7253 = vxpose.xlu0.b32.cont [3/16] 0.0, 128
      %7254 = vxpose.xlu0.b32.cont [4/16] 0.0, 128
      %7255 = vxpose.xlu0.b32.cont [5/16] 0.0, 128
      %7256 = vxpose.xlu0.b32.cont [6/16] 0.0, 128
      %7257 = vxpose.xlu0.b32.cont [7/16] 0.0, 128
      %7258 = vxpose.xlu0.b32.cont [8/16] 0.0, 128
      %7259 = vxpose.xlu0.b32.cont [9/16] 0.0, 128
      %7260 = vxpose.xlu0.b32.cont [10/16] 0.0, 128
      %7261 = vxpose.xlu0.b32.cont [11/16] 0.0, 128
      %7262 = vxpose.xlu0.b32.cont [12/16] 0.0, 128
      %7263 = vxpose.xlu0.b32.cont [13/16] 0.0, 128
      %7264 = vxpose.xlu0.b32.cont [14/16] 0.0, 128
      %7265 = vxpose.xlu0.b32.cont [15/16] 0.0, 128
      %7266 = vxpose.xlu0.b32.end [16/16] 0.0, 128
      %v7267 = vpop.trf.xlu0
      %v7268 = vpop.trf.xlu0
      %v7269 = vpop.trf.xlu0
      %v7270 = vpop.trf.xlu0
      %v7271 = vpop.trf.xlu0
      %v7272 = vpop.trf.xlu0
      %v7273 = vpop.trf.xlu0
      %v7274 = vpop.trf.xlu0
      %v7275 = vpop.trf.xlu0
      %v7276 = vpop.trf.xlu0
      %v7277 = vpop.trf.xlu0
      %v7278 = vpop.trf.xlu0
      %v7279 = vpop.trf.xlu0
      %v7280 = vpop.trf.xlu0
      %v7281 = vpop.trf.xlu0
      %v7282 = vpop.trf.xlu0
      %7283 = vxpose.xlu0.b32.start [1/16] %v7179, 128
      %7284 = vxpose.xlu0.b32.cont [2/16] %v7180, 128
      %7285 = vxpose.xlu0.b32.cont [3/16] 0.0, 128
      %7286 = vxpose.xlu0.b32.cont [4/16] 0.0, 128
      %7287 = vxpose.xlu0.b32.cont [5/16] 0.0, 128
      %7288 = vxpose.xlu0.b32.cont [6/16] 0.0, 128
      %7289 = vxpose.xlu0.b32.cont [7/16] 0.0, 128
      %7290 = vxpose.xlu0.b32.cont [8/16] 0.0, 128
      %7291 = vxpose.xlu0.b32.cont [9/16] 0.0, 128
      %7292 = vxpose.xlu0.b32.cont [10/16] 0.0, 128
      %7293 = vxpose.xlu0.b32.cont [11/16] 0.0, 128
      %7294 = vxpose.xlu0.b32.cont [12/16] 0.0, 128
      %7295 = vxpose.xlu0.b32.cont [13/16] 0.0, 128
      %7296 = vxpose.xlu0.b32.cont [14/16] 0.0, 128
      %7297 = vxpose.xlu0.b32.cont [15/16] 0.0, 128
      %7298 = vxpose.xlu0.b32.end [16/16] 0.0, 128
      %v7299 = vpop.trf.xlu0
      %v7300 = vpop.trf.xlu0
      %v7301 = vpop.trf.xlu0
      %v7302 = vpop.trf.xlu0
      %v7303 = vpop.trf.xlu0
      %v7304 = vpop.trf.xlu0
      %v7305 = vpop.trf.xlu0
      %v7306 = vpop.trf.xlu0
      %v7307 = vpop.trf.xlu0
      %v7308 = vpop.trf.xlu0
      %v7309 = vpop.trf.xlu0
      %v7310 = vpop.trf.xlu0
      %v7311 = vpop.trf.xlu0
      %v7312 = vpop.trf.xlu0
      %v7313 = vpop.trf.xlu0
      %v7314 = vpop.trf.xlu0
      %7315 = vxpose.xlu0.b32.start [1/16] %v7181, 128
      %7316 = vxpose.xlu0.b32.cont [2/16] %v7182, 128
      %7317 = vxpose.xlu0.b32.cont [3/16] 0.0, 128
      %7318 = vxpose.xlu0.b32.cont [4/16] 0.0, 128
      %7319 = vxpose.xlu0.b32.cont [5/16] 0.0, 128
      %7320 = vxpose.xlu0.b32.cont [6/16] 0.0, 128
      %7321 = vxpose.xlu0.b32.cont [7/16] 0.0, 128
      %7322 = vxpose.xlu0.b32.cont [8/16] 0.0, 128
      %7323 = vxpose.xlu0.b32.cont [9/16] 0.0, 128
      %7324 = vxpose.xlu0.b32.cont [10/16] 0.0, 128
      %7325 = vxpose.xlu0.b32.cont [11/16] 0.0, 128
      %7326 = vxpose.xlu0.b32.cont [12/16] 0.0, 128
      %7327 = vxpose.xlu0.b32.cont [13/16] 0.0, 128
      %7328 = vxpose.xlu0.b32.cont [14/16] 0.0, 128
      %7329 = vxpose.xlu0.b32.cont [15/16] 0.0, 128
      %7330 = vxpose.xlu0.b32.end [16/16] 0.0, 128
      %v7331 = vpop.trf.xlu0
      %v7332 = vpop.trf.xlu0
      %v7333 = vpop.trf.xlu0
      %v7334 = vpop.trf.xlu0
      %v7335 = vpop.trf.xlu0
      %v7336 = vpop.trf.xlu0
      %v7337 = vpop.trf.xlu0
      %v7338 = vpop.trf.xlu0
      %v7339 = vpop.trf.xlu0
      %v7340 = vpop.trf.xlu0
      %v7341 = vpop.trf.xlu0
      %v7342 = vpop.trf.xlu0
      %v7343 = vpop.trf.xlu0
      %v7344 = vpop.trf.xlu0
      %v7345 = vpop.trf.xlu0
      %v7346 = vpop.trf.xlu0
      %7347 = vxpose.xlu0.b32.start [1/16] %v7183, 128
      %7348 = vxpose.xlu0.b32.cont [2/16] %v7184, 128
      %7349 = vxpose.xlu0.b32.cont [3/16] 0.0, 128
      %7350 = vxpose.xlu0.b32.cont [4/16] 0.0, 128
      %7351 = vxpose.xlu0.b32.cont [5/16] 0.0, 128
      %7352 = vxpose.xlu0.b32.cont [6/16] 0.0, 128
      %7353 = vxpose.xlu0.b32.cont [7/16] 0.0, 128
      %7354 = vxpose.xlu0.b32.cont [8/16] 0.0, 128
      %7355 = vxpose.xlu0.b32.cont [9/16] 0.0, 128
      %7356 = vxpose.xlu0.b32.cont [10/16] 0.0, 128
      %7357 = vxpose.xlu0.b32.cont [11/16] 0.0, 128
      %7358 = vxpose.xlu0.b32.cont [12/16] 0.0, 128
      %7359 = vxpose.xlu0.b32.cont [13/16] 0.0, 128
      %7360 = vxpose.xlu0.b32.cont [14/16] 0.0, 128
      %7361 = vxpose.xlu0.b32.cont [15/16] 0.0, 128
      %7362 = vxpose.xlu0.b32.end [16/16] 0.0, 128
      %v7363 = vpop.trf.xlu0
      %v7364 = vpop.trf.xlu0
      %v7365 = vpop.trf.xlu0
      %v7366 = vpop.trf.xlu0
      %v7367 = vpop.trf.xlu0
      %v7368 = vpop.trf.xlu0
      %v7369 = vpop.trf.xlu0
      %v7370 = vpop.trf.xlu0
      %v7371 = vpop.trf.xlu0
      %v7372 = vpop.trf.xlu0
      %v7373 = vpop.trf.xlu0
      %v7374 = vpop.trf.xlu0
      %v7375 = vpop.trf.xlu0
      %v7376 = vpop.trf.xlu0
      %v7377 = vpop.trf.xlu0
      %v7378 = vpop.trf.xlu0
      %7379 = vxpose.xlu0.b32.start [1/16] %v7185, 128
      %7380 = vxpose.xlu0.b32.cont [2/16] %v7186, 128
      %7381 = vxpose.xlu0.b32.cont [3/16] 0.0, 128
      %7382 = vxpose.xlu0.b32.cont [4/16] 0.0, 128
      %7383 = vxpose.xlu0.b32.cont [5/16] 0.0, 128
      %7384 = vxpose.xlu0.b32.cont [6/16] 0.0, 128
      %7385 = vxpose.xlu0.b32.cont [7/16] 0.0, 128
      %7386 = vxpose.xlu0.b32.cont [8/16] 0.0, 128
      %7387 = vxpose.xlu0.b32.cont [9/16] 0.0, 128
      %7388 = vxpose.xlu0.b32.cont [10/16] 0.0, 128
      %7389 = vxpose.xlu0.b32.cont [11/16] 0.0, 128
      %7390 = vxpose.xlu0.b32.cont [12/16] 0.0, 128
      %7391 = vxpose.xlu0.b32.cont [13/16] 0.0, 128
      %7392 = vxpose.xlu0.b32.cont [14/16] 0.0, 128
      %7393 = vxpose.xlu0.b32.cont [15/16] 0.0, 128
      %7394 = vxpose.xlu0.b32.end [16/16] 0.0, 128
      %v7395 = vpop.trf.xlu0
      %v7396 = vpop.trf.xlu0
      %v7397 = vpop.trf.xlu0
      %v7398 = vpop.trf.xlu0
      %v7399 = vpop.trf.xlu0
      %v7400 = vpop.trf.xlu0
      %v7401 = vpop.trf.xlu0
      %v7402 = vpop.trf.xlu0
      %v7403 = vpop.trf.xlu0
      %v7404 = vpop.trf.xlu0
      %v7405 = vpop.trf.xlu0
      %v7406 = vpop.trf.xlu0
      %v7407 = vpop.trf.xlu0
      %v7408 = vpop.trf.xlu0
      %v7409 = vpop.trf.xlu0
      %v7410 = vpop.trf.xlu0
      %v7412 = vsel %vm500, %v7203, 0
      %v7415 = vsel %vm500, %v7204, 0
      %7417 = vmatpush.msra.mxu0 0.0
      %7418 = vmatpush.msra.mxu0 0.0
      %7419 = vmatpush.msra.mxu0 0.0
      %7420 = vmatpush.msra.mxu0 0.0
      %7421 = vmatpush.msra.mxu0 0.0
      %7422 = vmatpush.msra.mxu0 0.0
      %7423 = vmatpush.msra.mxu0 0.0
      %7424 = vmatpush.msra.mxu0 0.0
      %7425 = vmatpush.msra.mxu0 0.0
      %7426 = vmatpush.msra.mxu0 0.0
      %7427 = vmatpush.msra.mxu0 0.0
      %7428 = vmatpush.msra.mxu0 0.0
      %7429 = vmatpush.msra.mxu0 0.0
      %7430 = vmatpush.msra.mxu0 0.0
      %7431 = vmatpush.msra.mxu0 %v246
      %7432 = vmatpush.msra.mxu0 %v245
      %7433 = vmatmul.f32.gmra.mxu0 %v7412
      %v7434 = vpop.f32.mrf.mxu0
      %v7435 = vadd.f32 0.0, %v7434
      %7436 = vmatmul.f32.gmra.mxu0 %v7415
      %v7437 = vpop.f32.mrf.mxu0
      %v7438 = vadd.f32 0.0, %v7437
      %7439 = vdwg.mxu0
      %v7441 = vsel %vm500, %v7235, 0
      %v7444 = vsel %vm500, %v7236, 0
      %7446 = vmatpush.msra.mxu0 0.0
      %7447 = vmatpush.msra.mxu0 0.0
      %7448 = vmatpush.msra.mxu0 0.0
      %7449 = vmatpush.msra.mxu0 0.0
      %7450 = vmatpush.msra.mxu0 0.0
      %7451 = vmatpush.msra.mxu0 0.0
      %7452 = vmatpush.msra.mxu0 0.0
      %7453 = vmatpush.msra.mxu0 0.0
      %7454 = vmatpush.msra.mxu0 0.0
      %7455 = vmatpush.msra.mxu0 0.0
      %7456 = vmatpush.msra.mxu0 0.0
      %7457 = vmatpush.msra.mxu0 0.0
      %7458 = vmatpush.msra.mxu0 0.0
      %7459 = vmatpush.msra.mxu0 0.0
      %7460 = vmatpush.msra.mxu0 %v6593
      %7461 = vmatpush.msra.mxu0 %v6592
      %7462 = vmatmul.f32.gmra.mxu0 %v7441
      %v7463 = vpop.f32.mrf.mxu0
      %v7464 = vadd.f32 0.0, %v7463
      %7465 = vmatmul.f32.gmra.mxu0 %v7444
      %v7466 = vpop.f32.mrf.mxu0
      %v7467 = vadd.f32 0.0, %v7466
      %7468 = vdwg.mxu0
      %v7470 = vsel %vm500, %v7267, 0
      %v7473 = vsel %vm500, %v7268, 0
      %7475 = vmatpush.msra.mxu0 0.0
      %7476 = vmatpush.msra.mxu0 0.0
      %7477 = vmatpush.msra.mxu0 0.0
      %7478 = vmatpush.msra.mxu0 0.0
      %7479 = vmatpush.msra.mxu0 0.0
      %7480 = vmatpush.msra.mxu0 0.0
      %7481 = vmatpush.msra.mxu0 0.0
      %7482 = vmatpush.msra.mxu0 0.0
      %7483 = vmatpush.msra.mxu0 0.0
      %7484 = vmatpush.msra.mxu0 0.0
      %7485 = vmatpush.msra.mxu0 0.0
      %7486 = vmatpush.msra.mxu0 0.0
      %7487 = vmatpush.msra.mxu0 0.0
      %7488 = vmatpush.msra.mxu0 0.0
      %7489 = vmatpush.msra.mxu0 %v6595
      %7490 = vmatpush.msra.mxu0 %v6594
      %7491 = vmatmul.f32.gmra.mxu0 %v7470
      %v7492 = vpop.f32.mrf.mxu0
      %v7493 = vadd.f32 0.0, %v7492
      %7494 = vmatmul.f32.gmra.mxu0 %v7473
      %v7495 = vpop.f32.mrf.mxu0
      %v7496 = vadd.f32 0.0, %v7495
      %7497 = vdwg.mxu0
      %v7499 = vsel %vm500, %v7299, 0
      %v7502 = vsel %vm500, %v7300, 0
      %7504 = vmatpush.msra.mxu0 0.0
      %7505 = vmatpush.msra.mxu0 0.0
      %7506 = vmatpush.msra.mxu0 0.0
      %7507 = vmatpush.msra.mxu0 0.0
      %7508 = vmatpush.msra.mxu0 0.0
      %7509 = vmatpush.msra.mxu0 0.0
      %7510 = vmatpush.msra.mxu0 0.0
      %7511 = vmatpush.msra.mxu0 0.0
      %7512 = vmatpush.msra.mxu0 0.0
      %7513 = vmatpush.msra.mxu0 0.0
      %7514 = vmatpush.msra.mxu0 0.0
      %7515 = vmatpush.msra.mxu0 0.0
      %7516 = vmatpush.msra.mxu0 0.0
      %7517 = vmatpush.msra.mxu0 0.0
      %7518 = vmatpush.msra.mxu0 %v6597
      %7519 = vmatpush.msra.mxu0 %v6596
      %7520 = vmatmul.f32.gmra.mxu0 %v7499
      %v7521 = vpop.f32.mrf.mxu0
      %v7522 = vadd.f32 0.0, %v7521
      %7523 = vmatmul.f32.gmra.mxu0 %v7502
      %v7524 = vpop.f32.mrf.mxu0
      %v7525 = vadd.f32 0.0, %v7524
      %7526 = vdwg.mxu0
      %v7528 = vsel %vm500, %v7331, 0
      %v7531 = vsel %vm500, %v7332, 0
      %7533 = vmatpush.msra.mxu0 0.0
      %7534 = vmatpush.msra.mxu0 0.0
      %7535 = vmatpush.msra.mxu0 0.0
      %7536 = vmatpush.msra.mxu0 0.0
      %7537 = vmatpush.msra.mxu0 0.0
      %7538 = vmatpush.msra.mxu0 0.0
      %7539 = vmatpush.msra.mxu0 0.0
      %7540 = vmatpush.msra.mxu0 0.0
      %7541 = vmatpush.msra.mxu0 0.0
      %7542 = vmatpush.msra.mxu0 0.0
      %7543 = vmatpush.msra.mxu0 0.0
      %7544 = vmatpush.msra.mxu0 0.0
      %7545 = vmatpush.msra.mxu0 0.0
      %7546 = vmatpush.msra.mxu0 0.0
      %7547 = vmatpush.msra.mxu0 %v6599
      %7548 = vmatpush.msra.mxu0 %v6598
      %7549 = vmatmul.f32.gmra.mxu0 %v7528
      %v7550 = vpop.f32.mrf.mxu0
      %v7551 = vadd.f32 0.0, %v7550
      %7552 = vmatmul.f32.gmra.mxu0 %v7531
      %v7553 = vpop.f32.mrf.mxu0
      %v7554 = vadd.f32 0.0, %v7553
      %7555 = vdwg.mxu0
      %v7557 = vsel %vm500, %v7363, 0
      %v7560 = vsel %vm500, %v7364, 0
      %7562 = vmatpush.msra.mxu0 0.0
      %7563 = vmatpush.msra.mxu0 0.0
      %7564 = vmatpush.msra.mxu0 0.0
      %7565 = vmatpush.msra.mxu0 0.0
      %7566 = vmatpush.msra.mxu0 0.0
      %7567 = vmatpush.msra.mxu0 0.0
      %7568 = vmatpush.msra.mxu0 0.0
      %7569 = vmatpush.msra.mxu0 0.0
      %7570 = vmatpush.msra.mxu0 0.0
      %7571 = vmatpush.msra.mxu0 0.0
      %7572 = vmatpush.msra.mxu0 0.0
      %7573 = vmatpush.msra.mxu0 0.0
      %7574 = vmatpush.msra.mxu0 0.0
      %7575 = vmatpush.msra.mxu0 0.0
      %7576 = vmatpush.msra.mxu0 %v6601
      %7577 = vmatpush.msra.mxu0 %v6600
      %7578 = vmatmul.f32.gmra.mxu0 %v7557
      %v7579 = vpop.f32.mrf.mxu0
      %v7580 = vadd.f32 0.0, %v7579
      %7581 = vmatmul.f32.gmra.mxu0 %v7560
      %v7582 = vpop.f32.mrf.mxu0
      %v7583 = vadd.f32 0.0, %v7582
      %7584 = vdwg.mxu0
      %v7586 = vsel %vm500, %v7395, 0
      %v7589 = vsel %vm500, %v7396, 0
      %7591 = vmatpush.msra.mxu0 0.0
      %7592 = vmatpush.msra.mxu0 0.0
      %7593 = vmatpush.msra.mxu0 0.0
      %7594 = vmatpush.msra.mxu0 0.0
      %7595 = vmatpush.msra.mxu0 0.0
      %7596 = vmatpush.msra.mxu0 0.0
      %7597 = vmatpush.msra.mxu0 0.0
      %7598 = vmatpush.msra.mxu0 0.0
      %7599 = vmatpush.msra.mxu0 0.0
      %7600 = vmatpush.msra.mxu0 0.0
      %7601 = vmatpush.msra.mxu0 0.0
      %7602 = vmatpush.msra.mxu0 0.0
      %7603 = vmatpush.msra.mxu0 0.0
      %7604 = vmatpush.msra.mxu0 0.0
      %7605 = vmatpush.msra.mxu0 %v6603
      %7606 = vmatpush.msra.mxu0 %v6602
      %7607 = vmatmul.f32.gmra.mxu0 %v7586
      %v7608 = vpop.f32.mrf.mxu0
      %v7609 = vadd.f32 0.0, %v7608
      %7610 = vmatmul.f32.gmra.mxu0 %v7589
      %v7611 = vpop.f32.mrf.mxu0
      %v7612 = vadd.f32 0.0, %v7611
      %7613 = vdwg.mxu0
      %v7614 = vmul.f32 %v1295, %v6592
      %v7615 = vmul.f32 %v1300, %v6593
      %v7616 = vmul.f32 %v1295, %v6594
      %v7617 = vmul.f32 %v1300, %v6595
      %v7618 = vmul.f32 %v1295, %v6596
      %v7619 = vmul.f32 %v1300, %v6597
      %v7620 = vmul.f32 %v1295, %v6598
      %v7621 = vmul.f32 %v1300, %v6599
      %v7622 = vmul.f32 %v1295, %v6600
      %v7623 = vmul.f32 %v1300, %v6601
      %v7624 = vmul.f32 %v1295, %v6602
      %v7625 = vmul.f32 %v1300, %v6603
      %v7626 = vmul.f32 %v1295, %v6604
      %v7627 = vmul.f32 %v1300, %v6605
      %v7628 = vmul.f32 %v1321, %v7435
      %v7629 = vmul.f32 %v1326, %v7438
      %v7630 = vmul.f32 %v1321, %v7464
      %v7631 = vmul.f32 %v1326, %v7467
      %v7632 = vmul.f32 %v1321, %v7493
      %v7633 = vmul.f32 %v1326, %v7496
      %v7634 = vmul.f32 %v1321, %v7522
      %v7635 = vmul.f32 %v1326, %v7525
      %v7636 = vmul.f32 %v1321, %v7551
      %v7637 = vmul.f32 %v1326, %v7554
      %v7638 = vmul.f32 %v1321, %v7580
      %v7639 = vmul.f32 %v1326, %v7583
      %v7640 = vmul.f32 %v1321, %v7609
      %v7641 = vmul.f32 %v1326, %v7612
      %v7642 = vadd.f32 %v7614, %v7628
      %v7643 = vadd.f32 %v7615, %v7629
      %v7644 = vadd.f32 %v7616, %v7630
      %v7645 = vadd.f32 %v7617, %v7631
      %v7646 = vadd.f32 %v7618, %v7632
      %v7647 = vadd.f32 %v7619, %v7633
      %v7648 = vadd.f32 %v7620, %v7634
      %v7649 = vadd.f32 %v7621, %v7635
      %v7650 = vadd.f32 %v7622, %v7636
      %v7651 = vadd.f32 %v7623, %v7637
      %v7652 = vadd.f32 %v7624, %v7638
      %v7653 = vadd.f32 %v7625, %v7639
      %v7654 = vadd.f32 %v7626, %v7640
      %v7655 = vadd.f32 %v7627, %v7641
      %v7656 = vmul.f32 %v261, %v277
      %v7657 = vmul.f32 %v262, %v278
      %v7658 = vmul.f32 %v263, %v277
      %v7659 = vmul.f32 %v264, %v278
      %v7660 = vmul.f32 %v265, %v277
      %v7661 = vmul.f32 %v266, %v278
      %v7662 = vmul.f32 %v267, %v277
      %v7663 = vmul.f32 %v268, %v278
      %v7664 = vmul.f32 %v269, %v277
      %v7665 = vmul.f32 %v270, %v278
      %v7666 = vmul.f32 %v271, %v277
      %v7667 = vmul.f32 %v272, %v278
      %v7668 = vmul.f32 %v273, %v277
      %v7669 = vmul.f32 %v274, %v278
      %v7670 = vmul.f32 %v275, %v277
      %v7671 = vmul.f32 %v276, %v278
      %v7673 = vsel %vm282, %v245, 0
      %v7676 = vsel %vm282, %v246, 0
      %7678 = vmatpush.xpose.msra.mxu0 0.0
      %7679 = vmatpush.xpose.msra.mxu0 0.0
      %7680 = vmatpush.xpose.msra.mxu0 0.0
      %7681 = vmatpush.xpose.msra.mxu0 0.0
      %7682 = vmatpush.xpose.msra.mxu0 0.0
      %7683 = vmatpush.xpose.msra.mxu0 0.0
      %7684 = vmatpush.xpose.msra.mxu0 0.0
      %7685 = vmatpush.xpose.msra.mxu0 0.0
      %7686 = vmatpush.xpose.msra.mxu0 0.0
      %7687 = vmatpush.xpose.msra.mxu0 0.0
      %7688 = vmatpush.xpose.msra.mxu0 0.0
      %7689 = vmatpush.xpose.msra.mxu0 0.0
      %7690 = vmatpush.xpose.msra.mxu0 0.0
      %7691 = vmatpush.xpose.msra.mxu0 0.0
      %7692 = vmatpush.xpose.msra.mxu0 %v7676
      %7693 = vmatpush.xpose.msra.mxu0 %v7673
      %7694 = vmatmul.f32.gmra.mxu0 %v7673
      %v7695 = vpop.f32.mrf.mxu0
      %v7696 = vadd.f32 0.0, %v7695
      %7697 = vmatmul.f32.gmra.mxu0 %v7676
      %v7698 = vpop.f32.mrf.mxu0
      %v7699 = vadd.f32 0.0, %v7698
      %7700 = vdwg.mxu0
      %v7702 = vsel %vm282, %v7642, 0
      %v7705 = vsel %vm282, %v7643, 0
      %7707 = vmatpush.xpose.msra.mxu0 0.0
      %7708 = vmatpush.xpose.msra.mxu0 0.0
      %7709 = vmatpush.xpose.msra.mxu0 0.0
      %7710 = vmatpush.xpose.msra.mxu0 0.0
      %7711 = vmatpush.xpose.msra.mxu0 0.0
      %7712 = vmatpush.xpose.msra.mxu0 0.0
      %7713 = vmatpush.xpose.msra.mxu0 0.0
      %7714 = vmatpush.xpose.msra.mxu0 0.0
      %7715 = vmatpush.xpose.msra.mxu0 0.0
      %7716 = vmatpush.xpose.msra.mxu0 0.0
      %7717 = vmatpush.xpose.msra.mxu0 0.0
      %7718 = vmatpush.xpose.msra.mxu0 0.0
      %7719 = vmatpush.xpose.msra.mxu0 0.0
      %7720 = vmatpush.xpose.msra.mxu0 0.0
      %7721 = vmatpush.xpose.msra.mxu0 %v7705
      %7722 = vmatpush.xpose.msra.mxu0 %v7702
      %7723 = vmatmul.f32.gmra.mxu0 %v7702
      %v7724 = vpop.f32.mrf.mxu0
      %v7725 = vadd.f32 0.0, %v7724
      %7726 = vmatmul.f32.gmra.mxu0 %v7705
      %v7727 = vpop.f32.mrf.mxu0
      %v7728 = vadd.f32 0.0, %v7727
      %7729 = vdwg.mxu0
      %v7731 = vsel %vm282, %v7644, 0
      %v7734 = vsel %vm282, %v7645, 0
      %7736 = vmatpush.xpose.msra.mxu0 0.0
      %7737 = vmatpush.xpose.msra.mxu0 0.0
      %7738 = vmatpush.xpose.msra.mxu0 0.0
      %7739 = vmatpush.xpose.msra.mxu0 0.0
      %7740 = vmatpush.xpose.msra.mxu0 0.0
      %7741 = vmatpush.xpose.msra.mxu0 0.0
      %7742 = vmatpush.xpose.msra.mxu0 0.0
      %7743 = vmatpush.xpose.msra.mxu0 0.0
      %7744 = vmatpush.xpose.msra.mxu0 0.0
      %7745 = vmatpush.xpose.msra.mxu0 0.0
      %7746 = vmatpush.xpose.msra.mxu0 0.0
      %7747 = vmatpush.xpose.msra.mxu0 0.0
      %7748 = vmatpush.xpose.msra.mxu0 0.0
      %7749 = vmatpush.xpose.msra.mxu0 0.0
      %7750 = vmatpush.xpose.msra.mxu0 %v7734
      %7751 = vmatpush.xpose.msra.mxu0 %v7731
      %7752 = vmatmul.f32.gmra.mxu0 %v7731
      %v7753 = vpop.f32.mrf.mxu0
      %v7754 = vadd.f32 0.0, %v7753
      %7755 = vmatmul.f32.gmra.mxu0 %v7734
      %v7756 = vpop.f32.mrf.mxu0
      %v7757 = vadd.f32 0.0, %v7756
      %7758 = vdwg.mxu0
      %v7760 = vsel %vm282, %v7646, 0
      %v7763 = vsel %vm282, %v7647, 0
      %7765 = vmatpush.xpose.msra.mxu0 0.0
      %7766 = vmatpush.xpose.msra.mxu0 0.0
      %7767 = vmatpush.xpose.msra.mxu0 0.0
      %7768 = vmatpush.xpose.msra.mxu0 0.0
      %7769 = vmatpush.xpose.msra.mxu0 0.0
      %7770 = vmatpush.xpose.msra.mxu0 0.0
      %7771 = vmatpush.xpose.msra.mxu0 0.0
      %7772 = vmatpush.xpose.msra.mxu0 0.0
      %7773 = vmatpush.xpose.msra.mxu0 0.0
      %7774 = vmatpush.xpose.msra.mxu0 0.0
      %7775 = vmatpush.xpose.msra.mxu0 0.0
      %7776 = vmatpush.xpose.msra.mxu0 0.0
      %7777 = vmatpush.xpose.msra.mxu0 0.0
      %7778 = vmatpush.xpose.msra.mxu0 0.0
      %7779 = vmatpush.xpose.msra.mxu0 %v7763
      %7780 = vmatpush.xpose.msra.mxu0 %v7760
      %7781 = vmatmul.f32.gmra.mxu0 %v7760
      %v7782 = vpop.f32.mrf.mxu0
      %v7783 = vadd.f32 0.0, %v7782
      %7784 = vmatmul.f32.gmra.mxu0 %v7763
      %v7785 = vpop.f32.mrf.mxu0
      %v7786 = vadd.f32 0.0, %v7785
      %7787 = vdwg.mxu0
      %v7789 = vsel %vm282, %v7648, 0
      %v7792 = vsel %vm282, %v7649, 0
      %7794 = vmatpush.xpose.msra.mxu0 0.0
      %7795 = vmatpush.xpose.msra.mxu0 0.0
      %7796 = vmatpush.xpose.msra.mxu0 0.0
      %7797 = vmatpush.xpose.msra.mxu0 0.0
      %7798 = vmatpush.xpose.msra.mxu0 0.0
      %7799 = vmatpush.xpose.msra.mxu0 0.0
      %7800 = vmatpush.xpose.msra.mxu0 0.0
      %7801 = vmatpush.xpose.msra.mxu0 0.0
      %7802 = vmatpush.xpose.msra.mxu0 0.0
      %7803 = vmatpush.xpose.msra.mxu0 0.0
      %7804 = vmatpush.xpose.msra.mxu0 0.0
      %7805 = vmatpush.xpose.msra.mxu0 0.0
      %7806 = vmatpush.xpose.msra.mxu0 0.0
      %7807 = vmatpush.xpose.msra.mxu0 0.0
      %7808 = vmatpush.xpose.msra.mxu0 %v7792
      %7809 = vmatpush.xpose.msra.mxu0 %v7789
      %7810 = vmatmul.f32.gmra.mxu0 %v7789
      %v7811 = vpop.f32.mrf.mxu0
      %v7812 = vadd.f32 0.0, %v7811
      %7813 = vmatmul.f32.gmra.mxu0 %v7792
      %v7814 = vpop.f32.mrf.mxu0
      %v7815 = vadd.f32 0.0, %v7814
      %7816 = vdwg.mxu0
      %v7818 = vsel %vm282, %v7650, 0
      %v7821 = vsel %vm282, %v7651, 0
      %7823 = vmatpush.xpose.msra.mxu0 0.0
      %7824 = vmatpush.xpose.msra.mxu0 0.0
      %7825 = vmatpush.xpose.msra.mxu0 0.0
      %7826 = vmatpush.xpose.msra.mxu0 0.0
      %7827 = vmatpush.xpose.msra.mxu0 0.0
      %7828 = vmatpush.xpose.msra.mxu0 0.0
      %7829 = vmatpush.xpose.msra.mxu0 0.0
      %7830 = vmatpush.xpose.msra.mxu0 0.0
      %7831 = vmatpush.xpose.msra.mxu0 0.0
      %7832 = vmatpush.xpose.msra.mxu0 0.0
      %7833 = vmatpush.xpose.msra.mxu0 0.0
      %7834 = vmatpush.xpose.msra.mxu0 0.0
      %7835 = vmatpush.xpose.msra.mxu0 0.0
      %7836 = vmatpush.xpose.msra.mxu0 0.0
      %7837 = vmatpush.xpose.msra.mxu0 %v7821
      %7838 = vmatpush.xpose.msra.mxu0 %v7818
      %7839 = vmatmul.f32.gmra.mxu0 %v7818
      %v7840 = vpop.f32.mrf.mxu0
      %v7841 = vadd.f32 0.0, %v7840
      %7842 = vmatmul.f32.gmra.mxu0 %v7821
      %v7843 = vpop.f32.mrf.mxu0
      %v7844 = vadd.f32 0.0, %v7843
      %7845 = vdwg.mxu0
      %v7847 = vsel %vm282, %v7652, 0
      %v7850 = vsel %vm282, %v7653, 0
      %7852 = vmatpush.xpose.msra.mxu0 0.0
      %7853 = vmatpush.xpose.msra.mxu0 0.0
      %7854 = vmatpush.xpose.msra.mxu0 0.0
      %7855 = vmatpush.xpose.msra.mxu0 0.0
      %7856 = vmatpush.xpose.msra.mxu0 0.0
      %7857 = vmatpush.xpose.msra.mxu0 0.0
      %7858 = vmatpush.xpose.msra.mxu0 0.0
      %7859 = vmatpush.xpose.msra.mxu0 0.0
      %7860 = vmatpush.xpose.msra.mxu0 0.0
      %7861 = vmatpush.xpose.msra.mxu0 0.0
      %7862 = vmatpush.xpose.msra.mxu0 0.0
      %7863 = vmatpush.xpose.msra.mxu0 0.0
      %7864 = vmatpush.xpose.msra.mxu0 0.0
      %7865 = vmatpush.xpose.msra.mxu0 0.0
      %7866 = vmatpush.xpose.msra.mxu0 %v7850
      %7867 = vmatpush.xpose.msra.mxu0 %v7847
      %7868 = vmatmul.f32.gmra.mxu0 %v7847
      %v7869 = vpop.f32.mrf.mxu0
      %v7870 = vadd.f32 0.0, %v7869
      %7871 = vmatmul.f32.gmra.mxu0 %v7850
      %v7872 = vpop.f32.mrf.mxu0
      %v7873 = vadd.f32 0.0, %v7872
      %7874 = vdwg.mxu0
      %v7876 = vsel %vm282, %v7654, 0
      %v7879 = vsel %vm282, %v7655, 0
      %7881 = vmatpush.xpose.msra.mxu0 0.0
      %7882 = vmatpush.xpose.msra.mxu0 0.0
      %7883 = vmatpush.xpose.msra.mxu0 0.0
      %7884 = vmatpush.xpose.msra.mxu0 0.0
      %7885 = vmatpush.xpose.msra.mxu0 0.0
      %7886 = vmatpush.xpose.msra.mxu0 0.0
      %7887 = vmatpush.xpose.msra.mxu0 0.0
      %7888 = vmatpush.xpose.msra.mxu0 0.0
      %7889 = vmatpush.xpose.msra.mxu0 0.0
      %7890 = vmatpush.xpose.msra.mxu0 0.0
      %7891 = vmatpush.xpose.msra.mxu0 0.0
      %7892 = vmatpush.xpose.msra.mxu0 0.0
      %7893 = vmatpush.xpose.msra.mxu0 0.0
      %7894 = vmatpush.xpose.msra.mxu0 0.0
      %7895 = vmatpush.xpose.msra.mxu0 %v7879
      %7896 = vmatpush.xpose.msra.mxu0 %v7876
      %7897 = vmatmul.f32.gmra.mxu0 %v7876
      %v7898 = vpop.f32.mrf.mxu0
      %v7899 = vadd.f32 0.0, %v7898
      %7900 = vmatmul.f32.gmra.mxu0 %v7879
      %v7901 = vpop.f32.mrf.mxu0
      %v7902 = vadd.f32 0.0, %v7901
      %7903 = vdwg.mxu0
      %v7904 = vmul.f32 %v7696, 0.5
      %v7905 = vmul.f32 %v7699, 0.5
      %v7906 = vmul.f32 %v7725, 0.5
      %v7907 = vmul.f32 %v7728, 0.5
      %v7908 = vmul.f32 %v7754, 0.5
      %v7909 = vmul.f32 %v7757, 0.5
      %v7910 = vmul.f32 %v7783, 0.5
      %v7911 = vmul.f32 %v7786, 0.5
      %v7912 = vmul.f32 %v7812, 0.5
      %v7913 = vmul.f32 %v7815, 0.5
      %v7914 = vmul.f32 %v7841, 0.5
      %v7915 = vmul.f32 %v7844, 0.5
      %v7916 = vmul.f32 %v7870, 0.5
      %v7917 = vmul.f32 %v7873, 0.5
      %v7918 = vmul.f32 %v7899, 0.5
      %v7919 = vmul.f32 %v7902, 0.5
      %v7920 = vsel %vm500, %v7904, -inf
      %7921 = vmax.xlane.f32.xlu0 %v7920
      %v7922 = vpop.xlane.xlu0 %7921
      %v7923 = vsel %vm500, %v7905, -inf
      %7924 = vmax.xlane.f32.xlu0 %v7923
      %v7925 = vpop.xlane.xlu0 %7924
      %v7926 = vsel %vm500, %v7906, -inf
      %7927 = vmax.xlane.f32.xlu0 %v7926
      %v7928 = vpop.xlane.xlu0 %7927
      %v7929 = vsel %vm500, %v7907, -inf
      %7930 = vmax.xlane.f32.xlu0 %v7929
      %v7931 = vpop.xlane.xlu0 %7930
      %v7932 = vsel %vm500, %v7908, -inf
      %7933 = vmax.xlane.f32.xlu0 %v7932
      %v7934 = vpop.xlane.xlu0 %7933
      %v7935 = vsel %vm500, %v7909, -inf
      %7936 = vmax.xlane.f32.xlu0 %v7935
      %v7937 = vpop.xlane.xlu0 %7936
      %v7938 = vsel %vm500, %v7910, -inf
      %7939 = vmax.xlane.f32.xlu0 %v7938
      %v7940 = vpop.xlane.xlu0 %7939
      %v7941 = vsel %vm500, %v7911, -inf
      %7942 = vmax.xlane.f32.xlu0 %v7941
      %v7943 = vpop.xlane.xlu0 %7942
      %v7944 = vsel %vm500, %v7912, -inf
      %7945 = vmax.xlane.f32.xlu0 %v7944
      %v7946 = vpop.xlane.xlu0 %7945
      %v7947 = vsel %vm500, %v7913, -inf
      %7948 = vmax.xlane.f32.xlu0 %v7947
      %v7949 = vpop.xlane.xlu0 %7948
      %v7950 = vsel %vm500, %v7914, -inf
      %7951 = vmax.xlane.f32.xlu0 %v7950
      %v7952 = vpop.xlane.xlu0 %7951
      %v7953 = vsel %vm500, %v7915, -inf
      %7954 = vmax.xlane.f32.xlu0 %v7953
      %v7955 = vpop.xlane.xlu0 %7954
      %v7956 = vsel %vm500, %v7916, -inf
      %7957 = vmax.xlane.f32.xlu0 %v7956
      %v7958 = vpop.xlane.xlu0 %7957
      %v7959 = vsel %vm500, %v7917, -inf
      %7960 = vmax.xlane.f32.xlu0 %v7959
      %v7961 = vpop.xlane.xlu0 %7960
      %v7962 = vsel %vm500, %v7918, -inf
      %7963 = vmax.xlane.f32.xlu0 %v7962
      %v7964 = vpop.xlane.xlu0 %7963
      %v7965 = vsel %vm500, %v7919, -inf
      %7966 = vmax.xlane.f32.xlu0 %v7965
      %v7967 = vpop.xlane.xlu0 %7966
      %v7968 = vsub.f32 %v7904, %v7922
      %v7969 = vsub.f32 %v7905, %v7925
      %v7970 = vsub.f32 %v7906, %v7928
      %v7971 = vsub.f32 %v7907, %v7931
      %v7972 = vsub.f32 %v7908, %v7934
      %v7973 = vsub.f32 %v7909, %v7937
      %v7974 = vsub.f32 %v7910, %v7940
      %v7975 = vsub.f32 %v7911, %v7943
      %v7976 = vsub.f32 %v7912, %v7946
      %v7977 = vsub.f32 %v7913, %v7949
      %v7978 = vsub.f32 %v7914, %v7952
      %v7979 = vsub.f32 %v7915, %v7955
      %v7980 = vsub.f32 %v7916, %v7958
      %v7981 = vsub.f32 %v7917, %v7961
      %v7982 = vsub.f32 %v7918, %v7964
      %v7983 = vsub.f32 %v7919, %v7967
      %v7984 = vmul.f32 %v7968, 1.442695
      %v7985 = vpow.pop %v7984
      %v7986 = vmul.f32 %v7969, 1.442695
      %v7987 = vpow.pop %v7986
      %v7988 = vmul.f32 %v7970, 1.442695
      %v7989 = vpow.pop %v7988
      %v7990 = vmul.f32 %v7971, 1.442695
      %v7991 = vpow.pop %v7990
      %v7992 = vmul.f32 %v7972, 1.442695
      %v7993 = vpow.pop %v7992
      %v7994 = vmul.f32 %v7973, 1.442695
      %v7995 = vpow.pop %v7994
      %v7996 = vmul.f32 %v7974, 1.442695
      %v7997 = vpow.pop %v7996
      %v7998 = vmul.f32 %v7975, 1.442695
      %v7999 = vpow.pop %v7998
      %v8000 = vmul.f32 %v7976, 1.442695
      %v8001 = vpow.pop %v8000
      %v8002 = vmul.f32 %v7977, 1.442695
      %v8003 = vpow.pop %v8002
      %v8004 = vmul.f32 %v7978, 1.442695
      %v8005 = vpow.pop %v8004
      %v8006 = vmul.f32 %v7979, 1.442695
      %v8007 = vpow.pop %v8006
      %v8008 = vmul.f32 %v7980, 1.442695
      %v8009 = vpow.pop %v8008
      %v8010 = vmul.f32 %v7981, 1.442695
      %v8011 = vpow.pop %v8010
      %v8012 = vmul.f32 %v7982, 1.442695
      %v8013 = vpow.pop %v8012
      %v8014 = vmul.f32 %v7983, 1.442695
      %v8015 = vpow.pop %v8014
      %v8016 = vsel %vm500, %v7985, 0.0
      %8017 = vadd.xlane.f32.xlu0 %v8016
      %v8018 = vpop.xlane.xlu0 %8017
      %v8019 = vsel %vm500, %v7987, 0.0
      %8020 = vadd.xlane.f32.xlu0 %v8019
      %v8021 = vpop.xlane.xlu0 %8020
      %v8022 = vsel %vm500, %v7989, 0.0
      %8023 = vadd.xlane.f32.xlu0 %v8022
      %v8024 = vpop.xlane.xlu0 %8023
      %v8025 = vsel %vm500, %v7991, 0.0
      %8026 = vadd.xlane.f32.xlu0 %v8025
      %v8027 = vpop.xlane.xlu0 %8026
      %v8028 = vsel %vm500, %v7993, 0.0
      %8029 = vadd.xlane.f32.xlu0 %v8028
      %v8030 = vpop.xlane.xlu0 %8029
      %v8031 = vsel %vm500, %v7995, 0.0
      %8032 = vadd.xlane.f32.xlu0 %v8031
      %v8033 = vpop.xlane.xlu0 %8032
      %v8034 = vsel %vm500, %v7997, 0.0
      %8035 = vadd.xlane.f32.xlu0 %v8034
      %v8036 = vpop.xlane.xlu0 %8035
      %v8037 = vsel %vm500, %v7999, 0.0
      %8038 = vadd.xlane.f32.xlu0 %v8037
      %v8039 = vpop.xlane.xlu0 %8038
      %v8040 = vsel %vm500, %v8001, 0.0
      %8041 = vadd.xlane.f32.xlu0 %v8040
      %v8042 = vpop.xlane.xlu0 %8041
      %v8043 = vsel %vm500, %v8003, 0.0
      %8044 = vadd.xlane.f32.xlu0 %v8043
      %v8045 = vpop.xlane.xlu0 %8044
      %v8046 = vsel %vm500, %v8005, 0.0
      %8047 = vadd.xlane.f32.xlu0 %v8046
      %v8048 = vpop.xlane.xlu0 %8047
      %v8049 = vsel %vm500, %v8007, 0.0
      %8050 = vadd.xlane.f32.xlu0 %v8049
      %v8051 = vpop.xlane.xlu0 %8050
      %v8052 = vsel %vm500, %v8009, 0.0
      %8053 = vadd.xlane.f32.xlu0 %v8052
      %v8054 = vpop.xlane.xlu0 %8053
      %v8055 = vsel %vm500, %v8011, 0.0
      %8056 = vadd.xlane.f32.xlu0 %v8055
      %v8057 = vpop.xlane.xlu0 %8056
      %v8058 = vsel %vm500, %v8013, 0.0
      %8059 = vadd.xlane.f32.xlu0 %v8058
      %v8060 = vpop.xlane.xlu0 %8059
      %v8061 = vsel %vm500, %v8015, 0.0
      %8062 = vadd.xlane.f32.xlu0 %v8061
      %v8063 = vpop.xlane.xlu0 %8062
      %v8064 = vrcp.pop %v8018
      %v8065 = vmul.f32 %v8018, %v8064
      %v8066 = vsub.f32 1.0, %v8065
      %v8067 = vmul.f32 %v8064, %v8066
      %v8068 = vadd.f32 %v8064, %v8067
      %vm8069 = vweird.f32 %v8018
      %vm8070 = vweird.f32 %v8064
      %vm8071 = vmor %vm8069, %vm8070
      %v8072 = vsel %vm8071, %v8064, %v8068
      %v8073 = vand.u32 2147483647, %v8018
      %vm8074 = vcmp.eq.f32.partialorder %v8073, 8.507059e+37
      %v8075 = vand.u32 %v8018, 2147483648
      %v8076 = vor.u32 1.1754944e-38, %v8075
      %v8077 = vsel %vm8074, %v8076, %v8072
      %v8078 = vmul.f32 %v7985, %v8077
      %v8079 = vrcp.pop %v8021
      %v8080 = vmul.f32 %v8021, %v8079
      %v8081 = vsub.f32 1.0, %v8080
      %v8082 = vmul.f32 %v8079, %v8081
      %v8083 = vadd.f32 %v8079, %v8082
      %vm8084 = vweird.f32 %v8021
      %vm8085 = vweird.f32 %v8079
      %vm8086 = vmor %vm8084, %vm8085
      %v8087 = vsel %vm8086, %v8079, %v8083
      %v8088 = vand.u32 2147483647, %v8021
      %vm8089 = vcmp.eq.f32.partialorder %v8088, 8.507059e+37
      %v8090 = vand.u32 %v8021, 2147483648
      %v8091 = vor.u32 1.1754944e-38, %v8090
      %v8092 = vsel %vm8089, %v8091, %v8087
      %v8093 = vmul.f32 %v7987, %v8092
      %v8094 = vrcp.pop %v8024
      %v8095 = vmul.f32 %v8024, %v8094
      %v8096 = vsub.f32 1.0, %v8095
      %v8097 = vmul.f32 %v8094, %v8096
      %v8098 = vadd.f32 %v8094, %v8097
      %vm8099 = vweird.f32 %v8024
      %vm8100 = vweird.f32 %v8094
      %vm8101 = vmor %vm8099, %vm8100
      %v8102 = vsel %vm8101, %v8094, %v8098
      %v8103 = vand.u32 2147483647, %v8024
      %vm8104 = vcmp.eq.f32.partialorder %v8103, 8.507059e+37
      %v8105 = vand.u32 %v8024, 2147483648
      %v8106 = vor.u32 1.1754944e-38, %v8105
      %v8107 = vsel %vm8104, %v8106, %v8102
      %v8108 = vmul.f32 %v7989, %v8107
      %v8109 = vrcp.pop %v8027
      %v8110 = vmul.f32 %v8027, %v8109
      %v8111 = vsub.f32 1.0, %v8110
      %v8112 = vmul.f32 %v8109, %v8111
      %v8113 = vadd.f32 %v8109, %v8112
      %vm8114 = vweird.f32 %v8027
      %vm8115 = vweird.f32 %v8109
      %vm8116 = vmor %vm8114, %vm8115
      %v8117 = vsel %vm8116, %v8109, %v8113
      %v8118 = vand.u32 2147483647, %v8027
      %vm8119 = vcmp.eq.f32.partialorder %v8118, 8.507059e+37
      %v8120 = vand.u32 %v8027, 2147483648
      %v8121 = vor.u32 1.1754944e-38, %v8120
      %v8122 = vsel %vm8119, %v8121, %v8117
      %v8123 = vmul.f32 %v7991, %v8122
      %v8124 = vrcp.pop %v8030
      %v8125 = vmul.f32 %v8030, %v8124
      %v8126 = vsub.f32 1.0, %v8125
      %v8127 = vmul.f32 %v8124, %v8126
      %v8128 = vadd.f32 %v8124, %v8127
      %vm8129 = vweird.f32 %v8030
      %vm8130 = vweird.f32 %v8124
      %vm8131 = vmor %vm8129, %vm8130
      %v8132 = vsel %vm8131, %v8124, %v8128
      %v8133 = vand.u32 2147483647, %v8030
      %vm8134 = vcmp.eq.f32.partialorder %v8133, 8.507059e+37
      %v8135 = vand.u32 %v8030, 2147483648
      %v8136 = vor.u32 1.1754944e-38, %v8135
      %v8137 = vsel %vm8134, %v8136, %v8132
      %v8138 = vmul.f32 %v7993, %v8137
      %v8139 = vrcp.pop %v8033
      %v8140 = vmul.f32 %v8033, %v8139
      %v8141 = vsub.f32 1.0, %v8140
      %v8142 = vmul.f32 %v8139, %v8141
      %v8143 = vadd.f32 %v8139, %v8142
      %vm8144 = vweird.f32 %v8033
      %vm8145 = vweird.f32 %v8139
      %vm8146 = vmor %vm8144, %vm8145
      %v8147 = vsel %vm8146, %v8139, %v8143
      %v8148 = vand.u32 2147483647, %v8033
      %vm8149 = vcmp.eq.f32.partialorder %v8148, 8.507059e+37
      %v8150 = vand.u32 %v8033, 2147483648
      %v8151 = vor.u32 1.1754944e-38, %v8150
      %v8152 = vsel %vm8149, %v8151, %v8147
      %v8153 = vmul.f32 %v7995, %v8152
      %v8154 = vrcp.pop %v8036
      %v8155 = vmul.f32 %v8036, %v8154
      %v8156 = vsub.f32 1.0, %v8155
      %v8157 = vmul.f32 %v8154, %v8156
      %v8158 = vadd.f32 %v8154, %v8157
      %vm8159 = vweird.f32 %v8036
      %vm8160 = vweird.f32 %v8154
      %vm8161 = vmor %vm8159, %vm8160
      %v8162 = vsel %vm8161, %v8154, %v8158
      %v8163 = vand.u32 2147483647, %v8036
      %vm8164 = vcmp.eq.f32.partialorder %v8163, 8.507059e+37
      %v8165 = vand.u32 %v8036, 2147483648
      %v8166 = vor.u32 1.1754944e-38, %v8165
      %v8167 = vsel %vm8164, %v8166, %v8162
      %v8168 = vmul.f32 %v7997, %v8167
      %v8169 = vrcp.pop %v8039
      %v8170 = vmul.f32 %v8039, %v8169
      %v8171 = vsub.f32 1.0, %v8170
      %v8172 = vmul.f32 %v8169, %v8171
      %v8173 = vadd.f32 %v8169, %v8172
      %vm8174 = vweird.f32 %v8039
      %vm8175 = vweird.f32 %v8169
      %vm8176 = vmor %vm8174, %vm8175
      %v8177 = vsel %vm8176, %v8169, %v8173
      %v8178 = vand.u32 2147483647, %v8039
      %vm8179 = vcmp.eq.f32.partialorder %v8178, 8.507059e+37
      %v8180 = vand.u32 %v8039, 2147483648
      %v8181 = vor.u32 1.1754944e-38, %v8180
      %v8182 = vsel %vm8179, %v8181, %v8177
      %v8183 = vmul.f32 %v7999, %v8182
      %v8184 = vrcp.pop %v8042
      %v8185 = vmul.f32 %v8042, %v8184
      %v8186 = vsub.f32 1.0, %v8185
      %v8187 = vmul.f32 %v8184, %v8186
      %v8188 = vadd.f32 %v8184, %v8187
      %vm8189 = vweird.f32 %v8042
      %vm8190 = vweird.f32 %v8184
      %vm8191 = vmor %vm8189, %vm8190
      %v8192 = vsel %vm8191, %v8184, %v8188
      %v8193 = vand.u32 2147483647, %v8042
      %vm8194 = vcmp.eq.f32.partialorder %v8193, 8.507059e+37
      %v8195 = vand.u32 %v8042, 2147483648
      %v8196 = vor.u32 1.1754944e-38, %v8195
      %v8197 = vsel %vm8194, %v8196, %v8192
      %v8198 = vmul.f32 %v8001, %v8197
      %v8199 = vrcp.pop %v8045
      %v8200 = vmul.f32 %v8045, %v8199
      %v8201 = vsub.f32 1.0, %v8200
      %v8202 = vmul.f32 %v8199, %v8201
      %v8203 = vadd.f32 %v8199, %v8202
      %vm8204 = vweird.f32 %v8045
      %vm8205 = vweird.f32 %v8199
      %vm8206 = vmor %vm8204, %vm8205
      %v8207 = vsel %vm8206, %v8199, %v8203
      %v8208 = vand.u32 2147483647, %v8045
      %vm8209 = vcmp.eq.f32.partialorder %v8208, 8.507059e+37
      %v8210 = vand.u32 %v8045, 2147483648
      %v8211 = vor.u32 1.1754944e-38, %v8210
      %v8212 = vsel %vm8209, %v8211, %v8207
      %v8213 = vmul.f32 %v8003, %v8212
      %v8214 = vrcp.pop %v8048
      %v8215 = vmul.f32 %v8048, %v8214
      %v8216 = vsub.f32 1.0, %v8215
      %v8217 = vmul.f32 %v8214, %v8216
      %v8218 = vadd.f32 %v8214, %v8217
      %vm8219 = vweird.f32 %v8048
      %vm8220 = vweird.f32 %v8214
      %vm8221 = vmor %vm8219, %vm8220
      %v8222 = vsel %vm8221, %v8214, %v8218
      %v8223 = vand.u32 2147483647, %v8048
      %vm8224 = vcmp.eq.f32.partialorder %v8223, 8.507059e+37
      %v8225 = vand.u32 %v8048, 2147483648
      %v8226 = vor.u32 1.1754944e-38, %v8225
      %v8227 = vsel %vm8224, %v8226, %v8222
      %v8228 = vmul.f32 %v8005, %v8227
      %v8229 = vrcp.pop %v8051
      %v8230 = vmul.f32 %v8051, %v8229
      %v8231 = vsub.f32 1.0, %v8230
      %v8232 = vmul.f32 %v8229, %v8231
      %v8233 = vadd.f32 %v8229, %v8232
      %vm8234 = vweird.f32 %v8051
      %vm8235 = vweird.f32 %v8229
      %vm8236 = vmor %vm8234, %vm8235
      %v8237 = vsel %vm8236, %v8229, %v8233
      %v8238 = vand.u32 2147483647, %v8051
      %vm8239 = vcmp.eq.f32.partialorder %v8238, 8.507059e+37
      %v8240 = vand.u32 %v8051, 2147483648
      %v8241 = vor.u32 1.1754944e-38, %v8240
      %v8242 = vsel %vm8239, %v8241, %v8237
      %v8243 = vmul.f32 %v8007, %v8242
      %v8244 = vrcp.pop %v8054
      %v8245 = vmul.f32 %v8054, %v8244
      %v8246 = vsub.f32 1.0, %v8245
      %v8247 = vmul.f32 %v8244, %v8246
      %v8248 = vadd.f32 %v8244, %v8247
      %vm8249 = vweird.f32 %v8054
      %vm8250 = vweird.f32 %v8244
      %vm8251 = vmor %vm8249, %vm8250
      %v8252 = vsel %vm8251, %v8244, %v8248
      %v8253 = vand.u32 2147483647, %v8054
      %vm8254 = vcmp.eq.f32.partialorder %v8253, 8.507059e+37
      %v8255 = vand.u32 %v8054, 2147483648
      %v8256 = vor.u32 1.1754944e-38, %v8255
      %v8257 = vsel %vm8254, %v8256, %v8252
      %v8258 = vmul.f32 %v8009, %v8257
      %v8259 = vrcp.pop %v8057
      %v8260 = vmul.f32 %v8057, %v8259
      %v8261 = vsub.f32 1.0, %v8260
      %v8262 = vmul.f32 %v8259, %v8261
      %v8263 = vadd.f32 %v8259, %v8262
      %vm8264 = vweird.f32 %v8057
      %vm8265 = vweird.f32 %v8259
      %vm8266 = vmor %vm8264, %vm8265
      %v8267 = vsel %vm8266, %v8259, %v8263
      %v8268 = vand.u32 2147483647, %v8057
      %vm8269 = vcmp.eq.f32.partialorder %v8268, 8.507059e+37
      %v8270 = vand.u32 %v8057, 2147483648
      %v8271 = vor.u32 1.1754944e-38, %v8270
      %v8272 = vsel %vm8269, %v8271, %v8267
      %v8273 = vmul.f32 %v8011, %v8272
      %v8274 = vrcp.pop %v8060
      %v8275 = vmul.f32 %v8060, %v8274
      %v8276 = vsub.f32 1.0, %v8275
      %v8277 = vmul.f32 %v8274, %v8276
      %v8278 = vadd.f32 %v8274, %v8277
      %vm8279 = vweird.f32 %v8060
      %vm8280 = vweird.f32 %v8274
      %vm8281 = vmor %vm8279, %vm8280
      %v8282 = vsel %vm8281, %v8274, %v8278
      %v8283 = vand.u32 2147483647, %v8060
      %vm8284 = vcmp.eq.f32.partialorder %v8283, 8.507059e+37
      %v8285 = vand.u32 %v8060, 2147483648
      %v8286 = vor.u32 1.1754944e-38, %v8285
      %v8287 = vsel %vm8284, %v8286, %v8282
      %v8288 = vmul.f32 %v8013, %v8287
      %v8289 = vrcp.pop %v8063
      %v8290 = vmul.f32 %v8063, %v8289
      %v8291 = vsub.f32 1.0, %v8290
      %v8292 = vmul.f32 %v8289, %v8291
      %v8293 = vadd.f32 %v8289, %v8292
      %vm8294 = vweird.f32 %v8063
      %vm8295 = vweird.f32 %v8289
      %vm8296 = vmor %vm8294, %vm8295
      %v8297 = vsel %vm8296, %v8289, %v8293
      %v8298 = vand.u32 2147483647, %v8063
      %vm8299 = vcmp.eq.f32.partialorder %v8298, 8.507059e+37
      %v8300 = vand.u32 %v8063, 2147483648
      %v8301 = vor.u32 1.1754944e-38, %v8300
      %v8302 = vsel %vm8299, %v8301, %v8297
      %v8303 = vmul.f32 %v8015, %v8302
      %v8304 = vmul.f32 %v8078, 0.5
      %v8305 = vmul.f32 %v8093, 0.5
      %v8306 = vmul.f32 %v8108, 0.5
      %v8307 = vmul.f32 %v8123, 0.5
      %v8308 = vmul.f32 %v8138, 0.5
      %v8309 = vmul.f32 %v8153, 0.5
      %v8310 = vmul.f32 %v8168, 0.5
      %v8311 = vmul.f32 %v8183, 0.5
      %v8312 = vmul.f32 %v8198, 0.5
      %v8313 = vmul.f32 %v8213, 0.5
      %v8314 = vmul.f32 %v8228, 0.5
      %v8315 = vmul.f32 %v8243, 0.5
      %v8316 = vmul.f32 %v8258, 0.5
      %v8317 = vmul.f32 %v8273, 0.5
      %v8318 = vmul.f32 %v8288, 0.5
      %v8319 = vmul.f32 %v8303, 0.5
      %v8320 = vmul.f32 %v7656, %v8304
      %v8321 = vmul.f32 %v7657, %v8305
      %v8322 = vmul.f32 %v7658, %v8306
      %v8323 = vmul.f32 %v7659, %v8307
      %v8324 = vmul.f32 %v7660, %v8308
      %v8325 = vmul.f32 %v7661, %v8309
      %v8326 = vmul.f32 %v7662, %v8310
      %v8327 = vmul.f32 %v7663, %v8311
      %v8328 = vmul.f32 %v7664, %v8312
      %v8329 = vmul.f32 %v7665, %v8313
      %v8330 = vmul.f32 %v7666, %v8314
      %v8331 = vmul.f32 %v7667, %v8315
      %v8332 = vmul.f32 %v7668, %v8316
      %v8333 = vmul.f32 %v7669, %v8317
      %v8334 = vmul.f32 %v7670, %v8318
      %v8335 = vmul.f32 %v7671, %v8319
      %8336 = vxpose.xlu0.b32.start [1/16] %v8320, 128
      %8337 = vxpose.xlu0.b32.cont [2/16] %v8321, 128
      %8338 = vxpose.xlu0.b32.cont [3/16] 0.0, 128
      %8339 = vxpose.xlu0.b32.cont [4/16] 0.0, 128
      %8340 = vxpose.xlu0.b32.cont [5/16] 0.0, 128
      %8341 = vxpose.xlu0.b32.cont [6/16] 0.0, 128
      %8342 = vxpose.xlu0.b32.cont [7/16] 0.0, 128
      %8343 = vxpose.xlu0.b32.cont [8/16] 0.0, 128
      %8344 = vxpose.xlu0.b32.cont [9/16] 0.0, 128
      %8345 = vxpose.xlu0.b32.cont [10/16] 0.0, 128
      %8346 = vxpose.xlu0.b32.cont [11/16] 0.0, 128
      %8347 = vxpose.xlu0.b32.cont [12/16] 0.0, 128
      %8348 = vxpose.xlu0.b32.cont [13/16] 0.0, 128
      %8349 = vxpose.xlu0.b32.cont [14/16] 0.0, 128
      %8350 = vxpose.xlu0.b32.cont [15/16] 0.0, 128
      %8351 = vxpose.xlu0.b32.end [16/16] 0.0, 128
      %v8352 = vpop.trf.xlu0
      %v8353 = vpop.trf.xlu0
      %v8354 = vpop.trf.xlu0
      %v8355 = vpop.trf.xlu0
      %v8356 = vpop.trf.xlu0
      %v8357 = vpop.trf.xlu0
      %v8358 = vpop.trf.xlu0
      %v8359 = vpop.trf.xlu0
      %v8360 = vpop.trf.xlu0
      %v8361 = vpop.trf.xlu0
      %v8362 = vpop.trf.xlu0
      %v8363 = vpop.trf.xlu0
      %v8364 = vpop.trf.xlu0
      %v8365 = vpop.trf.xlu0
      %v8366 = vpop.trf.xlu0
      %v8367 = vpop.trf.xlu0
      %8368 = vxpose.xlu0.b32.start [1/16] %v8322, 128
      %8369 = vxpose.xlu0.b32.cont [2/16] %v8323, 128
      %8370 = vxpose.xlu0.b32.cont [3/16] 0.0, 128
      %8371 = vxpose.xlu0.b32.cont [4/16] 0.0, 128
      %8372 = vxpose.xlu0.b32.cont [5/16] 0.0, 128
      %8373 = vxpose.xlu0.b32.cont [6/16] 0.0, 128
      %8374 = vxpose.xlu0.b32.cont [7/16] 0.0, 128
      %8375 = vxpose.xlu0.b32.cont [8/16] 0.0, 128
      %8376 = vxpose.xlu0.b32.cont [9/16] 0.0, 128
      %8377 = vxpose.xlu0.b32.cont [10/16] 0.0, 128
      %8378 = vxpose.xlu0.b32.cont [11/16] 0.0, 128
      %8379 = vxpose.xlu0.b32.cont [12/16] 0.0, 128
      %8380 = vxpose.xlu0.b32.cont [13/16] 0.0, 128
      %8381 = vxpose.xlu0.b32.cont [14/16] 0.0, 128
      %8382 = vxpose.xlu0.b32.cont [15/16] 0.0, 128
      %8383 = vxpose.xlu0.b32.end [16/16] 0.0, 128
      %v8384 = vpop.trf.xlu0
      %v8385 = vpop.trf.xlu0
      %v8386 = vpop.trf.xlu0
      %v8387 = vpop.trf.xlu0
      %v8388 = vpop.trf.xlu0
      %v8389 = vpop.trf.xlu0
      %v8390 = vpop.trf.xlu0
      %v8391 = vpop.trf.xlu0
      %v8392 = vpop.trf.xlu0
      %v8393 = vpop.trf.xlu0
      %v8394 = vpop.trf.xlu0
      %v8395 = vpop.trf.xlu0
      %v8396 = vpop.trf.xlu0
      %v8397 = vpop.trf.xlu0
      %v8398 = vpop.trf.xlu0
      %v8399 = vpop.trf.xlu0
      %8400 = vxpose.xlu0.b32.start [1/16] %v8324, 128
      %8401 = vxpose.xlu0.b32.cont [2/16] %v8325, 128
      %8402 = vxpose.xlu0.b32.cont [3/16] 0.0, 128
      %8403 = vxpose.xlu0.b32.cont [4/16] 0.0, 128
      %8404 = vxpose.xlu0.b32.cont [5/16] 0.0, 128
      %8405 = vxpose.xlu0.b32.cont [6/16] 0.0, 128
      %8406 = vxpose.xlu0.b32.cont [7/16] 0.0, 128
      %8407 = vxpose.xlu0.b32.cont [8/16] 0.0, 128
      %8408 = vxpose.xlu0.b32.cont [9/16] 0.0, 128
      %8409 = vxpose.xlu0.b32.cont [10/16] 0.0, 128
      %8410 = vxpose.xlu0.b32.cont [11/16] 0.0, 128
      %8411 = vxpose.xlu0.b32.cont [12/16] 0.0, 128
      %8412 = vxpose.xlu0.b32.cont [13/16] 0.0, 128
      %8413 = vxpose.xlu0.b32.cont [14/16] 0.0, 128
      %8414 = vxpose.xlu0.b32.cont [15/16] 0.0, 128
      %8415 = vxpose.xlu0.b32.end [16/16] 0.0, 128
      %v8416 = vpop.trf.xlu0
      %v8417 = vpop.trf.xlu0
      %v8418 = vpop.trf.xlu0
      %v8419 = vpop.trf.xlu0
      %v8420 = vpop.trf.xlu0
      %v8421 = vpop.trf.xlu0
      %v8422 = vpop.trf.xlu0
      %v8423 = vpop.trf.xlu0
      %v8424 = vpop.trf.xlu0
      %v8425 = vpop.trf.xlu0
      %v8426 = vpop.trf.xlu0
      %v8427 = vpop.trf.xlu0
      %v8428 = vpop.trf.xlu0
      %v8429 = vpop.trf.xlu0
      %v8430 = vpop.trf.xlu0
      %v8431 = vpop.trf.xlu0
      %8432 = vxpose.xlu0.b32.start [1/16] %v8326, 128
      %8433 = vxpose.xlu0.b32.cont [2/16] %v8327, 128
      %8434 = vxpose.xlu0.b32.cont [3/16] 0.0, 128
      %8435 = vxpose.xlu0.b32.cont [4/16] 0.0, 128
      %8436 = vxpose.xlu0.b32.cont [5/16] 0.0, 128
      %8437 = vxpose.xlu0.b32.cont [6/16] 0.0, 128
      %8438 = vxpose.xlu0.b32.cont [7/16] 0.0, 128
      %8439 = vxpose.xlu0.b32.cont [8/16] 0.0, 128
      %8440 = vxpose.xlu0.b32.cont [9/16] 0.0, 128
      %8441 = vxpose.xlu0.b32.cont [10/16] 0.0, 128
      %8442 = vxpose.xlu0.b32.cont [11/16] 0.0, 128
      %8443 = vxpose.xlu0.b32.cont [12/16] 0.0, 128
      %8444 = vxpose.xlu0.b32.cont [13/16] 0.0, 128
      %8445 = vxpose.xlu0.b32.cont [14/16] 0.0, 128
      %8446 = vxpose.xlu0.b32.cont [15/16] 0.0, 128
      %8447 = vxpose.xlu0.b32.end [16/16] 0.0, 128
      %v8448 = vpop.trf.xlu0
      %v8449 = vpop.trf.xlu0
      %v8450 = vpop.trf.xlu0
      %v8451 = vpop.trf.xlu0
      %v8452 = vpop.trf.xlu0
      %v8453 = vpop.trf.xlu0
      %v8454 = vpop.trf.xlu0
      %v8455 = vpop.trf.xlu0
      %v8456 = vpop.trf.xlu0
      %v8457 = vpop.trf.xlu0
      %v8458 = vpop.trf.xlu0
      %v8459 = vpop.trf.xlu0
      %v8460 = vpop.trf.xlu0
      %v8461 = vpop.trf.xlu0
      %v8462 = vpop.trf.xlu0
      %v8463 = vpop.trf.xlu0
      %8464 = vxpose.xlu0.b32.start [1/16] %v8328, 128
      %8465 = vxpose.xlu0.b32.cont [2/16] %v8329, 128
      %8466 = vxpose.xlu0.b32.cont [3/16] 0.0, 128
      %8467 = vxpose.xlu0.b32.cont [4/16] 0.0, 128
      %8468 = vxpose.xlu0.b32.cont [5/16] 0.0, 128
      %8469 = vxpose.xlu0.b32.cont [6/16] 0.0, 128
      %8470 = vxpose.xlu0.b32.cont [7/16] 0.0, 128
      %8471 = vxpose.xlu0.b32.cont [8/16] 0.0, 128
      %8472 = vxpose.xlu0.b32.cont [9/16] 0.0, 128
      %8473 = vxpose.xlu0.b32.cont [10/16] 0.0, 128
      %8474 = vxpose.xlu0.b32.cont [11/16] 0.0, 128
      %8475 = vxpose.xlu0.b32.cont [12/16] 0.0, 128
      %8476 = vxpose.xlu0.b32.cont [13/16] 0.0, 128
      %8477 = vxpose.xlu0.b32.cont [14/16] 0.0, 128
      %8478 = vxpose.xlu0.b32.cont [15/16] 0.0, 128
      %8479 = vxpose.xlu0.b32.end [16/16] 0.0, 128
      %v8480 = vpop.trf.xlu0
      %v8481 = vpop.trf.xlu0
      %v8482 = vpop.trf.xlu0
      %v8483 = vpop.trf.xlu0
      %v8484 = vpop.trf.xlu0
      %v8485 = vpop.trf.xlu0
      %v8486 = vpop.trf.xlu0
      %v8487 = vpop.trf.xlu0
      %v8488 = vpop.trf.xlu0
      %v8489 = vpop.trf.xlu0
      %v8490 = vpop.trf.xlu0
      %v8491 = vpop.trf.xlu0
      %v8492 = vpop.trf.xlu0
      %v8493 = vpop.trf.xlu0
      %v8494 = vpop.trf.xlu0
      %v8495 = vpop.trf.xlu0
      %8496 = vxpose.xlu0.b32.start [1/16] %v8330, 128
      %8497 = vxpose.xlu0.b32.cont [2/16] %v8331, 128
      %8498 = vxpose.xlu0.b32.cont [3/16] 0.0, 128
      %8499 = vxpose.xlu0.b32.cont [4/16] 0.0, 128
      %8500 = vxpose.xlu0.b32.cont [5/16] 0.0, 128
      %8501 = vxpose.xlu0.b32.cont [6/16] 0.0, 128
      %8502 = vxpose.xlu0.b32.cont [7/16] 0.0, 128
      %8503 = vxpose.xlu0.b32.cont [8/16] 0.0, 128
      %8504 = vxpose.xlu0.b32.cont [9/16] 0.0, 128
      %8505 = vxpose.xlu0.b32.cont [10/16] 0.0, 128
      %8506 = vxpose.xlu0.b32.cont [11/16] 0.0, 128
      %8507 = vxpose.xlu0.b32.cont [12/16] 0.0, 128
      %8508 = vxpose.xlu0.b32.cont [13/16] 0.0, 128
      %8509 = vxpose.xlu0.b32.cont [14/16] 0.0, 128
      %8510 = vxpose.xlu0.b32.cont [15/16] 0.0, 128
      %8511 = vxpose.xlu0.b32.end [16/16] 0.0, 128
      %v8512 = vpop.trf.xlu0
      %v8513 = vpop.trf.xlu0
      %v8514 = vpop.trf.xlu0
      %v8515 = vpop.trf.xlu0
      %v8516 = vpop.trf.xlu0
      %v8517 = vpop.trf.xlu0
      %v8518 = vpop.trf.xlu0
      %v8519 = vpop.trf.xlu0
      %v8520 = vpop.trf.xlu0
      %v8521 = vpop.trf.xlu0
      %v8522 = vpop.trf.xlu0
      %v8523 = vpop.trf.xlu0
      %v8524 = vpop.trf.xlu0
      %v8525 = vpop.trf.xlu0
      %v8526 = vpop.trf.xlu0
      %v8527 = vpop.trf.xlu0
      %8528 = vxpose.xlu0.b32.start [1/16] %v8332, 128
      %8529 = vxpose.xlu0.b32.cont [2/16] %v8333, 128
      %8530 = vxpose.xlu0.b32.cont [3/16] 0.0, 128
      %8531 = vxpose.xlu0.b32.cont [4/16] 0.0, 128
      %8532 = vxpose.xlu0.b32.cont [5/16] 0.0, 128
      %8533 = vxpose.xlu0.b32.cont [6/16] 0.0, 128
      %8534 = vxpose.xlu0.b32.cont [7/16] 0.0, 128
      %8535 = vxpose.xlu0.b32.cont [8/16] 0.0, 128
      %8536 = vxpose.xlu0.b32.cont [9/16] 0.0, 128
      %8537 = vxpose.xlu0.b32.cont [10/16] 0.0, 128
      %8538 = vxpose.xlu0.b32.cont [11/16] 0.0, 128
      %8539 = vxpose.xlu0.b32.cont [12/16] 0.0, 128
      %8540 = vxpose.xlu0.b32.cont [13/16] 0.0, 128
      %8541 = vxpose.xlu0.b32.cont [14/16] 0.0, 128
      %8542 = vxpose.xlu0.b32.cont [15/16] 0.0, 128
      %8543 = vxpose.xlu0.b32.end [16/16] 0.0, 128
      %v8544 = vpop.trf.xlu0
      %v8545 = vpop.trf.xlu0
      %v8546 = vpop.trf.xlu0
      %v8547 = vpop.trf.xlu0
      %v8548 = vpop.trf.xlu0
      %v8549 = vpop.trf.xlu0
      %v8550 = vpop.trf.xlu0
      %v8551 = vpop.trf.xlu0
      %v8552 = vpop.trf.xlu0
      %v8553 = vpop.trf.xlu0
      %v8554 = vpop.trf.xlu0
      %v8555 = vpop.trf.xlu0
      %v8556 = vpop.trf.xlu0
      %v8557 = vpop.trf.xlu0
      %v8558 = vpop.trf.xlu0
      %v8559 = vpop.trf.xlu0
      %8560 = vxpose.xlu0.b32.start [1/16] %v8334, 128
      %8561 = vxpose.xlu0.b32.cont [2/16] %v8335, 128
      %8562 = vxpose.xlu0.b32.cont [3/16] 0.0, 128
      %8563 = vxpose.xlu0.b32.cont [4/16] 0.0, 128
      %8564 = vxpose.xlu0.b32.cont [5/16] 0.0, 128
      %8565 = vxpose.xlu0.b32.cont [6/16] 0.0, 128
      %8566 = vxpose.xlu0.b32.cont [7/16] 0.0, 128
      %8567 = vxpose.xlu0.b32.cont [8/16] 0.0, 128
      %8568 = vxpose.xlu0.b32.cont [9/16] 0.0, 128
      %8569 = vxpose.xlu0.b32.cont [10/16] 0.0, 128
      %8570 = vxpose.xlu0.b32.cont [11/16] 0.0, 128
      %8571 = vxpose.xlu0.b32.cont [12/16] 0.0, 128
      %8572 = vxpose.xlu0.b32.cont [13/16] 0.0, 128
      %8573 = vxpose.xlu0.b32.cont [14/16] 0.0, 128
      %8574 = vxpose.xlu0.b32.cont [15/16] 0.0, 128
      %8575 = vxpose.xlu0.b32.end [16/16] 0.0, 128
      %v8576 = vpop.trf.xlu0
      %v8577 = vpop.trf.xlu0
      %v8578 = vpop.trf.xlu0
      %v8579 = vpop.trf.xlu0
      %v8580 = vpop.trf.xlu0
      %v8581 = vpop.trf.xlu0
      %v8582 = vpop.trf.xlu0
      %v8583 = vpop.trf.xlu0
      %v8584 = vpop.trf.xlu0
      %v8585 = vpop.trf.xlu0
      %v8586 = vpop.trf.xlu0
      %v8587 = vpop.trf.xlu0
      %v8588 = vpop.trf.xlu0
      %v8589 = vpop.trf.xlu0
      %v8590 = vpop.trf.xlu0
      %v8591 = vpop.trf.xlu0
      %v8593 = vsel %vm500, %v8352, 0
      %v8596 = vsel %vm500, %v8353, 0
      %8598 = vmatpush.msra.mxu0 0.0
      %8599 = vmatpush.msra.mxu0 0.0
      %8600 = vmatpush.msra.mxu0 0.0
      %8601 = vmatpush.msra.mxu0 0.0
      %8602 = vmatpush.msra.mxu0 0.0
      %8603 = vmatpush.msra.mxu0 0.0
      %8604 = vmatpush.msra.mxu0 0.0
      %8605 = vmatpush.msra.mxu0 0.0
      %8606 = vmatpush.msra.mxu0 0.0
      %8607 = vmatpush.msra.mxu0 0.0
      %8608 = vmatpush.msra.mxu0 0.0
      %8609 = vmatpush.msra.mxu0 0.0
      %8610 = vmatpush.msra.mxu0 0.0
      %8611 = vmatpush.msra.mxu0 0.0
      %8612 = vmatpush.msra.mxu0 %v246
      %8613 = vmatpush.msra.mxu0 %v245
      %8614 = vmatmul.f32.gmra.mxu0 %v8593
      %v8615 = vpop.f32.mrf.mxu0
      %v8616 = vadd.f32 0.0, %v8615
      %8617 = vmatmul.f32.gmra.mxu0 %v8596
      %v8618 = vpop.f32.mrf.mxu0
      %v8619 = vadd.f32 0.0, %v8618
      %8620 = vdwg.mxu0
      %v8622 = vsel %vm500, %v8384, 0
      %v8625 = vsel %vm500, %v8385, 0
      %8627 = vmatpush.msra.mxu0 0.0
      %8628 = vmatpush.msra.mxu0 0.0
      %8629 = vmatpush.msra.mxu0 0.0
      %8630 = vmatpush.msra.mxu0 0.0
      %8631 = vmatpush.msra.mxu0 0.0
      %8632 = vmatpush.msra.mxu0 0.0
      %8633 = vmatpush.msra.mxu0 0.0
      %8634 = vmatpush.msra.mxu0 0.0
      %8635 = vmatpush.msra.mxu0 0.0
      %8636 = vmatpush.msra.mxu0 0.0
      %8637 = vmatpush.msra.mxu0 0.0
      %8638 = vmatpush.msra.mxu0 0.0
      %8639 = vmatpush.msra.mxu0 0.0
      %8640 = vmatpush.msra.mxu0 0.0
      %8641 = vmatpush.msra.mxu0 %v7643
      %8642 = vmatpush.msra.mxu0 %v7642
      %8643 = vmatmul.f32.gmra.mxu0 %v8622
      %v8644 = vpop.f32.mrf.mxu0
      %v8645 = vadd.f32 0.0, %v8644
      %8646 = vmatmul.f32.gmra.mxu0 %v8625
      %v8647 = vpop.f32.mrf.mxu0
      %v8648 = vadd.f32 0.0, %v8647
      %8649 = vdwg.mxu0
      %v8651 = vsel %vm500, %v8416, 0
      %v8654 = vsel %vm500, %v8417, 0
      %8656 = vmatpush.msra.mxu0 0.0
      %8657 = vmatpush.msra.mxu0 0.0
      %8658 = vmatpush.msra.mxu0 0.0
      %8659 = vmatpush.msra.mxu0 0.0
      %8660 = vmatpush.msra.mxu0 0.0
      %8661 = vmatpush.msra.mxu0 0.0
      %8662 = vmatpush.msra.mxu0 0.0
      %8663 = vmatpush.msra.mxu0 0.0
      %8664 = vmatpush.msra.mxu0 0.0
      %8665 = vmatpush.msra.mxu0 0.0
      %8666 = vmatpush.msra.mxu0 0.0
      %8667 = vmatpush.msra.mxu0 0.0
      %8668 = vmatpush.msra.mxu0 0.0
      %8669 = vmatpush.msra.mxu0 0.0
      %8670 = vmatpush.msra.mxu0 %v7645
      %8671 = vmatpush.msra.mxu0 %v7644
      %8672 = vmatmul.f32.gmra.mxu0 %v8651
      %v8673 = vpop.f32.mrf.mxu0
      %v8674 = vadd.f32 0.0, %v8673
      %8675 = vmatmul.f32.gmra.mxu0 %v8654
      %v8676 = vpop.f32.mrf.mxu0
      %v8677 = vadd.f32 0.0, %v8676
      %8678 = vdwg.mxu0
      %v8680 = vsel %vm500, %v8448, 0
      %v8683 = vsel %vm500, %v8449, 0
      %8685 = vmatpush.msra.mxu0 0.0
      %8686 = vmatpush.msra.mxu0 0.0
      %8687 = vmatpush.msra.mxu0 0.0
      %8688 = vmatpush.msra.mxu0 0.0
      %8689 = vmatpush.msra.mxu0 0.0
      %8690 = vmatpush.msra.mxu0 0.0
      %8691 = vmatpush.msra.mxu0 0.0
      %8692 = vmatpush.msra.mxu0 0.0
      %8693 = vmatpush.msra.mxu0 0.0
      %8694 = vmatpush.msra.mxu0 0.0
      %8695 = vmatpush.msra.mxu0 0.0
      %8696 = vmatpush.msra.mxu0 0.0
      %8697 = vmatpush.msra.mxu0 0.0
      %8698 = vmatpush.msra.mxu0 0.0
      %8699 = vmatpush.msra.mxu0 %v7647
      %8700 = vmatpush.msra.mxu0 %v7646
      %8701 = vmatmul.f32.gmra.mxu0 %v8680
      %v8702 = vpop.f32.mrf.mxu0
      %v8703 = vadd.f32 0.0, %v8702
      %8704 = vmatmul.f32.gmra.mxu0 %v8683
      %v8705 = vpop.f32.mrf.mxu0
      %v8706 = vadd.f32 0.0, %v8705
      %8707 = vdwg.mxu0
      %v8709 = vsel %vm500, %v8480, 0
      %v8712 = vsel %vm500, %v8481, 0
      %8714 = vmatpush.msra.mxu0 0.0
      %8715 = vmatpush.msra.mxu0 0.0
      %8716 = vmatpush.msra.mxu0 0.0
      %8717 = vmatpush.msra.mxu0 0.0
      %8718 = vmatpush.msra.mxu0 0.0
      %8719 = vmatpush.msra.mxu0 0.0
      %8720 = vmatpush.msra.mxu0 0.0
      %8721 = vmatpush.msra.mxu0 0.0
      %8722 = vmatpush.msra.mxu0 0.0
      %8723 = vmatpush.msra.mxu0 0.0
      %8724 = vmatpush.msra.mxu0 0.0
      %8725 = vmatpush.msra.mxu0 0.0
      %8726 = vmatpush.msra.mxu0 0.0
      %8727 = vmatpush.msra.mxu0 0.0
      %8728 = vmatpush.msra.mxu0 %v7649
      %8729 = vmatpush.msra.mxu0 %v7648
      %8730 = vmatmul.f32.gmra.mxu0 %v8709
      %v8731 = vpop.f32.mrf.mxu0
      %v8732 = vadd.f32 0.0, %v8731
      %8733 = vmatmul.f32.gmra.mxu0 %v8712
      %v8734 = vpop.f32.mrf.mxu0
      %v8735 = vadd.f32 0.0, %v8734
      %8736 = vdwg.mxu0
      %v8738 = vsel %vm500, %v8512, 0
      %v8741 = vsel %vm500, %v8513, 0
      %8743 = vmatpush.msra.mxu0 0.0
      %8744 = vmatpush.msra.mxu0 0.0
      %8745 = vmatpush.msra.mxu0 0.0
      %8746 = vmatpush.msra.mxu0 0.0
      %8747 = vmatpush.msra.mxu0 0.0
      %8748 = vmatpush.msra.mxu0 0.0
      %8749 = vmatpush.msra.mxu0 0.0
      %8750 = vmatpush.msra.mxu0 0.0
      %8751 = vmatpush.msra.mxu0 0.0
      %8752 = vmatpush.msra.mxu0 0.0
      %8753 = vmatpush.msra.mxu0 0.0
      %8754 = vmatpush.msra.mxu0 0.0
      %8755 = vmatpush.msra.mxu0 0.0
      %8756 = vmatpush.msra.mxu0 0.0
      %8757 = vmatpush.msra.mxu0 %v7651
      %8758 = vmatpush.msra.mxu0 %v7650
      %8759 = vmatmul.f32.gmra.mxu0 %v8738
      %v8760 = vpop.f32.mrf.mxu0
      %v8761 = vadd.f32 0.0, %v8760
      %8762 = vmatmul.f32.gmra.mxu0 %v8741
      %v8763 = vpop.f32.mrf.mxu0
      %v8764 = vadd.f32 0.0, %v8763
      %8765 = vdwg.mxu0
      %v8767 = vsel %vm500, %v8544, 0
      %v8770 = vsel %vm500, %v8545, 0
      %8772 = vmatpush.msra.mxu0 0.0
      %8773 = vmatpush.msra.mxu0 0.0
      %8774 = vmatpush.msra.mxu0 0.0
      %8775 = vmatpush.msra.mxu0 0.0
      %8776 = vmatpush.msra.mxu0 0.0
      %8777 = vmatpush.msra.mxu0 0.0
      %8778 = vmatpush.msra.mxu0 0.0
      %8779 = vmatpush.msra.mxu0 0.0
      %8780 = vmatpush.msra.mxu0 0.0
      %8781 = vmatpush.msra.mxu0 0.0
      %8782 = vmatpush.msra.mxu0 0.0
      %8783 = vmatpush.msra.mxu0 0.0
      %8784 = vmatpush.msra.mxu0 0.0
      %8785 = vmatpush.msra.mxu0 0.0
      %8786 = vmatpush.msra.mxu0 %v7653
      %8787 = vmatpush.msra.mxu0 %v7652
      %8788 = vmatmul.f32.gmra.mxu0 %v8767
      %v8789 = vpop.f32.mrf.mxu0
      %v8790 = vadd.f32 0.0, %v8789
      %8791 = vmatmul.f32.gmra.mxu0 %v8770
      %v8792 = vpop.f32.mrf.mxu0
      %v8793 = vadd.f32 0.0, %v8792
      %8794 = vdwg.mxu0
      %v8796 = vsel %vm500, %v8576, 0
      %v8799 = vsel %vm500, %v8577, 0
      %8801 = vmatpush.msra.mxu0 0.0
      %8802 = vmatpush.msra.mxu0 0.0
      %8803 = vmatpush.msra.mxu0 0.0
      %8804 = vmatpush.msra.mxu0 0.0
      %8805 = vmatpush.msra.mxu0 0.0
      %8806 = vmatpush.msra.mxu0 0.0
      %8807 = vmatpush.msra.mxu0 0.0
      %8808 = vmatpush.msra.mxu0 0.0
      %8809 = vmatpush.msra.mxu0 0.0
      %8810 = vmatpush.msra.mxu0 0.0
      %8811 = vmatpush.msra.mxu0 0.0
      %8812 = vmatpush.msra.mxu0 0.0
      %8813 = vmatpush.msra.mxu0 0.0
      %8814 = vmatpush.msra.mxu0 0.0
      %8815 = vmatpush.msra.mxu0 %v7655
      %8816 = vmatpush.msra.mxu0 %v7654
      %8817 = vmatmul.f32.gmra.mxu0 %v8796
      %v8818 = vpop.f32.mrf.mxu0
      %v8819 = vadd.f32 0.0, %v8818
      %8820 = vmatmul.f32.gmra.mxu0 %v8799
      %v8821 = vpop.f32.mrf.mxu0
      %v8822 = vadd.f32 0.0, %v8821
      %8823 = vdwg.mxu0
      %v8825 = vsel %vm282, %v8616, 0
      %v8828 = vsel %vm282, %v8619, 0
      %v8831 = vsel %vm282, %v8645, 0
      %v8834 = vsel %vm282, %v8648, 0
      %v8837 = vsel %vm282, %v8674, 0
      %v8840 = vsel %vm282, %v8677, 0
      %v8843 = vsel %vm282, %v8703, 0
      %v8846 = vsel %vm282, %v8706, 0
      %v8849 = vsel %vm282, %v8732, 0
      %v8852 = vsel %vm282, %v8735, 0
      %v8855 = vsel %vm282, %v8761, 0
      %v8858 = vsel %vm282, %v8764, 0
      %v8861 = vsel %vm282, %v8790, 0
      %v8864 = vsel %vm282, %v8793, 0
      %v8867 = vsel %vm282, %v8819, 0
      %v8870 = vsel %vm282, %v8822, 0
      %vm8872 = vcmask 1043456
      %v8874 = vsel %vm8872, %v281, 0
      %8876 = vmatpush.msra.mxu0 0.0
      %8877 = vmatpush.msra.mxu0 0.0
      %8878 = vmatpush.msra.mxu0 0.0
      %8879 = vmatpush.msra.mxu0 0.0
      %8880 = vmatpush.msra.mxu0 0.0
      %8881 = vmatpush.msra.mxu0 0.0
      %8882 = vmatpush.msra.mxu0 0.0
      %8883 = vmatpush.msra.mxu0 0.0
      %8884 = vmatpush.msra.mxu0 0.0
      %8885 = vmatpush.msra.mxu0 0.0
      %8886 = vmatpush.msra.mxu0 0.0
      %8887 = vmatpush.msra.mxu0 0.0
      %8888 = vmatpush.msra.mxu0 0.0
      %8889 = vmatpush.msra.mxu0 0.0
      %8890 = vmatpush.msra.mxu0 0.0
      %8891 = vmatpush.msra.mxu0 %v8874
      %8892 = vmatmul.f32.gmra.mxu0 %v8825
      %v8893 = vpop.f32.mrf.mxu0
      %v8894 = vadd.f32 0.0, %v8893
      %8895 = vmatmul.f32.gmra.mxu0 %v8828
      %v8896 = vpop.f32.mrf.mxu0
      %v8897 = vadd.f32 0.0, %v8896
      %8898 = vmatmul.f32.gmra.mxu0 %v8831
      %v8899 = vpop.f32.mrf.mxu0
      %v8900 = vadd.f32 0.0, %v8899
      %8901 = vmatmul.f32.gmra.mxu0 %v8834
      %v8902 = vpop.f32.mrf.mxu0
      %v8903 = vadd.f32 0.0, %v8902
      %8904 = vmatmul.f32.gmra.mxu0 %v8837
      %v8905 = vpop.f32.mrf.mxu0
      %v8906 = vadd.f32 0.0, %v8905
      %8907 = vmatmul.f32.gmra.mxu0 %v8840
      %v8908 = vpop.f32.mrf.mxu0
      %v8909 = vadd.f32 0.0, %v8908
      %8910 = vmatmul.f32.gmra.mxu0 %v8843
      %v8911 = vpop.f32.mrf.mxu0
      %v8912 = vadd.f32 0.0, %v8911
      %8913 = vmatmul.f32.gmra.mxu0 %v8846
      %v8914 = vpop.f32.mrf.mxu0
      %v8915 = vadd.f32 0.0, %v8914
      %8916 = vmatmul.f32.gmra.mxu0 %v8849
      %v8917 = vpop.f32.mrf.mxu0
      %v8918 = vadd.f32 0.0, %v8917
      %8919 = vmatmul.f32.gmra.mxu0 %v8852
      %v8920 = vpop.f32.mrf.mxu0
      %v8921 = vadd.f32 0.0, %v8920
      %8922 = vmatmul.f32.gmra.mxu0 %v8855
      %v8923 = vpop.f32.mrf.mxu0
      %v8924 = vadd.f32 0.0, %v8923
      %8925 = vmatmul.f32.gmra.mxu0 %v8858
      %v8926 = vpop.f32.mrf.mxu0
      %v8927 = vadd.f32 0.0, %v8926
      %8928 = vmatmul.f32.gmra.mxu0 %v8861
      %v8929 = vpop.f32.mrf.mxu0
      %v8930 = vadd.f32 0.0, %v8929
      %8931 = vmatmul.f32.gmra.mxu0 %v8864
      %v8932 = vpop.f32.mrf.mxu0
      %v8933 = vadd.f32 0.0, %v8932
      %8934 = vmatmul.f32.gmra.mxu0 %v8867
      %v8935 = vpop.f32.mrf.mxu0
      %v8936 = vadd.f32 0.0, %v8935
      %8937 = vmatmul.f32.gmra.mxu0 %v8870
      %v8938 = vpop.f32.mrf.mxu0
      %v8939 = vadd.f32 0.0, %v8938
      %8940 = vdwg.mxu0
      %v8941 = vmax.f32 %v8894, 0.0
      %v8942 = vmax.f32 %v8897, 0.0
      %v8943 = vmax.f32 %v8900, 0.0
      %v8944 = vmax.f32 %v8903, 0.0
      %v8945 = vmax.f32 %v8906, 0.0
      %v8946 = vmax.f32 %v8909, 0.0
      %v8947 = vmax.f32 %v8912, 0.0
      %v8948 = vmax.f32 %v8915, 0.0
      %v8949 = vmax.f32 %v8918, 0.0
      %v8950 = vmax.f32 %v8921, 0.0
      %v8951 = vmax.f32 %v8924, 0.0
      %v8952 = vmax.f32 %v8927, 0.0
      %v8953 = vmax.f32 %v8930, 0.0
      %v8954 = vmax.f32 %v8933, 0.0
      %v8955 = vmax.f32 %v8936, 0.0
      %v8956 = vmax.f32 %v8939, 0.0
      %vm8957 = vcmask 261120
      %8958 = vst.msk [vmem:[%s244] sm:$0xff] %vm8957, %v8941
      %8959 = vst.msk [vmem:[%s244 + $0x8] sm:$0xff] %vm8957, %v8942
      %8960 = vst.msk [vmem:[%s244 + $0x10] sm:$0xff] %vm8957, %v8943
      %8961 = vst.msk [vmem:[%s244 + $0x18] sm:$0xff] %vm8957, %v8944
      %8962 = vst.msk [vmem:[%s244 + $0x20] sm:$0xff] %vm8957, %v8945
      %8963 = vst.msk [vmem:[%s244 + $0x28] sm:$0xff] %vm8957, %v8946
      %8964 = vst.msk [vmem:[%s244 + $0x30] sm:$0xff] %vm8957, %v8947
      %8965 = vst.msk [vmem:[%s244 + $0x38] sm:$0xff] %vm8957, %v8948
      %8966 = vst.msk [vmem:[%s244 + $0x40] sm:$0xff] %vm8957, %v8949
      %8967 = vst.msk [vmem:[%s244 + $0x48] sm:$0xff] %vm8957, %v8950
      %8968 = vst.msk [vmem:[%s244 + $0x50] sm:$0xff] %vm8957, %v8951
      %8969 = vst.msk [vmem:[%s244 + $0x58] sm:$0xff] %vm8957, %v8952
      %8970 = vst.msk [vmem:[%s244 + $0x60] sm:$0xff] %vm8957, %v8953
      %8971 = vst.msk [vmem:[%s244 + $0x68] sm:$0xff] %vm8957, %v8954
      %8972 = vst.msk [vmem:[%s244 + $0x70] sm:$0xff] %vm8957, %v8955
      %8973 = vst.msk [vmem:[%s244 + $0x78] sm:$0xff] %vm8957, %v8956
      %p8974 = scmp.lt.s32.totalorder %s16, 1
      %s8975 = scalar_select %p8974, %s16, 1
      %s8976 = smul.addr %s8975, 16
      %s8977 = smul.addr %s8976, 8
      %s8978 = scalar_lea.vmem %s5, %s8977
      // Predicated region
      $region41: #{spatial_attention_scaled_gcn.1} parent=39 // pred_check
        %p8979 = pneg %p149
      $region42: #{spatial_attention_scaled_gcn.1} parent=39 // pred_check_branch
        %8981 = sbr.rel (%p8979) target = $region44
      $region43: #{spatial_attention_scaled_gcn.1} parent=39 // pred_region
        _
      $region44: #{spatial_attention_scaled_gcn.1} parent=39 // pred_fallthru
        _
    $region40: #{spatial_attention_scaled_gcn.1} parent=5 // pred_fallthru
      _
    %p8982 = scmp.le.s32.totalorder 2, %s11
    // Predicated region
    $region45: #{spatial_attention_scaled_gcn.1} parent=5 // pred_check
      %p8983 = pneg %p8982
    $region46: #{spatial_attention_scaled_gcn.1} parent=5 // pred_check_branch
      %8985 = sbr.rel (%p8983) target = $region48
    $region47: #{spatial_attention_scaled_gcn.1} parent=5 // pred_region
      %s8986 = ssub.s32 %s11, 2
      // Predicated region
      $region49: #{spatial_attention_scaled_gcn.1} parent=47 // pred_check
        %p8987 = pneg %p155
      $region50: #{spatial_attention_scaled_gcn.1} parent=47 // pred_check_branch
        %8989 = sbr.rel (%p8987) target = $region52
      $region51: #{spatial_attention_scaled_gcn.1} parent=47 // pred_region
        %p8990 = scmp.lt.s32.totalorder %s17, 1
        %s8991 = scalar_select %p8990, %s17, 1
        %s8992 = smul.addr %s8991, 16
        %s8993 = smul.addr %s8992, 8
        %s8994 = scalar_lea.vmem %s5, %s8993
      $region52: #{spatial_attention_scaled_gcn.1} parent=47 // pred_fallthru
        _
    $region48: #{spatial_attention_scaled_gcn.1} parent=5 // pred_fallthru
      _
  $region6: #{spatial_attention_scaled_gcn.1} parent=0 // loop_footer
    %s15 = sadd.s32 1, %s11
  $region7: #{spatial_attention_scaled_gcn.1} parent=0 // loop_footer_branch
    %10 = sbr.rel target = $region3
  $region8: #{spatial_attention_scaled_gcn.1} parent=0 // loop_exit
    _

</llo_original>
